<compile_context>
chip_gen: v7x
topology: tpu7x:2x2x1
jax: 0.10.0
libtpu: 0.0.40
codegen_flags: <defaults>
</compile_context>

<pallas_src>
import jax
import jax.numpy as jnp
from jax.experimental import pallas as pl
from jax.experimental.pallas import tpu as pltpu


# ----------------------------- Pallas kernel ----------------------------------

def _build_deconv_kernel(n_fold, n_layers, rows0):
    """Fused kernel for a stack of ConvTranspose3d(k=2, s=2) layers.

    Ref layout (one grid step = one batch element):
      refs[0]                  : x       (1, rows0, C0)  channels-last voxel rows
      refs[1 + 2l], refs[2+2l] : layer-l weight / bias
          l <  n_fold : weight (8, Cin, Cout)   -> offsets folded into sublanes
          l >= n_fold : weight (Win, Wout) block-diagonal -> offsets kept in lanes
      refs[1 + 2*n_layers]     : output  (1, rows0 * 8**n_fold, Wout_last)
      refs[2 + 2*n_layers:]    : VMEM scratch, one per folded layer
    """

    def kernel(*refs):
        w_refs = [refs[1 + 2 * l] for l in range(n_layers)]
        b_refs = [refs[2 + 2 * l] for l in range(n_layers)]
        out_ref = refs[1 + 2 * n_layers]
        scratch_refs = refs[2 + 2 * n_layers:]

        x = refs[0][0].astype(jnp.float32)          # (rows0, C0)
        rows = rows0

        # --- folded layers: one small matmul per kernel offset, contiguous row
        #     stores into VMEM scratch (offset-major row order). ---
        for l in range(n_fold):
            s = scratch_refs[l]
            b = b_refs[l][...]                       # (1, Cout), loaded once per layer
            for p in range(8):                       # static, fully unrolled
                s[pl.ds(p * rows, rows), :] = (
                    jnp.dot(x, w_refs[l][p], preferred_element_type=jnp.float32) + b)
            rows *= 8
            x = s[...]

        # --- lane layers: offsets stay in the lane axis; one dense (block-diagonal)
        #     matmul per layer keeps all operands and the output lane-dense. ---
        for l in range(n_fold, n_layers):
            x = (jnp.dot(x, w_refs[l][...], preferred_element_type=jnp.float32)
                 + b_refs[l][...])

        out_ref[0] = x.astype(out_ref.dtype)

    return kernel


# ------------------------- layout un-scrambling (wrapper) -----------------------

def _unscramble(y, B, D0, H0, W0, n_fold, n_col, cout):
    """Undo the offset->row / offset->lane packing:
    (B, 8**n_fold * D0*H0*W0, 8**n_col * cout) -> (B, cout, D0*2**L, H0*2**L, W0*2**L).
    """
    nc = y.shape[-1]
    # rows are ordered (k_{n_fold-1}, ..., k_1, k_0, d0, h0, w0), each k = (kd, kh, kw)
    t = y.reshape((B,) + (2, 2, 2) * n_fold + (D0, H0, W0, nc))
    d0_i = 1 + 3 * n_fold
    perm = [0]
    for ax in range(3):                                     # d-, h-, w-axis bit groups
        perm += [d0_i + ax] + [1 + 3 * (n_fold - 1 - l) + ax for l in range(n_fold)]
    perm += [d0_i + 3]
    sA = 2 ** n_fold
    t = jnp.transpose(t, perm).reshape(B, D0 * sA, H0 * sA, W0 * sA, nc)

    # lanes are ordered (k_{n_fold}, ..., k_{L-1}, cout)
    t = t.reshape((B, D0 * sA, H0 * sA, W0 * sA) + (2, 2, 2) * n_col + (cout,))
    perm = [0, 4 + 3 * n_col]
    for ax in range(3):
        perm += [1 + ax] + [4 + 3 * j + ax for j in range(n_col)]
    t = jnp.transpose(t, perm)
    sB = 2 ** n_col
    return t.reshape(B, cout, D0 * sA * sB, H0 * sA * sB, W0 * sA * sB)


# ------------------------------ Python wrapper ----------------------------------

def deconv_block_forward(x, params, *, num_fold=2):
    """x: (B, C0, D0, H0, W0).  params: list of (weight, bias) per ConvTranspose3d
    layer, PyTorch layout: weight = (Cin, Cout, 2, 2, 2), bias = (Cout,)."""
    B, C0, D0, H0, W0 = x.shape
    n_layers = len(params)
    assert 1 <= num_fold < n_layers
    n_col = n_layers - num_fold
    N0 = D0 * H0 * W0
    dtype = x.dtype

    # channels-last voxel rows, one row-block per batch element
    x_rows = jnp.transpose(x, (0, 2, 3, 4, 1)).reshape(B, N0, C0)

    kernel_args = [x_rows]
    in_specs = [pl.BlockSpec((1, N0, C0), lambda b: (b, 0, 0))]
    scratch_shapes = []

    cin = C0
    rows = N0
    # folded layers: weight (8, Cin, Cout); the 8 kernel offsets go to the row axis
    for l in range(num_fold):
        w, bias = params[l]
        cout = w.shape[1]
        wp = jnp.transpose(w, (2, 3, 4, 0, 1)).reshape(8, cin, cout).astype(dtype)
        bp = bias.reshape(1, cout).astype(dtype)
        kernel_args += [wp, bp]
        in_specs += [pl.BlockSpec((8, cin, cout), lambda b: (0, 0, 0)),
                     pl.BlockSpec((1, cout), lambda b: (0, 0))]
        rows *= 8
        scratch_shapes.append(pltpu.VMEM((rows, cout), jnp.float32))
        cin = cout

    # lane layers: offsets go to the lane axis via block-diagonal weights
    blocks = 1
    width_out = cin
    for l in range(num_fold, n_layers):
        w, bias = params[l]
        cout = w.shape[1]
        blk = jnp.transpose(w, (0, 2, 3, 4, 1)).reshape(cin, 8 * cout)
        wm = blk if blocks == 1 else jnp.kron(jnp.eye(blocks, dtype=dtype), blk)
        bm = jnp.tile(bias, 8 * blocks).reshape(1, blocks * 8 * cout)
        kernel_args += [wm.astype(dtype), bm.astype(dtype)]
        w_in, w_out = blocks * cin, blocks * 8 * cout
        in_specs += [pl.BlockSpec((w_in, w_out), lambda b: (0, 0)),
                     pl.BlockSpec((1, w_out), lambda b: (0, 0))]
        blocks *= 8
        cin = cout
        width_out = w_out
        # TODO(synk): for much deeper stacks the block-diagonal lane weights grow 8x per
        # layer; re-tune num_fold in that case.

    cout_final = cin
    out_scrambled = pl.pallas_call(
        _build_deconv_kernel(num_fold, n_layers, N0),
        out_shape=jax.ShapeDtypeStruct((B, rows, width_out), dtype),
        grid_spec=pltpu.PrefetchScalarGridSpec(
            num_scalar_prefetch=0,
            grid=(B,),
            in_specs=in_specs,
            out_specs=pl.BlockSpec((1, rows, width_out), lambda b: (b, 0, 0)),
            scratch_shapes=scratch_shapes,
        ),
        compiler_params=pltpu.CompilerParams(
            dimension_semantics=("parallel",),          # v7x megacore: one batch per TC
            vmem_limit_bytes=32 * 1024 * 1024,
        ),
    )(*kernel_args)

    return _unscramble(out_scrambled, B, D0, H0, W0, num_fold, n_col, cout_final)


# ------------------------------ pure-JAX reference -------------------------------

def _conv_transpose3d_ref(x, w, b):
    # PyTorch ConvTranspose3d with kernel_size=2, stride=2, padding=0.
    y = jnp.einsum('ncdhw,copqr->nodphqwr', x, w)
    B, Cout, D, _, H, _, W, _ = y.shape
    y = y.reshape(B, Cout, 2 * D, 2 * H, 2 * W)
    return y + b.reshape(1, Cout, 1, 1, 1)


def deconv_block_reference(x, params):
    for w, b in params:
        x = _conv_transpose3d_ref(x, w, b)
    return x


# ------------------------------------ main ---------------------------------------

if __name__ == "__main__":
    # DeconvBlock(in_channels=32, out_channels=2, num_upsample=5):
    #   channels 32 -> 16 -> 8 -> 4 -> 2 -> 2, spatial x32: (2,2,2) -> (64,64,64).
    B, IN_CH, OUT_CH, NUM_UP = 2, 32, 2, 5
    D0 = H0 = W0 = 2

    key = jax.random.PRNGKey(0)
    keys = jax.random.split(key, 2 * NUM_UP + 1)

    params = []
    cin = IN_CH
    for i in range(NUM_UP):
        cout = OUT_CH if i == NUM_UP - 1 else IN_CH // (2 ** (i + 1))
        w = 0.1 * jax.random.normal(keys[2 * i], (cin, cout, 2, 2, 2), jnp.float32)
        b = 0.1 * jax.random.normal(keys[2 * i + 1], (cout,), jnp.float32)
        params.append((w, b))
        cin = cout

    x = jax.random.normal(keys[-1], (B, IN_CH, D0, H0, W0), jnp.float32)

    out = deconv_block_forward(x, params)
    out = jax.block_until_ready(out)

    ref = deconv_block_reference(x, params)
    assert out.shape == (B, OUT_CH, D0 * 32, H0 * 32, W0 * 32), out.shape
    assert jnp.allclose(out, ref, atol=1e-4, rtol=1e-4), \
        float(jnp.max(jnp.abs(out - ref)))

    print("KERNEL_OK")
</pallas_src>

<mosaic_0001>
module attributes {stable_mosaic.version = 11 : i64} {
  func.func @kernel(%arg0: i32, %arg1: memref<1x8x32xf32, #tpu.memory_space<vmem>>, %arg2: memref<8x32x16xf32, #tpu.memory_space<vmem>>, %arg3: memref<1x16xf32, #tpu.memory_space<vmem>>, %arg4: memref<8x16x8xf32, #tpu.memory_space<vmem>>, %arg5: memref<1x8xf32, #tpu.memory_space<vmem>>, %arg6: memref<8x32xf32, #tpu.memory_space<vmem>>, %arg7: memref<1x32xf32, #tpu.memory_space<vmem>>, %arg8: memref<32x128xf32, #tpu.memory_space<vmem>>, %arg9: memref<1x128xf32, #tpu.memory_space<vmem>>, %arg10: memref<128x1024xf32, #tpu.memory_space<vmem>>, %arg11: memref<1x1024xf32, #tpu.memory_space<vmem>>, %arg12: memref<1x512x1024xf32, #tpu.memory_space<vmem>>, %arg13: memref<64x16xf32, #tpu.memory_space<vmem>>, %arg14: memref<512x8xf32, #tpu.memory_space<vmem>>) attributes {dimension_semantics = [#tpu.dimension_semantics<parallel>], iteration_bounds = array<i64: 2>, scalar_prefetch = 0 : i64, scratch_operands = 2 : i64, tpu.core_type = #tpu.core_type<tc>, window_params = [{transform_indices = @transform_0, window_bounds = array<i64: 1, 8, 32>}, {pipeline_mode = #tpu.pipeline_mode<synchronous>, transform_indices = @transform_1, window_bounds = array<i64: 8, 32, 16>}, {pipeline_mode = #tpu.pipeline_mode<synchronous>, transform_indices = @transform_2, window_bounds = array<i64: 1, 16>}, {pipeline_mode = #tpu.pipeline_mode<synchronous>, transform_indices = @transform_3, window_bounds = array<i64: 8, 16, 8>}, {pipeline_mode = #tpu.pipeline_mode<synchronous>, transform_indices = @transform_4, window_bounds = array<i64: 1, 8>}, {pipeline_mode = #tpu.pipeline_mode<synchronous>, transform_indices = @transform_5, window_bounds = array<i64: 8, 32>}, {pipeline_mode = #tpu.pipeline_mode<synchronous>, transform_indices = @transform_6, window_bounds = array<i64: 1, 32>}, {pipeline_mode = #tpu.pipeline_mode<synchronous>, transform_indices = @transform_7, window_bounds = array<i64: 32, 128>}, {pipeline_mode = #tpu.pipeline_mode<synchronous>, transform_indices = @transform_8, window_bounds = array<i64: 1, 128>}, {pipeline_mode = #tpu.pipeline_mode<synchronous>, transform_indices = @transform_9, window_bounds = array<i64: 128, 1024>}, {pipeline_mode = #tpu.pipeline_mode<synchronous>, transform_indices = @transform_10, window_bounds = array<i64: 1, 1024>}, {transform_indices = @transform_11, window_bounds = array<i64: 1, 512, 1024>}]} {
    %c0 = arith.constant 0 : index
    %c0_0 = arith.constant 0 : index
    %c0_1 = arith.constant 0 : index
    %0 = vector.load %arg1[%c0, %c0_0, %c0_1] : memref<1x8x32xf32, #tpu.memory_space<vmem>>, vector<1x8x32xf32>
    %1 = vector.shape_cast %0 : vector<1x8x32xf32> to vector<8x32xf32>
    %c0_2 = arith.constant 0 : index
    %c0_3 = arith.constant 0 : index
    %2 = vector.load %arg3[%c0_2, %c0_3] : memref<1x16xf32, #tpu.memory_space<vmem>>, vector<1x16xf32>
    %c0_4 = arith.constant 0 : index
    %c0_5 = arith.constant 0 : index
    %c0_6 = arith.constant 0 : index
    %3 = vector.load %arg2[%c0_4, %c0_5, %c0_6] : memref<8x32x16xf32, #tpu.memory_space<vmem>>, vector<1x32x16xf32>
    %4 = vector.shape_cast %3 : vector<1x32x16xf32> to vector<32x16xf32>
    %cst = arith.constant dense<0.000000e+00> : vector<8x16xf32>
    %5 = tpu.matmul %1, %4, %cst {dimension_numbers = #tpu.dot_dimension_numbers<[1], [0], [0], [1], [0, 0, 1, 1], [], []>} : vector<8x32xf32>, vector<32x16xf32>, vector<8x16xf32> -> vector<8x16xf32>
    %6 = vector.broadcast %2 : vector<1x16xf32> to vector<8x16xf32>
    %7 = arith.addf %5, %6 : vector<8x16xf32>
    %c0_7 = arith.constant 0 : index
    %c0_8 = arith.constant 0 : index
    %8 = vector.load %arg13[%c0_7, %c0_8] : memref<64x16xf32, #tpu.memory_space<vmem>>, vector<8x16xf32>
    tpu.vector_store %arg13[%c0_7, %c0_8], %7 {strides = array<i32>} : memref<64x16xf32, #tpu.memory_space<vmem>>, vector<8x16xf32>,
    %c1 = arith.constant 1 : index
    %c0_9 = arith.constant 0 : index
    %c0_10 = arith.constant 0 : index
    %9 = vector.load %arg2[%c1, %c0_9, %c0_10] : memref<8x32x16xf32, #tpu.memory_space<vmem>>, vector<1x32x16xf32>
    %10 = vector.shape_cast %9 : vector<1x32x16xf32> to vector<32x16xf32>
    %cst_11 = arith.constant dense<0.000000e+00> : vector<8x16xf32>
    %11 = tpu.matmul %1, %10, %cst_11 {dimension_numbers = #tpu.dot_dimension_numbers<[1], [0], [0], [1], [0, 0, 1, 1], [], []>} : vector<8x32xf32>, vector<32x16xf32>, vector<8x16xf32> -> vector<8x16xf32>
    %12 = vector.broadcast %2 : vector<1x16xf32> to vector<8x16xf32>
    %13 = arith.addf %11, %12 : vector<8x16xf32>
    %c8 = arith.constant 8 : index
    %c0_12 = arith.constant 0 : index
    %14 = vector.load %arg13[%c8, %c0_12] : memref<64x16xf32, #tpu.memory_space<vmem>>, vector<8x16xf32>
    tpu.vector_store %arg13[%c8, %c0_12], %13 {strides = array<i32>} : memref<64x16xf32, #tpu.memory_space<vmem>>, vector<8x16xf32>,
    %c2 = arith.constant 2 : index
    %c0_13 = arith.constant 0 : index
    %c0_14 = arith.constant 0 : index
    %15 = vector.load %arg2[%c2, %c0_13, %c0_14] : memref<8x32x16xf32, #tpu.memory_space<vmem>>, vector<1x32x16xf32>
    %16 = vector.shape_cast %15 : vector<1x32x16xf32> to vector<32x16xf32>
    %cst_15 = arith.constant dense<0.000000e+00> : vector<8x16xf32>
    %17 = tpu.matmul %1, %16, %cst_15 {dimension_numbers = #tpu.dot_dimension_numbers<[1], [0], [0], [1], [0, 0, 1, 1], [], []>} : vector<8x32xf32>, vector<32x16xf32>, vector<8x16xf32> -> vector<8x16xf32>
    %18 = vector.broadcast %2 : vector<1x16xf32> to vector<8x16xf32>
    %19 = arith.addf %17, %18 : vector<8x16xf32>
    %c16 = arith.constant 16 : index
    %c0_16 = arith.constant 0 : index
    %20 = vector.load %arg13[%c16, %c0_16] : memref<64x16xf32, #tpu.memory_space<vmem>>, vector<8x16xf32>
    tpu.vector_store %arg13[%c16, %c0_16], %19 {strides = array<i32>} : memref<64x16xf32, #tpu.memory_space<vmem>>, vector<8x16xf32>,
    %c3 = arith.constant 3 : index
    %c0_17 = arith.constant 0 : index
    %c0_18 = arith.constant 0 : index
    %21 = vector.load %arg2[%c3, %c0_17, %c0_18] : memref<8x32x16xf32, #tpu.memory_space<vmem>>, vector<1x32x16xf32>
    %22 = vector.shape_cast %21 : vector<1x32x16xf32> to vector<32x16xf32>
    %cst_19 = arith.constant dense<0.000000e+00> : vector<8x16xf32>
    %23 = tpu.matmul %1, %22, %cst_19 {dimension_numbers = #tpu.dot_dimension_numbers<[1], [0], [0], [1], [0, 0, 1, 1], [], []>} : vector<8x32xf32>, vector<32x16xf32>, vector<8x16xf32> -> vector<8x16xf32>
    %24 = vector.broadcast %2 : vector<1x16xf32> to vector<8x16xf32>
    %25 = arith.addf %23, %24 : vector<8x16xf32>
    %c24 = arith.constant 24 : index
    %c0_20 = arith.constant 0 : index
    %26 = vector.load %arg13[%c24, %c0_20] : memref<64x16xf32, #tpu.memory_space<vmem>>, vector<8x16xf32>
    tpu.vector_store %arg13[%c24, %c0_20], %25 {strides = array<i32>} : memref<64x16xf32, #tpu.memory_space<vmem>>, vector<8x16xf32>,
    %c4 = arith.constant 4 : index
    %c0_21 = arith.constant 0 : index
    %c0_22 = arith.constant 0 : index
    %27 = vector.load %arg2[%c4, %c0_21, %c0_22] : memref<8x32x16xf32, #tpu.memory_space<vmem>>, vector<1x32x16xf32>
    %28 = vector.shape_cast %27 : vector<1x32x16xf32> to vector<32x16xf32>
    %cst_23 = arith.constant dense<0.000000e+00> : vector<8x16xf32>
    %29 = tpu.matmul %1, %28, %cst_23 {dimension_numbers = #tpu.dot_dimension_numbers<[1], [0], [0], [1], [0, 0, 1, 1], [], []>} : vector<8x32xf32>, vector<32x16xf32>, vector<8x16xf32> -> vector<8x16xf32>
    %30 = vector.broadcast %2 : vector<1x16xf32> to vector<8x16xf32>
    %31 = arith.addf %29, %30 : vector<8x16xf32>
    %c32 = arith.constant 32 : index
    %c0_24 = arith.constant 0 : index
    %32 = vector.load %arg13[%c32, %c0_24] : memref<64x16xf32, #tpu.memory_space<vmem>>, vector<8x16xf32>
    tpu.vector_store %arg13[%c32, %c0_24], %31 {strides = array<i32>} : memref<64x16xf32, #tpu.memory_space<vmem>>, vector<8x16xf32>,
    %c5 = arith.constant 5 : index
    %c0_25 = arith.constant 0 : index
    %c0_26 = arith.constant 0 : index
    %33 = vector.load %arg2[%c5, %c0_25, %c0_26] : memref<8x32x16xf32, #tpu.memory_space<vmem>>, vector<1x32x16xf32>
    %34 = vector.shape_cast %33 : vector<1x32x16xf32> to vector<32x16xf32>
    %cst_27 = arith.constant dense<0.000000e+00> : vector<8x16xf32>
    %35 = tpu.matmul %1, %34, %cst_27 {dimension_numbers = #tpu.dot_dimension_numbers<[1], [0], [0], [1], [0, 0, 1, 1], [], []>} : vector<8x32xf32>, vector<32x16xf32>, vector<8x16xf32> -> vector<8x16xf32>
    %36 = vector.broadcast %2 : vector<1x16xf32> to vector<8x16xf32>
    %37 = arith.addf %35, %36 : vector<8x16xf32>
    %c40 = arith.constant 40 : index
    %c0_28 = arith.constant 0 : index
    %38 = vector.load %arg13[%c40, %c0_28] : memref<64x16xf32, #tpu.memory_space<vmem>>, vector<8x16xf32>
    tpu.vector_store %arg13[%c40, %c0_28], %37 {strides = array<i32>} : memref<64x16xf32, #tpu.memory_space<vmem>>, vector<8x16xf32>,
    %c6 = arith.constant 6 : index
    %c0_29 = arith.constant 0 : index
    %c0_30 = arith.constant 0 : index
    %39 = vector.load %arg2[%c6, %c0_29, %c0_30] : memref<8x32x16xf32, #tpu.memory_space<vmem>>, vector<1x32x16xf32>
    %40 = vector.shape_cast %39 : vector<1x32x16xf32> to vector<32x16xf32>
    %cst_31 = arith.constant dense<0.000000e+00> : vector<8x16xf32>
    %41 = tpu.matmul %1, %40, %cst_31 {dimension_numbers = #tpu.dot_dimension_numbers<[1], [0], [0], [1], [0, 0, 1, 1], [], []>} : vector<8x32xf32>, vector<32x16xf32>, vector<8x16xf32> -> vector<8x16xf32>
    %42 = vector.broadcast %2 : vector<1x16xf32> to vector<8x16xf32>
    %43 = arith.addf %41, %42 : vector<8x16xf32>
    %c48 = arith.constant 48 : index
    %c0_32 = arith.constant 0 : index
    %44 = vector.load %arg13[%c48, %c0_32] : memref<64x16xf32, #tpu.memory_space<vmem>>, vector<8x16xf32>
    tpu.vector_store %arg13[%c48, %c0_32], %43 {strides = array<i32>} : memref<64x16xf32, #tpu.memory_space<vmem>>, vector<8x16xf32>,
    %c7 = arith.constant 7 : index
    %c0_33 = arith.constant 0 : index
    %c0_34 = arith.constant 0 : index
    %45 = vector.load %arg2[%c7, %c0_33, %c0_34] : memref<8x32x16xf32, #tpu.memory_space<vmem>>, vector<1x32x16xf32>
    %46 = vector.shape_cast %45 : vector<1x32x16xf32> to vector<32x16xf32>
    %cst_35 = arith.constant dense<0.000000e+00> : vector<8x16xf32>
    %47 = tpu.matmul %1, %46, %cst_35 {dimension_numbers = #tpu.dot_dimension_numbers<[1], [0], [0], [1], [0, 0, 1, 1], [], []>} : vector<8x32xf32>, vector<32x16xf32>, vector<8x16xf32> -> vector<8x16xf32>
    %48 = vector.broadcast %2 : vector<1x16xf32> to vector<8x16xf32>
    %49 = arith.addf %47, %48 : vector<8x16xf32>
    %c56 = arith.constant 56 : index
    %c0_36 = arith.constant 0 : index
    %50 = vector.load %arg13[%c56, %c0_36] : memref<64x16xf32, #tpu.memory_space<vmem>>, vector<8x16xf32>
    tpu.vector_store %arg13[%c56, %c0_36], %49 {strides = array<i32>} : memref<64x16xf32, #tpu.memory_space<vmem>>, vector<8x16xf32>,
    %c0_37 = arith.constant 0 : index
    %c0_38 = arith.constant 0 : index
    %51 = vector.load %arg13[%c0_37, %c0_38] : memref<64x16xf32, #tpu.memory_space<vmem>>, vector<64x16xf32>
    %c0_39 = arith.constant 0 : index
    %c0_40 = arith.constant 0 : index
    %52 = vector.load %arg5[%c0_39, %c0_40] : memref<1x8xf32, #tpu.memory_space<vmem>>, vector<1x8xf32>
    %c0_41 = arith.constant 0 : index
    %c0_42 = arith.constant 0 : index
    %c0_43 = arith.constant 0 : index
    %53 = vector.load %arg4[%c0_41, %c0_42, %c0_43] : memref<8x16x8xf32, #tpu.memory_space<vmem>>, vector<1x16x8xf32>
    %54 = vector.shape_cast %53 : vector<1x16x8xf32> to vector<16x8xf32>
    %cst_44 = arith.constant dense<0.000000e+00> : vector<64x8xf32>
    %55 = tpu.matmul %51, %54, %cst_44 {dimension_numbers = #tpu.dot_dimension_numbers<[1], [0], [0], [1], [0, 0, 1, 1], [], []>} : vector<64x16xf32>, vector<16x8xf32>, vector<64x8xf32> -> vector<64x8xf32>
    %56 = vector.broadcast %52 : vector<1x8xf32> to vector<64x8xf32>
    %57 = arith.addf %55, %56 : vector<64x8xf32>
    %c0_45 = arith.constant 0 : index
    %c0_46 = arith.constant 0 : index
    %58 = vector.load %arg14[%c0_45, %c0_46] : memref<512x8xf32, #tpu.memory_space<vmem>>, vector<64x8xf32>
    tpu.vector_store %arg14[%c0_45, %c0_46], %57 {strides = array<i32>} : memref<512x8xf32, #tpu.memory_space<vmem>>, vector<64x8xf32>,
    %c1_47 = arith.constant 1 : index
    %c0_48 = arith.constant 0 : index
    %c0_49 = arith.constant 0 : index
    %59 = vector.load %arg4[%c1_47, %c0_48, %c0_49] : memref<8x16x8xf32, #tpu.memory_space<vmem>>, vector<1x16x8xf32>
    %60 = vector.shape_cast %59 : vector<1x16x8xf32> to vector<16x8xf32>
    %cst_50 = arith.constant dense<0.000000e+00> : vector<64x8xf32>
    %61 = tpu.matmul %51, %60, %cst_50 {dimension_numbers = #tpu.dot_dimension_numbers<[1], [0], [0], [1], [0, 0, 1, 1], [], []>} : vector<64x16xf32>, vector<16x8xf32>, vector<64x8xf32> -> vector<64x8xf32>
    %62 = vector.broadcast %52 : vector<1x8xf32> to vector<64x8xf32>
    %63 = arith.addf %61, %62 : vector<64x8xf32>
    %c64 = arith.constant 64 : index
    %c0_51 = arith.constant 0 : index
    %64 = vector.load %arg14[%c64, %c0_51] : memref<512x8xf32, #tpu.memory_space<vmem>>, vector<64x8xf32>
    tpu.vector_store %arg14[%c64, %c0_51], %63 {strides = array<i32>} : memref<512x8xf32, #tpu.memory_space<vmem>>, vector<64x8xf32>,
    %c2_52 = arith.constant 2 : index
    %c0_53 = arith.constant 0 : index
    %c0_54 = arith.constant 0 : index
    %65 = vector.load %arg4[%c2_52, %c0_53, %c0_54] : memref<8x16x8xf32, #tpu.memory_space<vmem>>, vector<1x16x8xf32>
    %66 = vector.shape_cast %65 : vector<1x16x8xf32> to vector<16x8xf32>
    %cst_55 = arith.constant dense<0.000000e+00> : vector<64x8xf32>
    %67 = tpu.matmul %51, %66, %cst_55 {dimension_numbers = #tpu.dot_dimension_numbers<[1], [0], [0], [1], [0, 0, 1, 1], [], []>} : vector<64x16xf32>, vector<16x8xf32>, vector<64x8xf32> -> vector<64x8xf32>
    %68 = vector.broadcast %52 : vector<1x8xf32> to vector<64x8xf32>
    %69 = arith.addf %67, %68 : vector<64x8xf32>
    %c128 = arith.constant 128 : index
    %c0_56 = arith.constant 0 : index
    %70 = vector.load %arg14[%c128, %c0_56] : memref<512x8xf32, #tpu.memory_space<vmem>>, vector<64x8xf32>
    tpu.vector_store %arg14[%c128, %c0_56], %69 {strides = array<i32>} : memref<512x8xf32, #tpu.memory_space<vmem>>, vector<64x8xf32>,
    %c3_57 = arith.constant 3 : index
    %c0_58 = arith.constant 0 : index
    %c0_59 = arith.constant 0 : index
    %71 = vector.load %arg4[%c3_57, %c0_58, %c0_59] : memref<8x16x8xf32, #tpu.memory_space<vmem>>, vector<1x16x8xf32>
    %72 = vector.shape_cast %71 : vector<1x16x8xf32> to vector<16x8xf32>
    %cst_60 = arith.constant dense<0.000000e+00> : vector<64x8xf32>
    %73 = tpu.matmul %51, %72, %cst_60 {dimension_numbers = #tpu.dot_dimension_numbers<[1], [0], [0], [1], [0, 0, 1, 1], [], []>} : vector<64x16xf32>, vector<16x8xf32>, vector<64x8xf32> -> vector<64x8xf32>
    %74 = vector.broadcast %52 : vector<1x8xf32> to vector<64x8xf32>
    %75 = arith.addf %73, %74 : vector<64x8xf32>
    %c192 = arith.constant 192 : index
    %c0_61 = arith.constant 0 : index
    %76 = vector.load %arg14[%c192, %c0_61] : memref<512x8xf32, #tpu.memory_space<vmem>>, vector<64x8xf32>
    tpu.vector_store %arg14[%c192, %c0_61], %75 {strides = array<i32>} : memref<512x8xf32, #tpu.memory_space<vmem>>, vector<64x8xf32>,
    %c4_62 = arith.constant 4 : index
    %c0_63 = arith.constant 0 : index
    %c0_64 = arith.constant 0 : index
    %77 = vector.load %arg4[%c4_62, %c0_63, %c0_64] : memref<8x16x8xf32, #tpu.memory_space<vmem>>, vector<1x16x8xf32>
    %78 = vector.shape_cast %77 : vector<1x16x8xf32> to vector<16x8xf32>
    %cst_65 = arith.constant dense<0.000000e+00> : vector<64x8xf32>
    %79 = tpu.matmul %51, %78, %cst_65 {dimension_numbers = #tpu.dot_dimension_numbers<[1], [0], [0], [1], [0, 0, 1, 1], [], []>} : vector<64x16xf32>, vector<16x8xf32>, vector<64x8xf32> -> vector<64x8xf32>
    %80 = vector.broadcast %52 : vector<1x8xf32> to vector<64x8xf32>
    %81 = arith.addf %79, %80 : vector<64x8xf32>
    %c256 = arith.constant 256 : index
    %c0_66 = arith.constant 0 : index
    %82 = vector.load %arg14[%c256, %c0_66] : memref<512x8xf32, #tpu.memory_space<vmem>>, vector<64x8xf32>
    tpu.vector_store %arg14[%c256, %c0_66], %81 {strides = array<i32>} : memref<512x8xf32, #tpu.memory_space<vmem>>, vector<64x8xf32>,
    %c5_67 = arith.constant 5 : index
    %c0_68 = arith.constant 0 : index
    %c0_69 = arith.constant 0 : index
    %83 = vector.load %arg4[%c5_67, %c0_68, %c0_69] : memref<8x16x8xf32, #tpu.memory_space<vmem>>, vector<1x16x8xf32>
    %84 = vector.shape_cast %83 : vector<1x16x8xf32> to vector<16x8xf32>
    %cst_70 = arith.constant dense<0.000000e+00> : vector<64x8xf32>
    %85 = tpu.matmul %51, %84, %cst_70 {dimension_numbers = #tpu.dot_dimension_numbers<[1], [0], [0], [1], [0, 0, 1, 1], [], []>} : vector<64x16xf32>, vector<16x8xf32>, vector<64x8xf32> -> vector<64x8xf32>
    %86 = vector.broadcast %52 : vector<1x8xf32> to vector<64x8xf32>
    %87 = arith.addf %85, %86 : vector<64x8xf32>
    %c320 = arith.constant 320 : index
    %c0_71 = arith.constant 0 : index
    %88 = vector.load %arg14[%c320, %c0_71] : memref<512x8xf32, #tpu.memory_space<vmem>>, vector<64x8xf32>
    tpu.vector_store %arg14[%c320, %c0_71], %87 {strides = array<i32>} : memref<512x8xf32, #tpu.memory_space<vmem>>, vector<64x8xf32>,
    %c6_72 = arith.constant 6 : index
    %c0_73 = arith.constant 0 : index
    %c0_74 = arith.constant 0 : index
    %89 = vector.load %arg4[%c6_72, %c0_73, %c0_74] : memref<8x16x8xf32, #tpu.memory_space<vmem>>, vector<1x16x8xf32>
    %90 = vector.shape_cast %89 : vector<1x16x8xf32> to vector<16x8xf32>
    %cst_75 = arith.constant dense<0.000000e+00> : vector<64x8xf32>
    %91 = tpu.matmul %51, %90, %cst_75 {dimension_numbers = #tpu.dot_dimension_numbers<[1], [0], [0], [1], [0, 0, 1, 1], [], []>} : vector<64x16xf32>, vector<16x8xf32>, vector<64x8xf32> -> vector<64x8xf32>
    %92 = vector.broadcast %52 : vector<1x8xf32> to vector<64x8xf32>
    %93 = arith.addf %91, %92 : vector<64x8xf32>
    %c384 = arith.constant 384 : index
    %c0_76 = arith.constant 0 : index
    %94 = vector.load %arg14[%c384, %c0_76] : memref<512x8xf32, #tpu.memory_space<vmem>>, vector<64x8xf32>
    tpu.vector_store %arg14[%c384, %c0_76], %93 {strides = array<i32>} : memref<512x8xf32, #tpu.memory_space<vmem>>, vector<64x8xf32>,
    %c7_77 = arith.constant 7 : index
    %c0_78 = arith.constant 0 : index
    %c0_79 = arith.constant 0 : index
    %95 = vector.load %arg4[%c7_77, %c0_78, %c0_79] : memref<8x16x8xf32, #tpu.memory_space<vmem>>, vector<1x16x8xf32>
    %96 = vector.shape_cast %95 : vector<1x16x8xf32> to vector<16x8xf32>
    %cst_80 = arith.constant dense<0.000000e+00> : vector<64x8xf32>
    %97 = tpu.matmul %51, %96, %cst_80 {dimension_numbers = #tpu.dot_dimension_numbers<[1], [0], [0], [1], [0, 0, 1, 1], [], []>} : vector<64x16xf32>, vector<16x8xf32>, vector<64x8xf32> -> vector<64x8xf32>
    %98 = vector.broadcast %52 : vector<1x8xf32> to vector<64x8xf32>
    %99 = arith.addf %97, %98 : vector<64x8xf32>
    %c448 = arith.constant 448 : index
    %c0_81 = arith.constant 0 : index
    %100 = vector.load %arg14[%c448, %c0_81] : memref<512x8xf32, #tpu.memory_space<vmem>>, vector<64x8xf32>
    tpu.vector_store %arg14[%c448, %c0_81], %99 {strides = array<i32>} : memref<512x8xf32, #tpu.memory_space<vmem>>, vector<64x8xf32>,
    %c0_82 = arith.constant 0 : index
    %c0_83 = arith.constant 0 : index
    %101 = vector.load %arg14[%c0_82, %c0_83] : memref<512x8xf32, #tpu.memory_space<vmem>>, vector<512x8xf32>
    %c0_84 = arith.constant 0 : index
    %c0_85 = arith.constant 0 : index
    %102 = vector.load %arg6[%c0_84, %c0_85] : memref<8x32xf32, #tpu.memory_space<vmem>>, vector<8x32xf32>
    %cst_86 = arith.constant dense<0.000000e+00> : vector<512x32xf32>
    %103 = tpu.matmul %101, %102, %cst_86 {dimension_numbers = #tpu.dot_dimension_numbers<[1], [0], [0], [1], [0, 0, 1, 1], [], []>} : vector<512x8xf32>, vector<8x32xf32>, vector<512x32xf32> -> vector<512x32xf32>
    %c0_87 = arith.constant 0 : index
    %c0_88 = arith.constant 0 : index
    %104 = vector.load %arg7[%c0_87, %c0_88] : memref<1x32xf32, #tpu.memory_space<vmem>>, vector<1x32xf32>
    %105 = vector.broadcast %104 : vector<1x32xf32> to vector<512x32xf32>
    %106 = arith.addf %103, %105 : vector<512x32xf32>
    %c0_89 = arith.constant 0 : index
    %c0_90 = arith.constant 0 : index
    %107 = vector.load %arg8[%c0_89, %c0_90] : memref<32x128xf32, #tpu.memory_space<vmem>>, vector<32x128xf32>
    %cst_91 = arith.constant dense<0.000000e+00> : vector<512x128xf32>
    %108 = tpu.matmul %106, %107, %cst_91 {dimension_numbers = #tpu.dot_dimension_numbers<[1], [0], [0], [1], [0, 0, 1, 1], [], []>} : vector<512x32xf32>, vector<32x128xf32>, vector<512x128xf32> -> vector<512x128xf32>
    %c0_92 = arith.constant 0 : index
    %c0_93 = arith.constant 0 : index
    %109 = vector.load %arg9[%c0_92, %c0_93] : memref<1x128xf32, #tpu.memory_space<vmem>>, vector<1x128xf32>
    %110 = vector.broadcast %109 : vector<1x128xf32> to vector<512x128xf32>
    %111 = arith.addf %108, %110 : vector<512x128xf32>
    %c0_94 = arith.constant 0 : index
    %c0_95 = arith.constant 0 : index
    %112 = vector.load %arg10[%c0_94, %c0_95] : memref<128x1024xf32, #tpu.memory_space<vmem>>, vector<128x1024xf32>
    %cst_96 = arith.constant dense<0.000000e+00> : vector<512x1024xf32>
    %113 = tpu.matmul %111, %112, %cst_96 {dimension_numbers = #tpu.dot_dimension_numbers<[1], [0], [0], [1], [0, 0, 1, 1], [], []>} : vector<512x128xf32>, vector<128x1024xf32>, vector<512x1024xf32> -> vector<512x1024xf32>
    %c0_97 = arith.constant 0 : index
    %c0_98 = arith.constant 0 : index
    %114 = vector.load %arg11[%c0_97, %c0_98] : memref<1x1024xf32, #tpu.memory_space<vmem>>, vector<1x1024xf32>
    %115 = vector.broadcast %114 : vector<1x1024xf32> to vector<512x1024xf32>
    %116 = arith.addf %113, %115 : vector<512x1024xf32>
    %c0_99 = arith.constant 0 : index
    %c0_100 = arith.constant 0 : index
    %c0_101 = arith.constant 0 : index
    %117 = vector.load %arg12[%c0_99, %c0_100, %c0_101] : memref<1x512x1024xf32, #tpu.memory_space<vmem>>, vector<1x512x1024xf32>
    %118 = vector.shape_cast %117 : vector<1x512x1024xf32> to vector<512x1024xf32>
    %119 = vector.shape_cast %116 : vector<512x1024xf32> to vector<1x512x1024xf32>
    tpu.vector_store %arg12[%c0_99, %c0_100, %c0_101], %119 {strides = array<i32>} : memref<1x512x1024xf32, #tpu.memory_space<vmem>>, vector<1x512x1024xf32>,
    return
  }
  func.func @transform_0(%arg0: i32) -> (i32, i32, i32) {
    %c0_i32 = arith.constant 0 : i32
    %c0_i32_0 = arith.constant 0 : i32
    %c0_i32_1 = arith.constant 0 : i32
    return %arg0, %c0_i32, %c0_i32_0 : i32, i32, i32
  }
  func.func @transform_1(%arg0: i32) -> (i32, i32, i32) {
    %c0_i32 = arith.constant 0 : i32
    %c0_i32_0 = arith.constant 0 : i32
    %c0_i32_1 = arith.constant 0 : i32
    %c0_i32_2 = arith.constant 0 : i32
    return %c0_i32, %c0_i32_0, %c0_i32_1 : i32, i32, i32
  }
  func.func @transform_2(%arg0: i32) -> (i32, i32) {
    %c0_i32 = arith.constant 0 : i32
    %c0_i32_0 = arith.constant 0 : i32
    %c0_i32_1 = arith.constant 0 : i32
    return %c0_i32, %c0_i32_0 : i32, i32
  }
  func.func @transform_3(%arg0: i32) -> (i32, i32, i32) {
    %c0_i32 = arith.constant 0 : i32
    %c0_i32_0 = arith.constant 0 : i32
    %c0_i32_1 = arith.constant 0 : i32
    %c0_i32_2 = arith.constant 0 : i32
    return %c0_i32, %c0_i32_0, %c0_i32_1 : i32, i32, i32
  }
  func.func @transform_4(%arg0: i32) -> (i32, i32) {
    %c0_i32 = arith.constant 0 : i32
    %c0_i32_0 = arith.constant 0 : i32
    %c0_i32_1 = arith.constant 0 : i32
    return %c0_i32, %c0_i32_0 : i32, i32
  }
  func.func @transform_5(%arg0: i32) -> (i32, i32) {
    %c0_i32 = arith.constant 0 : i32
    %c0_i32_0 = arith.constant 0 : i32
    %c0_i32_1 = arith.constant 0 : i32
    return %c0_i32, %c0_i32_0 : i32, i32
  }
  func.func @transform_6(%arg0: i32) -> (i32, i32) {
    %c0_i32 = arith.constant 0 : i32
    %c0_i32_0 = arith.constant 0 : i32
    %c0_i32_1 = arith.constant 0 : i32
    return %c0_i32, %c0_i32_0 : i32, i32
  }
  func.func @transform_7(%arg0: i32) -> (i32, i32) {
    %c0_i32 = arith.constant 0 : i32
    %c0_i32_0 = arith.constant 0 : i32
    %c0_i32_1 = arith.constant 0 : i32
    return %c0_i32, %c0_i32_0 : i32, i32
  }
  func.func @transform_8(%arg0: i32) -> (i32, i32) {
    %c0_i32 = arith.constant 0 : i32
    %c0_i32_0 = arith.constant 0 : i32
    %c0_i32_1 = arith.constant 0 : i32
    return %c0_i32, %c0_i32_0 : i32, i32
  }
  func.func @transform_9(%arg0: i32) -> (i32, i32) {
    %c0_i32 = arith.constant 0 : i32
    %c0_i32_0 = arith.constant 0 : i32
    %c0_i32_1 = arith.constant 0 : i32
    return %c0_i32, %c0_i32_0 : i32, i32
  }
  func.func @transform_10(%arg0: i32) -> (i32, i32) {
    %c0_i32 = arith.constant 0 : i32
    %c0_i32_0 = arith.constant 0 : i32
    %c0_i32_1 = arith.constant 0 : i32
    return %c0_i32, %c0_i32_0 : i32, i32
  }
  func.func @transform_11(%arg0: i32) -> (i32, i32, i32) {
    %c0_i32 = arith.constant 0 : i32
    %c0_i32_0 = arith.constant 0 : i32
    %c0_i32_1 = arith.constant 0 : i32
    return %arg0, %c0_i32, %c0_i32_0 : i32, i32, i32
  }
}

</mosaic_0001>

<llo_original>
// kernel: tpu_custom_call.1
$region0: #{tpu_custom_call.1}
  #allocation0 [shape = 'u32[]', space=smem, size = 0x4, offset = 0x4, fixed_abs, tag = 'smem constant byte address 0x4 - core index']
  #allocation1 [shape = 'u32[144,128]{1,0:T(1,128)}', space=vmem, size = 0x12000, scoped, tag = 'internal scratch']
  #allocation2 [shape = 'f32[64,16]{1,0:T(8,128)}', space=vmem, size = 0x8000, scoped, tag = 'scratch operand']
  #allocation3 [shape = 'f32[512,8]{1,0:T(8,128)}', space=vmem, size = 0x40000, scoped, tag = 'scratch operand']
  %s0 = inlined_call_operand.hbm [shape: f32[2,8,32], index: 0, kind: input, shape index: {}]
  %s1 = inlined_call_operand.vmem [shape: f32[8,32,16], index: 1, kind: input, shape index: {}]
  %s2 = inlined_call_operand.hbm [shape: f32[1,16], index: 2, kind: input, shape index: {}]
  %s3 = inlined_call_operand.vmem [shape: f32[8,16,8], index: 3, kind: input, shape index: {}]
  %s4 = inlined_call_operand.hbm [shape: f32[1,8], index: 4, kind: input, shape index: {}]
  %s5 = inlined_call_operand.hbm [shape: f32[8,32], index: 5, kind: input, shape index: {}]
  %s6 = inlined_call_operand.hbm [shape: f32[1,32], index: 6, kind: input, shape index: {}]
  %s7 = inlined_call_operand.hbm [shape: f32[32,128], index: 7, kind: input, shape index: {}]
  %s8 = inlined_call_operand.hbm [shape: f32[1,128], index: 8, kind: input, shape index: {}]
  %s9 = inlined_call_operand.hbm [shape: f32[128,1024], index: 9, kind: input, shape index: {}]
  %s10 = inlined_call_operand.hbm [shape: f32[1,1024], index: 10, kind: input, shape index: {}]
  %s11 = inlined_call_operand.hbm [shape: f32[2,512,1024], index: 11, kind: output, shape index: {}]
  %s12 = sld [smem:[#allocation0]]
  $region113: #{tpu_custom_call.1} parent=0
    _
  %s14 = ssub.s32 1, %s12
  %s15 = scalar_select 0, %s14, %s12
  $region1: #{tpu_custom_call.1} parent=0
    #allocation4 [shape = 'u8[8192]{0}', space=vmem, size = 0x2000, scoped, tag = 'input window, operand 0']
    #allocation5 [shape = 's32[2]{0}', space=sflag, size = 0x8, scoped, tag = 'scoped memory for tpu_custom_call.1']
    #allocation6 [shape = 's32[2]{0}', space=sflag, size = 0x8, scoped, tag = 'scoped memory for tpu_custom_call.1']
    #allocation7 [shape = 'u8[512]{0}', space=vmem, size = 0x400, scoped, tag = 'input window, operand 2, single buffered']
    #allocation8 [shape = 's32[1]{0}', space=sflag, size = 0x4, scoped, tag = 'scoped memory for tpu_custom_call.1']
    #allocation9 [shape = 'u8[512]{0}', space=vmem, size = 0x400, scoped, tag = 'input window, operand 4, single buffered']
    #allocation10 [shape = 'u8[4096]{0}', space=vmem, size = 0x1000, scoped, tag = 'input window, operand 5, single buffered']
    #allocation11 [shape = 's32[1]{0}', space=sflag, size = 0x4, scoped, tag = 'scoped memory for tpu_custom_call.1']
    #allocation12 [shape = 'u8[512]{0}', space=vmem, size = 0x400, scoped, tag = 'input window, operand 6, single buffered']
    #allocation13 [shape = 'u8[16384]{0}', space=vmem, size = 0x4000, scoped, tag = 'input window, operand 7, single buffered']
    #allocation14 [shape = 's32[1]{0}', space=sflag, size = 0x4, scoped, tag = 'scoped memory for tpu_custom_call.1']
    #allocation15 [shape = 'u8[512]{0}', space=vmem, size = 0x400, scoped, tag = 'input window, operand 8, single buffered']
    #allocation16 [shape = 'u8[524288]{0}', space=vmem, size = 0x80000, scoped, tag = 'input window, operand 9, single buffered']
    #allocation17 [shape = 's32[1]{0}', space=sflag, size = 0x4, scoped, tag = 'scoped memory for tpu_custom_call.1']
    #allocation18 [shape = 'u8[4096]{0}', space=vmem, size = 0x1000, scoped, tag = 'input window, operand 10, single buffered']
    #allocation19 [shape = 'u8[4194304]{0}', space=vmem, size = 0x400000, scoped, tag = 'output window, operand 0']
    %16 = vsyncpa [#allocation5], 0
    %s17 = scalar_lea.sflag [#allocation5], 1
    %18 = vsyncpa %s17, 0
    %19 = vsyncpa [#allocation8], 0
    %20 = vsyncpa [#allocation11], 0
    %21 = vsyncpa [#allocation14], 0
    %22 = vsyncpa [#allocation17], 0
    %23 = vsyncpa [#allocation6], 0
    %s24 = scalar_lea.sflag [#allocation6], 1
    %25 = vsyncpa %s24, 0
    loop: start=0, step=1, limit=4
    $region2: #{tpu_custom_call.1} parent=1 // loop_pre_header
      _
    $region3: #{tpu_custom_call.1} parent=1 // loop_header
      %s27 = sphi 0, %s31
      %p28 = scmp.ge.s32.totalorder %s27, 4
      %s37 = sphi 0, %s39
      %s40 = sphi 0, %s37
      %s41 = sphi 0, %s40
      %s57 = sphi 0, %s41
      %s61 = sphi 0, %s61
      %s63 = sphi 0, %s61
      %s64 = sphi 0, %s63
      %s78 = sphi 0, %s64
      %s82 = sphi 0, %s82
      %s84 = sphi 0, %s82
      %s85 = sphi 0, %s84
      %s99 = sphi 0, %s85
      %s103 = sphi 0, %s103
      %s105 = sphi 0, %s103
      %s106 = sphi 0, %s105
      %s120 = sphi 0, %s106
      %s124 = sphi 0, %s124
      %s126 = sphi 0, %s124
      %s127 = sphi 0, %s126
      %s141 = sphi 0, %s127
      %s145 = sphi 0, %s145
      %s147 = sphi 0, %s145
      %s148 = sphi 0, %s147
      %s162 = sphi 0, %s148
      %s166 = sphi 0, %s166
      %s168 = sphi 0, %s166
      %s169 = sphi 0, %s168
      %s183 = sphi 0, %s169
      %s187 = sphi 0, %s187
      %s189 = sphi 0, %s187
      %s190 = sphi 0, %s189
      %s204 = sphi 0, %s190
      %s208 = sphi 0, %s208
      %s210 = sphi 0, %s208
      %s211 = sphi 0, %s210
      %s225 = sphi 0, %s211
      %s229 = sphi 0, %s229
      %s231 = sphi 0, %s229
      %s232 = sphi 0, %s231
      %s246 = sphi 0, %s232
      %s250 = sphi 0, %s250
      %s252 = sphi 0, %s250
      %s253 = sphi 0, %s252
      %s267 = sphi 0, %s253
      %s273 = sphi 0, %s275
      %s276 = sphi 0, %s273
      %s277 = sphi 0, %s276
      %s293 = sphi 0, %s277
    $region4: #{tpu_custom_call.1} parent=1 // loop_header_branch
      %30 = sbr.rel (%p28) target = $region8
    $region5: #{tpu_custom_call.1} parent=1 // loop_body
      %s32 = ssub.s32 %s27, 1
      %s33 = ssub.s32 %s27, 2
      %s34 = sadd.s32 %s27, 1
      %s35 = ssub.s32 %s27, %s34
      %p36 = scmp.eq.s32.totalorder %s35, 0
      %s38 = sadd.s32 %s37, 1
      %s39 = scalar_select %p36, %s37, %s38
      %p42 = pneg %p36
      %p43 = scmp.eq.s32.totalorder %s27, 1
      %p44 = por %p42, %p43
      %p45 = scmp.ne.s32.totalorder %s37, %s40
      %p46 = scmp.eq.s32.totalorder %s27, 0
      %p47 = por %p45, %p46
      %p48 = scmp.ne.s32.totalorder %s37, %s40
      %p49 = scmp.eq.s32.totalorder %s32, 1
      %p50 = por %p48, %p49
      %p51 = scmp.ne.s32.totalorder %s40, %s41
      %p52 = scmp.eq.s32.totalorder %s32, 0
      %p53 = por %p51, %p52
      %p54 = scmp.ne.s32.totalorder %s40, %s41
      %p55 = scmp.eq.s32.totalorder %s33, 1
      %p56 = por %p54, %p55
      %p58 = scmp.ne.s32.totalorder %s41, %s57
      %p59 = scmp.eq.s32.totalorder %s33, 0
      %p60 = por %p58, %p59
      %s62 = sadd.s32 %s61, 1
      %p65 = scmp.eq.s32.totalorder %s27, 1
      %p66 = scmp.ne.s32.totalorder %s61, %s63
      %p67 = scmp.eq.s32.totalorder %s27, 0
      %p68 = por %p66, %p67
      %p69 = scmp.ne.s32.totalorder %s61, %s63
      %p70 = scmp.eq.s32.totalorder %s32, 1
      %p71 = por %p69, %p70
      %p72 = scmp.ne.s32.totalorder %s63, %s64
      %p73 = scmp.eq.s32.totalorder %s32, 0
      %p74 = por %p72, %p73
      %p75 = scmp.ne.s32.totalorder %s63, %s64
      %p76 = scmp.eq.s32.totalorder %s33, 1
      %p77 = por %p75, %p76
      %p79 = scmp.ne.s32.totalorder %s64, %s78
      %p80 = scmp.eq.s32.totalorder %s33, 0
      %p81 = por %p79, %p80
      %s83 = sadd.s32 %s82, 1
      %p86 = scmp.eq.s32.totalorder %s27, 1
      %p87 = scmp.ne.s32.totalorder %s82, %s84
      %p88 = scmp.eq.s32.totalorder %s27, 0
      %p89 = por %p87, %p88
      %p90 = scmp.ne.s32.totalorder %s82, %s84
      %p91 = scmp.eq.s32.totalorder %s32, 1
      %p92 = por %p90, %p91
      %p93 = scmp.ne.s32.totalorder %s84, %s85
      %p94 = scmp.eq.s32.totalorder %s32, 0
      %p95 = por %p93, %p94
      %p96 = scmp.ne.s32.totalorder %s84, %s85
      %p97 = scmp.eq.s32.totalorder %s33, 1
      %p98 = por %p96, %p97
      %p100 = scmp.ne.s32.totalorder %s85, %s99
      %p101 = scmp.eq.s32.totalorder %s33, 0
      %p102 = por %p100, %p101
      %s104 = sadd.s32 %s103, 1
      %p107 = scmp.eq.s32.totalorder %s27, 1
      %p108 = scmp.ne.s32.totalorder %s103, %s105
      %p109 = scmp.eq.s32.totalorder %s27, 0
      %p110 = por %p108, %p109
      %p111 = scmp.ne.s32.totalorder %s103, %s105
      %p112 = scmp.eq.s32.totalorder %s32, 1
      %p113 = por %p111, %p112
      %p114 = scmp.ne.s32.totalorder %s105, %s106
      %p115 = scmp.eq.s32.totalorder %s32, 0
      %p116 = por %p114, %p115
      %p117 = scmp.ne.s32.totalorder %s105, %s106
      %p118 = scmp.eq.s32.totalorder %s33, 1
      %p119 = por %p117, %p118
      %p121 = scmp.ne.s32.totalorder %s106, %s120
      %p122 = scmp.eq.s32.totalorder %s33, 0
      %p123 = por %p121, %p122
      %s125 = sadd.s32 %s124, 1
      %p128 = scmp.eq.s32.totalorder %s27, 1
      %p129 = scmp.ne.s32.totalorder %s124, %s126
      %p130 = scmp.eq.s32.totalorder %s27, 0
      %p131 = por %p129, %p130
      %p132 = scmp.ne.s32.totalorder %s124, %s126
      %p133 = scmp.eq.s32.totalorder %s32, 1
      %p134 = por %p132, %p133
      %p135 = scmp.ne.s32.totalorder %s126, %s127
      %p136 = scmp.eq.s32.totalorder %s32, 0
      %p137 = por %p135, %p136
      %p138 = scmp.ne.s32.totalorder %s126, %s127
      %p139 = scmp.eq.s32.totalorder %s33, 1
      %p140 = por %p138, %p139
      %p142 = scmp.ne.s32.totalorder %s127, %s141
      %p143 = scmp.eq.s32.totalorder %s33, 0
      %p144 = por %p142, %p143
      %s146 = sadd.s32 %s145, 1
      %p149 = scmp.eq.s32.totalorder %s27, 1
      %p150 = scmp.ne.s32.totalorder %s145, %s147
      %p151 = scmp.eq.s32.totalorder %s27, 0
      %p152 = por %p150, %p151
      %p153 = scmp.ne.s32.totalorder %s145, %s147
      %p154 = scmp.eq.s32.totalorder %s32, 1
      %p155 = por %p153, %p154
      %p156 = scmp.ne.s32.totalorder %s147, %s148
      %p157 = scmp.eq.s32.totalorder %s32, 0
      %p158 = por %p156, %p157
      %p159 = scmp.ne.s32.totalorder %s147, %s148
      %p160 = scmp.eq.s32.totalorder %s33, 1
      %p161 = por %p159, %p160
      %p163 = scmp.ne.s32.totalorder %s148, %s162
      %p164 = scmp.eq.s32.totalorder %s33, 0
      %p165 = por %p163, %p164
      %s167 = sadd.s32 %s166, 1
      %p170 = scmp.eq.s32.totalorder %s27, 1
      %p171 = scmp.ne.s32.totalorder %s166, %s168
      %p172 = scmp.eq.s32.totalorder %s27, 0
      %p173 = por %p171, %p172
      %p174 = scmp.ne.s32.totalorder %s166, %s168
      %p175 = scmp.eq.s32.totalorder %s32, 1
      %p176 = por %p174, %p175
      %p177 = scmp.ne.s32.totalorder %s168, %s169
      %p178 = scmp.eq.s32.totalorder %s32, 0
      %p179 = por %p177, %p178
      %p180 = scmp.ne.s32.totalorder %s168, %s169
      %p181 = scmp.eq.s32.totalorder %s33, 1
      %p182 = por %p180, %p181
      %p184 = scmp.ne.s32.totalorder %s169, %s183
      %p185 = scmp.eq.s32.totalorder %s33, 0
      %p186 = por %p184, %p185
      %s188 = sadd.s32 %s187, 1
      %p191 = scmp.eq.s32.totalorder %s27, 1
      %p192 = scmp.ne.s32.totalorder %s187, %s189
      %p193 = scmp.eq.s32.totalorder %s27, 0
      %p194 = por %p192, %p193
      %p195 = scmp.ne.s32.totalorder %s187, %s189
      %p196 = scmp.eq.s32.totalorder %s32, 1
      %p197 = por %p195, %p196
      %p198 = scmp.ne.s32.totalorder %s189, %s190
      %p199 = scmp.eq.s32.totalorder %s32, 0
      %p200 = por %p198, %p199
      %p201 = scmp.ne.s32.totalorder %s189, %s190
      %p202 = scmp.eq.s32.totalorder %s33, 1
      %p203 = por %p201, %p202
      %p205 = scmp.ne.s32.totalorder %s190, %s204
      %p206 = scmp.eq.s32.totalorder %s33, 0
      %p207 = por %p205, %p206
      %s209 = sadd.s32 %s208, 1
      %p212 = scmp.eq.s32.totalorder %s27, 1
      %p213 = scmp.ne.s32.totalorder %s208, %s210
      %p214 = scmp.eq.s32.totalorder %s27, 0
      %p215 = por %p213, %p214
      %p216 = scmp.ne.s32.totalorder %s208, %s210
      %p217 = scmp.eq.s32.totalorder %s32, 1
      %p218 = por %p216, %p217
      %p219 = scmp.ne.s32.totalorder %s210, %s211
      %p220 = scmp.eq.s32.totalorder %s32, 0
      %p221 = por %p219, %p220
      %p222 = scmp.ne.s32.totalorder %s210, %s211
      %p223 = scmp.eq.s32.totalorder %s33, 1
      %p224 = por %p222, %p223
      %p226 = scmp.ne.s32.totalorder %s211, %s225
      %p227 = scmp.eq.s32.totalorder %s33, 0
      %p228 = por %p226, %p227
      %s230 = sadd.s32 %s229, 1
      %p233 = scmp.eq.s32.totalorder %s27, 1
      %p234 = scmp.ne.s32.totalorder %s229, %s231
      %p235 = scmp.eq.s32.totalorder %s27, 0
      %p236 = por %p234, %p235
      %p237 = scmp.ne.s32.totalorder %s229, %s231
      %p238 = scmp.eq.s32.totalorder %s32, 1
      %p239 = por %p237, %p238
      %p240 = scmp.ne.s32.totalorder %s231, %s232
      %p241 = scmp.eq.s32.totalorder %s32, 0
      %p242 = por %p240, %p241
      %p243 = scmp.ne.s32.totalorder %s231, %s232
      %p244 = scmp.eq.s32.totalorder %s33, 1
      %p245 = por %p243, %p244
      %p247 = scmp.ne.s32.totalorder %s232, %s246
      %p248 = scmp.eq.s32.totalorder %s33, 0
      %p249 = por %p247, %p248
      %s251 = sadd.s32 %s250, 1
      %p254 = scmp.eq.s32.totalorder %s27, 1
      %p255 = scmp.ne.s32.totalorder %s250, %s252
      %p256 = scmp.eq.s32.totalorder %s27, 0
      %p257 = por %p255, %p256
      %p258 = scmp.ne.s32.totalorder %s250, %s252
      %p259 = scmp.eq.s32.totalorder %s32, 1
      %p260 = por %p258, %p259
      %p261 = scmp.ne.s32.totalorder %s252, %s253
      %p262 = scmp.eq.s32.totalorder %s32, 0
      %p263 = por %p261, %p262
      %p264 = scmp.ne.s32.totalorder %s252, %s253
      %p265 = scmp.eq.s32.totalorder %s33, 1
      %p266 = por %p264, %p265
      %p268 = scmp.ne.s32.totalorder %s253, %s267
      %p269 = scmp.eq.s32.totalorder %s33, 0
      %p270 = por %p268, %p269
      %s271 = ssub.s32 %s27, %s34
      %p272 = scmp.eq.s32.totalorder %s271, 0
      %s274 = sadd.s32 %s273, 1
      %s275 = scalar_select %p272, %s273, %s274
      %p278 = pneg %p272
      %p279 = scmp.eq.s32.totalorder %s27, 1
      %p280 = por %p278, %p279
      %p281 = scmp.ne.s32.totalorder %s273, %s276
      %p282 = scmp.eq.s32.totalorder %s27, 0
      %p283 = por %p281, %p282
      %p284 = scmp.ne.s32.totalorder %s273, %s276
      %p285 = scmp.eq.s32.totalorder %s32, 1
      %p286 = por %p284, %p285
      %p287 = scmp.ne.s32.totalorder %s276, %s277
      %p288 = scmp.eq.s32.totalorder %s32, 0
      %p289 = por %p287, %p288
      %p290 = scmp.ne.s32.totalorder %s276, %s277
      %p291 = scmp.eq.s32.totalorder %s33, 1
      %p292 = por %p290, %p291
      %p294 = scmp.ne.s32.totalorder %s277, %s293
      %p295 = scmp.eq.s32.totalorder %s33, 0
      %p296 = por %p294, %p295
      %p297 = scmp.le.s32.totalorder 1, %s27
      %p298 = scmp.lt.s32.totalorder %s27, 3
      %p299 = pnand %p297, %p298
      %p300 = pneg %p299
      // Predicated region
      $region9: #{tpu_custom_call.1} parent=5 // pred_check
        _
      $region10: #{tpu_custom_call.1} parent=5 // pred_check_branch
        %302 = sbr.rel (%p299) target = $region12
      $region11: #{tpu_custom_call.1} parent=5 // pred_region
        %s303 = ssub.s32 %s27, 1
        // Predicated region
        $region13: #{tpu_custom_call.1} parent=11 // pred_check
          %p304 = pneg %p74
        $region14: #{tpu_custom_call.1} parent=11 // pred_check_branch
          %306 = sbr.rel (%p304) target = $region16
        $region15: #{tpu_custom_call.1} parent=11 // pred_region
          _
        $region16: #{tpu_custom_call.1} parent=11 // pred_fallthru
          _
        // Predicated region
        $region17: #{tpu_custom_call.1} parent=11 // pred_check
          %p307 = pneg %p95
        $region18: #{tpu_custom_call.1} parent=11 // pred_check_branch
          %309 = sbr.rel (%p307) target = $region20
        $region19: #{tpu_custom_call.1} parent=11 // pred_region
          %s311 = ssub.s32 16, 16
          %312 = vsyncadd [#allocation8], %s311
          %s314 = sshll.u32 [#allocation7], 4
          %s315 = int_to_ptr.vmem [resolvable:$true] %s314
          %317 = dma.hbm_to_vmem [thread:$0]  %s2, 16, %s315, [#allocation8]
        $region20: #{tpu_custom_call.1} parent=11 // pred_fallthru
          _
        // Predicated region
        $region21: #{tpu_custom_call.1} parent=11 // pred_check
          %p318 = pneg %p116
        $region22: #{tpu_custom_call.1} parent=11 // pred_check_branch
          %320 = sbr.rel (%p318) target = $region24
        $region23: #{tpu_custom_call.1} parent=11 // pred_region
          _
        $region24: #{tpu_custom_call.1} parent=11 // pred_fallthru
          _
        // Predicated region
        $region25: #{tpu_custom_call.1} parent=11 // pred_check
          %p321 = pneg %p137
        $region26: #{tpu_custom_call.1} parent=11 // pred_check_branch
          %323 = sbr.rel (%p321) target = $region28
        $region27: #{tpu_custom_call.1} parent=11 // pred_region
          %s325 = ssub.s32 16, 16
          %326 = vsyncadd [#allocation8], %s325
          %s328 = sshll.u32 [#allocation9], 4
          %s329 = int_to_ptr.vmem [resolvable:$true] %s328
          %331 = dma.hbm_to_vmem [thread:$0]  %s4, 16, %s329, [#allocation8]
        $region28: #{tpu_custom_call.1} parent=11 // pred_fallthru
          _
        // Predicated region
        $region29: #{tpu_custom_call.1} parent=11 // pred_check
          %p332 = pneg %p158
        $region30: #{tpu_custom_call.1} parent=11 // pred_check_branch
          %334 = sbr.rel (%p332) target = $region32
        $region31: #{tpu_custom_call.1} parent=11 // pred_region
          %s336 = ssub.s32 128, 128
          %337 = vsyncadd [#allocation11], %s336
          %s339 = sshll.u32 [#allocation10], 4
          %s340 = int_to_ptr.vmem [resolvable:$true] %s339
          %342 = dma.hbm_to_vmem [thread:$0]  %s5, 128, %s340, [#allocation11]
        $region32: #{tpu_custom_call.1} parent=11 // pred_fallthru
          _
        // Predicated region
        $region33: #{tpu_custom_call.1} parent=11 // pred_check
          %p343 = pneg %p179
        $region34: #{tpu_custom_call.1} parent=11 // pred_check_branch
          %345 = sbr.rel (%p343) target = $region36
        $region35: #{tpu_custom_call.1} parent=11 // pred_region
          %s347 = ssub.s32 16, 16
          %348 = vsyncadd [#allocation11], %s347
          %s350 = sshll.u32 [#allocation12], 4
          %s351 = int_to_ptr.vmem [resolvable:$true] %s350
          %353 = dma.hbm_to_vmem [thread:$0]  %s6, 16, %s351, [#allocation11]
        $region36: #{tpu_custom_call.1} parent=11 // pred_fallthru
          _
        // Predicated region
        $region37: #{tpu_custom_call.1} parent=11 // pred_check
          %p354 = pneg %p200
        $region38: #{tpu_custom_call.1} parent=11 // pred_check_branch
          %356 = sbr.rel (%p354) target = $region40
        $region39: #{tpu_custom_call.1} parent=11 // pred_region
          %s358 = ssub.s32 512, 512
          %359 = vsyncadd [#allocation14], %s358
          %s360 = sshll.u32 [#allocation13], 4
          %s361 = int_to_ptr.vmem [resolvable:$true] %s360
          %366 = dma.hbm_to_vmem [thread:$0]  %s7, 512, %s361, [#allocation14], 128, 128, 8
        $region40: #{tpu_custom_call.1} parent=11 // pred_fallthru
          _
        // Predicated region
        $region41: #{tpu_custom_call.1} parent=11 // pred_check
          %p367 = pneg %p221
        $region42: #{tpu_custom_call.1} parent=11 // pred_check_branch
          %369 = sbr.rel (%p367) target = $region44
        $region43: #{tpu_custom_call.1} parent=11 // pred_region
          %s371 = ssub.s32 16, 16
          %372 = vsyncadd [#allocation14], %s371
          %s374 = sshll.u32 [#allocation15], 4
          %s375 = int_to_ptr.vmem [resolvable:$true] %s374
          %377 = dma.hbm_to_vmem [thread:$0]  %s8, 16, %s375, [#allocation14]
        $region44: #{tpu_custom_call.1} parent=11 // pred_fallthru
          _
        // Predicated region
        $region45: #{tpu_custom_call.1} parent=11 // pred_check
          %p378 = pneg %p242
        $region46: #{tpu_custom_call.1} parent=11 // pred_check_branch
          %380 = sbr.rel (%p378) target = $region48
        $region47: #{tpu_custom_call.1} parent=11 // pred_region
          %s382 = ssub.s32 16384, 16384
          %383 = vsyncadd [#allocation17], %s382
          %s384 = sshll.u32 [#allocation16], 4
          %s385 = int_to_ptr.vmem [resolvable:$true] %s384
          %390 = dma.hbm_to_vmem [thread:$0]  %s9, 16384, %s385, [#allocation17], 1024, 1024, 64
        $region48: #{tpu_custom_call.1} parent=11 // pred_fallthru
          _
        // Predicated region
        $region49: #{tpu_custom_call.1} parent=11 // pred_check
          %p391 = pneg %p263
        $region50: #{tpu_custom_call.1} parent=11 // pred_check_branch
          %393 = sbr.rel (%p391) target = $region52
        $region51: #{tpu_custom_call.1} parent=11 // pred_region
          %s395 = ssub.s32 128, 128
          %396 = vsyncadd [#allocation17], %s395
          %s398 = sshll.u32 [#allocation18], 4
          %s399 = int_to_ptr.vmem [resolvable:$true] %s398
          %401 = dma.hbm_to_vmem [thread:$0]  %s10, 128, %s399, [#allocation17]
        $region52: #{tpu_custom_call.1} parent=11 // pred_fallthru
          _
      $region12: #{tpu_custom_call.1} parent=5 // pred_fallthru
        _
      %p402 = scmp.lt.s32.totalorder %s27, 2
      // Predicated region
      $region53: #{tpu_custom_call.1} parent=5 // pred_check
        %p403 = pneg %p402
      $region54: #{tpu_custom_call.1} parent=5 // pred_check_branch
        %405 = sbr.rel (%p403) target = $region56
      $region55: #{tpu_custom_call.1} parent=5 // pred_region
        // Predicated region
        $region57: #{tpu_custom_call.1} parent=55 // pred_check
          %p406 = pneg %p47
        $region58: #{tpu_custom_call.1} parent=55 // pred_check_branch
          %408 = sbr.rel (%p406) target = $region60
        $region59: #{tpu_custom_call.1} parent=55 // pred_region
          %s409 = sand.u32 %s37, 1
          %s410 = scalar_lea.sflag [#allocation5], %s409
          %s411 = sand.u32 %s37, 1
          %s412 = smul.addr %s411, 8
          %s413 = scalar_lea.vmem [#allocation4], %s412
          %s415 = ssub.s32 128, 128
          %416 = vsyncadd %s410, %s415
          %s417 = smul.addr %s27, 128
          %s418 = scalar_lea.hbm %s0, %s417
          %s420 = sshll.u32 %s413, 4
          %s421 = int_to_ptr.vmem [resolvable:$true] %s420
          %423 = dma.hbm_to_vmem [thread:$0]  %s418, 128, %s421, %s410
        $region60: #{tpu_custom_call.1} parent=55 // pred_fallthru
          _
      $region56: #{tpu_custom_call.1} parent=5 // pred_fallthru
        _
      %p424 = scmp.le.s32.totalorder 1, %s27
      %p425 = scmp.lt.s32.totalorder %s27, 3
      %p426 = pnand %p424, %p425
      %p427 = pneg %p426
      // Predicated region
      $region61: #{tpu_custom_call.1} parent=5 // pred_check
        _
      $region62: #{tpu_custom_call.1} parent=5 // pred_check_branch
        %429 = sbr.rel (%p426) target = $region64
      $region63: #{tpu_custom_call.1} parent=5 // pred_region
        %s430 = ssub.s32 %s27, 1
        %s431 = sand.u32 %s40, 1
        %s432 = scalar_lea.sflag [#allocation5], %s431
        %s433 = sand.u32 %s40, 1
        %s434 = smul.addr %s433, 8
        %s435 = scalar_lea.vmem [#allocation4], %s434
        // Predicated region
        $region65: #{tpu_custom_call.1} parent=63 // pred_check
          %p436 = pneg %p53
        $region66: #{tpu_custom_call.1} parent=63 // pred_check_branch
          %438 = sbr.rel (%p436) target = $region68
        $region67: #{tpu_custom_call.1} parent=63 // pred_region
          %439 = dma.done %s432, 128
        $region68: #{tpu_custom_call.1} parent=63 // pred_fallthru
          _
        // Predicated region
        $region69: #{tpu_custom_call.1} parent=63 // pred_check
          %p440 = pneg %p95
        $region70: #{tpu_custom_call.1} parent=63 // pred_check_branch
          %442 = sbr.rel (%p440) target = $region72
        $region71: #{tpu_custom_call.1} parent=63 // pred_region
          %443 = dma.done [#allocation8], 16
        $region72: #{tpu_custom_call.1} parent=63 // pred_fallthru
          _
        // Predicated region
        $region73: #{tpu_custom_call.1} parent=63 // pred_check
          %p444 = pneg %p137
        $region74: #{tpu_custom_call.1} parent=63 // pred_check_branch
          %446 = sbr.rel (%p444) target = $region76
        $region75: #{tpu_custom_call.1} parent=63 // pred_region
          %447 = dma.done [#allocation8], 16
        $region76: #{tpu_custom_call.1} parent=63 // pred_fallthru
          _
        // Predicated region
        $region77: #{tpu_custom_call.1} parent=63 // pred_check
          %p448 = pneg %p158
        $region78: #{tpu_custom_call.1} parent=63 // pred_check_branch
          %450 = sbr.rel (%p448) target = $region80
        $region79: #{tpu_custom_call.1} parent=63 // pred_region
          %451 = dma.done [#allocation11], 128
        $region80: #{tpu_custom_call.1} parent=63 // pred_fallthru
          _
        // Predicated region
        $region81: #{tpu_custom_call.1} parent=63 // pred_check
          %p452 = pneg %p179
        $region82: #{tpu_custom_call.1} parent=63 // pred_check_branch
          %454 = sbr.rel (%p452) target = $region84
        $region83: #{tpu_custom_call.1} parent=63 // pred_region
          %455 = dma.done [#allocation11], 16
        $region84: #{tpu_custom_call.1} parent=63 // pred_fallthru
          _
        // Predicated region
        $region85: #{tpu_custom_call.1} parent=63 // pred_check
          %p456 = pneg %p200
        $region86: #{tpu_custom_call.1} parent=63 // pred_check_branch
          %458 = sbr.rel (%p456) target = $region88
        $region87: #{tpu_custom_call.1} parent=63 // pred_region
          %459 = dma.done [#allocation14], 512
        $region88: #{tpu_custom_call.1} parent=63 // pred_fallthru
          _
        // Predicated region
        $region89: #{tpu_custom_call.1} parent=63 // pred_check
          %p460 = pneg %p221
        $region90: #{tpu_custom_call.1} parent=63 // pred_check_branch
          %462 = sbr.rel (%p460) target = $region92
        $region91: #{tpu_custom_call.1} parent=63 // pred_region
          %463 = dma.done [#allocation14], 16
        $region92: #{tpu_custom_call.1} parent=63 // pred_fallthru
          _
        // Predicated region
        $region93: #{tpu_custom_call.1} parent=63 // pred_check
          %p464 = pneg %p242
        $region94: #{tpu_custom_call.1} parent=63 // pred_check_branch
          %466 = sbr.rel (%p464) target = $region96
        $region95: #{tpu_custom_call.1} parent=63 // pred_region
          %467 = dma.done [#allocation17], 16384
        $region96: #{tpu_custom_call.1} parent=63 // pred_fallthru
          _
        // Predicated region
        $region97: #{tpu_custom_call.1} parent=63 // pred_check
          %p468 = pneg %p263
        $region98: #{tpu_custom_call.1} parent=63 // pred_check_branch
          %470 = sbr.rel (%p468) target = $region100
        $region99: #{tpu_custom_call.1} parent=63 // pred_region
          %471 = dma.done [#allocation17], 128
        $region100: #{tpu_custom_call.1} parent=63 // pred_fallthru
          _
        %s472 = sand.u32 %s40, 1
        %s473 = scalar_lea.sflag [#allocation5], %s472
        %s474 = sand.u32 %s40, 1
        %s475 = smul.addr %s474, 8
        %s476 = scalar_lea.vmem [#allocation4], %s475
        %p477 = pneg %p53
        %p478 = pneg %p50
        %p479 = pneg %p74
        %p480 = pneg %p71
        %p481 = pneg %p95
        %p482 = pneg %p92
        %p483 = pneg %p116
        %p484 = pneg %p113
        %p485 = pneg %p137
        %p486 = pneg %p134
        %p487 = pneg %p158
        %p488 = pneg %p155
        %p489 = pneg %p179
        %p490 = pneg %p176
        %p491 = pneg %p200
        %p492 = pneg %p197
        %p493 = pneg %p221
        %p494 = pneg %p218
        %p495 = pneg %p242
        %p496 = pneg %p239
        %p497 = pneg %p263
        %p498 = pneg %p260
        %p499 = pneg %p289
        %p500 = pneg %p286
        %s501 = sand.u32 %s276, 1
        %s502 = scalar_lea.sflag [#allocation6], %s501
        %s503 = sand.u32 %s276, 1
        %s504 = smul.addr %s503, 4096
        %s505 = scalar_lea.vmem [#allocation19], %s504
        %v506 = vld [vmem:[%s435] sm:$0xff]
        %v507 = vld [vmem:[#allocation7] sm:$0x1]
        %v508 = vld [vmem:[%s1] sm:$0xff]
        %v509 = vld [vmem:[%s1 + $0x8] sm:$0xff]
        %v510 = vld [vmem:[%s1 + $0x10] sm:$0xff]
        %v511 = vld [vmem:[%s1 + $0x18] sm:$0xff]
        %v513 = vlaneseq
        %v514 = vshrl.u32 %v513, 7
        %v515 = vsub.s32 0, %v514
        %v516 = vrot.slane %v507, %v515
        %vm518 = vcmask 261120
        %v520 = vsel %vm518, %v506, 0
        %522 = vmatprep.subr.mxu0 0.0
        %523 = vmatpush1.msra.mxu0 %v508
        %524 = vmatprep.subr.mxu0 0.0
        %525 = vmatpush1.msra.mxu0 %v509
        %526 = vmatprep.subr.mxu0 0.0
        %527 = vmatpush1.msra.mxu0 %v510
        %528 = vmatprep.subr.mxu0 0.0
        %529 = vmatpush1.msra.mxu0 %v511
        %530 = vmatprep.subr.mxu0 0.0
        %531 = vmatpush1.msra.mxu0 0.0
        %532 = vmatprep.subr.mxu0 0.0
        %533 = vmatpush1.msra.mxu0 0.0
        %534 = vmatprep.subr.mxu0 0.0
        %535 = vmatpush1.msra.mxu0 0.0
        %536 = vmatprep.subr.mxu0 0.0
        %537 = vmatpush1.msra.mxu0 0.0
        %538 = vmatprep.subr.mxu0 0.0
        %539 = vmatpush1.msra.mxu0 0.0
        %540 = vmatprep.subr.mxu0 0.0
        %541 = vmatpush1.msra.mxu0 0.0
        %542 = vmatprep.subr.mxu0 0.0
        %543 = vmatpush1.msra.mxu0 0.0
        %544 = vmatprep.subr.mxu0 0.0
        %545 = vmatpush1.msra.mxu0 0.0
        %546 = vmatprep.subr.mxu0 0.0
        %547 = vmatpush1.msra.mxu0 0.0
        %548 = vmatprep.subr.mxu0 0.0
        %549 = vmatpush1.msra.mxu0 0.0
        %550 = vmatprep.subr.mxu0 0.0
        %551 = vmatpush1.msra.mxu0 0.0
        %552 = vmatprep.subr.mxu0 0.0
        %553 = vmatpush1.msra.mxu0 0.0
        %554 = vmatprep.subr.mxu0 0.0
        %555 = vmatpush1.msra.mxu0 0.0
        %556 = vmatprep.subr.mxu0 0.0
        %557 = vmatpush1.msra.mxu0 0.0
        %558 = vmatprep.subr.mxu0 0.0
        %559 = vmatpush1.msra.mxu0 0.0
        %560 = vmatprep.subr.mxu0 0.0
        %561 = vmatpush1.msra.mxu0 0.0
        %562 = vmatprep.subr.mxu0 0.0
        %563 = vmatpush1.msra.mxu0 0.0
        %564 = vmatprep.subr.mxu0 0.0
        %565 = vmatpush1.msra.mxu0 0.0
        %566 = vmatprep.subr.mxu0 0.0
        %567 = vmatpush1.msra.mxu0 0.0
        %568 = vmatprep.subr.mxu0 0.0
        %569 = vmatpush1.msra.mxu0 0.0
        %570 = vmatprep.subr.mxu0 0.0
        %571 = vmatpush1.msra.mxu0 0.0
        %572 = vmatprep.subr.mxu0 0.0
        %573 = vmatpush1.msra.mxu0 0.0
        %574 = vmatprep.subr.mxu0 0.0
        %575 = vmatpush1.msra.mxu0 0.0
        %576 = vmatprep.subr.mxu0 0.0
        %577 = vmatpush1.msra.mxu0 0.0
        %578 = vmatprep.subr.mxu0 0.0
        %579 = vmatpush1.msra.mxu0 0.0
        %580 = vmatprep.subr.mxu0 0.0
        %581 = vmatpush1.msra.mxu0 0.0
        %582 = vmatprep.subr.mxu0 0.0
        %583 = vmatpush1.msra.mxu0 0.0
        %584 = vmatprep.subr.mxu0 0.0
        %585 = vmatpush1.msra.mxu0 0.0
        %586 = vmatprep.mubr.f32.mxu0 0.0
        %587 = vmatmul.mubr.f32.gmra.mrb[0].mxu0 %v520
        %v588 = vpop.f32.mrb[0].mxu0
        %v589 = vadd.f32 %v516, %v588
        %v590 = vpop.f32.mrb[0].mxu0
        %591 = vdwg.mxu0
        %vm592 = vcmask 130048
        %593 = vst.msk [vmem:[#allocation2] sm:$0xff] %vm592, %v589
        %s594 = scalar_lea.vmem %s1, 32
        %v595 = vld [vmem:[%s594] sm:$0xff]
        %v596 = vld [vmem:[%s594 + $0x8] sm:$0xff]
        %v597 = vld [vmem:[%s594 + $0x10] sm:$0xff]
        %v598 = vld [vmem:[%s594 + $0x18] sm:$0xff]
        %599 = vmatprep.subr.mxu0 0.0
        %600 = vmatpush1.msra.mxu0 %v595
        %601 = vmatprep.subr.mxu0 0.0
        %602 = vmatpush1.msra.mxu0 %v596
        %603 = vmatprep.subr.mxu0 0.0
        %604 = vmatpush1.msra.mxu0 %v597
        %605 = vmatprep.subr.mxu0 0.0
        %606 = vmatpush1.msra.mxu0 %v598
        %607 = vmatprep.subr.mxu0 0.0
        %608 = vmatpush1.msra.mxu0 0.0
        %609 = vmatprep.subr.mxu0 0.0
        %610 = vmatpush1.msra.mxu0 0.0
        %611 = vmatprep.subr.mxu0 0.0
        %612 = vmatpush1.msra.mxu0 0.0
        %613 = vmatprep.subr.mxu0 0.0
        %614 = vmatpush1.msra.mxu0 0.0
        %615 = vmatprep.subr.mxu0 0.0
        %616 = vmatpush1.msra.mxu0 0.0
        %617 = vmatprep.subr.mxu0 0.0
        %618 = vmatpush1.msra.mxu0 0.0
        %619 = vmatprep.subr.mxu0 0.0
        %620 = vmatpush1.msra.mxu0 0.0
        %621 = vmatprep.subr.mxu0 0.0
        %622 = vmatpush1.msra.mxu0 0.0
        %623 = vmatprep.subr.mxu0 0.0
        %624 = vmatpush1.msra.mxu0 0.0
        %625 = vmatprep.subr.mxu0 0.0
        %626 = vmatpush1.msra.mxu0 0.0
        %627 = vmatprep.subr.mxu0 0.0
        %628 = vmatpush1.msra.mxu0 0.0
        %629 = vmatprep.subr.mxu0 0.0
        %630 = vmatpush1.msra.mxu0 0.0
        %631 = vmatprep.subr.mxu0 0.0
        %632 = vmatpush1.msra.mxu0 0.0
        %633 = vmatprep.subr.mxu0 0.0
        %634 = vmatpush1.msra.mxu0 0.0
        %635 = vmatprep.subr.mxu0 0.0
        %636 = vmatpush1.msra.mxu0 0.0
        %637 = vmatprep.subr.mxu0 0.0
        %638 = vmatpush1.msra.mxu0 0.0
        %639 = vmatprep.subr.mxu0 0.0
        %640 = vmatpush1.msra.mxu0 0.0
        %641 = vmatprep.subr.mxu0 0.0
        %642 = vmatpush1.msra.mxu0 0.0
        %643 = vmatprep.subr.mxu0 0.0
        %644 = vmatpush1.msra.mxu0 0.0
        %645 = vmatprep.subr.mxu0 0.0
        %646 = vmatpush1.msra.mxu0 0.0
        %647 = vmatprep.subr.mxu0 0.0
        %648 = vmatpush1.msra.mxu0 0.0
        %649 = vmatprep.subr.mxu0 0.0
        %650 = vmatpush1.msra.mxu0 0.0
        %651 = vmatprep.subr.mxu0 0.0
        %652 = vmatpush1.msra.mxu0 0.0
        %653 = vmatprep.subr.mxu0 0.0
        %654 = vmatpush1.msra.mxu0 0.0
        %655 = vmatprep.subr.mxu0 0.0
        %656 = vmatpush1.msra.mxu0 0.0
        %657 = vmatprep.subr.mxu0 0.0
        %658 = vmatpush1.msra.mxu0 0.0
        %659 = vmatprep.subr.mxu0 0.0
        %660 = vmatpush1.msra.mxu0 0.0
        %661 = vmatprep.subr.mxu0 0.0
        %662 = vmatpush1.msra.mxu0 0.0
        %663 = vmatprep.mubr.f32.mxu0 0.0
        %664 = vmatmul.mubr.f32.gmra.mrb[0].mxu0 %v520
        %v665 = vpop.f32.mrb[0].mxu0
        %v666 = vadd.f32 %v516, %v665
        %v667 = vpop.f32.mrb[0].mxu0
        %668 = vdwg.mxu0
        %669 = vst.msk [vmem:[#allocation2 + $0x8] sm:$0xff] %vm592, %v666
        %s670 = scalar_lea.vmem %s1, 64
        %v671 = vld [vmem:[%s670] sm:$0xff]
        %v672 = vld [vmem:[%s670 + $0x8] sm:$0xff]
        %v673 = vld [vmem:[%s670 + $0x10] sm:$0xff]
        %v674 = vld [vmem:[%s670 + $0x18] sm:$0xff]
        %675 = vmatprep.subr.mxu0 0.0
        %676 = vmatpush1.msra.mxu0 %v671
        %677 = vmatprep.subr.mxu0 0.0
        %678 = vmatpush1.msra.mxu0 %v672
        %679 = vmatprep.subr.mxu0 0.0
        %680 = vmatpush1.msra.mxu0 %v673
        %681 = vmatprep.subr.mxu0 0.0
        %682 = vmatpush1.msra.mxu0 %v674
        %683 = vmatprep.subr.mxu0 0.0
        %684 = vmatpush1.msra.mxu0 0.0
        %685 = vmatprep.subr.mxu0 0.0
        %686 = vmatpush1.msra.mxu0 0.0
        %687 = vmatprep.subr.mxu0 0.0
        %688 = vmatpush1.msra.mxu0 0.0
        %689 = vmatprep.subr.mxu0 0.0
        %690 = vmatpush1.msra.mxu0 0.0
        %691 = vmatprep.subr.mxu0 0.0
        %692 = vmatpush1.msra.mxu0 0.0
        %693 = vmatprep.subr.mxu0 0.0
        %694 = vmatpush1.msra.mxu0 0.0
        %695 = vmatprep.subr.mxu0 0.0
        %696 = vmatpush1.msra.mxu0 0.0
        %697 = vmatprep.subr.mxu0 0.0
        %698 = vmatpush1.msra.mxu0 0.0
        %699 = vmatprep.subr.mxu0 0.0
        %700 = vmatpush1.msra.mxu0 0.0
        %701 = vmatprep.subr.mxu0 0.0
        %702 = vmatpush1.msra.mxu0 0.0
        %703 = vmatprep.subr.mxu0 0.0
        %704 = vmatpush1.msra.mxu0 0.0
        %705 = vmatprep.subr.mxu0 0.0
        %706 = vmatpush1.msra.mxu0 0.0
        %707 = vmatprep.subr.mxu0 0.0
        %708 = vmatpush1.msra.mxu0 0.0
        %709 = vmatprep.subr.mxu0 0.0
        %710 = vmatpush1.msra.mxu0 0.0
        %711 = vmatprep.subr.mxu0 0.0
        %712 = vmatpush1.msra.mxu0 0.0
        %713 = vmatprep.subr.mxu0 0.0
        %714 = vmatpush1.msra.mxu0 0.0
        %715 = vmatprep.subr.mxu0 0.0
        %716 = vmatpush1.msra.mxu0 0.0
        %717 = vmatprep.subr.mxu0 0.0
        %718 = vmatpush1.msra.mxu0 0.0
        %719 = vmatprep.subr.mxu0 0.0
        %720 = vmatpush1.msra.mxu0 0.0
        %721 = vmatprep.subr.mxu0 0.0
        %722 = vmatpush1.msra.mxu0 0.0
        %723 = vmatprep.subr.mxu0 0.0
        %724 = vmatpush1.msra.mxu0 0.0
        %725 = vmatprep.subr.mxu0 0.0
        %726 = vmatpush1.msra.mxu0 0.0
        %727 = vmatprep.subr.mxu0 0.0
        %728 = vmatpush1.msra.mxu0 0.0
        %729 = vmatprep.subr.mxu0 0.0
        %730 = vmatpush1.msra.mxu0 0.0
        %731 = vmatprep.subr.mxu0 0.0
        %732 = vmatpush1.msra.mxu0 0.0
        %733 = vmatprep.subr.mxu0 0.0
        %734 = vmatpush1.msra.mxu0 0.0
        %735 = vmatprep.subr.mxu0 0.0
        %736 = vmatpush1.msra.mxu0 0.0
        %737 = vmatprep.subr.mxu0 0.0
        %738 = vmatpush1.msra.mxu0 0.0
        %739 = vmatprep.mubr.f32.mxu0 0.0
        %740 = vmatmul.mubr.f32.gmra.mrb[0].mxu0 %v520
        %v741 = vpop.f32.mrb[0].mxu0
        %v742 = vadd.f32 %v516, %v741
        %v743 = vpop.f32.mrb[0].mxu0
        %744 = vdwg.mxu0
        %745 = vst.msk [vmem:[#allocation2 + $0x10] sm:$0xff] %vm592, %v742
        %s746 = scalar_lea.vmem %s1, 96
        %v747 = vld [vmem:[%s746] sm:$0xff]
        %v748 = vld [vmem:[%s746 + $0x8] sm:$0xff]
        %v749 = vld [vmem:[%s746 + $0x10] sm:$0xff]
        %v750 = vld [vmem:[%s746 + $0x18] sm:$0xff]
        %751 = vmatprep.subr.mxu0 0.0
        %752 = vmatpush1.msra.mxu0 %v747
        %753 = vmatprep.subr.mxu0 0.0
        %754 = vmatpush1.msra.mxu0 %v748
        %755 = vmatprep.subr.mxu0 0.0
        %756 = vmatpush1.msra.mxu0 %v749
        %757 = vmatprep.subr.mxu0 0.0
        %758 = vmatpush1.msra.mxu0 %v750
        %759 = vmatprep.subr.mxu0 0.0
        %760 = vmatpush1.msra.mxu0 0.0
        %761 = vmatprep.subr.mxu0 0.0
        %762 = vmatpush1.msra.mxu0 0.0
        %763 = vmatprep.subr.mxu0 0.0
        %764 = vmatpush1.msra.mxu0 0.0
        %765 = vmatprep.subr.mxu0 0.0
        %766 = vmatpush1.msra.mxu0 0.0
        %767 = vmatprep.subr.mxu0 0.0
        %768 = vmatpush1.msra.mxu0 0.0
        %769 = vmatprep.subr.mxu0 0.0
        %770 = vmatpush1.msra.mxu0 0.0
        %771 = vmatprep.subr.mxu0 0.0
        %772 = vmatpush1.msra.mxu0 0.0
        %773 = vmatprep.subr.mxu0 0.0
        %774 = vmatpush1.msra.mxu0 0.0
        %775 = vmatprep.subr.mxu0 0.0
        %776 = vmatpush1.msra.mxu0 0.0
        %777 = vmatprep.subr.mxu0 0.0
        %778 = vmatpush1.msra.mxu0 0.0
        %779 = vmatprep.subr.mxu0 0.0
        %780 = vmatpush1.msra.mxu0 0.0
        %781 = vmatprep.subr.mxu0 0.0
        %782 = vmatpush1.msra.mxu0 0.0
        %783 = vmatprep.subr.mxu0 0.0
        %784 = vmatpush1.msra.mxu0 0.0
        %785 = vmatprep.subr.mxu0 0.0
        %786 = vmatpush1.msra.mxu0 0.0
        %787 = vmatprep.subr.mxu0 0.0
        %788 = vmatpush1.msra.mxu0 0.0
        %789 = vmatprep.subr.mxu0 0.0
        %790 = vmatpush1.msra.mxu0 0.0
        %791 = vmatprep.subr.mxu0 0.0
        %792 = vmatpush1.msra.mxu0 0.0
        %793 = vmatprep.subr.mxu0 0.0
        %794 = vmatpush1.msra.mxu0 0.0
        %795 = vmatprep.subr.mxu0 0.0
        %796 = vmatpush1.msra.mxu0 0.0
        %797 = vmatprep.subr.mxu0 0.0
        %798 = vmatpush1.msra.mxu0 0.0
        %799 = vmatprep.subr.mxu0 0.0
        %800 = vmatpush1.msra.mxu0 0.0
        %801 = vmatprep.subr.mxu0 0.0
        %802 = vmatpush1.msra.mxu0 0.0
        %803 = vmatprep.subr.mxu0 0.0
        %804 = vmatpush1.msra.mxu0 0.0
        %805 = vmatprep.subr.mxu0 0.0
        %806 = vmatpush1.msra.mxu0 0.0
        %807 = vmatprep.subr.mxu0 0.0
        %808 = vmatpush1.msra.mxu0 0.0
        %809 = vmatprep.subr.mxu0 0.0
        %810 = vmatpush1.msra.mxu0 0.0
        %811 = vmatprep.subr.mxu0 0.0
        %812 = vmatpush1.msra.mxu0 0.0
        %813 = vmatprep.subr.mxu0 0.0
        %814 = vmatpush1.msra.mxu0 0.0
        %815 = vmatprep.mubr.f32.mxu0 0.0
        %816 = vmatmul.mubr.f32.gmra.mrb[0].mxu0 %v520
        %v817 = vpop.f32.mrb[0].mxu0
        %v818 = vadd.f32 %v516, %v817
        %v819 = vpop.f32.mrb[0].mxu0
        %820 = vdwg.mxu0
        %821 = vst.msk [vmem:[#allocation2 + $0x18] sm:$0xff] %vm592, %v818
        %s822 = scalar_lea.vmem %s1, 128
        %v823 = vld [vmem:[%s822] sm:$0xff]
        %v824 = vld [vmem:[%s822 + $0x8] sm:$0xff]
        %v825 = vld [vmem:[%s822 + $0x10] sm:$0xff]
        %v826 = vld [vmem:[%s822 + $0x18] sm:$0xff]
        %827 = vmatprep.subr.mxu0 0.0
        %828 = vmatpush1.msra.mxu0 %v823
        %829 = vmatprep.subr.mxu0 0.0
        %830 = vmatpush1.msra.mxu0 %v824
        %831 = vmatprep.subr.mxu0 0.0
        %832 = vmatpush1.msra.mxu0 %v825
        %833 = vmatprep.subr.mxu0 0.0
        %834 = vmatpush1.msra.mxu0 %v826
        %835 = vmatprep.subr.mxu0 0.0
        %836 = vmatpush1.msra.mxu0 0.0
        %837 = vmatprep.subr.mxu0 0.0
        %838 = vmatpush1.msra.mxu0 0.0
        %839 = vmatprep.subr.mxu0 0.0
        %840 = vmatpush1.msra.mxu0 0.0
        %841 = vmatprep.subr.mxu0 0.0
        %842 = vmatpush1.msra.mxu0 0.0
        %843 = vmatprep.subr.mxu0 0.0
        %844 = vmatpush1.msra.mxu0 0.0
        %845 = vmatprep.subr.mxu0 0.0
        %846 = vmatpush1.msra.mxu0 0.0
        %847 = vmatprep.subr.mxu0 0.0
        %848 = vmatpush1.msra.mxu0 0.0
        %849 = vmatprep.subr.mxu0 0.0
        %850 = vmatpush1.msra.mxu0 0.0
        %851 = vmatprep.subr.mxu0 0.0
        %852 = vmatpush1.msra.mxu0 0.0
        %853 = vmatprep.subr.mxu0 0.0
        %854 = vmatpush1.msra.mxu0 0.0
        %855 = vmatprep.subr.mxu0 0.0
        %856 = vmatpush1.msra.mxu0 0.0
        %857 = vmatprep.subr.mxu0 0.0
        %858 = vmatpush1.msra.mxu0 0.0
        %859 = vmatprep.subr.mxu0 0.0
        %860 = vmatpush1.msra.mxu0 0.0
        %861 = vmatprep.subr.mxu0 0.0
        %862 = vmatpush1.msra.mxu0 0.0
        %863 = vmatprep.subr.mxu0 0.0
        %864 = vmatpush1.msra.mxu0 0.0
        %865 = vmatprep.subr.mxu0 0.0
        %866 = vmatpush1.msra.mxu0 0.0
        %867 = vmatprep.subr.mxu0 0.0
        %868 = vmatpush1.msra.mxu0 0.0
        %869 = vmatprep.subr.mxu0 0.0
        %870 = vmatpush1.msra.mxu0 0.0
        %871 = vmatprep.subr.mxu0 0.0
        %872 = vmatpush1.msra.mxu0 0.0
        %873 = vmatprep.subr.mxu0 0.0
        %874 = vmatpush1.msra.mxu0 0.0
        %875 = vmatprep.subr.mxu0 0.0
        %876 = vmatpush1.msra.mxu0 0.0
        %877 = vmatprep.subr.mxu0 0.0
        %878 = vmatpush1.msra.mxu0 0.0
        %879 = vmatprep.subr.mxu0 0.0
        %880 = vmatpush1.msra.mxu0 0.0
        %881 = vmatprep.subr.mxu0 0.0
        %882 = vmatpush1.msra.mxu0 0.0
        %883 = vmatprep.subr.mxu0 0.0
        %884 = vmatpush1.msra.mxu0 0.0
        %885 = vmatprep.subr.mxu0 0.0
        %886 = vmatpush1.msra.mxu0 0.0
        %887 = vmatprep.subr.mxu0 0.0
        %888 = vmatpush1.msra.mxu0 0.0
        %889 = vmatprep.subr.mxu0 0.0
        %890 = vmatpush1.msra.mxu0 0.0
        %891 = vmatprep.mubr.f32.mxu0 0.0
        %892 = vmatmul.mubr.f32.gmra.mrb[0].mxu0 %v520
        %v893 = vpop.f32.mrb[0].mxu0
        %v894 = vadd.f32 %v516, %v893
        %v895 = vpop.f32.mrb[0].mxu0
        %896 = vdwg.mxu0
        %897 = vst.msk [vmem:[#allocation2 + $0x20] sm:$0xff] %vm592, %v894
        %s898 = scalar_lea.vmem %s1, 160
        %v899 = vld [vmem:[%s898] sm:$0xff]
        %v900 = vld [vmem:[%s898 + $0x8] sm:$0xff]
        %v901 = vld [vmem:[%s898 + $0x10] sm:$0xff]
        %v902 = vld [vmem:[%s898 + $0x18] sm:$0xff]
        %903 = vmatprep.subr.mxu0 0.0
        %904 = vmatpush1.msra.mxu0 %v899
        %905 = vmatprep.subr.mxu0 0.0
        %906 = vmatpush1.msra.mxu0 %v900
        %907 = vmatprep.subr.mxu0 0.0
        %908 = vmatpush1.msra.mxu0 %v901
        %909 = vmatprep.subr.mxu0 0.0
        %910 = vmatpush1.msra.mxu0 %v902
        %911 = vmatprep.subr.mxu0 0.0
        %912 = vmatpush1.msra.mxu0 0.0
        %913 = vmatprep.subr.mxu0 0.0
        %914 = vmatpush1.msra.mxu0 0.0
        %915 = vmatprep.subr.mxu0 0.0
        %916 = vmatpush1.msra.mxu0 0.0
        %917 = vmatprep.subr.mxu0 0.0
        %918 = vmatpush1.msra.mxu0 0.0
        %919 = vmatprep.subr.mxu0 0.0
        %920 = vmatpush1.msra.mxu0 0.0
        %921 = vmatprep.subr.mxu0 0.0
        %922 = vmatpush1.msra.mxu0 0.0
        %923 = vmatprep.subr.mxu0 0.0
        %924 = vmatpush1.msra.mxu0 0.0
        %925 = vmatprep.subr.mxu0 0.0
        %926 = vmatpush1.msra.mxu0 0.0
        %927 = vmatprep.subr.mxu0 0.0
        %928 = vmatpush1.msra.mxu0 0.0
        %929 = vmatprep.subr.mxu0 0.0
        %930 = vmatpush1.msra.mxu0 0.0
        %931 = vmatprep.subr.mxu0 0.0
        %932 = vmatpush1.msra.mxu0 0.0
        %933 = vmatprep.subr.mxu0 0.0
        %934 = vmatpush1.msra.mxu0 0.0
        %935 = vmatprep.subr.mxu0 0.0
        %936 = vmatpush1.msra.mxu0 0.0
        %937 = vmatprep.subr.mxu0 0.0
        %938 = vmatpush1.msra.mxu0 0.0
        %939 = vmatprep.subr.mxu0 0.0
        %940 = vmatpush1.msra.mxu0 0.0
        %941 = vmatprep.subr.mxu0 0.0
        %942 = vmatpush1.msra.mxu0 0.0
        %943 = vmatprep.subr.mxu0 0.0
        %944 = vmatpush1.msra.mxu0 0.0
        %945 = vmatprep.subr.mxu0 0.0
        %946 = vmatpush1.msra.mxu0 0.0
        %947 = vmatprep.subr.mxu0 0.0
        %948 = vmatpush1.msra.mxu0 0.0
        %949 = vmatprep.subr.mxu0 0.0
        %950 = vmatpush1.msra.mxu0 0.0
        %951 = vmatprep.subr.mxu0 0.0
        %952 = vmatpush1.msra.mxu0 0.0
        %953 = vmatprep.subr.mxu0 0.0
        %954 = vmatpush1.msra.mxu0 0.0
        %955 = vmatprep.subr.mxu0 0.0
        %956 = vmatpush1.msra.mxu0 0.0
        %957 = vmatprep.subr.mxu0 0.0
        %958 = vmatpush1.msra.mxu0 0.0
        %959 = vmatprep.subr.mxu0 0.0
        %960 = vmatpush1.msra.mxu0 0.0
        %961 = vmatprep.subr.mxu0 0.0
        %962 = vmatpush1.msra.mxu0 0.0
        %963 = vmatprep.subr.mxu0 0.0
        %964 = vmatpush1.msra.mxu0 0.0
        %965 = vmatprep.subr.mxu0 0.0
        %966 = vmatpush1.msra.mxu0 0.0
        %967 = vmatprep.mubr.f32.mxu0 0.0
        %968 = vmatmul.mubr.f32.gmra.mrb[0].mxu0 %v520
        %v969 = vpop.f32.mrb[0].mxu0
        %v970 = vadd.f32 %v516, %v969
        %v971 = vpop.f32.mrb[0].mxu0
        %972 = vdwg.mxu0
        %973 = vst.msk [vmem:[#allocation2 + $0x28] sm:$0xff] %vm592, %v970
        %s974 = scalar_lea.vmem %s1, 192
        %v975 = vld [vmem:[%s974] sm:$0xff]
        %v976 = vld [vmem:[%s974 + $0x8] sm:$0xff]
        %v977 = vld [vmem:[%s974 + $0x10] sm:$0xff]
        %v978 = vld [vmem:[%s974 + $0x18] sm:$0xff]
        %979 = vmatprep.subr.mxu0 0.0
        %980 = vmatpush1.msra.mxu0 %v975
        %981 = vmatprep.subr.mxu0 0.0
        %982 = vmatpush1.msra.mxu0 %v976
        %983 = vmatprep.subr.mxu0 0.0
        %984 = vmatpush1.msra.mxu0 %v977
        %985 = vmatprep.subr.mxu0 0.0
        %986 = vmatpush1.msra.mxu0 %v978
        %987 = vmatprep.subr.mxu0 0.0
        %988 = vmatpush1.msra.mxu0 0.0
        %989 = vmatprep.subr.mxu0 0.0
        %990 = vmatpush1.msra.mxu0 0.0
        %991 = vmatprep.subr.mxu0 0.0
        %992 = vmatpush1.msra.mxu0 0.0
        %993 = vmatprep.subr.mxu0 0.0
        %994 = vmatpush1.msra.mxu0 0.0
        %995 = vmatprep.subr.mxu0 0.0
        %996 = vmatpush1.msra.mxu0 0.0
        %997 = vmatprep.subr.mxu0 0.0
        %998 = vmatpush1.msra.mxu0 0.0
        %999 = vmatprep.subr.mxu0 0.0
        %1000 = vmatpush1.msra.mxu0 0.0
        %1001 = vmatprep.subr.mxu0 0.0
        %1002 = vmatpush1.msra.mxu0 0.0
        %1003 = vmatprep.subr.mxu0 0.0
        %1004 = vmatpush1.msra.mxu0 0.0
        %1005 = vmatprep.subr.mxu0 0.0
        %1006 = vmatpush1.msra.mxu0 0.0
        %1007 = vmatprep.subr.mxu0 0.0
        %1008 = vmatpush1.msra.mxu0 0.0
        %1009 = vmatprep.subr.mxu0 0.0
        %1010 = vmatpush1.msra.mxu0 0.0
        %1011 = vmatprep.subr.mxu0 0.0
        %1012 = vmatpush1.msra.mxu0 0.0
        %1013 = vmatprep.subr.mxu0 0.0
        %1014 = vmatpush1.msra.mxu0 0.0
        %1015 = vmatprep.subr.mxu0 0.0
        %1016 = vmatpush1.msra.mxu0 0.0
        %1017 = vmatprep.subr.mxu0 0.0
        %1018 = vmatpush1.msra.mxu0 0.0
        %1019 = vmatprep.subr.mxu0 0.0
        %1020 = vmatpush1.msra.mxu0 0.0
        %1021 = vmatprep.subr.mxu0 0.0
        %1022 = vmatpush1.msra.mxu0 0.0
        %1023 = vmatprep.subr.mxu0 0.0
        %1024 = vmatpush1.msra.mxu0 0.0
        %1025 = vmatprep.subr.mxu0 0.0
        %1026 = vmatpush1.msra.mxu0 0.0
        %1027 = vmatprep.subr.mxu0 0.0
        %1028 = vmatpush1.msra.mxu0 0.0
        %1029 = vmatprep.subr.mxu0 0.0
        %1030 = vmatpush1.msra.mxu0 0.0
        %1031 = vmatprep.subr.mxu0 0.0
        %1032 = vmatpush1.msra.mxu0 0.0
        %1033 = vmatprep.subr.mxu0 0.0
        %1034 = vmatpush1.msra.mxu0 0.0
        %1035 = vmatprep.subr.mxu0 0.0
        %1036 = vmatpush1.msra.mxu0 0.0
        %1037 = vmatprep.subr.mxu0 0.0
        %1038 = vmatpush1.msra.mxu0 0.0
        %1039 = vmatprep.subr.mxu0 0.0
        %1040 = vmatpush1.msra.mxu0 0.0
        %1041 = vmatprep.subr.mxu0 0.0
        %1042 = vmatpush1.msra.mxu0 0.0
        %1043 = vmatprep.mubr.f32.mxu0 0.0
        %1044 = vmatmul.mubr.f32.gmra.mrb[0].mxu0 %v520
        %v1045 = vpop.f32.mrb[0].mxu0
        %v1046 = vadd.f32 %v516, %v1045
        %v1047 = vpop.f32.mrb[0].mxu0
        %1048 = vdwg.mxu0
        %1049 = vst.msk [vmem:[#allocation2 + $0x30] sm:$0xff] %vm592, %v1046
        %s1050 = scalar_lea.vmem %s1, 224
        %v1051 = vld [vmem:[%s1050] sm:$0xff]
        %v1052 = vld [vmem:[%s1050 + $0x8] sm:$0xff]
        %v1053 = vld [vmem:[%s1050 + $0x10] sm:$0xff]
        %v1054 = vld [vmem:[%s1050 + $0x18] sm:$0xff]
        %1055 = vmatprep.subr.mxu0 0.0
        %1056 = vmatpush1.msra.mxu0 %v1051
        %1057 = vmatprep.subr.mxu0 0.0
        %1058 = vmatpush1.msra.mxu0 %v1052
        %1059 = vmatprep.subr.mxu0 0.0
        %1060 = vmatpush1.msra.mxu0 %v1053
        %1061 = vmatprep.subr.mxu0 0.0
        %1062 = vmatpush1.msra.mxu0 %v1054
        %1063 = vmatprep.subr.mxu0 0.0
        %1064 = vmatpush1.msra.mxu0 0.0
        %1065 = vmatprep.subr.mxu0 0.0
        %1066 = vmatpush1.msra.mxu0 0.0
        %1067 = vmatprep.subr.mxu0 0.0
        %1068 = vmatpush1.msra.mxu0 0.0
        %1069 = vmatprep.subr.mxu0 0.0
        %1070 = vmatpush1.msra.mxu0 0.0
        %1071 = vmatprep.subr.mxu0 0.0
        %1072 = vmatpush1.msra.mxu0 0.0
        %1073 = vmatprep.subr.mxu0 0.0
        %1074 = vmatpush1.msra.mxu0 0.0
        %1075 = vmatprep.subr.mxu0 0.0
        %1076 = vmatpush1.msra.mxu0 0.0
        %1077 = vmatprep.subr.mxu0 0.0
        %1078 = vmatpush1.msra.mxu0 0.0
        %1079 = vmatprep.subr.mxu0 0.0
        %1080 = vmatpush1.msra.mxu0 0.0
        %1081 = vmatprep.subr.mxu0 0.0
        %1082 = vmatpush1.msra.mxu0 0.0
        %1083 = vmatprep.subr.mxu0 0.0
        %1084 = vmatpush1.msra.mxu0 0.0
        %1085 = vmatprep.subr.mxu0 0.0
        %1086 = vmatpush1.msra.mxu0 0.0
        %1087 = vmatprep.subr.mxu0 0.0
        %1088 = vmatpush1.msra.mxu0 0.0
        %1089 = vmatprep.subr.mxu0 0.0
        %1090 = vmatpush1.msra.mxu0 0.0
        %1091 = vmatprep.subr.mxu0 0.0
        %1092 = vmatpush1.msra.mxu0 0.0
        %1093 = vmatprep.subr.mxu0 0.0
        %1094 = vmatpush1.msra.mxu0 0.0
        %1095 = vmatprep.subr.mxu0 0.0
        %1096 = vmatpush1.msra.mxu0 0.0
        %1097 = vmatprep.subr.mxu0 0.0
        %1098 = vmatpush1.msra.mxu0 0.0
        %1099 = vmatprep.subr.mxu0 0.0
        %1100 = vmatpush1.msra.mxu0 0.0
        %1101 = vmatprep.subr.mxu0 0.0
        %1102 = vmatpush1.msra.mxu0 0.0
        %1103 = vmatprep.subr.mxu0 0.0
        %1104 = vmatpush1.msra.mxu0 0.0
        %1105 = vmatprep.subr.mxu0 0.0
        %1106 = vmatpush1.msra.mxu0 0.0
        %1107 = vmatprep.subr.mxu0 0.0
        %1108 = vmatpush1.msra.mxu0 0.0
        %1109 = vmatprep.subr.mxu0 0.0
        %1110 = vmatpush1.msra.mxu0 0.0
        %1111 = vmatprep.subr.mxu0 0.0
        %1112 = vmatpush1.msra.mxu0 0.0
        %1113 = vmatprep.subr.mxu0 0.0
        %1114 = vmatpush1.msra.mxu0 0.0
        %1115 = vmatprep.subr.mxu0 0.0
        %1116 = vmatpush1.msra.mxu0 0.0
        %1117 = vmatprep.subr.mxu0 0.0
        %1118 = vmatpush1.msra.mxu0 0.0
        %1119 = vmatprep.mubr.f32.mxu0 0.0
        %1120 = vmatmul.mubr.f32.gmra.mrb[0].mxu0 %v520
        %v1121 = vpop.f32.mrb[0].mxu0
        %v1122 = vadd.f32 %v516, %v1121
        %v1123 = vpop.f32.mrb[0].mxu0
        %1124 = vdwg.mxu0
        %1125 = vst.msk [vmem:[#allocation2 + $0x38] sm:$0xff] %vm592, %v1122
        %v1126 = vld [vmem:[#allocation2] sm:$0xff]
        %v1127 = vld [vmem:[#allocation2 + $0x8] sm:$0xff]
        %v1128 = vld [vmem:[#allocation2 + $0x10] sm:$0xff]
        %v1129 = vld [vmem:[#allocation2 + $0x18] sm:$0xff]
        %v1130 = vld [vmem:[#allocation2 + $0x20] sm:$0xff]
        %v1131 = vld [vmem:[#allocation2 + $0x28] sm:$0xff]
        %v1132 = vld [vmem:[#allocation2 + $0x30] sm:$0xff]
        %v1133 = vld [vmem:[#allocation2 + $0x38] sm:$0xff]
        %v1134 = vld [vmem:[#allocation9] sm:$0x1]
        %v1135 = vld [vmem:[%s3] sm:$0xff]
        %v1136 = vld [vmem:[%s3 + $0x8] sm:$0xff]
        %v1138 = vlaneseq
        %v1139 = vshrl.u32 %v1138, 7
        %v1140 = vsub.s32 0, %v1139
        %v1141 = vrot.slane %v1134, %v1140
        %v1144 = vsel %vm592, %v1126, 0
        %v1147 = vsel %vm592, %v1127, 0
        %v1150 = vsel %vm592, %v1128, 0
        %v1153 = vsel %vm592, %v1129, 0
        %v1156 = vsel %vm592, %v1130, 0
        %v1159 = vsel %vm592, %v1131, 0
        %v1162 = vsel %vm592, %v1132, 0
        %v1165 = vsel %vm592, %v1133, 0
        %1167 = vmatprep.subr.mxu0 0.0
        %1168 = vmatpush1.msra.mxu0 %v1135
        %1169 = vmatprep.subr.mxu0 0.0
        %1170 = vmatpush1.msra.mxu0 %v1136
        %1171 = vmatprep.subr.mxu0 0.0
        %1172 = vmatpush1.msra.mxu0 0.0
        %1173 = vmatprep.subr.mxu0 0.0
        %1174 = vmatpush1.msra.mxu0 0.0
        %1175 = vmatprep.subr.mxu0 0.0
        %1176 = vmatpush1.msra.mxu0 0.0
        %1177 = vmatprep.subr.mxu0 0.0
        %1178 = vmatpush1.msra.mxu0 0.0
        %1179 = vmatprep.subr.mxu0 0.0
        %1180 = vmatpush1.msra.mxu0 0.0
        %1181 = vmatprep.subr.mxu0 0.0
        %1182 = vmatpush1.msra.mxu0 0.0
        %1183 = vmatprep.subr.mxu0 0.0
        %1184 = vmatpush1.msra.mxu0 0.0
        %1185 = vmatprep.subr.mxu0 0.0
        %1186 = vmatpush1.msra.mxu0 0.0
        %1187 = vmatprep.subr.mxu0 0.0
        %1188 = vmatpush1.msra.mxu0 0.0
        %1189 = vmatprep.subr.mxu0 0.0
        %1190 = vmatpush1.msra.mxu0 0.0
        %1191 = vmatprep.subr.mxu0 0.0
        %1192 = vmatpush1.msra.mxu0 0.0
        %1193 = vmatprep.subr.mxu0 0.0
        %1194 = vmatpush1.msra.mxu0 0.0
        %1195 = vmatprep.subr.mxu0 0.0
        %1196 = vmatpush1.msra.mxu0 0.0
        %1197 = vmatprep.subr.mxu0 0.0
        %1198 = vmatpush1.msra.mxu0 0.0
        %1199 = vmatprep.subr.mxu0 0.0
        %1200 = vmatpush1.msra.mxu0 0.0
        %1201 = vmatprep.subr.mxu0 0.0
        %1202 = vmatpush1.msra.mxu0 0.0
        %1203 = vmatprep.subr.mxu0 0.0
        %1204 = vmatpush1.msra.mxu0 0.0
        %1205 = vmatprep.subr.mxu0 0.0
        %1206 = vmatpush1.msra.mxu0 0.0
        %1207 = vmatprep.subr.mxu0 0.0
        %1208 = vmatpush1.msra.mxu0 0.0
        %1209 = vmatprep.subr.mxu0 0.0
        %1210 = vmatpush1.msra.mxu0 0.0
        %1211 = vmatprep.subr.mxu0 0.0
        %1212 = vmatpush1.msra.mxu0 0.0
        %1213 = vmatprep.subr.mxu0 0.0
        %1214 = vmatpush1.msra.mxu0 0.0
        %1215 = vmatprep.subr.mxu0 0.0
        %1216 = vmatpush1.msra.mxu0 0.0
        %1217 = vmatprep.subr.mxu0 0.0
        %1218 = vmatpush1.msra.mxu0 0.0
        %1219 = vmatprep.subr.mxu0 0.0
        %1220 = vmatpush1.msra.mxu0 0.0
        %1221 = vmatprep.subr.mxu0 0.0
        %1222 = vmatpush1.msra.mxu0 0.0
        %1223 = vmatprep.subr.mxu0 0.0
        %1224 = vmatpush1.msra.mxu0 0.0
        %1225 = vmatprep.subr.mxu0 0.0
        %1226 = vmatpush1.msra.mxu0 0.0
        %1227 = vmatprep.subr.mxu0 0.0
        %1228 = vmatpush1.msra.mxu0 0.0
        %1229 = vmatprep.subr.mxu0 0.0
        %1230 = vmatpush1.msra.mxu0 0.0
        %1231 = vmatprep.mubr.f32.mxu0 0.0
        %1232 = vmatmul.mubr.f32.gmra.mrb[0].mxu0 %v1144
        %v1233 = vpop.f32.mrb[0].mxu0
        %v1234 = vadd.f32 %v1141, %v1233
        %v1235 = vpop.f32.mrb[0].mxu0
        %1236 = vmatprep.mubr.f32.mxu0 0.0
        %1237 = vmatmul.mubr.f32.gmra.mrb[0].mxu0 %v1147
        %v1238 = vpop.f32.mrb[0].mxu0
        %v1239 = vadd.f32 %v1141, %v1238
        %v1240 = vpop.f32.mrb[0].mxu0
        %1241 = vmatprep.mubr.f32.mxu0 0.0
        %1242 = vmatmul.mubr.f32.gmra.mrb[0].mxu0 %v1150
        %v1243 = vpop.f32.mrb[0].mxu0
        %v1244 = vadd.f32 %v1141, %v1243
        %v1245 = vpop.f32.mrb[0].mxu0
        %1246 = vmatprep.mubr.f32.mxu0 0.0
        %1247 = vmatmul.mubr.f32.gmra.mrb[0].mxu0 %v1153
        %v1248 = vpop.f32.mrb[0].mxu0
        %v1249 = vadd.f32 %v1141, %v1248
        %v1250 = vpop.f32.mrb[0].mxu0
        %1251 = vmatprep.mubr.f32.mxu0 0.0
        %1252 = vmatmul.mubr.f32.gmra.mrb[0].mxu0 %v1156
        %v1253 = vpop.f32.mrb[0].mxu0
        %v1254 = vadd.f32 %v1141, %v1253
        %v1255 = vpop.f32.mrb[0].mxu0
        %1256 = vmatprep.mubr.f32.mxu0 0.0
        %1257 = vmatmul.mubr.f32.gmra.mrb[0].mxu0 %v1159
        %v1258 = vpop.f32.mrb[0].mxu0
        %v1259 = vadd.f32 %v1141, %v1258
        %v1260 = vpop.f32.mrb[0].mxu0
        %1261 = vmatprep.mubr.f32.mxu0 0.0
        %1262 = vmatmul.mubr.f32.gmra.mrb[0].mxu0 %v1162
        %v1263 = vpop.f32.mrb[0].mxu0
        %v1264 = vadd.f32 %v1141, %v1263
        %v1265 = vpop.f32.mrb[0].mxu0
        %1266 = vmatprep.mubr.f32.mxu0 0.0
        %1267 = vmatmul.mubr.f32.gmra.mrb[0].mxu0 %v1165
        %v1268 = vpop.f32.mrb[0].mxu0
        %v1269 = vadd.f32 %v1141, %v1268
        %v1270 = vpop.f32.mrb[0].mxu0
        %1271 = vdwg.mxu0
        %vm1272 = vcmask 64512
        %1273 = vst.msk [vmem:[#allocation3] sm:$0xff] %vm1272, %v1234
        %1274 = vst.msk [vmem:[#allocation3 + $0x8] sm:$0xff] %vm1272, %v1239
        %1275 = vst.msk [vmem:[#allocation3 + $0x10] sm:$0xff] %vm1272, %v1244
        %1276 = vst.msk [vmem:[#allocation3 + $0x18] sm:$0xff] %vm1272, %v1249
        %1277 = vst.msk [vmem:[#allocation3 + $0x20] sm:$0xff] %vm1272, %v1254
        %1278 = vst.msk [vmem:[#allocation3 + $0x28] sm:$0xff] %vm1272, %v1259
        %1279 = vst.msk [vmem:[#allocation3 + $0x30] sm:$0xff] %vm1272, %v1264
        %1280 = vst.msk [vmem:[#allocation3 + $0x38] sm:$0xff] %vm1272, %v1269
        %s1281 = scalar_lea.vmem %s3, 16
        %v1282 = vld [vmem:[%s1281] sm:$0xff]
        %v1283 = vld [vmem:[%s1281 + $0x8] sm:$0xff]
        %1284 = vmatprep.subr.mxu0 0.0
        %1285 = vmatpush1.msra.mxu0 %v1282
        %1286 = vmatprep.subr.mxu0 0.0
        %1287 = vmatpush1.msra.mxu0 %v1283
        %1288 = vmatprep.subr.mxu0 0.0
        %1289 = vmatpush1.msra.mxu0 0.0
        %1290 = vmatprep.subr.mxu0 0.0
        %1291 = vmatpush1.msra.mxu0 0.0
        %1292 = vmatprep.subr.mxu0 0.0
        %1293 = vmatpush1.msra.mxu0 0.0
        %1294 = vmatprep.subr.mxu0 0.0
        %1295 = vmatpush1.msra.mxu0 0.0
        %1296 = vmatprep.subr.mxu0 0.0
        %1297 = vmatpush1.msra.mxu0 0.0
        %1298 = vmatprep.subr.mxu0 0.0
        %1299 = vmatpush1.msra.mxu0 0.0
        %1300 = vmatprep.subr.mxu0 0.0
        %1301 = vmatpush1.msra.mxu0 0.0
        %1302 = vmatprep.subr.mxu0 0.0
        %1303 = vmatpush1.msra.mxu0 0.0
        %1304 = vmatprep.subr.mxu0 0.0
        %1305 = vmatpush1.msra.mxu0 0.0
        %1306 = vmatprep.subr.mxu0 0.0
        %1307 = vmatpush1.msra.mxu0 0.0
        %1308 = vmatprep.subr.mxu0 0.0
        %1309 = vmatpush1.msra.mxu0 0.0
        %1310 = vmatprep.subr.mxu0 0.0
        %1311 = vmatpush1.msra.mxu0 0.0
        %1312 = vmatprep.subr.mxu0 0.0
        %1313 = vmatpush1.msra.mxu0 0.0
        %1314 = vmatprep.subr.mxu0 0.0
        %1315 = vmatpush1.msra.mxu0 0.0
        %1316 = vmatprep.subr.mxu0 0.0
        %1317 = vmatpush1.msra.mxu0 0.0
        %1318 = vmatprep.subr.mxu0 0.0
        %1319 = vmatpush1.msra.mxu0 0.0
        %1320 = vmatprep.subr.mxu0 0.0
        %1321 = vmatpush1.msra.mxu0 0.0
        %1322 = vmatprep.subr.mxu0 0.0
        %1323 = vmatpush1.msra.mxu0 0.0
        %1324 = vmatprep.subr.mxu0 0.0
        %1325 = vmatpush1.msra.mxu0 0.0
        %1326 = vmatprep.subr.mxu0 0.0
        %1327 = vmatpush1.msra.mxu0 0.0
        %1328 = vmatprep.subr.mxu0 0.0
        %1329 = vmatpush1.msra.mxu0 0.0
        %1330 = vmatprep.subr.mxu0 0.0
        %1331 = vmatpush1.msra.mxu0 0.0
        %1332 = vmatprep.subr.mxu0 0.0
        %1333 = vmatpush1.msra.mxu0 0.0
        %1334 = vmatprep.subr.mxu0 0.0
        %1335 = vmatpush1.msra.mxu0 0.0
        %1336 = vmatprep.subr.mxu0 0.0
        %1337 = vmatpush1.msra.mxu0 0.0
        %1338 = vmatprep.subr.mxu0 0.0
        %1339 = vmatpush1.msra.mxu0 0.0
        %1340 = vmatprep.subr.mxu0 0.0
        %1341 = vmatpush1.msra.mxu0 0.0
        %1342 = vmatprep.subr.mxu0 0.0
        %1343 = vmatpush1.msra.mxu0 0.0
        %1344 = vmatprep.subr.mxu0 0.0
        %1345 = vmatpush1.msra.mxu0 0.0
        %1346 = vmatprep.subr.mxu0 0.0
        %1347 = vmatpush1.msra.mxu0 0.0
        %1348 = vmatprep.mubr.f32.mxu0 0.0
        %1349 = vmatmul.mubr.f32.gmra.mrb[0].mxu0 %v1144
        %v1350 = vpop.f32.mrb[0].mxu0
        %v1351 = vadd.f32 %v1141, %v1350
        %v1352 = vpop.f32.mrb[0].mxu0
        %1353 = vmatprep.mubr.f32.mxu0 0.0
        %1354 = vmatmul.mubr.f32.gmra.mrb[0].mxu0 %v1147
        %v1355 = vpop.f32.mrb[0].mxu0
        %v1356 = vadd.f32 %v1141, %v1355
        %v1357 = vpop.f32.mrb[0].mxu0
        %1358 = vmatprep.mubr.f32.mxu0 0.0
        %1359 = vmatmul.mubr.f32.gmra.mrb[0].mxu0 %v1150
        %v1360 = vpop.f32.mrb[0].mxu0
        %v1361 = vadd.f32 %v1141, %v1360
        %v1362 = vpop.f32.mrb[0].mxu0
        %1363 = vmatprep.mubr.f32.mxu0 0.0
        %1364 = vmatmul.mubr.f32.gmra.mrb[0].mxu0 %v1153
        %v1365 = vpop.f32.mrb[0].mxu0
        %v1366 = vadd.f32 %v1141, %v1365
        %v1367 = vpop.f32.mrb[0].mxu0
        %1368 = vmatprep.mubr.f32.mxu0 0.0
        %1369 = vmatmul.mubr.f32.gmra.mrb[0].mxu0 %v1156
        %v1370 = vpop.f32.mrb[0].mxu0
        %v1371 = vadd.f32 %v1141, %v1370
        %v1372 = vpop.f32.mrb[0].mxu0
        %1373 = vmatprep.mubr.f32.mxu0 0.0
        %1374 = vmatmul.mubr.f32.gmra.mrb[0].mxu0 %v1159
        %v1375 = vpop.f32.mrb[0].mxu0
        %v1376 = vadd.f32 %v1141, %v1375
        %v1377 = vpop.f32.mrb[0].mxu0
        %1378 = vmatprep.mubr.f32.mxu0 0.0
        %1379 = vmatmul.mubr.f32.gmra.mrb[0].mxu0 %v1162
        %v1380 = vpop.f32.mrb[0].mxu0
        %v1381 = vadd.f32 %v1141, %v1380
        %v1382 = vpop.f32.mrb[0].mxu0
        %1383 = vmatprep.mubr.f32.mxu0 0.0
        %1384 = vmatmul.mubr.f32.gmra.mrb[0].mxu0 %v1165
        %v1385 = vpop.f32.mrb[0].mxu0
        %v1386 = vadd.f32 %v1141, %v1385
        %v1387 = vpop.f32.mrb[0].mxu0
        %1388 = vdwg.mxu0
        %1389 = vst.msk [vmem:[#allocation3 + $0x40] sm:$0xff] %vm1272, %v1351
        %1390 = vst.msk [vmem:[#allocation3 + $0x48] sm:$0xff] %vm1272, %v1356
        %1391 = vst.msk [vmem:[#allocation3 + $0x50] sm:$0xff] %vm1272, %v1361
        %1392 = vst.msk [vmem:[#allocation3 + $0x58] sm:$0xff] %vm1272, %v1366
        %1393 = vst.msk [vmem:[#allocation3 + $0x60] sm:$0xff] %vm1272, %v1371
        %1394 = vst.msk [vmem:[#allocation3 + $0x68] sm:$0xff] %vm1272, %v1376
        %1395 = vst.msk [vmem:[#allocation3 + $0x70] sm:$0xff] %vm1272, %v1381
        %1396 = vst.msk [vmem:[#allocation3 + $0x78] sm:$0xff] %vm1272, %v1386
        %s1397 = scalar_lea.vmem %s3, 32
        %v1398 = vld [vmem:[%s1397] sm:$0xff]
        %v1399 = vld [vmem:[%s1397 + $0x8] sm:$0xff]
        %1400 = vmatprep.subr.mxu0 0.0
        %1401 = vmatpush1.msra.mxu0 %v1398
        %1402 = vmatprep.subr.mxu0 0.0
        %1403 = vmatpush1.msra.mxu0 %v1399
        %1404 = vmatprep.subr.mxu0 0.0
        %1405 = vmatpush1.msra.mxu0 0.0
        %1406 = vmatprep.subr.mxu0 0.0
        %1407 = vmatpush1.msra.mxu0 0.0
        %1408 = vmatprep.subr.mxu0 0.0
        %1409 = vmatpush1.msra.mxu0 0.0
        %1410 = vmatprep.subr.mxu0 0.0
        %1411 = vmatpush1.msra.mxu0 0.0
        %1412 = vmatprep.subr.mxu0 0.0
        %1413 = vmatpush1.msra.mxu0 0.0
        %1414 = vmatprep.subr.mxu0 0.0
        %1415 = vmatpush1.msra.mxu0 0.0
        %1416 = vmatprep.subr.mxu0 0.0
        %1417 = vmatpush1.msra.mxu0 0.0
        %1418 = vmatprep.subr.mxu0 0.0
        %1419 = vmatpush1.msra.mxu0 0.0
        %1420 = vmatprep.subr.mxu0 0.0
        %1421 = vmatpush1.msra.mxu0 0.0
        %1422 = vmatprep.subr.mxu0 0.0
        %1423 = vmatpush1.msra.mxu0 0.0
        %1424 = vmatprep.subr.mxu0 0.0
        %1425 = vmatpush1.msra.mxu0 0.0
        %1426 = vmatprep.subr.mxu0 0.0
        %1427 = vmatpush1.msra.mxu0 0.0
        %1428 = vmatprep.subr.mxu0 0.0
        %1429 = vmatpush1.msra.mxu0 0.0
        %1430 = vmatprep.subr.mxu0 0.0
        %1431 = vmatpush1.msra.mxu0 0.0
        %1432 = vmatprep.subr.mxu0 0.0
        %1433 = vmatpush1.msra.mxu0 0.0
        %1434 = vmatprep.subr.mxu0 0.0
        %1435 = vmatpush1.msra.mxu0 0.0
        %1436 = vmatprep.subr.mxu0 0.0
        %1437 = vmatpush1.msra.mxu0 0.0
        %1438 = vmatprep.subr.mxu0 0.0
        %1439 = vmatpush1.msra.mxu0 0.0
        %1440 = vmatprep.subr.mxu0 0.0
        %1441 = vmatpush1.msra.mxu0 0.0
        %1442 = vmatprep.subr.mxu0 0.0
        %1443 = vmatpush1.msra.mxu0 0.0
        %1444 = vmatprep.subr.mxu0 0.0
        %1445 = vmatpush1.msra.mxu0 0.0
        %1446 = vmatprep.subr.mxu0 0.0
        %1447 = vmatpush1.msra.mxu0 0.0
        %1448 = vmatprep.subr.mxu0 0.0
        %1449 = vmatpush1.msra.mxu0 0.0
        %1450 = vmatprep.subr.mxu0 0.0
        %1451 = vmatpush1.msra.mxu0 0.0
        %1452 = vmatprep.subr.mxu0 0.0
        %1453 = vmatpush1.msra.mxu0 0.0
        %1454 = vmatprep.subr.mxu0 0.0
        %1455 = vmatpush1.msra.mxu0 0.0
        %1456 = vmatprep.subr.mxu0 0.0
        %1457 = vmatpush1.msra.mxu0 0.0
        %1458 = vmatprep.subr.mxu0 0.0
        %1459 = vmatpush1.msra.mxu0 0.0
        %1460 = vmatprep.subr.mxu0 0.0
        %1461 = vmatpush1.msra.mxu0 0.0
        %1462 = vmatprep.subr.mxu0 0.0
        %1463 = vmatpush1.msra.mxu0 0.0
        %1464 = vmatprep.mubr.f32.mxu0 0.0
        %1465 = vmatmul.mubr.f32.gmra.mrb[0].mxu0 %v1144
        %v1466 = vpop.f32.mrb[0].mxu0
        %v1467 = vadd.f32 %v1141, %v1466
        %v1468 = vpop.f32.mrb[0].mxu0
        %1469 = vmatprep.mubr.f32.mxu0 0.0
        %1470 = vmatmul.mubr.f32.gmra.mrb[0].mxu0 %v1147
        %v1471 = vpop.f32.mrb[0].mxu0
        %v1472 = vadd.f32 %v1141, %v1471
        %v1473 = vpop.f32.mrb[0].mxu0
        %1474 = vmatprep.mubr.f32.mxu0 0.0
        %1475 = vmatmul.mubr.f32.gmra.mrb[0].mxu0 %v1150
        %v1476 = vpop.f32.mrb[0].mxu0
        %v1477 = vadd.f32 %v1141, %v1476
        %v1478 = vpop.f32.mrb[0].mxu0
        %1479 = vmatprep.mubr.f32.mxu0 0.0
        %1480 = vmatmul.mubr.f32.gmra.mrb[0].mxu0 %v1153
        %v1481 = vpop.f32.mrb[0].mxu0
        %v1482 = vadd.f32 %v1141, %v1481
        %v1483 = vpop.f32.mrb[0].mxu0
        %1484 = vmatprep.mubr.f32.mxu0 0.0
        %1485 = vmatmul.mubr.f32.gmra.mrb[0].mxu0 %v1156
        %v1486 = vpop.f32.mrb[0].mxu0
        %v1487 = vadd.f32 %v1141, %v1486
        %v1488 = vpop.f32.mrb[0].mxu0
        %1489 = vmatprep.mubr.f32.mxu0 0.0
        %1490 = vmatmul.mubr.f32.gmra.mrb[0].mxu0 %v1159
        %v1491 = vpop.f32.mrb[0].mxu0
        %v1492 = vadd.f32 %v1141, %v1491
        %v1493 = vpop.f32.mrb[0].mxu0
        %1494 = vmatprep.mubr.f32.mxu0 0.0
        %1495 = vmatmul.mubr.f32.gmra.mrb[0].mxu0 %v1162
        %v1496 = vpop.f32.mrb[0].mxu0
        %v1497 = vadd.f32 %v1141, %v1496
        %v1498 = vpop.f32.mrb[0].mxu0
        %1499 = vmatprep.mubr.f32.mxu0 0.0
        %1500 = vmatmul.mubr.f32.gmra.mrb[0].mxu0 %v1165
        %v1501 = vpop.f32.mrb[0].mxu0
        %v1502 = vadd.f32 %v1141, %v1501
        %v1503 = vpop.f32.mrb[0].mxu0
        %1504 = vdwg.mxu0
        %1505 = vst.msk [vmem:[#allocation3 + $0x80] sm:$0xff] %vm1272, %v1467
        %1506 = vst.msk [vmem:[#allocation3 + $0x88] sm:$0xff] %vm1272, %v1472
        %1507 = vst.msk [vmem:[#allocation3 + $0x90] sm:$0xff] %vm1272, %v1477
        %1508 = vst.msk [vmem:[#allocation3 + $0x98] sm:$0xff] %vm1272, %v1482
        %1509 = vst.msk [vmem:[#allocation3 + $0xa0] sm:$0xff] %vm1272, %v1487
        %1510 = vst.msk [vmem:[#allocation3 + $0xa8] sm:$0xff] %vm1272, %v1492
        %1511 = vst.msk [vmem:[#allocation3 + $0xb0] sm:$0xff] %vm1272, %v1497
        %1512 = vst.msk [vmem:[#allocation3 + $0xb8] sm:$0xff] %vm1272, %v1502
        %s1513 = scalar_lea.vmem %s3, 48
        %v1514 = vld [vmem:[%s1513] sm:$0xff]
        %v1515 = vld [vmem:[%s1513 + $0x8] sm:$0xff]
        %1516 = vmatprep.subr.mxu0 0.0
        %1517 = vmatpush1.msra.mxu0 %v1514
        %1518 = vmatprep.subr.mxu0 0.0
        %1519 = vmatpush1.msra.mxu0 %v1515
        %1520 = vmatprep.subr.mxu0 0.0
        %1521 = vmatpush1.msra.mxu0 0.0
        %1522 = vmatprep.subr.mxu0 0.0
        %1523 = vmatpush1.msra.mxu0 0.0
        %1524 = vmatprep.subr.mxu0 0.0
        %1525 = vmatpush1.msra.mxu0 0.0
        %1526 = vmatprep.subr.mxu0 0.0
        %1527 = vmatpush1.msra.mxu0 0.0
        %1528 = vmatprep.subr.mxu0 0.0
        %1529 = vmatpush1.msra.mxu0 0.0
        %1530 = vmatprep.subr.mxu0 0.0
        %1531 = vmatpush1.msra.mxu0 0.0
        %1532 = vmatprep.subr.mxu0 0.0
        %1533 = vmatpush1.msra.mxu0 0.0
        %1534 = vmatprep.subr.mxu0 0.0
        %1535 = vmatpush1.msra.mxu0 0.0
        %1536 = vmatprep.subr.mxu0 0.0
        %1537 = vmatpush1.msra.mxu0 0.0
        %1538 = vmatprep.subr.mxu0 0.0
        %1539 = vmatpush1.msra.mxu0 0.0
        %1540 = vmatprep.subr.mxu0 0.0
        %1541 = vmatpush1.msra.mxu0 0.0
        %1542 = vmatprep.subr.mxu0 0.0
        %1543 = vmatpush1.msra.mxu0 0.0
        %1544 = vmatprep.subr.mxu0 0.0
        %1545 = vmatpush1.msra.mxu0 0.0
        %1546 = vmatprep.subr.mxu0 0.0
        %1547 = vmatpush1.msra.mxu0 0.0
        %1548 = vmatprep.subr.mxu0 0.0
        %1549 = vmatpush1.msra.mxu0 0.0
        %1550 = vmatprep.subr.mxu0 0.0
        %1551 = vmatpush1.msra.mxu0 0.0
        %1552 = vmatprep.subr.mxu0 0.0
        %1553 = vmatpush1.msra.mxu0 0.0
        %1554 = vmatprep.subr.mxu0 0.0
        %1555 = vmatpush1.msra.mxu0 0.0
        %1556 = vmatprep.subr.mxu0 0.0
        %1557 = vmatpush1.msra.mxu0 0.0
        %1558 = vmatprep.subr.mxu0 0.0
        %1559 = vmatpush1.msra.mxu0 0.0
        %1560 = vmatprep.subr.mxu0 0.0
        %1561 = vmatpush1.msra.mxu0 0.0
        %1562 = vmatprep.subr.mxu0 0.0
        %1563 = vmatpush1.msra.mxu0 0.0
        %1564 = vmatprep.subr.mxu0 0.0
        %1565 = vmatpush1.msra.mxu0 0.0
        %1566 = vmatprep.subr.mxu0 0.0
        %1567 = vmatpush1.msra.mxu0 0.0
        %1568 = vmatprep.subr.mxu0 0.0
        %1569 = vmatpush1.msra.mxu0 0.0
        %1570 = vmatprep.subr.mxu0 0.0
        %1571 = vmatpush1.msra.mxu0 0.0
        %1572 = vmatprep.subr.mxu0 0.0
        %1573 = vmatpush1.msra.mxu0 0.0
        %1574 = vmatprep.subr.mxu0 0.0
        %1575 = vmatpush1.msra.mxu0 0.0
        %1576 = vmatprep.subr.mxu0 0.0
        %1577 = vmatpush1.msra.mxu0 0.0
        %1578 = vmatprep.subr.mxu0 0.0
        %1579 = vmatpush1.msra.mxu0 0.0
        %1580 = vmatprep.mubr.f32.mxu0 0.0
        %1581 = vmatmul.mubr.f32.gmra.mrb[0].mxu0 %v1144
        %v1582 = vpop.f32.mrb[0].mxu0
        %v1583 = vadd.f32 %v1141, %v1582
        %v1584 = vpop.f32.mrb[0].mxu0
        %1585 = vmatprep.mubr.f32.mxu0 0.0
        %1586 = vmatmul.mubr.f32.gmra.mrb[0].mxu0 %v1147
        %v1587 = vpop.f32.mrb[0].mxu0
        %v1588 = vadd.f32 %v1141, %v1587
        %v1589 = vpop.f32.mrb[0].mxu0
        %1590 = vmatprep.mubr.f32.mxu0 0.0
        %1591 = vmatmul.mubr.f32.gmra.mrb[0].mxu0 %v1150
        %v1592 = vpop.f32.mrb[0].mxu0
        %v1593 = vadd.f32 %v1141, %v1592
        %v1594 = vpop.f32.mrb[0].mxu0
        %1595 = vmatprep.mubr.f32.mxu0 0.0
        %1596 = vmatmul.mubr.f32.gmra.mrb[0].mxu0 %v1153
        %v1597 = vpop.f32.mrb[0].mxu0
        %v1598 = vadd.f32 %v1141, %v1597
        %v1599 = vpop.f32.mrb[0].mxu0
        %1600 = vmatprep.mubr.f32.mxu0 0.0
        %1601 = vmatmul.mubr.f32.gmra.mrb[0].mxu0 %v1156
        %v1602 = vpop.f32.mrb[0].mxu0
        %v1603 = vadd.f32 %v1141, %v1602
        %v1604 = vpop.f32.mrb[0].mxu0
        %1605 = vmatprep.mubr.f32.mxu0 0.0
        %1606 = vmatmul.mubr.f32.gmra.mrb[0].mxu0 %v1159
        %v1607 = vpop.f32.mrb[0].mxu0
        %v1608 = vadd.f32 %v1141, %v1607
        %v1609 = vpop.f32.mrb[0].mxu0
        %1610 = vmatprep.mubr.f32.mxu0 0.0
        %1611 = vmatmul.mubr.f32.gmra.mrb[0].mxu0 %v1162
        %v1612 = vpop.f32.mrb[0].mxu0
        %v1613 = vadd.f32 %v1141, %v1612
        %v1614 = vpop.f32.mrb[0].mxu0
        %1615 = vmatprep.mubr.f32.mxu0 0.0
        %1616 = vmatmul.mubr.f32.gmra.mrb[0].mxu0 %v1165
        %v1617 = vpop.f32.mrb[0].mxu0
        %v1618 = vadd.f32 %v1141, %v1617
        %v1619 = vpop.f32.mrb[0].mxu0
        %1620 = vdwg.mxu0
        %1621 = vst.msk [vmem:[#allocation3 + $0xc0] sm:$0xff] %vm1272, %v1583
        %1622 = vst.msk [vmem:[#allocation3 + $0xc8] sm:$0xff] %vm1272, %v1588
        %1623 = vst.msk [vmem:[#allocation3 + $0xd0] sm:$0xff] %vm1272, %v1593
        %1624 = vst.msk [vmem:[#allocation3 + $0xd8] sm:$0xff] %vm1272, %v1598
        %1625 = vst.msk [vmem:[#allocation3 + $0xe0] sm:$0xff] %vm1272, %v1603
        %1626 = vst.msk [vmem:[#allocation3 + $0xe8] sm:$0xff] %vm1272, %v1608
        %1627 = vst.msk [vmem:[#allocation3 + $0xf0] sm:$0xff] %vm1272, %v1613
        %1628 = vst.msk [vmem:[#allocation3 + $0xf8] sm:$0xff] %vm1272, %v1618
        %s1629 = scalar_lea.vmem %s3, 64
        %v1630 = vld [vmem:[%s1629] sm:$0xff]
        %v1631 = vld [vmem:[%s1629 + $0x8] sm:$0xff]
        %1632 = vmatprep.subr.mxu0 0.0
        %1633 = vmatpush1.msra.mxu0 %v1630
        %1634 = vmatprep.subr.mxu0 0.0
        %1635 = vmatpush1.msra.mxu0 %v1631
        %1636 = vmatprep.subr.mxu0 0.0
        %1637 = vmatpush1.msra.mxu0 0.0
        %1638 = vmatprep.subr.mxu0 0.0
        %1639 = vmatpush1.msra.mxu0 0.0
        %1640 = vmatprep.subr.mxu0 0.0
        %1641 = vmatpush1.msra.mxu0 0.0
        %1642 = vmatprep.subr.mxu0 0.0
        %1643 = vmatpush1.msra.mxu0 0.0
        %1644 = vmatprep.subr.mxu0 0.0
        %1645 = vmatpush1.msra.mxu0 0.0
        %1646 = vmatprep.subr.mxu0 0.0
        %1647 = vmatpush1.msra.mxu0 0.0
        %1648 = vmatprep.subr.mxu0 0.0
        %1649 = vmatpush1.msra.mxu0 0.0
        %1650 = vmatprep.subr.mxu0 0.0
        %1651 = vmatpush1.msra.mxu0 0.0
        %1652 = vmatprep.subr.mxu0 0.0
        %1653 = vmatpush1.msra.mxu0 0.0
        %1654 = vmatprep.subr.mxu0 0.0
        %1655 = vmatpush1.msra.mxu0 0.0
        %1656 = vmatprep.subr.mxu0 0.0
        %1657 = vmatpush1.msra.mxu0 0.0
        %1658 = vmatprep.subr.mxu0 0.0
        %1659 = vmatpush1.msra.mxu0 0.0
        %1660 = vmatprep.subr.mxu0 0.0
        %1661 = vmatpush1.msra.mxu0 0.0
        %1662 = vmatprep.subr.mxu0 0.0
        %1663 = vmatpush1.msra.mxu0 0.0
        %1664 = vmatprep.subr.mxu0 0.0
        %1665 = vmatpush1.msra.mxu0 0.0
        %1666 = vmatprep.subr.mxu0 0.0
        %1667 = vmatpush1.msra.mxu0 0.0
        %1668 = vmatprep.subr.mxu0 0.0
        %1669 = vmatpush1.msra.mxu0 0.0
        %1670 = vmatprep.subr.mxu0 0.0
        %1671 = vmatpush1.msra.mxu0 0.0
        %1672 = vmatprep.subr.mxu0 0.0
        %1673 = vmatpush1.msra.mxu0 0.0
        %1674 = vmatprep.subr.mxu0 0.0
        %1675 = vmatpush1.msra.mxu0 0.0
        %1676 = vmatprep.subr.mxu0 0.0
        %1677 = vmatpush1.msra.mxu0 0.0
        %1678 = vmatprep.subr.mxu0 0.0
        %1679 = vmatpush1.msra.mxu0 0.0
        %1680 = vmatprep.subr.mxu0 0.0
        %1681 = vmatpush1.msra.mxu0 0.0
        %1682 = vmatprep.subr.mxu0 0.0
        %1683 = vmatpush1.msra.mxu0 0.0
        %1684 = vmatprep.subr.mxu0 0.0
        %1685 = vmatpush1.msra.mxu0 0.0
        %1686 = vmatprep.subr.mxu0 0.0
        %1687 = vmatpush1.msra.mxu0 0.0
        %1688 = vmatprep.subr.mxu0 0.0
        %1689 = vmatpush1.msra.mxu0 0.0
        %1690 = vmatprep.subr.mxu0 0.0
        %1691 = vmatpush1.msra.mxu0 0.0
        %1692 = vmatprep.subr.mxu0 0.0
        %1693 = vmatpush1.msra.mxu0 0.0
        %1694 = vmatprep.subr.mxu0 0.0
        %1695 = vmatpush1.msra.mxu0 0.0
        %1696 = vmatprep.mubr.f32.mxu0 0.0
        %1697 = vmatmul.mubr.f32.gmra.mrb[0].mxu0 %v1144
        %v1698 = vpop.f32.mrb[0].mxu0
        %v1699 = vadd.f32 %v1141, %v1698
        %v1700 = vpop.f32.mrb[0].mxu0
        %1701 = vmatprep.mubr.f32.mxu0 0.0
        %1702 = vmatmul.mubr.f32.gmra.mrb[0].mxu0 %v1147
        %v1703 = vpop.f32.mrb[0].mxu0
        %v1704 = vadd.f32 %v1141, %v1703
        %v1705 = vpop.f32.mrb[0].mxu0
        %1706 = vmatprep.mubr.f32.mxu0 0.0
        %1707 = vmatmul.mubr.f32.gmra.mrb[0].mxu0 %v1150
        %v1708 = vpop.f32.mrb[0].mxu0
        %v1709 = vadd.f32 %v1141, %v1708
        %v1710 = vpop.f32.mrb[0].mxu0
        %1711 = vmatprep.mubr.f32.mxu0 0.0
        %1712 = vmatmul.mubr.f32.gmra.mrb[0].mxu0 %v1153
        %v1713 = vpop.f32.mrb[0].mxu0
        %v1714 = vadd.f32 %v1141, %v1713
        %v1715 = vpop.f32.mrb[0].mxu0
        %1716 = vmatprep.mubr.f32.mxu0 0.0
        %1717 = vmatmul.mubr.f32.gmra.mrb[0].mxu0 %v1156
        %v1718 = vpop.f32.mrb[0].mxu0
        %v1719 = vadd.f32 %v1141, %v1718
        %v1720 = vpop.f32.mrb[0].mxu0
        %1721 = vmatprep.mubr.f32.mxu0 0.0
        %1722 = vmatmul.mubr.f32.gmra.mrb[0].mxu0 %v1159
        %v1723 = vpop.f32.mrb[0].mxu0
        %v1724 = vadd.f32 %v1141, %v1723
        %v1725 = vpop.f32.mrb[0].mxu0
        %1726 = vmatprep.mubr.f32.mxu0 0.0
        %1727 = vmatmul.mubr.f32.gmra.mrb[0].mxu0 %v1162
        %v1728 = vpop.f32.mrb[0].mxu0
        %v1729 = vadd.f32 %v1141, %v1728
        %v1730 = vpop.f32.mrb[0].mxu0
        %1731 = vmatprep.mubr.f32.mxu0 0.0
        %1732 = vmatmul.mubr.f32.gmra.mrb[0].mxu0 %v1165
        %v1733 = vpop.f32.mrb[0].mxu0
        %v1734 = vadd.f32 %v1141, %v1733
        %v1735 = vpop.f32.mrb[0].mxu0
        %1736 = vdwg.mxu0
        %1737 = vst.msk [vmem:[#allocation3 + $0x100] sm:$0xff] %vm1272, %v1699
        %1738 = vst.msk [vmem:[#allocation3 + $0x108] sm:$0xff] %vm1272, %v1704
        %1739 = vst.msk [vmem:[#allocation3 + $0x110] sm:$0xff] %vm1272, %v1709
        %1740 = vst.msk [vmem:[#allocation3 + $0x118] sm:$0xff] %vm1272, %v1714
        %1741 = vst.msk [vmem:[#allocation3 + $0x120] sm:$0xff] %vm1272, %v1719
        %1742 = vst.msk [vmem:[#allocation3 + $0x128] sm:$0xff] %vm1272, %v1724
        %1743 = vst.msk [vmem:[#allocation3 + $0x130] sm:$0xff] %vm1272, %v1729
        %1744 = vst.msk [vmem:[#allocation3 + $0x138] sm:$0xff] %vm1272, %v1734
        %s1745 = scalar_lea.vmem %s3, 80
        %v1746 = vld [vmem:[%s1745] sm:$0xff]
        %v1747 = vld [vmem:[%s1745 + $0x8] sm:$0xff]
        %1748 = vmatprep.subr.mxu0 0.0
        %1749 = vmatpush1.msra.mxu0 %v1746
        %1750 = vmatprep.subr.mxu0 0.0
        %1751 = vmatpush1.msra.mxu0 %v1747
        %1752 = vmatprep.subr.mxu0 0.0
        %1753 = vmatpush1.msra.mxu0 0.0
        %1754 = vmatprep.subr.mxu0 0.0
        %1755 = vmatpush1.msra.mxu0 0.0
        %1756 = vmatprep.subr.mxu0 0.0
        %1757 = vmatpush1.msra.mxu0 0.0
        %1758 = vmatprep.subr.mxu0 0.0
        %1759 = vmatpush1.msra.mxu0 0.0
        %1760 = vmatprep.subr.mxu0 0.0
        %1761 = vmatpush1.msra.mxu0 0.0
        %1762 = vmatprep.subr.mxu0 0.0
        %1763 = vmatpush1.msra.mxu0 0.0
        %1764 = vmatprep.subr.mxu0 0.0
        %1765 = vmatpush1.msra.mxu0 0.0
        %1766 = vmatprep.subr.mxu0 0.0
        %1767 = vmatpush1.msra.mxu0 0.0
        %1768 = vmatprep.subr.mxu0 0.0
        %1769 = vmatpush1.msra.mxu0 0.0
        %1770 = vmatprep.subr.mxu0 0.0
        %1771 = vmatpush1.msra.mxu0 0.0
        %1772 = vmatprep.subr.mxu0 0.0
        %1773 = vmatpush1.msra.mxu0 0.0
        %1774 = vmatprep.subr.mxu0 0.0
        %1775 = vmatpush1.msra.mxu0 0.0
        %1776 = vmatprep.subr.mxu0 0.0
        %1777 = vmatpush1.msra.mxu0 0.0
        %1778 = vmatprep.subr.mxu0 0.0
        %1779 = vmatpush1.msra.mxu0 0.0
        %1780 = vmatprep.subr.mxu0 0.0
        %1781 = vmatpush1.msra.mxu0 0.0
        %1782 = vmatprep.subr.mxu0 0.0
        %1783 = vmatpush1.msra.mxu0 0.0
        %1784 = vmatprep.subr.mxu0 0.0
        %1785 = vmatpush1.msra.mxu0 0.0
        %1786 = vmatprep.subr.mxu0 0.0
        %1787 = vmatpush1.msra.mxu0 0.0
        %1788 = vmatprep.subr.mxu0 0.0
        %1789 = vmatpush1.msra.mxu0 0.0
        %1790 = vmatprep.subr.mxu0 0.0
        %1791 = vmatpush1.msra.mxu0 0.0
        %1792 = vmatprep.subr.mxu0 0.0
        %1793 = vmatpush1.msra.mxu0 0.0
        %1794 = vmatprep.subr.mxu0 0.0
        %1795 = vmatpush1.msra.mxu0 0.0
        %1796 = vmatprep.subr.mxu0 0.0
        %1797 = vmatpush1.msra.mxu0 0.0
        %1798 = vmatprep.subr.mxu0 0.0
        %1799 = vmatpush1.msra.mxu0 0.0
        %1800 = vmatprep.subr.mxu0 0.0
        %1801 = vmatpush1.msra.mxu0 0.0
        %1802 = vmatprep.subr.mxu0 0.0
        %1803 = vmatpush1.msra.mxu0 0.0
        %1804 = vmatprep.subr.mxu0 0.0
        %1805 = vmatpush1.msra.mxu0 0.0
        %1806 = vmatprep.subr.mxu0 0.0
        %1807 = vmatpush1.msra.mxu0 0.0
        %1808 = vmatprep.subr.mxu0 0.0
        %1809 = vmatpush1.msra.mxu0 0.0
        %1810 = vmatprep.subr.mxu0 0.0
        %1811 = vmatpush1.msra.mxu0 0.0
        %1812 = vmatprep.mubr.f32.mxu0 0.0
        %1813 = vmatmul.mubr.f32.gmra.mrb[0].mxu0 %v1144
        %v1814 = vpop.f32.mrb[0].mxu0
        %v1815 = vadd.f32 %v1141, %v1814
        %v1816 = vpop.f32.mrb[0].mxu0
        %1817 = vmatprep.mubr.f32.mxu0 0.0
        %1818 = vmatmul.mubr.f32.gmra.mrb[0].mxu0 %v1147
        %v1819 = vpop.f32.mrb[0].mxu0
        %v1820 = vadd.f32 %v1141, %v1819
        %v1821 = vpop.f32.mrb[0].mxu0
        %1822 = vmatprep.mubr.f32.mxu0 0.0
        %1823 = vmatmul.mubr.f32.gmra.mrb[0].mxu0 %v1150
        %v1824 = vpop.f32.mrb[0].mxu0
        %v1825 = vadd.f32 %v1141, %v1824
        %v1826 = vpop.f32.mrb[0].mxu0
        %1827 = vmatprep.mubr.f32.mxu0 0.0
        %1828 = vmatmul.mubr.f32.gmra.mrb[0].mxu0 %v1153
        %v1829 = vpop.f32.mrb[0].mxu0
        %v1830 = vadd.f32 %v1141, %v1829
        %v1831 = vpop.f32.mrb[0].mxu0
        %1832 = vmatprep.mubr.f32.mxu0 0.0
        %1833 = vmatmul.mubr.f32.gmra.mrb[0].mxu0 %v1156
        %v1834 = vpop.f32.mrb[0].mxu0
        %v1835 = vadd.f32 %v1141, %v1834
        %v1836 = vpop.f32.mrb[0].mxu0
        %1837 = vmatprep.mubr.f32.mxu0 0.0
        %1838 = vmatmul.mubr.f32.gmra.mrb[0].mxu0 %v1159
        %v1839 = vpop.f32.mrb[0].mxu0
        %v1840 = vadd.f32 %v1141, %v1839
        %v1841 = vpop.f32.mrb[0].mxu0
        %1842 = vmatprep.mubr.f32.mxu0 0.0
        %1843 = vmatmul.mubr.f32.gmra.mrb[0].mxu0 %v1162
        %v1844 = vpop.f32.mrb[0].mxu0
        %v1845 = vadd.f32 %v1141, %v1844
        %v1846 = vpop.f32.mrb[0].mxu0
        %1847 = vmatprep.mubr.f32.mxu0 0.0
        %1848 = vmatmul.mubr.f32.gmra.mrb[0].mxu0 %v1165
        %v1849 = vpop.f32.mrb[0].mxu0
        %v1850 = vadd.f32 %v1141, %v1849
        %v1851 = vpop.f32.mrb[0].mxu0
        %1852 = vdwg.mxu0
        %1853 = vst.msk [vmem:[#allocation3 + $0x140] sm:$0xff] %vm1272, %v1815
        %1854 = vst.msk [vmem:[#allocation3 + $0x148] sm:$0xff] %vm1272, %v1820
        %1855 = vst.msk [vmem:[#allocation3 + $0x150] sm:$0xff] %vm1272, %v1825
        %1856 = vst.msk [vmem:[#allocation3 + $0x158] sm:$0xff] %vm1272, %v1830
        %1857 = vst.msk [vmem:[#allocation3 + $0x160] sm:$0xff] %vm1272, %v1835
        %1858 = vst.msk [vmem:[#allocation3 + $0x168] sm:$0xff] %vm1272, %v1840
        %1859 = vst.msk [vmem:[#allocation3 + $0x170] sm:$0xff] %vm1272, %v1845
        %1860 = vst.msk [vmem:[#allocation3 + $0x178] sm:$0xff] %vm1272, %v1850
        %s1861 = scalar_lea.vmem %s3, 96
        %v1862 = vld [vmem:[%s1861] sm:$0xff]
        %v1863 = vld [vmem:[%s1861 + $0x8] sm:$0xff]
        %1864 = vmatprep.subr.mxu0 0.0
        %1865 = vmatpush1.msra.mxu0 %v1862
        %1866 = vmatprep.subr.mxu0 0.0
        %1867 = vmatpush1.msra.mxu0 %v1863
        %1868 = vmatprep.subr.mxu0 0.0
        %1869 = vmatpush1.msra.mxu0 0.0
        %1870 = vmatprep.subr.mxu0 0.0
        %1871 = vmatpush1.msra.mxu0 0.0
        %1872 = vmatprep.subr.mxu0 0.0
        %1873 = vmatpush1.msra.mxu0 0.0
        %1874 = vmatprep.subr.mxu0 0.0
        %1875 = vmatpush1.msra.mxu0 0.0
        %1876 = vmatprep.subr.mxu0 0.0
        %1877 = vmatpush1.msra.mxu0 0.0
        %1878 = vmatprep.subr.mxu0 0.0
        %1879 = vmatpush1.msra.mxu0 0.0
        %1880 = vmatprep.subr.mxu0 0.0
        %1881 = vmatpush1.msra.mxu0 0.0
        %1882 = vmatprep.subr.mxu0 0.0
        %1883 = vmatpush1.msra.mxu0 0.0
        %1884 = vmatprep.subr.mxu0 0.0
        %1885 = vmatpush1.msra.mxu0 0.0
        %1886 = vmatprep.subr.mxu0 0.0
        %1887 = vmatpush1.msra.mxu0 0.0
        %1888 = vmatprep.subr.mxu0 0.0
        %1889 = vmatpush1.msra.mxu0 0.0
        %1890 = vmatprep.subr.mxu0 0.0
        %1891 = vmatpush1.msra.mxu0 0.0
        %1892 = vmatprep.subr.mxu0 0.0
        %1893 = vmatpush1.msra.mxu0 0.0
        %1894 = vmatprep.subr.mxu0 0.0
        %1895 = vmatpush1.msra.mxu0 0.0
        %1896 = vmatprep.subr.mxu0 0.0
        %1897 = vmatpush1.msra.mxu0 0.0
        %1898 = vmatprep.subr.mxu0 0.0
        %1899 = vmatpush1.msra.mxu0 0.0
        %1900 = vmatprep.subr.mxu0 0.0
        %1901 = vmatpush1.msra.mxu0 0.0
        %1902 = vmatprep.subr.mxu0 0.0
        %1903 = vmatpush1.msra.mxu0 0.0
        %1904 = vmatprep.subr.mxu0 0.0
        %1905 = vmatpush1.msra.mxu0 0.0
        %1906 = vmatprep.subr.mxu0 0.0
        %1907 = vmatpush1.msra.mxu0 0.0
        %1908 = vmatprep.subr.mxu0 0.0
        %1909 = vmatpush1.msra.mxu0 0.0
        %1910 = vmatprep.subr.mxu0 0.0
        %1911 = vmatpush1.msra.mxu0 0.0
        %1912 = vmatprep.subr.mxu0 0.0
        %1913 = vmatpush1.msra.mxu0 0.0
        %1914 = vmatprep.subr.mxu0 0.0
        %1915 = vmatpush1.msra.mxu0 0.0
        %1916 = vmatprep.subr.mxu0 0.0
        %1917 = vmatpush1.msra.mxu0 0.0
        %1918 = vmatprep.subr.mxu0 0.0
        %1919 = vmatpush1.msra.mxu0 0.0
        %1920 = vmatprep.subr.mxu0 0.0
        %1921 = vmatpush1.msra.mxu0 0.0
        %1922 = vmatprep.subr.mxu0 0.0
        %1923 = vmatpush1.msra.mxu0 0.0
        %1924 = vmatprep.subr.mxu0 0.0
        %1925 = vmatpush1.msra.mxu0 0.0
        %1926 = vmatprep.subr.mxu0 0.0
        %1927 = vmatpush1.msra.mxu0 0.0
        %1928 = vmatprep.mubr.f32.mxu0 0.0
        %1929 = vmatmul.mubr.f32.gmra.mrb[0].mxu0 %v1144
        %v1930 = vpop.f32.mrb[0].mxu0
        %v1931 = vadd.f32 %v1141, %v1930
        %v1932 = vpop.f32.mrb[0].mxu0
        %1933 = vmatprep.mubr.f32.mxu0 0.0
        %1934 = vmatmul.mubr.f32.gmra.mrb[0].mxu0 %v1147
        %v1935 = vpop.f32.mrb[0].mxu0
        %v1936 = vadd.f32 %v1141, %v1935
        %v1937 = vpop.f32.mrb[0].mxu0
        %1938 = vmatprep.mubr.f32.mxu0 0.0
        %1939 = vmatmul.mubr.f32.gmra.mrb[0].mxu0 %v1150
        %v1940 = vpop.f32.mrb[0].mxu0
        %v1941 = vadd.f32 %v1141, %v1940
        %v1942 = vpop.f32.mrb[0].mxu0
        %1943 = vmatprep.mubr.f32.mxu0 0.0
        %1944 = vmatmul.mubr.f32.gmra.mrb[0].mxu0 %v1153
        %v1945 = vpop.f32.mrb[0].mxu0
        %v1946 = vadd.f32 %v1141, %v1945
        %v1947 = vpop.f32.mrb[0].mxu0
        %1948 = vmatprep.mubr.f32.mxu0 0.0
        %1949 = vmatmul.mubr.f32.gmra.mrb[0].mxu0 %v1156
        %v1950 = vpop.f32.mrb[0].mxu0
        %v1951 = vadd.f32 %v1141, %v1950
        %v1952 = vpop.f32.mrb[0].mxu0
        %1953 = vmatprep.mubr.f32.mxu0 0.0
        %1954 = vmatmul.mubr.f32.gmra.mrb[0].mxu0 %v1159
        %v1955 = vpop.f32.mrb[0].mxu0
        %v1956 = vadd.f32 %v1141, %v1955
        %v1957 = vpop.f32.mrb[0].mxu0
        %1958 = vmatprep.mubr.f32.mxu0 0.0
        %1959 = vmatmul.mubr.f32.gmra.mrb[0].mxu0 %v1162
        %v1960 = vpop.f32.mrb[0].mxu0
        %v1961 = vadd.f32 %v1141, %v1960
        %v1962 = vpop.f32.mrb[0].mxu0
        %1963 = vmatprep.mubr.f32.mxu0 0.0
        %1964 = vmatmul.mubr.f32.gmra.mrb[0].mxu0 %v1165
        %v1965 = vpop.f32.mrb[0].mxu0
        %v1966 = vadd.f32 %v1141, %v1965
        %v1967 = vpop.f32.mrb[0].mxu0
        %1968 = vdwg.mxu0
        %1969 = vst.msk [vmem:[#allocation3 + $0x180] sm:$0xff] %vm1272, %v1931
        %1970 = vst.msk [vmem:[#allocation3 + $0x188] sm:$0xff] %vm1272, %v1936
        %1971 = vst.msk [vmem:[#allocation3 + $0x190] sm:$0xff] %vm1272, %v1941
        %1972 = vst.msk [vmem:[#allocation3 + $0x198] sm:$0xff] %vm1272, %v1946
        %1973 = vst.msk [vmem:[#allocation3 + $0x1a0] sm:$0xff] %vm1272, %v1951
        %1974 = vst.msk [vmem:[#allocation3 + $0x1a8] sm:$0xff] %vm1272, %v1956
        %1975 = vst.msk [vmem:[#allocation3 + $0x1b0] sm:$0xff] %vm1272, %v1961
        %1976 = vst.msk [vmem:[#allocation3 + $0x1b8] sm:$0xff] %vm1272, %v1966
        %s1977 = scalar_lea.vmem %s3, 112
        %v1978 = vld [vmem:[%s1977] sm:$0xff]
        %v1979 = vld [vmem:[%s1977 + $0x8] sm:$0xff]
        %1980 = vmatprep.subr.mxu0 0.0
        %1981 = vmatpush1.msra.mxu0 %v1978
        %1982 = vmatprep.subr.mxu0 0.0
        %1983 = vmatpush1.msra.mxu0 %v1979
        %1984 = vmatprep.subr.mxu0 0.0
        %1985 = vmatpush1.msra.mxu0 0.0
        %1986 = vmatprep.subr.mxu0 0.0
        %1987 = vmatpush1.msra.mxu0 0.0
        %1988 = vmatprep.subr.mxu0 0.0
        %1989 = vmatpush1.msra.mxu0 0.0
        %1990 = vmatprep.subr.mxu0 0.0
        %1991 = vmatpush1.msra.mxu0 0.0
        %1992 = vmatprep.subr.mxu0 0.0
        %1993 = vmatpush1.msra.mxu0 0.0
        %1994 = vmatprep.subr.mxu0 0.0
        %1995 = vmatpush1.msra.mxu0 0.0
        %1996 = vmatprep.subr.mxu0 0.0
        %1997 = vmatpush1.msra.mxu0 0.0
        %1998 = vmatprep.subr.mxu0 0.0
        %1999 = vmatpush1.msra.mxu0 0.0
        %2000 = vmatprep.subr.mxu0 0.0
        %2001 = vmatpush1.msra.mxu0 0.0
        %2002 = vmatprep.subr.mxu0 0.0
        %2003 = vmatpush1.msra.mxu0 0.0
        %2004 = vmatprep.subr.mxu0 0.0
        %2005 = vmatpush1.msra.mxu0 0.0
        %2006 = vmatprep.subr.mxu0 0.0
        %2007 = vmatpush1.msra.mxu0 0.0
        %2008 = vmatprep.subr.mxu0 0.0
        %2009 = vmatpush1.msra.mxu0 0.0
        %2010 = vmatprep.subr.mxu0 0.0
        %2011 = vmatpush1.msra.mxu0 0.0
        %2012 = vmatprep.subr.mxu0 0.0
        %2013 = vmatpush1.msra.mxu0 0.0
        %2014 = vmatprep.subr.mxu0 0.0
        %2015 = vmatpush1.msra.mxu0 0.0
        %2016 = vmatprep.subr.mxu0 0.0
        %2017 = vmatpush1.msra.mxu0 0.0
        %2018 = vmatprep.subr.mxu0 0.0
        %2019 = vmatpush1.msra.mxu0 0.0
        %2020 = vmatprep.subr.mxu0 0.0
        %2021 = vmatpush1.msra.mxu0 0.0
        %2022 = vmatprep.subr.mxu0 0.0
        %2023 = vmatpush1.msra.mxu0 0.0
        %2024 = vmatprep.subr.mxu0 0.0
        %2025 = vmatpush1.msra.mxu0 0.0
        %2026 = vmatprep.subr.mxu0 0.0
        %2027 = vmatpush1.msra.mxu0 0.0
        %2028 = vmatprep.subr.mxu0 0.0
        %2029 = vmatpush1.msra.mxu0 0.0
        %2030 = vmatprep.subr.mxu0 0.0
        %2031 = vmatpush1.msra.mxu0 0.0
        %2032 = vmatprep.subr.mxu0 0.0
        %2033 = vmatpush1.msra.mxu0 0.0
        %2034 = vmatprep.subr.mxu0 0.0
        %2035 = vmatpush1.msra.mxu0 0.0
        %2036 = vmatprep.subr.mxu0 0.0
        %2037 = vmatpush1.msra.mxu0 0.0
        %2038 = vmatprep.subr.mxu0 0.0
        %2039 = vmatpush1.msra.mxu0 0.0
        %2040 = vmatprep.subr.mxu0 0.0
        %2041 = vmatpush1.msra.mxu0 0.0
        %2042 = vmatprep.subr.mxu0 0.0
        %2043 = vmatpush1.msra.mxu0 0.0
        %2044 = vmatprep.mubr.f32.mxu0 0.0
        %2045 = vmatmul.mubr.f32.gmra.mrb[0].mxu0 %v1144
        %v2046 = vpop.f32.mrb[0].mxu0
        %v2047 = vadd.f32 %v1141, %v2046
        %v2048 = vpop.f32.mrb[0].mxu0
        %2049 = vmatprep.mubr.f32.mxu0 0.0
        %2050 = vmatmul.mubr.f32.gmra.mrb[0].mxu0 %v1147
        %v2051 = vpop.f32.mrb[0].mxu0
        %v2052 = vadd.f32 %v1141, %v2051
        %v2053 = vpop.f32.mrb[0].mxu0
        %2054 = vmatprep.mubr.f32.mxu0 0.0
        %2055 = vmatmul.mubr.f32.gmra.mrb[0].mxu0 %v1150
        %v2056 = vpop.f32.mrb[0].mxu0
        %v2057 = vadd.f32 %v1141, %v2056
        %v2058 = vpop.f32.mrb[0].mxu0
        %2059 = vmatprep.mubr.f32.mxu0 0.0
        %2060 = vmatmul.mubr.f32.gmra.mrb[0].mxu0 %v1153
        %v2061 = vpop.f32.mrb[0].mxu0
        %v2062 = vadd.f32 %v1141, %v2061
        %v2063 = vpop.f32.mrb[0].mxu0
        %2064 = vmatprep.mubr.f32.mxu0 0.0
        %2065 = vmatmul.mubr.f32.gmra.mrb[0].mxu0 %v1156
        %v2066 = vpop.f32.mrb[0].mxu0
        %v2067 = vadd.f32 %v1141, %v2066
        %v2068 = vpop.f32.mrb[0].mxu0
        %2069 = vmatprep.mubr.f32.mxu0 0.0
        %2070 = vmatmul.mubr.f32.gmra.mrb[0].mxu0 %v1159
        %v2071 = vpop.f32.mrb[0].mxu0
        %v2072 = vadd.f32 %v1141, %v2071
        %v2073 = vpop.f32.mrb[0].mxu0
        %2074 = vmatprep.mubr.f32.mxu0 0.0
        %2075 = vmatmul.mubr.f32.gmra.mrb[0].mxu0 %v1162
        %v2076 = vpop.f32.mrb[0].mxu0
        %v2077 = vadd.f32 %v1141, %v2076
        %v2078 = vpop.f32.mrb[0].mxu0
        %2079 = vmatprep.mubr.f32.mxu0 0.0
        %2080 = vmatmul.mubr.f32.gmra.mrb[0].mxu0 %v1165
        %v2081 = vpop.f32.mrb[0].mxu0
        %v2082 = vadd.f32 %v1141, %v2081
        %v2083 = vpop.f32.mrb[0].mxu0
        %2084 = vdwg.mxu0
        %2085 = vst.msk [vmem:[#allocation3 + $0x1c0] sm:$0xff] %vm1272, %v2047
        %2086 = vst.msk [vmem:[#allocation3 + $0x1c8] sm:$0xff] %vm1272, %v2052
        %2087 = vst.msk [vmem:[#allocation3 + $0x1d0] sm:$0xff] %vm1272, %v2057
        %2088 = vst.msk [vmem:[#allocation3 + $0x1d8] sm:$0xff] %vm1272, %v2062
        %2089 = vst.msk [vmem:[#allocation3 + $0x1e0] sm:$0xff] %vm1272, %v2067
        %2090 = vst.msk [vmem:[#allocation3 + $0x1e8] sm:$0xff] %vm1272, %v2072
        %2091 = vst.msk [vmem:[#allocation3 + $0x1f0] sm:$0xff] %vm1272, %v2077
        %2092 = vst.msk [vmem:[#allocation3 + $0x1f8] sm:$0xff] %vm1272, %v2082
        %v2093 = vld [vmem:[#allocation3] sm:$0xff]
        %v2094 = vld [vmem:[#allocation3 + $0x8] sm:$0xff]
        %v2095 = vld [vmem:[#allocation3 + $0x10] sm:$0xff]
        %v2096 = vld [vmem:[#allocation3 + $0x18] sm:$0xff]
        %v2097 = vld [vmem:[#allocation3 + $0x20] sm:$0xff]
        %v2098 = vld [vmem:[#allocation3 + $0x28] sm:$0xff]
        %v2099 = vld [vmem:[#allocation3 + $0x30] sm:$0xff]
        %v2100 = vld [vmem:[#allocation3 + $0x38] sm:$0xff]
        %v2101 = vld [vmem:[#allocation3 + $0x40] sm:$0xff]
        %v2102 = vld [vmem:[#allocation3 + $0x48] sm:$0xff]
        %v2103 = vld [vmem:[#allocation3 + $0x50] sm:$0xff]
        %v2104 = vld [vmem:[#allocation3 + $0x58] sm:$0xff]
        %v2105 = vld [vmem:[#allocation3 + $0x60] sm:$0xff]
        %v2106 = vld [vmem:[#allocation3 + $0x68] sm:$0xff]
        %v2107 = vld [vmem:[#allocation3 + $0x70] sm:$0xff]
        %v2108 = vld [vmem:[#allocation3 + $0x78] sm:$0xff]
        %v2109 = vld [vmem:[#allocation3 + $0x80] sm:$0xff]
        %v2110 = vld [vmem:[#allocation3 + $0x88] sm:$0xff]
        %v2111 = vld [vmem:[#allocation3 + $0x90] sm:$0xff]
        %v2112 = vld [vmem:[#allocation3 + $0x98] sm:$0xff]
        %v2113 = vld [vmem:[#allocation3 + $0xa0] sm:$0xff]
        %v2114 = vld [vmem:[#allocation3 + $0xa8] sm:$0xff]
        %v2115 = vld [vmem:[#allocation3 + $0xb0] sm:$0xff]
        %v2116 = vld [vmem:[#allocation3 + $0xb8] sm:$0xff]
        %v2117 = vld [vmem:[#allocation3 + $0xc0] sm:$0xff]
        %v2118 = vld [vmem:[#allocation3 + $0xc8] sm:$0xff]
        %v2119 = vld [vmem:[#allocation3 + $0xd0] sm:$0xff]
        %v2120 = vld [vmem:[#allocation3 + $0xd8] sm:$0xff]
        %v2121 = vld [vmem:[#allocation3 + $0xe0] sm:$0xff]
        %v2122 = vld [vmem:[#allocation3 + $0xe8] sm:$0xff]
        %v2123 = vld [vmem:[#allocation3 + $0xf0] sm:$0xff]
        %v2124 = vld [vmem:[#allocation3 + $0xf8] sm:$0xff]
        %v2125 = vld [vmem:[#allocation3 + $0x100] sm:$0xff]
        %v2126 = vld [vmem:[#allocation3 + $0x108] sm:$0xff]
        %v2127 = vld [vmem:[#allocation3 + $0x110] sm:$0xff]
        %v2128 = vld [vmem:[#allocation3 + $0x118] sm:$0xff]
        %v2129 = vld [vmem:[#allocation3 + $0x120] sm:$0xff]
        %v2130 = vld [vmem:[#allocation3 + $0x128] sm:$0xff]
        %v2131 = vld [vmem:[#allocation3 + $0x130] sm:$0xff]
        %v2132 = vld [vmem:[#allocation3 + $0x138] sm:$0xff]
        %v2133 = vld [vmem:[#allocation3 + $0x140] sm:$0xff]
        %v2134 = vld [vmem:[#allocation3 + $0x148] sm:$0xff]
        %v2135 = vld [vmem:[#allocation3 + $0x150] sm:$0xff]
        %v2136 = vld [vmem:[#allocation3 + $0x158] sm:$0xff]
        %v2137 = vld [vmem:[#allocation3 + $0x160] sm:$0xff]
        %v2138 = vld [vmem:[#allocation3 + $0x168] sm:$0xff]
        %v2139 = vld [vmem:[#allocation3 + $0x170] sm:$0xff]
        %v2140 = vld [vmem:[#allocation3 + $0x178] sm:$0xff]
        %v2141 = vld [vmem:[#allocation3 + $0x180] sm:$0xff]
        %v2142 = vld [vmem:[#allocation3 + $0x188] sm:$0xff]
        %v2143 = vld [vmem:[#allocation3 + $0x190] sm:$0xff]
        %v2144 = vld [vmem:[#allocation3 + $0x198] sm:$0xff]
        %v2145 = vld [vmem:[#allocation3 + $0x1a0] sm:$0xff]
        %v2146 = vld [vmem:[#allocation3 + $0x1a8] sm:$0xff]
        %v2147 = vld [vmem:[#allocation3 + $0x1b0] sm:$0xff]
        %v2148 = vld [vmem:[#allocation3 + $0x1b8] sm:$0xff]
        %v2149 = vld [vmem:[#allocation3 + $0x1c0] sm:$0xff]
        %v2150 = vld [vmem:[#allocation3 + $0x1c8] sm:$0xff]
        %v2151 = vld [vmem:[#allocation3 + $0x1d0] sm:$0xff]
        %v2152 = vld [vmem:[#allocation3 + $0x1d8] sm:$0xff]
        %v2153 = vld [vmem:[#allocation3 + $0x1e0] sm:$0xff]
        %v2154 = vld [vmem:[#allocation3 + $0x1e8] sm:$0xff]
        %v2155 = vld [vmem:[#allocation3 + $0x1f0] sm:$0xff]
        %v2156 = vld [vmem:[#allocation3 + $0x1f8] sm:$0xff]
        %v2157 = vld [vmem:[#allocation10] sm:$0xff]
        %v2158 = vld [vmem:[#allocation12] sm:$0x1]
        %v2160 = vlaneseq
        %v2161 = vshrl.u32 %v2160, 7
        %v2162 = vsub.s32 0, %v2161
        %v2163 = vrot.slane %v2158, %v2162
        %v2166 = vsel %vm1272, %v2093, 0
        %v2169 = vsel %vm1272, %v2094, 0
        %v2172 = vsel %vm1272, %v2095, 0
        %v2175 = vsel %vm1272, %v2096, 0
        %v2178 = vsel %vm1272, %v2097, 0
        %v2181 = vsel %vm1272, %v2098, 0
        %v2184 = vsel %vm1272, %v2099, 0
        %v2187 = vsel %vm1272, %v2100, 0
        %v2190 = vsel %vm1272, %v2101, 0
        %v2193 = vsel %vm1272, %v2102, 0
        %v2196 = vsel %vm1272, %v2103, 0
        %v2199 = vsel %vm1272, %v2104, 0
        %v2202 = vsel %vm1272, %v2105, 0
        %v2205 = vsel %vm1272, %v2106, 0
        %v2208 = vsel %vm1272, %v2107, 0
        %v2211 = vsel %vm1272, %v2108, 0
        %v2214 = vsel %vm1272, %v2109, 0
        %v2217 = vsel %vm1272, %v2110, 0
        %v2220 = vsel %vm1272, %v2111, 0
        %v2223 = vsel %vm1272, %v2112, 0
        %v2226 = vsel %vm1272, %v2113, 0
        %v2229 = vsel %vm1272, %v2114, 0
        %v2232 = vsel %vm1272, %v2115, 0
        %v2235 = vsel %vm1272, %v2116, 0
        %v2238 = vsel %vm1272, %v2117, 0
        %v2241 = vsel %vm1272, %v2118, 0
        %v2244 = vsel %vm1272, %v2119, 0
        %v2247 = vsel %vm1272, %v2120, 0
        %v2250 = vsel %vm1272, %v2121, 0
        %v2253 = vsel %vm1272, %v2122, 0
        %v2256 = vsel %vm1272, %v2123, 0
        %v2259 = vsel %vm1272, %v2124, 0
        %v2262 = vsel %vm1272, %v2125, 0
        %v2265 = vsel %vm1272, %v2126, 0
        %v2268 = vsel %vm1272, %v2127, 0
        %v2271 = vsel %vm1272, %v2128, 0
        %v2274 = vsel %vm1272, %v2129, 0
        %v2277 = vsel %vm1272, %v2130, 0
        %v2280 = vsel %vm1272, %v2131, 0
        %v2283 = vsel %vm1272, %v2132, 0
        %v2286 = vsel %vm1272, %v2133, 0
        %v2289 = vsel %vm1272, %v2134, 0
        %v2292 = vsel %vm1272, %v2135, 0
        %v2295 = vsel %vm1272, %v2136, 0
        %v2298 = vsel %vm1272, %v2137, 0
        %v2301 = vsel %vm1272, %v2138, 0
        %v2304 = vsel %vm1272, %v2139, 0
        %v2307 = vsel %vm1272, %v2140, 0
        %v2310 = vsel %vm1272, %v2141, 0
        %v2313 = vsel %vm1272, %v2142, 0
        %v2316 = vsel %vm1272, %v2143, 0
        %v2319 = vsel %vm1272, %v2144, 0
        %v2322 = vsel %vm1272, %v2145, 0
        %v2325 = vsel %vm1272, %v2146, 0
        %v2328 = vsel %vm1272, %v2147, 0
        %v2331 = vsel %vm1272, %v2148, 0
        %v2334 = vsel %vm1272, %v2149, 0
        %v2337 = vsel %vm1272, %v2150, 0
        %v2340 = vsel %vm1272, %v2151, 0
        %v2343 = vsel %vm1272, %v2152, 0
        %v2346 = vsel %vm1272, %v2153, 0
        %v2349 = vsel %vm1272, %v2154, 0
        %v2352 = vsel %vm1272, %v2155, 0
        %v2355 = vsel %vm1272, %v2156, 0
        %2357 = vmatprep.subr.mxu0 0.0
        %2358 = vmatpush1.msra.mxu0 %v2157
        %2359 = vmatprep.subr.mxu0 0.0
        %2360 = vmatpush1.msra.mxu0 0.0
        %2361 = vmatprep.subr.mxu0 0.0
        %2362 = vmatpush1.msra.mxu0 0.0
        %2363 = vmatprep.subr.mxu0 0.0
        %2364 = vmatpush1.msra.mxu0 0.0
        %2365 = vmatprep.subr.mxu0 0.0
        %2366 = vmatpush1.msra.mxu0 0.0
        %2367 = vmatprep.subr.mxu0 0.0
        %2368 = vmatpush1.msra.mxu0 0.0
        %2369 = vmatprep.subr.mxu0 0.0
        %2370 = vmatpush1.msra.mxu0 0.0
        %2371 = vmatprep.subr.mxu0 0.0
        %2372 = vmatpush1.msra.mxu0 0.0
        %2373 = vmatprep.subr.mxu0 0.0
        %2374 = vmatpush1.msra.mxu0 0.0
        %2375 = vmatprep.subr.mxu0 0.0
        %2376 = vmatpush1.msra.mxu0 0.0
        %2377 = vmatprep.subr.mxu0 0.0
        %2378 = vmatpush1.msra.mxu0 0.0
        %2379 = vmatprep.subr.mxu0 0.0
        %2380 = vmatpush1.msra.mxu0 0.0
        %2381 = vmatprep.subr.mxu0 0.0
        %2382 = vmatpush1.msra.mxu0 0.0
        %2383 = vmatprep.subr.mxu0 0.0
        %2384 = vmatpush1.msra.mxu0 0.0
        %2385 = vmatprep.subr.mxu0 0.0
        %2386 = vmatpush1.msra.mxu0 0.0
        %2387 = vmatprep.subr.mxu0 0.0
        %2388 = vmatpush1.msra.mxu0 0.0
        %2389 = vmatprep.subr.mxu0 0.0
        %2390 = vmatpush1.msra.mxu0 0.0
        %2391 = vmatprep.subr.mxu0 0.0
        %2392 = vmatpush1.msra.mxu0 0.0
        %2393 = vmatprep.subr.mxu0 0.0
        %2394 = vmatpush1.msra.mxu0 0.0
        %2395 = vmatprep.subr.mxu0 0.0
        %2396 = vmatpush1.msra.mxu0 0.0
        %2397 = vmatprep.subr.mxu0 0.0
        %2398 = vmatpush1.msra.mxu0 0.0
        %2399 = vmatprep.subr.mxu0 0.0
        %2400 = vmatpush1.msra.mxu0 0.0
        %2401 = vmatprep.subr.mxu0 0.0
        %2402 = vmatpush1.msra.mxu0 0.0
        %2403 = vmatprep.subr.mxu0 0.0
        %2404 = vmatpush1.msra.mxu0 0.0
        %2405 = vmatprep.subr.mxu0 0.0
        %2406 = vmatpush1.msra.mxu0 0.0
        %2407 = vmatprep.subr.mxu0 0.0
        %2408 = vmatpush1.msra.mxu0 0.0
        %2409 = vmatprep.subr.mxu0 0.0
        %2410 = vmatpush1.msra.mxu0 0.0
        %2411 = vmatprep.subr.mxu0 0.0
        %2412 = vmatpush1.msra.mxu0 0.0
        %2413 = vmatprep.subr.mxu0 0.0
        %2414 = vmatpush1.msra.mxu0 0.0
        %2415 = vmatprep.subr.mxu0 0.0
        %2416 = vmatpush1.msra.mxu0 0.0
        %2417 = vmatprep.subr.mxu0 0.0
        %2418 = vmatpush1.msra.mxu0 0.0
        %2419 = vmatprep.subr.mxu0 0.0
        %2420 = vmatpush1.msra.mxu0 0.0
        %2421 = vmatprep.mubr.f32.mxu0 0.0
        %2422 = vmatmul.mubr.f32.gmra.mrb[0].mxu0 %v2166
        %v2423 = vpop.f32.mrb[0].mxu0
        %v2424 = vadd.f32 %v2163, %v2423
        %v2425 = vpop.f32.mrb[0].mxu0
        %2426 = vmatprep.mubr.f32.mxu0 0.0
        %2427 = vmatmul.mubr.f32.gmra.mrb[0].mxu0 %v2169
        %v2428 = vpop.f32.mrb[0].mxu0
        %v2429 = vadd.f32 %v2163, %v2428
        %v2430 = vpop.f32.mrb[0].mxu0
        %2431 = vmatprep.mubr.f32.mxu0 0.0
        %2432 = vmatmul.mubr.f32.gmra.mrb[0].mxu0 %v2172
        %v2433 = vpop.f32.mrb[0].mxu0
        %v2434 = vadd.f32 %v2163, %v2433
        %v2435 = vpop.f32.mrb[0].mxu0
        %2436 = vmatprep.mubr.f32.mxu0 0.0
        %2437 = vmatmul.mubr.f32.gmra.mrb[0].mxu0 %v2175
        %v2438 = vpop.f32.mrb[0].mxu0
        %v2439 = vadd.f32 %v2163, %v2438
        %v2440 = vpop.f32.mrb[0].mxu0
        %2441 = vmatprep.mubr.f32.mxu0 0.0
        %2442 = vmatmul.mubr.f32.gmra.mrb[0].mxu0 %v2178
        %v2443 = vpop.f32.mrb[0].mxu0
        %v2444 = vadd.f32 %v2163, %v2443
        %v2445 = vpop.f32.mrb[0].mxu0
        %2446 = vmatprep.mubr.f32.mxu0 0.0
        %2447 = vmatmul.mubr.f32.gmra.mrb[0].mxu0 %v2181
        %v2448 = vpop.f32.mrb[0].mxu0
        %v2449 = vadd.f32 %v2163, %v2448
        %v2450 = vpop.f32.mrb[0].mxu0
        %2451 = vmatprep.mubr.f32.mxu0 0.0
        %2452 = vmatmul.mubr.f32.gmra.mrb[0].mxu0 %v2184
        %v2453 = vpop.f32.mrb[0].mxu0
        %v2454 = vadd.f32 %v2163, %v2453
        %v2455 = vpop.f32.mrb[0].mxu0
        %2456 = vmatprep.mubr.f32.mxu0 0.0
        %2457 = vmatmul.mubr.f32.gmra.mrb[0].mxu0 %v2187
        %v2458 = vpop.f32.mrb[0].mxu0
        %v2459 = vadd.f32 %v2163, %v2458
        %v2460 = vpop.f32.mrb[0].mxu0
        %2461 = vmatprep.mubr.f32.mxu0 0.0
        %2462 = vmatmul.mubr.f32.gmra.mrb[0].mxu0 %v2190
        %v2463 = vpop.f32.mrb[0].mxu0
        %v2464 = vadd.f32 %v2163, %v2463
        %v2465 = vpop.f32.mrb[0].mxu0
        %2466 = vmatprep.mubr.f32.mxu0 0.0
        %2467 = vmatmul.mubr.f32.gmra.mrb[0].mxu0 %v2193
        %v2468 = vpop.f32.mrb[0].mxu0
        %v2469 = vadd.f32 %v2163, %v2468
        %v2470 = vpop.f32.mrb[0].mxu0
        %2471 = vmatprep.mubr.f32.mxu0 0.0
        %2472 = vmatmul.mubr.f32.gmra.mrb[0].mxu0 %v2196
        %v2473 = vpop.f32.mrb[0].mxu0
        %v2474 = vadd.f32 %v2163, %v2473
        %v2475 = vpop.f32.mrb[0].mxu0
        %2476 = vmatprep.mubr.f32.mxu0 0.0
        %2477 = vmatmul.mubr.f32.gmra.mrb[0].mxu0 %v2199
        %v2478 = vpop.f32.mrb[0].mxu0
        %v2479 = vadd.f32 %v2163, %v2478
        %v2480 = vpop.f32.mrb[0].mxu0
        %2481 = vmatprep.mubr.f32.mxu0 0.0
        %2482 = vmatmul.mubr.f32.gmra.mrb[0].mxu0 %v2202
        %v2483 = vpop.f32.mrb[0].mxu0
        %v2484 = vadd.f32 %v2163, %v2483
        %v2485 = vpop.f32.mrb[0].mxu0
        %2486 = vmatprep.mubr.f32.mxu0 0.0
        %2487 = vmatmul.mubr.f32.gmra.mrb[0].mxu0 %v2205
        %v2488 = vpop.f32.mrb[0].mxu0
        %v2489 = vadd.f32 %v2163, %v2488
        %v2490 = vpop.f32.mrb[0].mxu0
        %2491 = vmatprep.mubr.f32.mxu0 0.0
        %2492 = vmatmul.mubr.f32.gmra.mrb[0].mxu0 %v2208
        %v2493 = vpop.f32.mrb[0].mxu0
        %v2494 = vadd.f32 %v2163, %v2493
        %v2495 = vpop.f32.mrb[0].mxu0
        %2496 = vmatprep.mubr.f32.mxu0 0.0
        %2497 = vmatmul.mubr.f32.gmra.mrb[0].mxu0 %v2211
        %v2498 = vpop.f32.mrb[0].mxu0
        %v2499 = vadd.f32 %v2163, %v2498
        %v2500 = vpop.f32.mrb[0].mxu0
        %2501 = vmatprep.mubr.f32.mxu0 0.0
        %2502 = vmatmul.mubr.f32.gmra.mrb[0].mxu0 %v2214
        %v2503 = vpop.f32.mrb[0].mxu0
        %v2504 = vadd.f32 %v2163, %v2503
        %v2505 = vpop.f32.mrb[0].mxu0
        %2506 = vmatprep.mubr.f32.mxu0 0.0
        %2507 = vmatmul.mubr.f32.gmra.mrb[0].mxu0 %v2217
        %v2508 = vpop.f32.mrb[0].mxu0
        %v2509 = vadd.f32 %v2163, %v2508
        %v2510 = vpop.f32.mrb[0].mxu0
        %2511 = vmatprep.mubr.f32.mxu0 0.0
        %2512 = vmatmul.mubr.f32.gmra.mrb[0].mxu0 %v2220
        %v2513 = vpop.f32.mrb[0].mxu0
        %v2514 = vadd.f32 %v2163, %v2513
        %v2515 = vpop.f32.mrb[0].mxu0
        %2516 = vmatprep.mubr.f32.mxu0 0.0
        %2517 = vmatmul.mubr.f32.gmra.mrb[0].mxu0 %v2223
        %v2518 = vpop.f32.mrb[0].mxu0
        %v2519 = vadd.f32 %v2163, %v2518
        %v2520 = vpop.f32.mrb[0].mxu0
        %2521 = vmatprep.mubr.f32.mxu0 0.0
        %2522 = vmatmul.mubr.f32.gmra.mrb[0].mxu0 %v2226
        %v2523 = vpop.f32.mrb[0].mxu0
        %v2524 = vadd.f32 %v2163, %v2523
        %v2525 = vpop.f32.mrb[0].mxu0
        %2526 = vmatprep.mubr.f32.mxu0 0.0
        %2527 = vmatmul.mubr.f32.gmra.mrb[0].mxu0 %v2229
        %v2528 = vpop.f32.mrb[0].mxu0
        %v2529 = vadd.f32 %v2163, %v2528
        %v2530 = vpop.f32.mrb[0].mxu0
        %2531 = vmatprep.mubr.f32.mxu0 0.0
        %2532 = vmatmul.mubr.f32.gmra.mrb[0].mxu0 %v2232
        %v2533 = vpop.f32.mrb[0].mxu0
        %v2534 = vadd.f32 %v2163, %v2533
        %v2535 = vpop.f32.mrb[0].mxu0
        %2536 = vmatprep.mubr.f32.mxu0 0.0
        %2537 = vmatmul.mubr.f32.gmra.mrb[0].mxu0 %v2235
        %v2538 = vpop.f32.mrb[0].mxu0
        %v2539 = vadd.f32 %v2163, %v2538
        %v2540 = vpop.f32.mrb[0].mxu0
        %2541 = vmatprep.mubr.f32.mxu0 0.0
        %2542 = vmatmul.mubr.f32.gmra.mrb[0].mxu0 %v2238
        %v2543 = vpop.f32.mrb[0].mxu0
        %v2544 = vadd.f32 %v2163, %v2543
        %v2545 = vpop.f32.mrb[0].mxu0
        %2546 = vmatprep.mubr.f32.mxu0 0.0
        %2547 = vmatmul.mubr.f32.gmra.mrb[0].mxu0 %v2241
        %v2548 = vpop.f32.mrb[0].mxu0
        %v2549 = vadd.f32 %v2163, %v2548
        %v2550 = vpop.f32.mrb[0].mxu0
        %2551 = vmatprep.mubr.f32.mxu0 0.0
        %2552 = vmatmul.mubr.f32.gmra.mrb[0].mxu0 %v2244
        %v2553 = vpop.f32.mrb[0].mxu0
        %v2554 = vadd.f32 %v2163, %v2553
        %v2555 = vpop.f32.mrb[0].mxu0
        %2556 = vmatprep.mubr.f32.mxu0 0.0
        %2557 = vmatmul.mubr.f32.gmra.mrb[0].mxu0 %v2247
        %v2558 = vpop.f32.mrb[0].mxu0
        %v2559 = vadd.f32 %v2163, %v2558
        %v2560 = vpop.f32.mrb[0].mxu0
        %2561 = vmatprep.mubr.f32.mxu0 0.0
        %2562 = vmatmul.mubr.f32.gmra.mrb[0].mxu0 %v2250
        %v2563 = vpop.f32.mrb[0].mxu0
        %v2564 = vadd.f32 %v2163, %v2563
        %v2565 = vpop.f32.mrb[0].mxu0
        %2566 = vmatprep.mubr.f32.mxu0 0.0
        %2567 = vmatmul.mubr.f32.gmra.mrb[0].mxu0 %v2253
        %v2568 = vpop.f32.mrb[0].mxu0
        %v2569 = vadd.f32 %v2163, %v2568
        %v2570 = vpop.f32.mrb[0].mxu0
        %2571 = vmatprep.mubr.f32.mxu0 0.0
        %2572 = vmatmul.mubr.f32.gmra.mrb[0].mxu0 %v2256
        %v2573 = vpop.f32.mrb[0].mxu0
        %v2574 = vadd.f32 %v2163, %v2573
        %v2575 = vpop.f32.mrb[0].mxu0
        %2576 = vmatprep.mubr.f32.mxu0 0.0
        %2577 = vmatmul.mubr.f32.gmra.mrb[0].mxu0 %v2259
        %v2578 = vpop.f32.mrb[0].mxu0
        %v2579 = vadd.f32 %v2163, %v2578
        %v2580 = vpop.f32.mrb[0].mxu0
        %2581 = vmatprep.mubr.f32.mxu0 0.0
        %2582 = vmatmul.mubr.f32.gmra.mrb[0].mxu0 %v2262
        %v2583 = vpop.f32.mrb[0].mxu0
        %v2584 = vadd.f32 %v2163, %v2583
        %v2585 = vpop.f32.mrb[0].mxu0
        %2586 = vmatprep.mubr.f32.mxu0 0.0
        %2587 = vmatmul.mubr.f32.gmra.mrb[0].mxu0 %v2265
        %v2588 = vpop.f32.mrb[0].mxu0
        %v2589 = vadd.f32 %v2163, %v2588
        %v2590 = vpop.f32.mrb[0].mxu0
        %2591 = vmatprep.mubr.f32.mxu0 0.0
        %2592 = vmatmul.mubr.f32.gmra.mrb[0].mxu0 %v2268
        %v2593 = vpop.f32.mrb[0].mxu0
        %v2594 = vadd.f32 %v2163, %v2593
        %v2595 = vpop.f32.mrb[0].mxu0
        %2596 = vmatprep.mubr.f32.mxu0 0.0
        %2597 = vmatmul.mubr.f32.gmra.mrb[0].mxu0 %v2271
        %v2598 = vpop.f32.mrb[0].mxu0
        %v2599 = vadd.f32 %v2163, %v2598
        %v2600 = vpop.f32.mrb[0].mxu0
        %2601 = vmatprep.mubr.f32.mxu0 0.0
        %2602 = vmatmul.mubr.f32.gmra.mrb[0].mxu0 %v2274
        %v2603 = vpop.f32.mrb[0].mxu0
        %v2604 = vadd.f32 %v2163, %v2603
        %v2605 = vpop.f32.mrb[0].mxu0
        %2606 = vmatprep.mubr.f32.mxu0 0.0
        %2607 = vmatmul.mubr.f32.gmra.mrb[0].mxu0 %v2277
        %v2608 = vpop.f32.mrb[0].mxu0
        %v2609 = vadd.f32 %v2163, %v2608
        %v2610 = vpop.f32.mrb[0].mxu0
        %2611 = vmatprep.mubr.f32.mxu0 0.0
        %2612 = vmatmul.mubr.f32.gmra.mrb[0].mxu0 %v2280
        %v2613 = vpop.f32.mrb[0].mxu0
        %v2614 = vadd.f32 %v2163, %v2613
        %v2615 = vpop.f32.mrb[0].mxu0
        %2616 = vmatprep.mubr.f32.mxu0 0.0
        %2617 = vmatmul.mubr.f32.gmra.mrb[0].mxu0 %v2283
        %v2618 = vpop.f32.mrb[0].mxu0
        %v2619 = vadd.f32 %v2163, %v2618
        %v2620 = vpop.f32.mrb[0].mxu0
        %2621 = vmatprep.mubr.f32.mxu0 0.0
        %2622 = vmatmul.mubr.f32.gmra.mrb[0].mxu0 %v2286
        %v2623 = vpop.f32.mrb[0].mxu0
        %v2624 = vadd.f32 %v2163, %v2623
        %v2625 = vpop.f32.mrb[0].mxu0
        %2626 = vmatprep.mubr.f32.mxu0 0.0
        %2627 = vmatmul.mubr.f32.gmra.mrb[0].mxu0 %v2289
        %v2628 = vpop.f32.mrb[0].mxu0
        %v2629 = vadd.f32 %v2163, %v2628
        %v2630 = vpop.f32.mrb[0].mxu0
        %2631 = vmatprep.mubr.f32.mxu0 0.0
        %2632 = vmatmul.mubr.f32.gmra.mrb[0].mxu0 %v2292
        %v2633 = vpop.f32.mrb[0].mxu0
        %v2634 = vadd.f32 %v2163, %v2633
        %v2635 = vpop.f32.mrb[0].mxu0
        %2636 = vmatprep.mubr.f32.mxu0 0.0
        %2637 = vmatmul.mubr.f32.gmra.mrb[0].mxu0 %v2295
        %v2638 = vpop.f32.mrb[0].mxu0
        %v2639 = vadd.f32 %v2163, %v2638
        %v2640 = vpop.f32.mrb[0].mxu0
        %2641 = vmatprep.mubr.f32.mxu0 0.0
        %2642 = vmatmul.mubr.f32.gmra.mrb[0].mxu0 %v2298
        %v2643 = vpop.f32.mrb[0].mxu0
        %v2644 = vadd.f32 %v2163, %v2643
        %v2645 = vpop.f32.mrb[0].mxu0
        %2646 = vmatprep.mubr.f32.mxu0 0.0
        %2647 = vmatmul.mubr.f32.gmra.mrb[0].mxu0 %v2301
        %v2648 = vpop.f32.mrb[0].mxu0
        %v2649 = vadd.f32 %v2163, %v2648
        %v2650 = vpop.f32.mrb[0].mxu0
        %2651 = vmatprep.mubr.f32.mxu0 0.0
        %2652 = vmatmul.mubr.f32.gmra.mrb[0].mxu0 %v2304
        %v2653 = vpop.f32.mrb[0].mxu0
        %v2654 = vadd.f32 %v2163, %v2653
        %v2655 = vpop.f32.mrb[0].mxu0
        %2656 = vmatprep.mubr.f32.mxu0 0.0
        %2657 = vmatmul.mubr.f32.gmra.mrb[0].mxu0 %v2307
        %v2658 = vpop.f32.mrb[0].mxu0
        %v2659 = vadd.f32 %v2163, %v2658
        %v2660 = vpop.f32.mrb[0].mxu0
        %2661 = vmatprep.mubr.f32.mxu0 0.0
        %2662 = vmatmul.mubr.f32.gmra.mrb[0].mxu0 %v2310
        %v2663 = vpop.f32.mrb[0].mxu0
        %v2664 = vadd.f32 %v2163, %v2663
        %v2665 = vpop.f32.mrb[0].mxu0
        %2666 = vmatprep.mubr.f32.mxu0 0.0
        %2667 = vmatmul.mubr.f32.gmra.mrb[0].mxu0 %v2313
        %v2668 = vpop.f32.mrb[0].mxu0
        %v2669 = vadd.f32 %v2163, %v2668
        %v2670 = vpop.f32.mrb[0].mxu0
        %2671 = vmatprep.mubr.f32.mxu0 0.0
        %2672 = vmatmul.mubr.f32.gmra.mrb[0].mxu0 %v2316
        %v2673 = vpop.f32.mrb[0].mxu0
        %v2674 = vadd.f32 %v2163, %v2673
        %v2675 = vpop.f32.mrb[0].mxu0
        %2676 = vmatprep.mubr.f32.mxu0 0.0
        %2677 = vmatmul.mubr.f32.gmra.mrb[0].mxu0 %v2319
        %v2678 = vpop.f32.mrb[0].mxu0
        %v2679 = vadd.f32 %v2163, %v2678
        %v2680 = vpop.f32.mrb[0].mxu0
        %2681 = vmatprep.mubr.f32.mxu0 0.0
        %2682 = vmatmul.mubr.f32.gmra.mrb[0].mxu0 %v2322
        %v2683 = vpop.f32.mrb[0].mxu0
        %v2684 = vadd.f32 %v2163, %v2683
        %v2685 = vpop.f32.mrb[0].mxu0
        %2686 = vmatprep.mubr.f32.mxu0 0.0
        %2687 = vmatmul.mubr.f32.gmra.mrb[0].mxu0 %v2325
        %v2688 = vpop.f32.mrb[0].mxu0
        %v2689 = vadd.f32 %v2163, %v2688
        %v2690 = vpop.f32.mrb[0].mxu0
        %2691 = vmatprep.mubr.f32.mxu0 0.0
        %2692 = vmatmul.mubr.f32.gmra.mrb[0].mxu0 %v2328
        %v2693 = vpop.f32.mrb[0].mxu0
        %v2694 = vadd.f32 %v2163, %v2693
        %v2695 = vpop.f32.mrb[0].mxu0
        %2696 = vmatprep.mubr.f32.mxu0 0.0
        %2697 = vmatmul.mubr.f32.gmra.mrb[0].mxu0 %v2331
        %v2698 = vpop.f32.mrb[0].mxu0
        %v2699 = vadd.f32 %v2163, %v2698
        %v2700 = vpop.f32.mrb[0].mxu0
        %2701 = vmatprep.mubr.f32.mxu0 0.0
        %2702 = vmatmul.mubr.f32.gmra.mrb[0].mxu0 %v2334
        %v2703 = vpop.f32.mrb[0].mxu0
        %v2704 = vadd.f32 %v2163, %v2703
        %v2705 = vpop.f32.mrb[0].mxu0
        %2706 = vmatprep.mubr.f32.mxu0 0.0
        %2707 = vmatmul.mubr.f32.gmra.mrb[0].mxu0 %v2337
        %v2708 = vpop.f32.mrb[0].mxu0
        %v2709 = vadd.f32 %v2163, %v2708
        %v2710 = vpop.f32.mrb[0].mxu0
        %2711 = vmatprep.mubr.f32.mxu0 0.0
        %2712 = vmatmul.mubr.f32.gmra.mrb[0].mxu0 %v2340
        %v2713 = vpop.f32.mrb[0].mxu0
        %v2714 = vadd.f32 %v2163, %v2713
        %v2715 = vpop.f32.mrb[0].mxu0
        %2716 = vmatprep.mubr.f32.mxu0 0.0
        %2717 = vmatmul.mubr.f32.gmra.mrb[0].mxu0 %v2343
        %v2718 = vpop.f32.mrb[0].mxu0
        %v2719 = vadd.f32 %v2163, %v2718
        %v2720 = vpop.f32.mrb[0].mxu0
        %2721 = vmatprep.mubr.f32.mxu0 0.0
        %2722 = vmatmul.mubr.f32.gmra.mrb[0].mxu0 %v2346
        %v2723 = vpop.f32.mrb[0].mxu0
        %v2724 = vadd.f32 %v2163, %v2723
        %v2725 = vpop.f32.mrb[0].mxu0
        %2726 = vmatprep.mubr.f32.mxu0 0.0
        %2727 = vmatmul.mubr.f32.gmra.mrb[0].mxu0 %v2349
        %v2728 = vpop.f32.mrb[0].mxu0
        %v2729 = vadd.f32 %v2163, %v2728
        %v2730 = vpop.f32.mrb[0].mxu0
        %2731 = vmatprep.mubr.f32.mxu0 0.0
        %2732 = vmatmul.mubr.f32.gmra.mrb[0].mxu0 %v2352
        %v2733 = vpop.f32.mrb[0].mxu0
        %v2734 = vadd.f32 %v2163, %v2733
        %v2735 = vpop.f32.mrb[0].mxu0
        %2736 = vmatprep.mubr.f32.mxu0 0.0
        %2737 = vmatmul.mubr.f32.gmra.mrb[0].mxu0 %v2355
        %v2738 = vpop.f32.mrb[0].mxu0
        %v2739 = vadd.f32 %v2163, %v2738
        %v2740 = vpop.f32.mrb[0].mxu0
        %2741 = vdwg.mxu0
        %v2742 = vld [vmem:[#allocation13] sm:$0xff]
        %v2743 = vld [vmem:[#allocation13 + $0x8] sm:$0xff]
        %v2744 = vld [vmem:[#allocation13 + $0x10] sm:$0xff]
        %v2745 = vld [vmem:[#allocation13 + $0x18] sm:$0xff]
        %v2746 = vld [vmem:[#allocation15] sm:$0x1]
        %v2748 = vlaneseq
        %v2749 = vshrl.u32 %v2748, 7
        %v2750 = vsub.s32 0, %v2749
        %v2751 = vrot.slane %v2746, %v2750
        %v2754 = vsel %vm518, %v2424, 0
        %v2757 = vsel %vm518, %v2429, 0
        %v2760 = vsel %vm518, %v2434, 0
        %v2763 = vsel %vm518, %v2439, 0
        %v2766 = vsel %vm518, %v2444, 0
        %v2769 = vsel %vm518, %v2449, 0
        %v2772 = vsel %vm518, %v2454, 0
        %v2775 = vsel %vm518, %v2459, 0
        %v2778 = vsel %vm518, %v2464, 0
        %v2781 = vsel %vm518, %v2469, 0
        %v2784 = vsel %vm518, %v2474, 0
        %v2787 = vsel %vm518, %v2479, 0
        %v2790 = vsel %vm518, %v2484, 0
        %v2793 = vsel %vm518, %v2489, 0
        %v2796 = vsel %vm518, %v2494, 0
        %v2799 = vsel %vm518, %v2499, 0
        %v2802 = vsel %vm518, %v2504, 0
        %v2805 = vsel %vm518, %v2509, 0
        %v2808 = vsel %vm518, %v2514, 0
        %v2811 = vsel %vm518, %v2519, 0
        %v2814 = vsel %vm518, %v2524, 0
        %v2817 = vsel %vm518, %v2529, 0
        %v2820 = vsel %vm518, %v2534, 0
        %v2823 = vsel %vm518, %v2539, 0
        %v2826 = vsel %vm518, %v2544, 0
        %v2829 = vsel %vm518, %v2549, 0
        %v2832 = vsel %vm518, %v2554, 0
        %v2835 = vsel %vm518, %v2559, 0
        %v2838 = vsel %vm518, %v2564, 0
        %v2841 = vsel %vm518, %v2569, 0
        %v2844 = vsel %vm518, %v2574, 0
        %v2847 = vsel %vm518, %v2579, 0
        %v2850 = vsel %vm518, %v2584, 0
        %v2853 = vsel %vm518, %v2589, 0
        %v2856 = vsel %vm518, %v2594, 0
        %v2859 = vsel %vm518, %v2599, 0
        %v2862 = vsel %vm518, %v2604, 0
        %v2865 = vsel %vm518, %v2609, 0
        %v2868 = vsel %vm518, %v2614, 0
        %v2871 = vsel %vm518, %v2619, 0
        %v2874 = vsel %vm518, %v2624, 0
        %v2877 = vsel %vm518, %v2629, 0
        %v2880 = vsel %vm518, %v2634, 0
        %v2883 = vsel %vm518, %v2639, 0
        %v2886 = vsel %vm518, %v2644, 0
        %v2889 = vsel %vm518, %v2649, 0
        %v2892 = vsel %vm518, %v2654, 0
        %v2895 = vsel %vm518, %v2659, 0
        %v2898 = vsel %vm518, %v2664, 0
        %v2901 = vsel %vm518, %v2669, 0
        %v2904 = vsel %vm518, %v2674, 0
        %v2907 = vsel %vm518, %v2679, 0
        %v2910 = vsel %vm518, %v2684, 0
        %v2913 = vsel %vm518, %v2689, 0
        %v2916 = vsel %vm518, %v2694, 0
        %v2919 = vsel %vm518, %v2699, 0
        %v2922 = vsel %vm518, %v2704, 0
        %v2925 = vsel %vm518, %v2709, 0
        %v2928 = vsel %vm518, %v2714, 0
        %v2931 = vsel %vm518, %v2719, 0
        %v2934 = vsel %vm518, %v2724, 0
        %v2937 = vsel %vm518, %v2729, 0
        %v2940 = vsel %vm518, %v2734, 0
        %v2943 = vsel %vm518, %v2739, 0
        %2945 = vmatprep.subr.mxu0 0.0
        %2946 = vmatpush1.msra.mxu0 %v2742
        %2947 = vmatprep.subr.mxu0 0.0
        %2948 = vmatpush1.msra.mxu0 %v2743
        %2949 = vmatprep.subr.mxu0 0.0
        %2950 = vmatpush1.msra.mxu0 %v2744
        %2951 = vmatprep.subr.mxu0 0.0
        %2952 = vmatpush1.msra.mxu0 %v2745
        %2953 = vmatprep.subr.mxu0 0.0
        %2954 = vmatpush1.msra.mxu0 0.0
        %2955 = vmatprep.subr.mxu0 0.0
        %2956 = vmatpush1.msra.mxu0 0.0
        %2957 = vmatprep.subr.mxu0 0.0
        %2958 = vmatpush1.msra.mxu0 0.0
        %2959 = vmatprep.subr.mxu0 0.0
        %2960 = vmatpush1.msra.mxu0 0.0
        %2961 = vmatprep.subr.mxu0 0.0
        %2962 = vmatpush1.msra.mxu0 0.0
        %2963 = vmatprep.subr.mxu0 0.0
        %2964 = vmatpush1.msra.mxu0 0.0
        %2965 = vmatprep.subr.mxu0 0.0
        %2966 = vmatpush1.msra.mxu0 0.0
        %2967 = vmatprep.subr.mxu0 0.0
        %2968 = vmatpush1.msra.mxu0 0.0
        %2969 = vmatprep.subr.mxu0 0.0
        %2970 = vmatpush1.msra.mxu0 0.0
        %2971 = vmatprep.subr.mxu0 0.0
        %2972 = vmatpush1.msra.mxu0 0.0
        %2973 = vmatprep.subr.mxu0 0.0
        %2974 = vmatpush1.msra.mxu0 0.0
        %2975 = vmatprep.subr.mxu0 0.0
        %2976 = vmatpush1.msra.mxu0 0.0
        %2977 = vmatprep.subr.mxu0 0.0
        %2978 = vmatpush1.msra.mxu0 0.0
        %2979 = vmatprep.subr.mxu0 0.0
        %2980 = vmatpush1.msra.mxu0 0.0
        %2981 = vmatprep.subr.mxu0 0.0
        %2982 = vmatpush1.msra.mxu0 0.0
        %2983 = vmatprep.subr.mxu0 0.0
        %2984 = vmatpush1.msra.mxu0 0.0
        %2985 = vmatprep.subr.mxu0 0.0
        %2986 = vmatpush1.msra.mxu0 0.0
        %2987 = vmatprep.subr.mxu0 0.0
        %2988 = vmatpush1.msra.mxu0 0.0
        %2989 = vmatprep.subr.mxu0 0.0
        %2990 = vmatpush1.msra.mxu0 0.0
        %2991 = vmatprep.subr.mxu0 0.0
        %2992 = vmatpush1.msra.mxu0 0.0
        %2993 = vmatprep.subr.mxu0 0.0
        %2994 = vmatpush1.msra.mxu0 0.0
        %2995 = vmatprep.subr.mxu0 0.0
        %2996 = vmatpush1.msra.mxu0 0.0
        %2997 = vmatprep.subr.mxu0 0.0
        %2998 = vmatpush1.msra.mxu0 0.0
        %2999 = vmatprep.subr.mxu0 0.0
        %3000 = vmatpush1.msra.mxu0 0.0
        %3001 = vmatprep.subr.mxu0 0.0
        %3002 = vmatpush1.msra.mxu0 0.0
        %3003 = vmatprep.subr.mxu0 0.0
        %3004 = vmatpush1.msra.mxu0 0.0
        %3005 = vmatprep.subr.mxu0 0.0
        %3006 = vmatpush1.msra.mxu0 0.0
        %3007 = vmatprep.subr.mxu0 0.0
        %3008 = vmatpush1.msra.mxu0 0.0
        %3009 = vmatprep.mubr.f32.mxu0 0.0
        %3010 = vmatmul.mubr.f32.gmra.mrb[0].mxu0 %v2754
        %v3011 = vpop.f32.mrb[0].mxu0
        %v3012 = vadd.f32 %v2751, %v3011
        %v3013 = vpop.f32.mrb[0].mxu0
        %3014 = vmatprep.mubr.f32.mxu0 0.0
        %3015 = vmatmul.mubr.f32.gmra.mrb[0].mxu0 %v2757
        %v3016 = vpop.f32.mrb[0].mxu0
        %v3017 = vadd.f32 %v2751, %v3016
        %v3018 = vpop.f32.mrb[0].mxu0
        %3019 = vmatprep.mubr.f32.mxu0 0.0
        %3020 = vmatmul.mubr.f32.gmra.mrb[0].mxu0 %v2760
        %v3021 = vpop.f32.mrb[0].mxu0
        %v3022 = vadd.f32 %v2751, %v3021
        %v3023 = vpop.f32.mrb[0].mxu0
        %3024 = vmatprep.mubr.f32.mxu0 0.0
        %3025 = vmatmul.mubr.f32.gmra.mrb[0].mxu0 %v2763
        %v3026 = vpop.f32.mrb[0].mxu0
        %v3027 = vadd.f32 %v2751, %v3026
        %v3028 = vpop.f32.mrb[0].mxu0
        %3029 = vmatprep.mubr.f32.mxu0 0.0
        %3030 = vmatmul.mubr.f32.gmra.mrb[0].mxu0 %v2766
        %v3031 = vpop.f32.mrb[0].mxu0
        %v3032 = vadd.f32 %v2751, %v3031
        %v3033 = vpop.f32.mrb[0].mxu0
        %3034 = vmatprep.mubr.f32.mxu0 0.0
        %3035 = vmatmul.mubr.f32.gmra.mrb[0].mxu0 %v2769
        %v3036 = vpop.f32.mrb[0].mxu0
        %v3037 = vadd.f32 %v2751, %v3036
        %v3038 = vpop.f32.mrb[0].mxu0
        %3039 = vmatprep.mubr.f32.mxu0 0.0
        %3040 = vmatmul.mubr.f32.gmra.mrb[0].mxu0 %v2772
        %v3041 = vpop.f32.mrb[0].mxu0
        %v3042 = vadd.f32 %v2751, %v3041
        %v3043 = vpop.f32.mrb[0].mxu0
        %3044 = vmatprep.mubr.f32.mxu0 0.0
        %3045 = vmatmul.mubr.f32.gmra.mrb[0].mxu0 %v2775
        %v3046 = vpop.f32.mrb[0].mxu0
        %v3047 = vadd.f32 %v2751, %v3046
        %v3048 = vpop.f32.mrb[0].mxu0
        %3049 = vmatprep.mubr.f32.mxu0 0.0
        %3050 = vmatmul.mubr.f32.gmra.mrb[0].mxu0 %v2778
        %v3051 = vpop.f32.mrb[0].mxu0
        %v3052 = vadd.f32 %v2751, %v3051
        %v3053 = vpop.f32.mrb[0].mxu0
        %3054 = vmatprep.mubr.f32.mxu0 0.0
        %3055 = vmatmul.mubr.f32.gmra.mrb[0].mxu0 %v2781
        %v3056 = vpop.f32.mrb[0].mxu0
        %v3057 = vadd.f32 %v2751, %v3056
        %v3058 = vpop.f32.mrb[0].mxu0
        %3059 = vmatprep.mubr.f32.mxu0 0.0
        %3060 = vmatmul.mubr.f32.gmra.mrb[0].mxu0 %v2784
        %v3061 = vpop.f32.mrb[0].mxu0
        %v3062 = vadd.f32 %v2751, %v3061
        %v3063 = vpop.f32.mrb[0].mxu0
        %3064 = vmatprep.mubr.f32.mxu0 0.0
        %3065 = vmatmul.mubr.f32.gmra.mrb[0].mxu0 %v2787
        %v3066 = vpop.f32.mrb[0].mxu0
        %v3067 = vadd.f32 %v2751, %v3066
        %v3068 = vpop.f32.mrb[0].mxu0
        %3069 = vmatprep.mubr.f32.mxu0 0.0
        %3070 = vmatmul.mubr.f32.gmra.mrb[0].mxu0 %v2790
        %v3071 = vpop.f32.mrb[0].mxu0
        %v3072 = vadd.f32 %v2751, %v3071
        %v3073 = vpop.f32.mrb[0].mxu0
        %3074 = vmatprep.mubr.f32.mxu0 0.0
        %3075 = vmatmul.mubr.f32.gmra.mrb[0].mxu0 %v2793
        %v3076 = vpop.f32.mrb[0].mxu0
        %v3077 = vadd.f32 %v2751, %v3076
        %v3078 = vpop.f32.mrb[0].mxu0
        %3079 = vmatprep.mubr.f32.mxu0 0.0
        %3080 = vmatmul.mubr.f32.gmra.mrb[0].mxu0 %v2796
        %v3081 = vpop.f32.mrb[0].mxu0
        %v3082 = vadd.f32 %v2751, %v3081
        %v3083 = vpop.f32.mrb[0].mxu0
        %3084 = vmatprep.mubr.f32.mxu0 0.0
        %3085 = vmatmul.mubr.f32.gmra.mrb[0].mxu0 %v2799
        %v3086 = vpop.f32.mrb[0].mxu0
        %v3087 = vadd.f32 %v2751, %v3086
        %v3088 = vpop.f32.mrb[0].mxu0
        %3089 = vmatprep.mubr.f32.mxu0 0.0
        %3090 = vmatmul.mubr.f32.gmra.mrb[0].mxu0 %v2802
        %v3091 = vpop.f32.mrb[0].mxu0
        %v3092 = vadd.f32 %v2751, %v3091
        %v3093 = vpop.f32.mrb[0].mxu0
        %3094 = vmatprep.mubr.f32.mxu0 0.0
        %3095 = vmatmul.mubr.f32.gmra.mrb[0].mxu0 %v2805
        %v3096 = vpop.f32.mrb[0].mxu0
        %v3097 = vadd.f32 %v2751, %v3096
        %v3098 = vpop.f32.mrb[0].mxu0
        %3099 = vmatprep.mubr.f32.mxu0 0.0
        %3100 = vmatmul.mubr.f32.gmra.mrb[0].mxu0 %v2808
        %v3101 = vpop.f32.mrb[0].mxu0
        %v3102 = vadd.f32 %v2751, %v3101
        %v3103 = vpop.f32.mrb[0].mxu0
        %3104 = vmatprep.mubr.f32.mxu0 0.0
        %3105 = vmatmul.mubr.f32.gmra.mrb[0].mxu0 %v2811
        %v3106 = vpop.f32.mrb[0].mxu0
        %v3107 = vadd.f32 %v2751, %v3106
        %v3108 = vpop.f32.mrb[0].mxu0
        %3109 = vmatprep.mubr.f32.mxu0 0.0
        %3110 = vmatmul.mubr.f32.gmra.mrb[0].mxu0 %v2814
        %v3111 = vpop.f32.mrb[0].mxu0
        %v3112 = vadd.f32 %v2751, %v3111
        %v3113 = vpop.f32.mrb[0].mxu0
        %3114 = vmatprep.mubr.f32.mxu0 0.0
        %3115 = vmatmul.mubr.f32.gmra.mrb[0].mxu0 %v2817
        %v3116 = vpop.f32.mrb[0].mxu0
        %v3117 = vadd.f32 %v2751, %v3116
        %v3118 = vpop.f32.mrb[0].mxu0
        %3119 = vmatprep.mubr.f32.mxu0 0.0
        %3120 = vmatmul.mubr.f32.gmra.mrb[0].mxu0 %v2820
        %v3121 = vpop.f32.mrb[0].mxu0
        %v3122 = vadd.f32 %v2751, %v3121
        %v3123 = vpop.f32.mrb[0].mxu0
        %3124 = vmatprep.mubr.f32.mxu0 0.0
        %3125 = vmatmul.mubr.f32.gmra.mrb[0].mxu0 %v2823
        %v3126 = vpop.f32.mrb[0].mxu0
        %v3127 = vadd.f32 %v2751, %v3126
        %v3128 = vpop.f32.mrb[0].mxu0
        %3129 = vmatprep.mubr.f32.mxu0 0.0
        %3130 = vmatmul.mubr.f32.gmra.mrb[0].mxu0 %v2826
        %v3131 = vpop.f32.mrb[0].mxu0
        %v3132 = vadd.f32 %v2751, %v3131
        %v3133 = vpop.f32.mrb[0].mxu0
        %3134 = vmatprep.mubr.f32.mxu0 0.0
        %3135 = vmatmul.mubr.f32.gmra.mrb[0].mxu0 %v2829
        %v3136 = vpop.f32.mrb[0].mxu0
        %v3137 = vadd.f32 %v2751, %v3136
        %v3138 = vpop.f32.mrb[0].mxu0
        %3139 = vmatprep.mubr.f32.mxu0 0.0
        %3140 = vmatmul.mubr.f32.gmra.mrb[0].mxu0 %v2832
        %v3141 = vpop.f32.mrb[0].mxu0
        %v3142 = vadd.f32 %v2751, %v3141
        %v3143 = vpop.f32.mrb[0].mxu0
        %3144 = vmatprep.mubr.f32.mxu0 0.0
        %3145 = vmatmul.mubr.f32.gmra.mrb[0].mxu0 %v2835
        %v3146 = vpop.f32.mrb[0].mxu0
        %v3147 = vadd.f32 %v2751, %v3146
        %v3148 = vpop.f32.mrb[0].mxu0
        %3149 = vmatprep.mubr.f32.mxu0 0.0
        %3150 = vmatmul.mubr.f32.gmra.mrb[0].mxu0 %v2838
        %v3151 = vpop.f32.mrb[0].mxu0
        %v3152 = vadd.f32 %v2751, %v3151
        %v3153 = vpop.f32.mrb[0].mxu0
        %3154 = vmatprep.mubr.f32.mxu0 0.0
        %3155 = vmatmul.mubr.f32.gmra.mrb[0].mxu0 %v2841
        %v3156 = vpop.f32.mrb[0].mxu0
        %v3157 = vadd.f32 %v2751, %v3156
        %v3158 = vpop.f32.mrb[0].mxu0
        %3159 = vmatprep.mubr.f32.mxu0 0.0
        %3160 = vmatmul.mubr.f32.gmra.mrb[0].mxu0 %v2844
        %v3161 = vpop.f32.mrb[0].mxu0
        %v3162 = vadd.f32 %v2751, %v3161
        %v3163 = vpop.f32.mrb[0].mxu0
        %3164 = vmatprep.mubr.f32.mxu0 0.0
        %3165 = vmatmul.mubr.f32.gmra.mrb[0].mxu0 %v2847
        %v3166 = vpop.f32.mrb[0].mxu0
        %v3167 = vadd.f32 %v2751, %v3166
        %v3168 = vpop.f32.mrb[0].mxu0
        %3169 = vmatprep.mubr.f32.mxu0 0.0
        %3170 = vmatmul.mubr.f32.gmra.mrb[0].mxu0 %v2850
        %v3171 = vpop.f32.mrb[0].mxu0
        %v3172 = vadd.f32 %v2751, %v3171
        %v3173 = vpop.f32.mrb[0].mxu0
        %3174 = vmatprep.mubr.f32.mxu0 0.0
        %3175 = vmatmul.mubr.f32.gmra.mrb[0].mxu0 %v2853
        %v3176 = vpop.f32.mrb[0].mxu0
        %v3177 = vadd.f32 %v2751, %v3176
        %v3178 = vpop.f32.mrb[0].mxu0
        %3179 = vmatprep.mubr.f32.mxu0 0.0
        %3180 = vmatmul.mubr.f32.gmra.mrb[0].mxu0 %v2856
        %v3181 = vpop.f32.mrb[0].mxu0
        %v3182 = vadd.f32 %v2751, %v3181
        %v3183 = vpop.f32.mrb[0].mxu0
        %3184 = vmatprep.mubr.f32.mxu0 0.0
        %3185 = vmatmul.mubr.f32.gmra.mrb[0].mxu0 %v2859
        %v3186 = vpop.f32.mrb[0].mxu0
        %v3187 = vadd.f32 %v2751, %v3186
        %v3188 = vpop.f32.mrb[0].mxu0
        %3189 = vmatprep.mubr.f32.mxu0 0.0
        %3190 = vmatmul.mubr.f32.gmra.mrb[0].mxu0 %v2862
        %v3191 = vpop.f32.mrb[0].mxu0
        %v3192 = vadd.f32 %v2751, %v3191
        %v3193 = vpop.f32.mrb[0].mxu0
        %3194 = vmatprep.mubr.f32.mxu0 0.0
        %3195 = vmatmul.mubr.f32.gmra.mrb[0].mxu0 %v2865
        %v3196 = vpop.f32.mrb[0].mxu0
        %v3197 = vadd.f32 %v2751, %v3196
        %v3198 = vpop.f32.mrb[0].mxu0
        %3199 = vmatprep.mubr.f32.mxu0 0.0
        %3200 = vmatmul.mubr.f32.gmra.mrb[0].mxu0 %v2868
        %v3201 = vpop.f32.mrb[0].mxu0
        %v3202 = vadd.f32 %v2751, %v3201
        %v3203 = vpop.f32.mrb[0].mxu0
        %3204 = vmatprep.mubr.f32.mxu0 0.0
        %3205 = vmatmul.mubr.f32.gmra.mrb[0].mxu0 %v2871
        %v3206 = vpop.f32.mrb[0].mxu0
        %v3207 = vadd.f32 %v2751, %v3206
        %v3208 = vpop.f32.mrb[0].mxu0
        %3209 = vmatprep.mubr.f32.mxu0 0.0
        %3210 = vmatmul.mubr.f32.gmra.mrb[0].mxu0 %v2874
        %v3211 = vpop.f32.mrb[0].mxu0
        %v3212 = vadd.f32 %v2751, %v3211
        %v3213 = vpop.f32.mrb[0].mxu0
        %3214 = vmatprep.mubr.f32.mxu0 0.0
        %3215 = vmatmul.mubr.f32.gmra.mrb[0].mxu0 %v2877
        %v3216 = vpop.f32.mrb[0].mxu0
        %v3217 = vadd.f32 %v2751, %v3216
        %v3218 = vpop.f32.mrb[0].mxu0
        %3219 = vmatprep.mubr.f32.mxu0 0.0
        %3220 = vmatmul.mubr.f32.gmra.mrb[0].mxu0 %v2880
        %v3221 = vpop.f32.mrb[0].mxu0
        %v3222 = vadd.f32 %v2751, %v3221
        %v3223 = vpop.f32.mrb[0].mxu0
        %3224 = vmatprep.mubr.f32.mxu0 0.0
        %3225 = vmatmul.mubr.f32.gmra.mrb[0].mxu0 %v2883
        %v3226 = vpop.f32.mrb[0].mxu0
        %v3227 = vadd.f32 %v2751, %v3226
        %v3228 = vpop.f32.mrb[0].mxu0
        %3229 = vmatprep.mubr.f32.mxu0 0.0
        %3230 = vmatmul.mubr.f32.gmra.mrb[0].mxu0 %v2886
        %v3231 = vpop.f32.mrb[0].mxu0
        %v3232 = vadd.f32 %v2751, %v3231
        %v3233 = vpop.f32.mrb[0].mxu0
        %3234 = vmatprep.mubr.f32.mxu0 0.0
        %3235 = vmatmul.mubr.f32.gmra.mrb[0].mxu0 %v2889
        %v3236 = vpop.f32.mrb[0].mxu0
        %v3237 = vadd.f32 %v2751, %v3236
        %v3238 = vpop.f32.mrb[0].mxu0
        %3239 = vmatprep.mubr.f32.mxu0 0.0
        %3240 = vmatmul.mubr.f32.gmra.mrb[0].mxu0 %v2892
        %v3241 = vpop.f32.mrb[0].mxu0
        %v3242 = vadd.f32 %v2751, %v3241
        %v3243 = vpop.f32.mrb[0].mxu0
        %3244 = vmatprep.mubr.f32.mxu0 0.0
        %3245 = vmatmul.mubr.f32.gmra.mrb[0].mxu0 %v2895
        %v3246 = vpop.f32.mrb[0].mxu0
        %v3247 = vadd.f32 %v2751, %v3246
        %v3248 = vpop.f32.mrb[0].mxu0
        %3249 = vmatprep.mubr.f32.mxu0 0.0
        %3250 = vmatmul.mubr.f32.gmra.mrb[0].mxu0 %v2898
        %v3251 = vpop.f32.mrb[0].mxu0
        %v3252 = vadd.f32 %v2751, %v3251
        %v3253 = vpop.f32.mrb[0].mxu0
        %3254 = vmatprep.mubr.f32.mxu0 0.0
        %3255 = vmatmul.mubr.f32.gmra.mrb[0].mxu0 %v2901
        %v3256 = vpop.f32.mrb[0].mxu0
        %v3257 = vadd.f32 %v2751, %v3256
        %v3258 = vpop.f32.mrb[0].mxu0
        %3259 = vmatprep.mubr.f32.mxu0 0.0
        %3260 = vmatmul.mubr.f32.gmra.mrb[0].mxu0 %v2904
        %v3261 = vpop.f32.mrb[0].mxu0
        %v3262 = vadd.f32 %v2751, %v3261
        %v3263 = vpop.f32.mrb[0].mxu0
        %3264 = vmatprep.mubr.f32.mxu0 0.0
        %3265 = vmatmul.mubr.f32.gmra.mrb[0].mxu0 %v2907
        %v3266 = vpop.f32.mrb[0].mxu0
        %v3267 = vadd.f32 %v2751, %v3266
        %v3268 = vpop.f32.mrb[0].mxu0
        %3269 = vmatprep.mubr.f32.mxu0 0.0
        %3270 = vmatmul.mubr.f32.gmra.mrb[0].mxu0 %v2910
        %v3271 = vpop.f32.mrb[0].mxu0
        %v3272 = vadd.f32 %v2751, %v3271
        %v3273 = vpop.f32.mrb[0].mxu0
        %3274 = vmatprep.mubr.f32.mxu0 0.0
        %3275 = vmatmul.mubr.f32.gmra.mrb[0].mxu0 %v2913
        %v3276 = vpop.f32.mrb[0].mxu0
        %v3277 = vadd.f32 %v2751, %v3276
        %v3278 = vpop.f32.mrb[0].mxu0
        %3279 = vmatprep.mubr.f32.mxu0 0.0
        %3280 = vmatmul.mubr.f32.gmra.mrb[0].mxu0 %v2916
        %v3281 = vpop.f32.mrb[0].mxu0
        %v3282 = vadd.f32 %v2751, %v3281
        %v3283 = vpop.f32.mrb[0].mxu0
        %3284 = vmatprep.mubr.f32.mxu0 0.0
        %3285 = vmatmul.mubr.f32.gmra.mrb[0].mxu0 %v2919
        %v3286 = vpop.f32.mrb[0].mxu0
        %v3287 = vadd.f32 %v2751, %v3286
        %v3288 = vpop.f32.mrb[0].mxu0
        %3289 = vmatprep.mubr.f32.mxu0 0.0
        %3290 = vmatmul.mubr.f32.gmra.mrb[0].mxu0 %v2922
        %v3291 = vpop.f32.mrb[0].mxu0
        %v3292 = vadd.f32 %v2751, %v3291
        %v3293 = vpop.f32.mrb[0].mxu0
        %3294 = vmatprep.mubr.f32.mxu0 0.0
        %3295 = vmatmul.mubr.f32.gmra.mrb[0].mxu0 %v2925
        %v3296 = vpop.f32.mrb[0].mxu0
        %v3297 = vadd.f32 %v2751, %v3296
        %v3298 = vpop.f32.mrb[0].mxu0
        %3299 = vmatprep.mubr.f32.mxu0 0.0
        %3300 = vmatmul.mubr.f32.gmra.mrb[0].mxu0 %v2928
        %v3301 = vpop.f32.mrb[0].mxu0
        %v3302 = vadd.f32 %v2751, %v3301
        %v3303 = vpop.f32.mrb[0].mxu0
        %3304 = vmatprep.mubr.f32.mxu0 0.0
        %3305 = vmatmul.mubr.f32.gmra.mrb[0].mxu0 %v2931
        %v3306 = vpop.f32.mrb[0].mxu0
        %v3307 = vadd.f32 %v2751, %v3306
        %v3308 = vpop.f32.mrb[0].mxu0
        %3309 = vmatprep.mubr.f32.mxu0 0.0
        %3310 = vmatmul.mubr.f32.gmra.mrb[0].mxu0 %v2934
        %v3311 = vpop.f32.mrb[0].mxu0
        %v3312 = vadd.f32 %v2751, %v3311
        %v3313 = vpop.f32.mrb[0].mxu0
        %3314 = vmatprep.mubr.f32.mxu0 0.0
        %3315 = vmatmul.mubr.f32.gmra.mrb[0].mxu0 %v2937
        %v3316 = vpop.f32.mrb[0].mxu0
        %v3317 = vadd.f32 %v2751, %v3316
        %v3318 = vpop.f32.mrb[0].mxu0
        %3319 = vmatprep.mubr.f32.mxu0 0.0
        %3320 = vmatmul.mubr.f32.gmra.mrb[0].mxu0 %v2940
        %v3321 = vpop.f32.mrb[0].mxu0
        %v3322 = vadd.f32 %v2751, %v3321
        %v3323 = vpop.f32.mrb[0].mxu0
        %3324 = vmatprep.mubr.f32.mxu0 0.0
        %3325 = vmatmul.mubr.f32.gmra.mrb[0].mxu0 %v2943
        %v3326 = vpop.f32.mrb[0].mxu0
        %v3327 = vadd.f32 %v2751, %v3326
        %v3328 = vpop.f32.mrb[0].mxu0
        %3329 = vdwg.mxu0
        %v3330 = vld [vmem:[#allocation16] sm:$0xff]
        %v3331 = vld [vmem:[#allocation16 + $0x8] sm:$0xff]
        %v3332 = vld [vmem:[#allocation16 + $0x10] sm:$0xff]
        %v3333 = vld [vmem:[#allocation16 + $0x18] sm:$0xff]
        %v3334 = vld [vmem:[#allocation16 + $0x20] sm:$0xff]
        %v3335 = vld [vmem:[#allocation16 + $0x28] sm:$0xff]
        %v3336 = vld [vmem:[#allocation16 + $0x30] sm:$0xff]
        %v3337 = vld [vmem:[#allocation16 + $0x38] sm:$0xff]
        %v3338 = vld [vmem:[#allocation16 + $0x40] sm:$0xff]
        %v3339 = vld [vmem:[#allocation16 + $0x48] sm:$0xff]
        %v3340 = vld [vmem:[#allocation16 + $0x50] sm:$0xff]
        %v3341 = vld [vmem:[#allocation16 + $0x58] sm:$0xff]
        %v3342 = vld [vmem:[#allocation16 + $0x60] sm:$0xff]
        %v3343 = vld [vmem:[#allocation16 + $0x68] sm:$0xff]
        %v3344 = vld [vmem:[#allocation16 + $0x70] sm:$0xff]
        %v3345 = vld [vmem:[#allocation16 + $0x78] sm:$0xff]
        %v3346 = vld [vmem:[#allocation16 + $0x80] sm:$0xff]
        %v3347 = vld [vmem:[#allocation16 + $0x88] sm:$0xff]
        %v3348 = vld [vmem:[#allocation16 + $0x90] sm:$0xff]
        %v3349 = vld [vmem:[#allocation16 + $0x98] sm:$0xff]
        %v3350 = vld [vmem:[#allocation16 + $0xa0] sm:$0xff]
        %v3351 = vld [vmem:[#allocation16 + $0xa8] sm:$0xff]
        %v3352 = vld [vmem:[#allocation16 + $0xb0] sm:$0xff]
        %v3353 = vld [vmem:[#allocation16 + $0xb8] sm:$0xff]
        %v3354 = vld [vmem:[#allocation16 + $0xc0] sm:$0xff]
        %v3355 = vld [vmem:[#allocation16 + $0xc8] sm:$0xff]
        %v3356 = vld [vmem:[#allocation16 + $0xd0] sm:$0xff]
        %v3357 = vld [vmem:[#allocation16 + $0xd8] sm:$0xff]
        %v3358 = vld [vmem:[#allocation16 + $0xe0] sm:$0xff]
        %v3359 = vld [vmem:[#allocation16 + $0xe8] sm:$0xff]
        %v3360 = vld [vmem:[#allocation16 + $0xf0] sm:$0xff]
        %v3361 = vld [vmem:[#allocation16 + $0xf8] sm:$0xff]
        %v3362 = vld [vmem:[#allocation16 + $0x100] sm:$0xff]
        %v3363 = vld [vmem:[#allocation16 + $0x108] sm:$0xff]
        %v3364 = vld [vmem:[#allocation16 + $0x110] sm:$0xff]
        %v3365 = vld [vmem:[#allocation16 + $0x118] sm:$0xff]
        %v3366 = vld [vmem:[#allocation16 + $0x120] sm:$0xff]
        %v3367 = vld [vmem:[#allocation16 + $0x128] sm:$0xff]
        %v3368 = vld [vmem:[#allocation16 + $0x130] sm:$0xff]
        %v3369 = vld [vmem:[#allocation16 + $0x138] sm:$0xff]
        %v3370 = vld [vmem:[#allocation16 + $0x140] sm:$0xff]
        %v3371 = vld [vmem:[#allocation16 + $0x148] sm:$0xff]
        %v3372 = vld [vmem:[#allocation16 + $0x150] sm:$0xff]
        %v3373 = vld [vmem:[#allocation16 + $0x158] sm:$0xff]
        %v3374 = vld [vmem:[#allocation16 + $0x160] sm:$0xff]
        %v3375 = vld [vmem:[#allocation16 + $0x168] sm:$0xff]
        %v3376 = vld [vmem:[#allocation16 + $0x170] sm:$0xff]
        %v3377 = vld [vmem:[#allocation16 + $0x178] sm:$0xff]
        %v3378 = vld [vmem:[#allocation16 + $0x180] sm:$0xff]
        %v3379 = vld [vmem:[#allocation16 + $0x188] sm:$0xff]
        %v3380 = vld [vmem:[#allocation16 + $0x190] sm:$0xff]
        %v3381 = vld [vmem:[#allocation16 + $0x198] sm:$0xff]
        %v3382 = vld [vmem:[#allocation16 + $0x1a0] sm:$0xff]
        %v3383 = vld [vmem:[#allocation16 + $0x1a8] sm:$0xff]
        %v3384 = vld [vmem:[#allocation16 + $0x1b0] sm:$0xff]
        %v3385 = vld [vmem:[#allocation16 + $0x1b8] sm:$0xff]
        %v3386 = vld [vmem:[#allocation16 + $0x1c0] sm:$0xff]
        %v3387 = vld [vmem:[#allocation16 + $0x1c8] sm:$0xff]
        %v3388 = vld [vmem:[#allocation16 + $0x1d0] sm:$0xff]
        %v3389 = vld [vmem:[#allocation16 + $0x1d8] sm:$0xff]
        %v3390 = vld [vmem:[#allocation16 + $0x1e0] sm:$0xff]
        %v3391 = vld [vmem:[#allocation16 + $0x1e8] sm:$0xff]
        %v3392 = vld [vmem:[#allocation16 + $0x1f0] sm:$0xff]
        %v3393 = vld [vmem:[#allocation16 + $0x1f8] sm:$0xff]
        %v3394 = vld [vmem:[#allocation16 + $0x200] sm:$0xff]
        %v3395 = vld [vmem:[#allocation16 + $0x208] sm:$0xff]
        %v3396 = vld [vmem:[#allocation16 + $0x210] sm:$0xff]
        %v3397 = vld [vmem:[#allocation16 + $0x218] sm:$0xff]
        %v3398 = vld [vmem:[#allocation16 + $0x220] sm:$0xff]
        %v3399 = vld [vmem:[#allocation16 + $0x228] sm:$0xff]
        %v3400 = vld [vmem:[#allocation16 + $0x230] sm:$0xff]
        %v3401 = vld [vmem:[#allocation16 + $0x238] sm:$0xff]
        %v3402 = vld [vmem:[#allocation16 + $0x240] sm:$0xff]
        %v3403 = vld [vmem:[#allocation16 + $0x248] sm:$0xff]
        %v3404 = vld [vmem:[#allocation16 + $0x250] sm:$0xff]
        %v3405 = vld [vmem:[#allocation16 + $0x258] sm:$0xff]
        %v3406 = vld [vmem:[#allocation16 + $0x260] sm:$0xff]
        %v3407 = vld [vmem:[#allocation16 + $0x268] sm:$0xff]
        %v3408 = vld [vmem:[#allocation16 + $0x270] sm:$0xff]
        %v3409 = vld [vmem:[#allocation16 + $0x278] sm:$0xff]
        %v3410 = vld [vmem:[#allocation16 + $0x280] sm:$0xff]
        %v3411 = vld [vmem:[#allocation16 + $0x288] sm:$0xff]
        %v3412 = vld [vmem:[#allocation16 + $0x290] sm:$0xff]
        %v3413 = vld [vmem:[#allocation16 + $0x298] sm:$0xff]
        %v3414 = vld [vmem:[#allocation16 + $0x2a0] sm:$0xff]
        %v3415 = vld [vmem:[#allocation16 + $0x2a8] sm:$0xff]
        %v3416 = vld [vmem:[#allocation16 + $0x2b0] sm:$0xff]
        %v3417 = vld [vmem:[#allocation16 + $0x2b8] sm:$0xff]
        %v3418 = vld [vmem:[#allocation16 + $0x2c0] sm:$0xff]
        %v3419 = vld [vmem:[#allocation16 + $0x2c8] sm:$0xff]
        %v3420 = vld [vmem:[#allocation16 + $0x2d0] sm:$0xff]
        %v3421 = vld [vmem:[#allocation16 + $0x2d8] sm:$0xff]
        %v3422 = vld [vmem:[#allocation16 + $0x2e0] sm:$0xff]
        %v3423 = vld [vmem:[#allocation16 + $0x2e8] sm:$0xff]
        %v3424 = vld [vmem:[#allocation16 + $0x2f0] sm:$0xff]
        %v3425 = vld [vmem:[#allocation16 + $0x2f8] sm:$0xff]
        %v3426 = vld [vmem:[#allocation16 + $0x300] sm:$0xff]
        %v3427 = vld [vmem:[#allocation16 + $0x308] sm:$0xff]
        %v3428 = vld [vmem:[#allocation16 + $0x310] sm:$0xff]
        %v3429 = vld [vmem:[#allocation16 + $0x318] sm:$0xff]
        %v3430 = vld [vmem:[#allocation16 + $0x320] sm:$0xff]
        %v3431 = vld [vmem:[#allocation16 + $0x328] sm:$0xff]
        %v3432 = vld [vmem:[#allocation16 + $0x330] sm:$0xff]
        %v3433 = vld [vmem:[#allocation16 + $0x338] sm:$0xff]
        %v3434 = vld [vmem:[#allocation16 + $0x340] sm:$0xff]
        %v3435 = vld [vmem:[#allocation16 + $0x348] sm:$0xff]
        %v3436 = vld [vmem:[#allocation16 + $0x350] sm:$0xff]
        %v3437 = vld [vmem:[#allocation16 + $0x358] sm:$0xff]
        %v3438 = vld [vmem:[#allocation16 + $0x360] sm:$0xff]
        %v3439 = vld [vmem:[#allocation16 + $0x368] sm:$0xff]
        %v3440 = vld [vmem:[#allocation16 + $0x370] sm:$0xff]
        %v3441 = vld [vmem:[#allocation16 + $0x378] sm:$0xff]
        %v3442 = vld [vmem:[#allocation16 + $0x380] sm:$0xff]
        %v3443 = vld [vmem:[#allocation16 + $0x388] sm:$0xff]
        %v3444 = vld [vmem:[#allocation16 + $0x390] sm:$0xff]
        %v3445 = vld [vmem:[#allocation16 + $0x398] sm:$0xff]
        %v3446 = vld [vmem:[#allocation16 + $0x3a0] sm:$0xff]
        %v3447 = vld [vmem:[#allocation16 + $0x3a8] sm:$0xff]
        %v3448 = vld [vmem:[#allocation16 + $0x3b0] sm:$0xff]
        %v3449 = vld [vmem:[#allocation16 + $0x3b8] sm:$0xff]
        %v3450 = vld [vmem:[#allocation16 + $0x3c0] sm:$0xff]
        %v3451 = vld [vmem:[#allocation16 + $0x3c8] sm:$0xff]
        %v3452 = vld [vmem:[#allocation16 + $0x3d0] sm:$0xff]
        %v3453 = vld [vmem:[#allocation16 + $0x3d8] sm:$0xff]
        %v3454 = vld [vmem:[#allocation16 + $0x3e0] sm:$0xff]
        %v3455 = vld [vmem:[#allocation16 + $0x3e8] sm:$0xff]
        %v3456 = vld [vmem:[#allocation16 + $0x3f0] sm:$0xff]
        %v3457 = vld [vmem:[#allocation16 + $0x3f8] sm:$0xff]
        %v3458 = vld [vmem:[#allocation18] sm:$0xff]
        %v3460 = vlaneseq
        %v3461 = vshrl.u32 %v3460, 7
        %v3462 = vsub.s32 0, %v3461
        %v3463 = vrot.slane %v3458, %v3462
        %v3464 = vlaneseq
        %v3465 = vshrl.u32 %v3464, 7
        %v3466 = vsub.s32 1, %v3465
        %v3467 = vrot.slane %v3458, %v3466
        %v3468 = vlaneseq
        %v3469 = vshrl.u32 %v3468, 7
        %v3470 = vsub.s32 2, %v3469
        %v3471 = vrot.slane %v3458, %v3470
        %v3472 = vlaneseq
        %v3473 = vshrl.u32 %v3472, 7
        %v3474 = vsub.s32 3, %v3473
        %v3475 = vrot.slane %v3458, %v3474
        %v3476 = vlaneseq
        %v3477 = vshrl.u32 %v3476, 7
        %v3478 = vsub.s32 4, %v3477
        %v3479 = vrot.slane %v3458, %v3478
        %v3480 = vlaneseq
        %v3481 = vshrl.u32 %v3480, 7
        %v3482 = vsub.s32 5, %v3481
        %v3483 = vrot.slane %v3458, %v3482
        %v3484 = vlaneseq
        %v3485 = vshrl.u32 %v3484, 7
        %v3486 = vsub.s32 6, %v3485
        %v3487 = vrot.slane %v3458, %v3486
        %v3488 = vlaneseq
        %v3489 = vshrl.u32 %v3488, 7
        %v3490 = vsub.s32 7, %v3489
        %v3491 = vrot.slane %v3458, %v3490
        %3500 = vmatprep.subr.mxu0 %v3331
        %3501 = vmatpush1.msra.mxu0 %v3330
        %3502 = vmatprep.subr.mxu0 %v3339
        %3503 = vmatpush1.msra.mxu0 %v3338
        %3504 = vmatprep.subr.mxu0 %v3347
        %3505 = vmatpush1.msra.mxu0 %v3346
        %3506 = vmatprep.subr.mxu0 %v3355
        %3507 = vmatpush1.msra.mxu0 %v3354
        %3508 = vmatprep.subr.mxu0 %v3363
        %3509 = vmatpush1.msra.mxu0 %v3362
        %3510 = vmatprep.subr.mxu0 %v3371
        %3511 = vmatpush1.msra.mxu0 %v3370
        %3512 = vmatprep.subr.mxu0 %v3379
        %3513 = vmatpush1.msra.mxu0 %v3378
        %3514 = vmatprep.subr.mxu0 %v3387
        %3515 = vmatpush1.msra.mxu0 %v3386
        %3516 = vmatprep.subr.mxu0 %v3395
        %3517 = vmatpush1.msra.mxu0 %v3394
        %3518 = vmatprep.subr.mxu0 %v3403
        %3519 = vmatpush1.msra.mxu0 %v3402
        %3520 = vmatprep.subr.mxu0 %v3411
        %3521 = vmatpush1.msra.mxu0 %v3410
        %3522 = vmatprep.subr.mxu0 %v3419
        %3523 = vmatpush1.msra.mxu0 %v3418
        %3524 = vmatprep.subr.mxu0 %v3427
        %3525 = vmatpush1.msra.mxu0 %v3426
        %3526 = vmatprep.subr.mxu0 %v3435
        %3527 = vmatpush1.msra.mxu0 %v3434
        %3528 = vmatprep.subr.mxu0 %v3443
        %3529 = vmatpush1.msra.mxu0 %v3442
        %3530 = vmatprep.subr.mxu0 %v3451
        %3531 = vmatpush1.msra.mxu0 %v3450
        %3532 = vmatprep.subr.mxu0 0.0
        %3533 = vmatpush1.msra.mxu0 0.0
        %3534 = vmatprep.subr.mxu0 0.0
        %3535 = vmatpush1.msra.mxu0 0.0
        %3536 = vmatprep.subr.mxu0 0.0
        %3537 = vmatpush1.msra.mxu0 0.0
        %3538 = vmatprep.subr.mxu0 0.0
        %3539 = vmatpush1.msra.mxu0 0.0
        %3540 = vmatprep.subr.mxu0 0.0
        %3541 = vmatpush1.msra.mxu0 0.0
        %3542 = vmatprep.subr.mxu0 0.0
        %3543 = vmatpush1.msra.mxu0 0.0
        %3544 = vmatprep.subr.mxu0 0.0
        %3545 = vmatpush1.msra.mxu0 0.0
        %3546 = vmatprep.subr.mxu0 0.0
        %3547 = vmatpush1.msra.mxu0 0.0
        %3548 = vmatprep.subr.mxu0 0.0
        %3549 = vmatpush1.msra.mxu0 0.0
        %3550 = vmatprep.subr.mxu0 0.0
        %3551 = vmatpush1.msra.mxu0 0.0
        %3552 = vmatprep.subr.mxu0 0.0
        %3553 = vmatpush1.msra.mxu0 0.0
        %3554 = vmatprep.subr.mxu0 0.0
        %3555 = vmatpush1.msra.mxu0 0.0
        %3556 = vmatprep.subr.mxu0 0.0
        %3557 = vmatpush1.msra.mxu0 0.0
        %3558 = vmatprep.subr.mxu0 0.0
        %3559 = vmatpush1.msra.mxu0 0.0
        %3560 = vmatprep.subr.mxu0 0.0
        %3561 = vmatpush1.msra.mxu0 0.0
        %3562 = vmatprep.subr.mxu0 0.0
        %3563 = vmatpush1.msra.mxu0 0.0
        %3564 = vmatprep.mubr.f32.mxu0 0.0
        %3565 = vmatmul.mubr.f32.gmra.mrb[0].mxu0 %v3012
        %v3566 = vpop.f32.mrb[0].mxu0
        %v3567 = vadd.f32 %v3463, %v3566
        %v3568 = vpop.f32.mrb[0].mxu0
        %v3569 = vadd.f32 %v3467, %v3568
        %3570 = vmatprep.mubr.f32.mxu0 0.0
        %3571 = vmatmul.mubr.f32.gmra.mrb[0].mxu0 %v3017
        %v3572 = vpop.f32.mrb[0].mxu0
        %v3573 = vadd.f32 %v3463, %v3572
        %v3574 = vpop.f32.mrb[0].mxu0
        %v3575 = vadd.f32 %v3467, %v3574
        %3576 = vmatprep.mubr.f32.mxu0 0.0
        %3577 = vmatmul.mubr.f32.gmra.mrb[0].mxu0 %v3022
        %v3578 = vpop.f32.mrb[0].mxu0
        %v3579 = vadd.f32 %v3463, %v3578
        %v3580 = vpop.f32.mrb[0].mxu0
        %v3581 = vadd.f32 %v3467, %v3580
        %3582 = vmatprep.mubr.f32.mxu0 0.0
        %3583 = vmatmul.mubr.f32.gmra.mrb[0].mxu0 %v3027
        %v3584 = vpop.f32.mrb[0].mxu0
        %v3585 = vadd.f32 %v3463, %v3584
        %v3586 = vpop.f32.mrb[0].mxu0
        %v3587 = vadd.f32 %v3467, %v3586
        %3588 = vmatprep.mubr.f32.mxu0 0.0
        %3589 = vmatmul.mubr.f32.gmra.mrb[0].mxu0 %v3032
        %v3590 = vpop.f32.mrb[0].mxu0
        %v3591 = vadd.f32 %v3463, %v3590
        %v3592 = vpop.f32.mrb[0].mxu0
        %v3593 = vadd.f32 %v3467, %v3592
        %3594 = vmatprep.mubr.f32.mxu0 0.0
        %3595 = vmatmul.mubr.f32.gmra.mrb[0].mxu0 %v3037
        %v3596 = vpop.f32.mrb[0].mxu0
        %v3597 = vadd.f32 %v3463, %v3596
        %v3598 = vpop.f32.mrb[0].mxu0
        %v3599 = vadd.f32 %v3467, %v3598
        %3600 = vmatprep.mubr.f32.mxu0 0.0
        %3601 = vmatmul.mubr.f32.gmra.mrb[0].mxu0 %v3042
        %v3602 = vpop.f32.mrb[0].mxu0
        %v3603 = vadd.f32 %v3463, %v3602
        %v3604 = vpop.f32.mrb[0].mxu0
        %v3605 = vadd.f32 %v3467, %v3604
        %3606 = vmatprep.mubr.f32.mxu0 0.0
        %3607 = vmatmul.mubr.f32.gmra.mrb[0].mxu0 %v3047
        %v3608 = vpop.f32.mrb[0].mxu0
        %v3609 = vadd.f32 %v3463, %v3608
        %v3610 = vpop.f32.mrb[0].mxu0
        %v3611 = vadd.f32 %v3467, %v3610
        %3612 = vmatprep.mubr.f32.mxu0 0.0
        %3613 = vmatmul.mubr.f32.gmra.mrb[0].mxu0 %v3052
        %v3614 = vpop.f32.mrb[0].mxu0
        %v3615 = vadd.f32 %v3463, %v3614
        %v3616 = vpop.f32.mrb[0].mxu0
        %v3617 = vadd.f32 %v3467, %v3616
        %3618 = vmatprep.mubr.f32.mxu0 0.0
        %3619 = vmatmul.mubr.f32.gmra.mrb[0].mxu0 %v3057
        %v3620 = vpop.f32.mrb[0].mxu0
        %v3621 = vadd.f32 %v3463, %v3620
        %v3622 = vpop.f32.mrb[0].mxu0
        %v3623 = vadd.f32 %v3467, %v3622
        %3624 = vmatprep.mubr.f32.mxu0 0.0
        %3625 = vmatmul.mubr.f32.gmra.mrb[0].mxu0 %v3062
        %v3626 = vpop.f32.mrb[0].mxu0
        %v3627 = vadd.f32 %v3463, %v3626
        %v3628 = vpop.f32.mrb[0].mxu0
        %v3629 = vadd.f32 %v3467, %v3628
        %3630 = vmatprep.mubr.f32.mxu0 0.0
        %3631 = vmatmul.mubr.f32.gmra.mrb[0].mxu0 %v3067
        %v3632 = vpop.f32.mrb[0].mxu0
        %v3633 = vadd.f32 %v3463, %v3632
        %v3634 = vpop.f32.mrb[0].mxu0
        %v3635 = vadd.f32 %v3467, %v3634
        %3636 = vmatprep.mubr.f32.mxu0 0.0
        %3637 = vmatmul.mubr.f32.gmra.mrb[0].mxu0 %v3072
        %v3638 = vpop.f32.mrb[0].mxu0
        %v3639 = vadd.f32 %v3463, %v3638
        %v3640 = vpop.f32.mrb[0].mxu0
        %v3641 = vadd.f32 %v3467, %v3640
        %3642 = vmatprep.mubr.f32.mxu0 0.0
        %3643 = vmatmul.mubr.f32.gmra.mrb[0].mxu0 %v3077
        %v3644 = vpop.f32.mrb[0].mxu0
        %v3645 = vadd.f32 %v3463, %v3644
        %v3646 = vpop.f32.mrb[0].mxu0
        %v3647 = vadd.f32 %v3467, %v3646
        %3648 = vmatprep.mubr.f32.mxu0 0.0
        %3649 = vmatmul.mubr.f32.gmra.mrb[0].mxu0 %v3082
        %v3650 = vpop.f32.mrb[0].mxu0
        %v3651 = vadd.f32 %v3463, %v3650
        %v3652 = vpop.f32.mrb[0].mxu0
        %v3653 = vadd.f32 %v3467, %v3652
        %3654 = vmatprep.mubr.f32.mxu0 0.0
        %3655 = vmatmul.mubr.f32.gmra.mrb[0].mxu0 %v3087
        %v3656 = vpop.f32.mrb[0].mxu0
        %v3657 = vadd.f32 %v3463, %v3656
        %v3658 = vpop.f32.mrb[0].mxu0
        %v3659 = vadd.f32 %v3467, %v3658
        %3660 = vmatprep.mubr.f32.mxu0 0.0
        %3661 = vmatmul.mubr.f32.gmra.mrb[0].mxu0 %v3092
        %v3662 = vpop.f32.mrb[0].mxu0
        %v3663 = vadd.f32 %v3463, %v3662
        %v3664 = vpop.f32.mrb[0].mxu0
        %v3665 = vadd.f32 %v3467, %v3664
        %3666 = vmatprep.mubr.f32.mxu0 0.0
        %3667 = vmatmul.mubr.f32.gmra.mrb[0].mxu0 %v3097
        %v3668 = vpop.f32.mrb[0].mxu0
        %v3669 = vadd.f32 %v3463, %v3668
        %v3670 = vpop.f32.mrb[0].mxu0
        %v3671 = vadd.f32 %v3467, %v3670
        %3672 = vmatprep.mubr.f32.mxu0 0.0
        %3673 = vmatmul.mubr.f32.gmra.mrb[0].mxu0 %v3102
        %v3674 = vpop.f32.mrb[0].mxu0
        %v3675 = vadd.f32 %v3463, %v3674
        %v3676 = vpop.f32.mrb[0].mxu0
        %v3677 = vadd.f32 %v3467, %v3676
        %3678 = vmatprep.mubr.f32.mxu0 0.0
        %3679 = vmatmul.mubr.f32.gmra.mrb[0].mxu0 %v3107
        %v3680 = vpop.f32.mrb[0].mxu0
        %v3681 = vadd.f32 %v3463, %v3680
        %v3682 = vpop.f32.mrb[0].mxu0
        %v3683 = vadd.f32 %v3467, %v3682
        %3684 = vmatprep.mubr.f32.mxu0 0.0
        %3685 = vmatmul.mubr.f32.gmra.mrb[0].mxu0 %v3112
        %v3686 = vpop.f32.mrb[0].mxu0
        %v3687 = vadd.f32 %v3463, %v3686
        %v3688 = vpop.f32.mrb[0].mxu0
        %v3689 = vadd.f32 %v3467, %v3688
        %3690 = vmatprep.mubr.f32.mxu0 0.0
        %3691 = vmatmul.mubr.f32.gmra.mrb[0].mxu0 %v3117
        %v3692 = vpop.f32.mrb[0].mxu0
        %v3693 = vadd.f32 %v3463, %v3692
        %v3694 = vpop.f32.mrb[0].mxu0
        %v3695 = vadd.f32 %v3467, %v3694
        %3696 = vmatprep.mubr.f32.mxu0 0.0
        %3697 = vmatmul.mubr.f32.gmra.mrb[0].mxu0 %v3122
        %v3698 = vpop.f32.mrb[0].mxu0
        %v3699 = vadd.f32 %v3463, %v3698
        %v3700 = vpop.f32.mrb[0].mxu0
        %v3701 = vadd.f32 %v3467, %v3700
        %3702 = vmatprep.mubr.f32.mxu0 0.0
        %3703 = vmatmul.mubr.f32.gmra.mrb[0].mxu0 %v3127
        %v3704 = vpop.f32.mrb[0].mxu0
        %v3705 = vadd.f32 %v3463, %v3704
        %v3706 = vpop.f32.mrb[0].mxu0
        %v3707 = vadd.f32 %v3467, %v3706
        %3708 = vmatprep.mubr.f32.mxu0 0.0
        %3709 = vmatmul.mubr.f32.gmra.mrb[0].mxu0 %v3132
        %v3710 = vpop.f32.mrb[0].mxu0
        %v3711 = vadd.f32 %v3463, %v3710
        %v3712 = vpop.f32.mrb[0].mxu0
        %v3713 = vadd.f32 %v3467, %v3712
        %3714 = vmatprep.mubr.f32.mxu0 0.0
        %3715 = vmatmul.mubr.f32.gmra.mrb[0].mxu0 %v3137
        %v3716 = vpop.f32.mrb[0].mxu0
        %v3717 = vadd.f32 %v3463, %v3716
        %v3718 = vpop.f32.mrb[0].mxu0
        %v3719 = vadd.f32 %v3467, %v3718
        %3720 = vmatprep.mubr.f32.mxu0 0.0
        %3721 = vmatmul.mubr.f32.gmra.mrb[0].mxu0 %v3142
        %v3722 = vpop.f32.mrb[0].mxu0
        %v3723 = vadd.f32 %v3463, %v3722
        %v3724 = vpop.f32.mrb[0].mxu0
        %v3725 = vadd.f32 %v3467, %v3724
        %3726 = vmatprep.mubr.f32.mxu0 0.0
        %3727 = vmatmul.mubr.f32.gmra.mrb[0].mxu0 %v3147
        %v3728 = vpop.f32.mrb[0].mxu0
        %v3729 = vadd.f32 %v3463, %v3728
        %v3730 = vpop.f32.mrb[0].mxu0
        %v3731 = vadd.f32 %v3467, %v3730
        %3732 = vmatprep.mubr.f32.mxu0 0.0
        %3733 = vmatmul.mubr.f32.gmra.mrb[0].mxu0 %v3152
        %v3734 = vpop.f32.mrb[0].mxu0
        %v3735 = vadd.f32 %v3463, %v3734
        %v3736 = vpop.f32.mrb[0].mxu0
        %v3737 = vadd.f32 %v3467, %v3736
        %3738 = vmatprep.mubr.f32.mxu0 0.0
        %3739 = vmatmul.mubr.f32.gmra.mrb[0].mxu0 %v3157
        %v3740 = vpop.f32.mrb[0].mxu0
        %v3741 = vadd.f32 %v3463, %v3740
        %v3742 = vpop.f32.mrb[0].mxu0
        %v3743 = vadd.f32 %v3467, %v3742
        %3744 = vmatprep.mubr.f32.mxu0 0.0
        %3745 = vmatmul.mubr.f32.gmra.mrb[0].mxu0 %v3162
        %v3746 = vpop.f32.mrb[0].mxu0
        %v3747 = vadd.f32 %v3463, %v3746
        %v3748 = vpop.f32.mrb[0].mxu0
        %v3749 = vadd.f32 %v3467, %v3748
        %3750 = vmatprep.mubr.f32.mxu0 0.0
        %3751 = vmatmul.mubr.f32.gmra.mrb[0].mxu0 %v3167
        %v3752 = vpop.f32.mrb[0].mxu0
        %v3753 = vadd.f32 %v3463, %v3752
        %v3754 = vpop.f32.mrb[0].mxu0
        %v3755 = vadd.f32 %v3467, %v3754
        %3756 = vmatprep.mubr.f32.mxu0 0.0
        %3757 = vmatmul.mubr.f32.gmra.mrb[0].mxu0 %v3172
        %v3758 = vpop.f32.mrb[0].mxu0
        %v3759 = vadd.f32 %v3463, %v3758
        %v3760 = vpop.f32.mrb[0].mxu0
        %v3761 = vadd.f32 %v3467, %v3760
        %3762 = vmatprep.mubr.f32.mxu0 0.0
        %3763 = vmatmul.mubr.f32.gmra.mrb[0].mxu0 %v3177
        %v3764 = vpop.f32.mrb[0].mxu0
        %v3765 = vadd.f32 %v3463, %v3764
        %v3766 = vpop.f32.mrb[0].mxu0
        %v3767 = vadd.f32 %v3467, %v3766
        %3768 = vmatprep.mubr.f32.mxu0 0.0
        %3769 = vmatmul.mubr.f32.gmra.mrb[0].mxu0 %v3182
        %v3770 = vpop.f32.mrb[0].mxu0
        %v3771 = vadd.f32 %v3463, %v3770
        %v3772 = vpop.f32.mrb[0].mxu0
        %v3773 = vadd.f32 %v3467, %v3772
        %3774 = vmatprep.mubr.f32.mxu0 0.0
        %3775 = vmatmul.mubr.f32.gmra.mrb[0].mxu0 %v3187
        %v3776 = vpop.f32.mrb[0].mxu0
        %v3777 = vadd.f32 %v3463, %v3776
        %v3778 = vpop.f32.mrb[0].mxu0
        %v3779 = vadd.f32 %v3467, %v3778
        %3780 = vmatprep.mubr.f32.mxu0 0.0
        %3781 = vmatmul.mubr.f32.gmra.mrb[0].mxu0 %v3192
        %v3782 = vpop.f32.mrb[0].mxu0
        %v3783 = vadd.f32 %v3463, %v3782
        %v3784 = vpop.f32.mrb[0].mxu0
        %v3785 = vadd.f32 %v3467, %v3784
        %3786 = vmatprep.mubr.f32.mxu0 0.0
        %3787 = vmatmul.mubr.f32.gmra.mrb[0].mxu0 %v3197
        %v3788 = vpop.f32.mrb[0].mxu0
        %v3789 = vadd.f32 %v3463, %v3788
        %v3790 = vpop.f32.mrb[0].mxu0
        %v3791 = vadd.f32 %v3467, %v3790
        %3792 = vmatprep.mubr.f32.mxu0 0.0
        %3793 = vmatmul.mubr.f32.gmra.mrb[0].mxu0 %v3202
        %v3794 = vpop.f32.mrb[0].mxu0
        %v3795 = vadd.f32 %v3463, %v3794
        %v3796 = vpop.f32.mrb[0].mxu0
        %v3797 = vadd.f32 %v3467, %v3796
        %3798 = vmatprep.mubr.f32.mxu0 0.0
        %3799 = vmatmul.mubr.f32.gmra.mrb[0].mxu0 %v3207
        %v3800 = vpop.f32.mrb[0].mxu0
        %v3801 = vadd.f32 %v3463, %v3800
        %v3802 = vpop.f32.mrb[0].mxu0
        %v3803 = vadd.f32 %v3467, %v3802
        %3804 = vmatprep.mubr.f32.mxu0 0.0
        %3805 = vmatmul.mubr.f32.gmra.mrb[0].mxu0 %v3212
        %v3806 = vpop.f32.mrb[0].mxu0
        %v3807 = vadd.f32 %v3463, %v3806
        %v3808 = vpop.f32.mrb[0].mxu0
        %v3809 = vadd.f32 %v3467, %v3808
        %3810 = vmatprep.mubr.f32.mxu0 0.0
        %3811 = vmatmul.mubr.f32.gmra.mrb[0].mxu0 %v3217
        %v3812 = vpop.f32.mrb[0].mxu0
        %v3813 = vadd.f32 %v3463, %v3812
        %v3814 = vpop.f32.mrb[0].mxu0
        %v3815 = vadd.f32 %v3467, %v3814
        %3816 = vmatprep.mubr.f32.mxu0 0.0
        %3817 = vmatmul.mubr.f32.gmra.mrb[0].mxu0 %v3222
        %v3818 = vpop.f32.mrb[0].mxu0
        %v3819 = vadd.f32 %v3463, %v3818
        %v3820 = vpop.f32.mrb[0].mxu0
        %v3821 = vadd.f32 %v3467, %v3820
        %3822 = vmatprep.mubr.f32.mxu0 0.0
        %3823 = vmatmul.mubr.f32.gmra.mrb[0].mxu0 %v3227
        %v3824 = vpop.f32.mrb[0].mxu0
        %v3825 = vadd.f32 %v3463, %v3824
        %v3826 = vpop.f32.mrb[0].mxu0
        %v3827 = vadd.f32 %v3467, %v3826
        %3828 = vmatprep.mubr.f32.mxu0 0.0
        %3829 = vmatmul.mubr.f32.gmra.mrb[0].mxu0 %v3232
        %v3830 = vpop.f32.mrb[0].mxu0
        %v3831 = vadd.f32 %v3463, %v3830
        %v3832 = vpop.f32.mrb[0].mxu0
        %v3833 = vadd.f32 %v3467, %v3832
        %3834 = vmatprep.mubr.f32.mxu0 0.0
        %3835 = vmatmul.mubr.f32.gmra.mrb[0].mxu0 %v3237
        %v3836 = vpop.f32.mrb[0].mxu0
        %v3837 = vadd.f32 %v3463, %v3836
        %v3838 = vpop.f32.mrb[0].mxu0
        %v3839 = vadd.f32 %v3467, %v3838
        %3840 = vmatprep.mubr.f32.mxu0 0.0
        %3841 = vmatmul.mubr.f32.gmra.mrb[0].mxu0 %v3242
        %v3842 = vpop.f32.mrb[0].mxu0
        %v3843 = vadd.f32 %v3463, %v3842
        %v3844 = vpop.f32.mrb[0].mxu0
        %v3845 = vadd.f32 %v3467, %v3844
        %3846 = vmatprep.mubr.f32.mxu0 0.0
        %3847 = vmatmul.mubr.f32.gmra.mrb[0].mxu0 %v3247
        %v3848 = vpop.f32.mrb[0].mxu0
        %v3849 = vadd.f32 %v3463, %v3848
        %v3850 = vpop.f32.mrb[0].mxu0
        %v3851 = vadd.f32 %v3467, %v3850
        %3852 = vmatprep.mubr.f32.mxu0 0.0
        %3853 = vmatmul.mubr.f32.gmra.mrb[0].mxu0 %v3252
        %v3854 = vpop.f32.mrb[0].mxu0
        %v3855 = vadd.f32 %v3463, %v3854
        %v3856 = vpop.f32.mrb[0].mxu0
        %v3857 = vadd.f32 %v3467, %v3856
        %3858 = vmatprep.mubr.f32.mxu0 0.0
        %3859 = vmatmul.mubr.f32.gmra.mrb[0].mxu0 %v3257
        %v3860 = vpop.f32.mrb[0].mxu0
        %v3861 = vadd.f32 %v3463, %v3860
        %v3862 = vpop.f32.mrb[0].mxu0
        %v3863 = vadd.f32 %v3467, %v3862
        %3864 = vmatprep.mubr.f32.mxu0 0.0
        %3865 = vmatmul.mubr.f32.gmra.mrb[0].mxu0 %v3262
        %v3866 = vpop.f32.mrb[0].mxu0
        %v3867 = vadd.f32 %v3463, %v3866
        %v3868 = vpop.f32.mrb[0].mxu0
        %v3869 = vadd.f32 %v3467, %v3868
        %3870 = vmatprep.mubr.f32.mxu0 0.0
        %3871 = vmatmul.mubr.f32.gmra.mrb[0].mxu0 %v3267
        %v3872 = vpop.f32.mrb[0].mxu0
        %v3873 = vadd.f32 %v3463, %v3872
        %v3874 = vpop.f32.mrb[0].mxu0
        %v3875 = vadd.f32 %v3467, %v3874
        %3876 = vmatprep.mubr.f32.mxu0 0.0
        %3877 = vmatmul.mubr.f32.gmra.mrb[0].mxu0 %v3272
        %v3878 = vpop.f32.mrb[0].mxu0
        %v3879 = vadd.f32 %v3463, %v3878
        %v3880 = vpop.f32.mrb[0].mxu0
        %v3881 = vadd.f32 %v3467, %v3880
        %3882 = vmatprep.mubr.f32.mxu0 0.0
        %3883 = vmatmul.mubr.f32.gmra.mrb[0].mxu0 %v3277
        %v3884 = vpop.f32.mrb[0].mxu0
        %v3885 = vadd.f32 %v3463, %v3884
        %v3886 = vpop.f32.mrb[0].mxu0
        %v3887 = vadd.f32 %v3467, %v3886
        %3888 = vmatprep.mubr.f32.mxu0 0.0
        %3889 = vmatmul.mubr.f32.gmra.mrb[0].mxu0 %v3282
        %v3890 = vpop.f32.mrb[0].mxu0
        %v3891 = vadd.f32 %v3463, %v3890
        %v3892 = vpop.f32.mrb[0].mxu0
        %v3893 = vadd.f32 %v3467, %v3892
        %3894 = vmatprep.mubr.f32.mxu0 0.0
        %3895 = vmatmul.mubr.f32.gmra.mrb[0].mxu0 %v3287
        %v3896 = vpop.f32.mrb[0].mxu0
        %v3897 = vadd.f32 %v3463, %v3896
        %v3898 = vpop.f32.mrb[0].mxu0
        %v3899 = vadd.f32 %v3467, %v3898
        %3900 = vmatprep.mubr.f32.mxu0 0.0
        %3901 = vmatmul.mubr.f32.gmra.mrb[0].mxu0 %v3292
        %v3902 = vpop.f32.mrb[0].mxu0
        %v3903 = vadd.f32 %v3463, %v3902
        %v3904 = vpop.f32.mrb[0].mxu0
        %v3905 = vadd.f32 %v3467, %v3904
        %3906 = vmatprep.mubr.f32.mxu0 0.0
        %3907 = vmatmul.mubr.f32.gmra.mrb[0].mxu0 %v3297
        %v3908 = vpop.f32.mrb[0].mxu0
        %v3909 = vadd.f32 %v3463, %v3908
        %v3910 = vpop.f32.mrb[0].mxu0
        %v3911 = vadd.f32 %v3467, %v3910
        %3912 = vmatprep.mubr.f32.mxu0 0.0
        %3913 = vmatmul.mubr.f32.gmra.mrb[0].mxu0 %v3302
        %v3914 = vpop.f32.mrb[0].mxu0
        %v3915 = vadd.f32 %v3463, %v3914
        %v3916 = vpop.f32.mrb[0].mxu0
        %v3917 = vadd.f32 %v3467, %v3916
        %3918 = vmatprep.mubr.f32.mxu0 0.0
        %3919 = vmatmul.mubr.f32.gmra.mrb[0].mxu0 %v3307
        %v3920 = vpop.f32.mrb[0].mxu0
        %v3921 = vadd.f32 %v3463, %v3920
        %v3922 = vpop.f32.mrb[0].mxu0
        %v3923 = vadd.f32 %v3467, %v3922
        %3924 = vmatprep.mubr.f32.mxu0 0.0
        %3925 = vmatmul.mubr.f32.gmra.mrb[0].mxu0 %v3312
        %v3926 = vpop.f32.mrb[0].mxu0
        %v3927 = vadd.f32 %v3463, %v3926
        %v3928 = vpop.f32.mrb[0].mxu0
        %v3929 = vadd.f32 %v3467, %v3928
        %3930 = vmatprep.mubr.f32.mxu0 0.0
        %3931 = vmatmul.mubr.f32.gmra.mrb[0].mxu0 %v3317
        %v3932 = vpop.f32.mrb[0].mxu0
        %v3933 = vadd.f32 %v3463, %v3932
        %v3934 = vpop.f32.mrb[0].mxu0
        %v3935 = vadd.f32 %v3467, %v3934
        %3936 = vmatprep.mubr.f32.mxu0 0.0
        %3937 = vmatmul.mubr.f32.gmra.mrb[0].mxu0 %v3322
        %v3938 = vpop.f32.mrb[0].mxu0
        %v3939 = vadd.f32 %v3463, %v3938
        %v3940 = vpop.f32.mrb[0].mxu0
        %v3941 = vadd.f32 %v3467, %v3940
        %3942 = vmatprep.mubr.f32.mxu0 0.0
        %3943 = vmatmul.mubr.f32.gmra.mrb[0].mxu0 %v3327
        %v3944 = vpop.f32.mrb[0].mxu0
        %v3945 = vadd.f32 %v3463, %v3944
        %v3946 = vpop.f32.mrb[0].mxu0
        %v3947 = vadd.f32 %v3467, %v3946
        %3948 = vdwg.mxu0
        %3949 = vmatprep.subr.mxu0 %v3333
        %3950 = vmatpush1.msra.mxu0 %v3332
        %3951 = vmatprep.subr.mxu0 %v3341
        %3952 = vmatpush1.msra.mxu0 %v3340
        %3953 = vmatprep.subr.mxu0 %v3349
        %3954 = vmatpush1.msra.mxu0 %v3348
        %3955 = vmatprep.subr.mxu0 %v3357
        %3956 = vmatpush1.msra.mxu0 %v3356
        %3957 = vmatprep.subr.mxu0 %v3365
        %3958 = vmatpush1.msra.mxu0 %v3364
        %3959 = vmatprep.subr.mxu0 %v3373
        %3960 = vmatpush1.msra.mxu0 %v3372
        %3961 = vmatprep.subr.mxu0 %v3381
        %3962 = vmatpush1.msra.mxu0 %v3380
        %3963 = vmatprep.subr.mxu0 %v3389
        %3964 = vmatpush1.msra.mxu0 %v3388
        %3965 = vmatprep.subr.mxu0 %v3397
        %3966 = vmatpush1.msra.mxu0 %v3396
        %3967 = vmatprep.subr.mxu0 %v3405
        %3968 = vmatpush1.msra.mxu0 %v3404
        %3969 = vmatprep.subr.mxu0 %v3413
        %3970 = vmatpush1.msra.mxu0 %v3412
        %3971 = vmatprep.subr.mxu0 %v3421
        %3972 = vmatpush1.msra.mxu0 %v3420
        %3973 = vmatprep.subr.mxu0 %v3429
        %3974 = vmatpush1.msra.mxu0 %v3428
        %3975 = vmatprep.subr.mxu0 %v3437
        %3976 = vmatpush1.msra.mxu0 %v3436
        %3977 = vmatprep.subr.mxu0 %v3445
        %3978 = vmatpush1.msra.mxu0 %v3444
        %3979 = vmatprep.subr.mxu0 %v3453
        %3980 = vmatpush1.msra.mxu0 %v3452
        %3981 = vmatprep.subr.mxu0 0.0
        %3982 = vmatpush1.msra.mxu0 0.0
        %3983 = vmatprep.subr.mxu0 0.0
        %3984 = vmatpush1.msra.mxu0 0.0
        %3985 = vmatprep.subr.mxu0 0.0
        %3986 = vmatpush1.msra.mxu0 0.0
        %3987 = vmatprep.subr.mxu0 0.0
        %3988 = vmatpush1.msra.mxu0 0.0
        %3989 = vmatprep.subr.mxu0 0.0
        %3990 = vmatpush1.msra.mxu0 0.0
        %3991 = vmatprep.subr.mxu0 0.0
        %3992 = vmatpush1.msra.mxu0 0.0
        %3993 = vmatprep.subr.mxu0 0.0
        %3994 = vmatpush1.msra.mxu0 0.0
        %3995 = vmatprep.subr.mxu0 0.0
        %3996 = vmatpush1.msra.mxu0 0.0
        %3997 = vmatprep.subr.mxu0 0.0
        %3998 = vmatpush1.msra.mxu0 0.0
        %3999 = vmatprep.subr.mxu0 0.0
        %4000 = vmatpush1.msra.mxu0 0.0
        %4001 = vmatprep.subr.mxu0 0.0
        %4002 = vmatpush1.msra.mxu0 0.0
        %4003 = vmatprep.subr.mxu0 0.0
        %4004 = vmatpush1.msra.mxu0 0.0
        %4005 = vmatprep.subr.mxu0 0.0
        %4006 = vmatpush1.msra.mxu0 0.0
        %4007 = vmatprep.subr.mxu0 0.0
        %4008 = vmatpush1.msra.mxu0 0.0
        %4009 = vmatprep.subr.mxu0 0.0
        %4010 = vmatpush1.msra.mxu0 0.0
        %4011 = vmatprep.subr.mxu0 0.0
        %4012 = vmatpush1.msra.mxu0 0.0
        %4013 = vmatprep.mubr.f32.mxu0 0.0
        %4014 = vmatmul.mubr.f32.gmra.mrb[0].mxu0 %v3012
        %v4015 = vpop.f32.mrb[0].mxu0
        %v4016 = vadd.f32 %v3471, %v4015
        %v4017 = vpop.f32.mrb[0].mxu0
        %v4018 = vadd.f32 %v3475, %v4017
        %4019 = vmatprep.mubr.f32.mxu0 0.0
        %4020 = vmatmul.mubr.f32.gmra.mrb[0].mxu0 %v3017
        %v4021 = vpop.f32.mrb[0].mxu0
        %v4022 = vadd.f32 %v3471, %v4021
        %v4023 = vpop.f32.mrb[0].mxu0
        %v4024 = vadd.f32 %v3475, %v4023
        %4025 = vmatprep.mubr.f32.mxu0 0.0
        %4026 = vmatmul.mubr.f32.gmra.mrb[0].mxu0 %v3022
        %v4027 = vpop.f32.mrb[0].mxu0
        %v4028 = vadd.f32 %v3471, %v4027
        %v4029 = vpop.f32.mrb[0].mxu0
        %v4030 = vadd.f32 %v3475, %v4029
        %4031 = vmatprep.mubr.f32.mxu0 0.0
        %4032 = vmatmul.mubr.f32.gmra.mrb[0].mxu0 %v3027
        %v4033 = vpop.f32.mrb[0].mxu0
        %v4034 = vadd.f32 %v3471, %v4033
        %v4035 = vpop.f32.mrb[0].mxu0
        %v4036 = vadd.f32 %v3475, %v4035
        %4037 = vmatprep.mubr.f32.mxu0 0.0
        %4038 = vmatmul.mubr.f32.gmra.mrb[0].mxu0 %v3032
        %v4039 = vpop.f32.mrb[0].mxu0
        %v4040 = vadd.f32 %v3471, %v4039
        %v4041 = vpop.f32.mrb[0].mxu0
        %v4042 = vadd.f32 %v3475, %v4041
        %4043 = vmatprep.mubr.f32.mxu0 0.0
        %4044 = vmatmul.mubr.f32.gmra.mrb[0].mxu0 %v3037
        %v4045 = vpop.f32.mrb[0].mxu0
        %v4046 = vadd.f32 %v3471, %v4045
        %v4047 = vpop.f32.mrb[0].mxu0
        %v4048 = vadd.f32 %v3475, %v4047
        %4049 = vmatprep.mubr.f32.mxu0 0.0
        %4050 = vmatmul.mubr.f32.gmra.mrb[0].mxu0 %v3042
        %v4051 = vpop.f32.mrb[0].mxu0
        %v4052 = vadd.f32 %v3471, %v4051
        %v4053 = vpop.f32.mrb[0].mxu0
        %v4054 = vadd.f32 %v3475, %v4053
        %4055 = vmatprep.mubr.f32.mxu0 0.0
        %4056 = vmatmul.mubr.f32.gmra.mrb[0].mxu0 %v3047
        %v4057 = vpop.f32.mrb[0].mxu0
        %v4058 = vadd.f32 %v3471, %v4057
        %v4059 = vpop.f32.mrb[0].mxu0
        %v4060 = vadd.f32 %v3475, %v4059
        %4061 = vmatprep.mubr.f32.mxu0 0.0
        %4062 = vmatmul.mubr.f32.gmra.mrb[0].mxu0 %v3052
        %v4063 = vpop.f32.mrb[0].mxu0
        %v4064 = vadd.f32 %v3471, %v4063
        %v4065 = vpop.f32.mrb[0].mxu0
        %v4066 = vadd.f32 %v3475, %v4065
        %4067 = vmatprep.mubr.f32.mxu0 0.0
        %4068 = vmatmul.mubr.f32.gmra.mrb[0].mxu0 %v3057
        %v4069 = vpop.f32.mrb[0].mxu0
        %v4070 = vadd.f32 %v3471, %v4069
        %v4071 = vpop.f32.mrb[0].mxu0
        %v4072 = vadd.f32 %v3475, %v4071
        %4073 = vmatprep.mubr.f32.mxu0 0.0
        %4074 = vmatmul.mubr.f32.gmra.mrb[0].mxu0 %v3062
        %v4075 = vpop.f32.mrb[0].mxu0
        %v4076 = vadd.f32 %v3471, %v4075
        %v4077 = vpop.f32.mrb[0].mxu0
        %v4078 = vadd.f32 %v3475, %v4077
        %4079 = vmatprep.mubr.f32.mxu0 0.0
        %4080 = vmatmul.mubr.f32.gmra.mrb[0].mxu0 %v3067
        %v4081 = vpop.f32.mrb[0].mxu0
        %v4082 = vadd.f32 %v3471, %v4081
        %v4083 = vpop.f32.mrb[0].mxu0
        %v4084 = vadd.f32 %v3475, %v4083
        %4085 = vmatprep.mubr.f32.mxu0 0.0
        %4086 = vmatmul.mubr.f32.gmra.mrb[0].mxu0 %v3072
        %v4087 = vpop.f32.mrb[0].mxu0
        %v4088 = vadd.f32 %v3471, %v4087
        %v4089 = vpop.f32.mrb[0].mxu0
        %v4090 = vadd.f32 %v3475, %v4089
        %4091 = vmatprep.mubr.f32.mxu0 0.0
        %4092 = vmatmul.mubr.f32.gmra.mrb[0].mxu0 %v3077
        %v4093 = vpop.f32.mrb[0].mxu0
        %v4094 = vadd.f32 %v3471, %v4093
        %v4095 = vpop.f32.mrb[0].mxu0
        %v4096 = vadd.f32 %v3475, %v4095
        %4097 = vmatprep.mubr.f32.mxu0 0.0
        %4098 = vmatmul.mubr.f32.gmra.mrb[0].mxu0 %v3082
        %v4099 = vpop.f32.mrb[0].mxu0
        %v4100 = vadd.f32 %v3471, %v4099
        %v4101 = vpop.f32.mrb[0].mxu0
        %v4102 = vadd.f32 %v3475, %v4101
        %4103 = vmatprep.mubr.f32.mxu0 0.0
        %4104 = vmatmul.mubr.f32.gmra.mrb[0].mxu0 %v3087
        %v4105 = vpop.f32.mrb[0].mxu0
        %v4106 = vadd.f32 %v3471, %v4105
        %v4107 = vpop.f32.mrb[0].mxu0
        %v4108 = vadd.f32 %v3475, %v4107
        %4109 = vmatprep.mubr.f32.mxu0 0.0
        %4110 = vmatmul.mubr.f32.gmra.mrb[0].mxu0 %v3092
        %v4111 = vpop.f32.mrb[0].mxu0
        %v4112 = vadd.f32 %v3471, %v4111
        %v4113 = vpop.f32.mrb[0].mxu0
        %v4114 = vadd.f32 %v3475, %v4113
        %4115 = vmatprep.mubr.f32.mxu0 0.0
        %4116 = vmatmul.mubr.f32.gmra.mrb[0].mxu0 %v3097
        %v4117 = vpop.f32.mrb[0].mxu0
        %v4118 = vadd.f32 %v3471, %v4117
        %v4119 = vpop.f32.mrb[0].mxu0
        %v4120 = vadd.f32 %v3475, %v4119
        %4121 = vmatprep.mubr.f32.mxu0 0.0
        %4122 = vmatmul.mubr.f32.gmra.mrb[0].mxu0 %v3102
        %v4123 = vpop.f32.mrb[0].mxu0
        %v4124 = vadd.f32 %v3471, %v4123
        %v4125 = vpop.f32.mrb[0].mxu0
        %v4126 = vadd.f32 %v3475, %v4125
        %4127 = vmatprep.mubr.f32.mxu0 0.0
        %4128 = vmatmul.mubr.f32.gmra.mrb[0].mxu0 %v3107
        %v4129 = vpop.f32.mrb[0].mxu0
        %v4130 = vadd.f32 %v3471, %v4129
        %v4131 = vpop.f32.mrb[0].mxu0
        %v4132 = vadd.f32 %v3475, %v4131
        %4133 = vmatprep.mubr.f32.mxu0 0.0
        %4134 = vmatmul.mubr.f32.gmra.mrb[0].mxu0 %v3112
        %v4135 = vpop.f32.mrb[0].mxu0
        %v4136 = vadd.f32 %v3471, %v4135
        %v4137 = vpop.f32.mrb[0].mxu0
        %v4138 = vadd.f32 %v3475, %v4137
        %4139 = vmatprep.mubr.f32.mxu0 0.0
        %4140 = vmatmul.mubr.f32.gmra.mrb[0].mxu0 %v3117
        %v4141 = vpop.f32.mrb[0].mxu0
        %v4142 = vadd.f32 %v3471, %v4141
        %v4143 = vpop.f32.mrb[0].mxu0
        %v4144 = vadd.f32 %v3475, %v4143
        %4145 = vmatprep.mubr.f32.mxu0 0.0
        %4146 = vmatmul.mubr.f32.gmra.mrb[0].mxu0 %v3122
        %v4147 = vpop.f32.mrb[0].mxu0
        %v4148 = vadd.f32 %v3471, %v4147
        %v4149 = vpop.f32.mrb[0].mxu0
        %v4150 = vadd.f32 %v3475, %v4149
        %4151 = vmatprep.mubr.f32.mxu0 0.0
        %4152 = vmatmul.mubr.f32.gmra.mrb[0].mxu0 %v3127
        %v4153 = vpop.f32.mrb[0].mxu0
        %v4154 = vadd.f32 %v3471, %v4153
        %v4155 = vpop.f32.mrb[0].mxu0
        %v4156 = vadd.f32 %v3475, %v4155
        %4157 = vmatprep.mubr.f32.mxu0 0.0
        %4158 = vmatmul.mubr.f32.gmra.mrb[0].mxu0 %v3132
        %v4159 = vpop.f32.mrb[0].mxu0
        %v4160 = vadd.f32 %v3471, %v4159
        %v4161 = vpop.f32.mrb[0].mxu0
        %v4162 = vadd.f32 %v3475, %v4161
        %4163 = vmatprep.mubr.f32.mxu0 0.0
        %4164 = vmatmul.mubr.f32.gmra.mrb[0].mxu0 %v3137
        %v4165 = vpop.f32.mrb[0].mxu0
        %v4166 = vadd.f32 %v3471, %v4165
        %v4167 = vpop.f32.mrb[0].mxu0
        %v4168 = vadd.f32 %v3475, %v4167
        %4169 = vmatprep.mubr.f32.mxu0 0.0
        %4170 = vmatmul.mubr.f32.gmra.mrb[0].mxu0 %v3142
        %v4171 = vpop.f32.mrb[0].mxu0
        %v4172 = vadd.f32 %v3471, %v4171
        %v4173 = vpop.f32.mrb[0].mxu0
        %v4174 = vadd.f32 %v3475, %v4173
        %4175 = vmatprep.mubr.f32.mxu0 0.0
        %4176 = vmatmul.mubr.f32.gmra.mrb[0].mxu0 %v3147
        %v4177 = vpop.f32.mrb[0].mxu0
        %v4178 = vadd.f32 %v3471, %v4177
        %v4179 = vpop.f32.mrb[0].mxu0
        %v4180 = vadd.f32 %v3475, %v4179
        %4181 = vmatprep.mubr.f32.mxu0 0.0
        %4182 = vmatmul.mubr.f32.gmra.mrb[0].mxu0 %v3152
        %v4183 = vpop.f32.mrb[0].mxu0
        %v4184 = vadd.f32 %v3471, %v4183
        %v4185 = vpop.f32.mrb[0].mxu0
        %v4186 = vadd.f32 %v3475, %v4185
        %4187 = vmatprep.mubr.f32.mxu0 0.0
        %4188 = vmatmul.mubr.f32.gmra.mrb[0].mxu0 %v3157
        %v4189 = vpop.f32.mrb[0].mxu0
        %v4190 = vadd.f32 %v3471, %v4189
        %v4191 = vpop.f32.mrb[0].mxu0
        %v4192 = vadd.f32 %v3475, %v4191
        %4193 = vmatprep.mubr.f32.mxu0 0.0
        %4194 = vmatmul.mubr.f32.gmra.mrb[0].mxu0 %v3162
        %v4195 = vpop.f32.mrb[0].mxu0
        %v4196 = vadd.f32 %v3471, %v4195
        %v4197 = vpop.f32.mrb[0].mxu0
        %v4198 = vadd.f32 %v3475, %v4197
        %4199 = vmatprep.mubr.f32.mxu0 0.0
        %4200 = vmatmul.mubr.f32.gmra.mrb[0].mxu0 %v3167
        %v4201 = vpop.f32.mrb[0].mxu0
        %v4202 = vadd.f32 %v3471, %v4201
        %v4203 = vpop.f32.mrb[0].mxu0
        %v4204 = vadd.f32 %v3475, %v4203
        %4205 = vmatprep.mubr.f32.mxu0 0.0
        %4206 = vmatmul.mubr.f32.gmra.mrb[0].mxu0 %v3172
        %v4207 = vpop.f32.mrb[0].mxu0
        %v4208 = vadd.f32 %v3471, %v4207
        %v4209 = vpop.f32.mrb[0].mxu0
        %v4210 = vadd.f32 %v3475, %v4209
        %4211 = vmatprep.mubr.f32.mxu0 0.0
        %4212 = vmatmul.mubr.f32.gmra.mrb[0].mxu0 %v3177
        %v4213 = vpop.f32.mrb[0].mxu0
        %v4214 = vadd.f32 %v3471, %v4213
        %v4215 = vpop.f32.mrb[0].mxu0
        %v4216 = vadd.f32 %v3475, %v4215
        %4217 = vmatprep.mubr.f32.mxu0 0.0
        %4218 = vmatmul.mubr.f32.gmra.mrb[0].mxu0 %v3182
        %v4219 = vpop.f32.mrb[0].mxu0
        %v4220 = vadd.f32 %v3471, %v4219
        %v4221 = vpop.f32.mrb[0].mxu0
        %v4222 = vadd.f32 %v3475, %v4221
        %4223 = vmatprep.mubr.f32.mxu0 0.0
        %4224 = vmatmul.mubr.f32.gmra.mrb[0].mxu0 %v3187
        %v4225 = vpop.f32.mrb[0].mxu0
        %v4226 = vadd.f32 %v3471, %v4225
        %v4227 = vpop.f32.mrb[0].mxu0
        %v4228 = vadd.f32 %v3475, %v4227
        %4229 = vmatprep.mubr.f32.mxu0 0.0
        %4230 = vmatmul.mubr.f32.gmra.mrb[0].mxu0 %v3192
        %v4231 = vpop.f32.mrb[0].mxu0
        %v4232 = vadd.f32 %v3471, %v4231
        %v4233 = vpop.f32.mrb[0].mxu0
        %v4234 = vadd.f32 %v3475, %v4233
        %4235 = vmatprep.mubr.f32.mxu0 0.0
        %4236 = vmatmul.mubr.f32.gmra.mrb[0].mxu0 %v3197
        %v4237 = vpop.f32.mrb[0].mxu0
        %v4238 = vadd.f32 %v3471, %v4237
        %v4239 = vpop.f32.mrb[0].mxu0
        %v4240 = vadd.f32 %v3475, %v4239
        %4241 = vmatprep.mubr.f32.mxu0 0.0
        %4242 = vmatmul.mubr.f32.gmra.mrb[0].mxu0 %v3202
        %v4243 = vpop.f32.mrb[0].mxu0
        %v4244 = vadd.f32 %v3471, %v4243
        %v4245 = vpop.f32.mrb[0].mxu0
        %v4246 = vadd.f32 %v3475, %v4245
        %4247 = vmatprep.mubr.f32.mxu0 0.0
        %4248 = vmatmul.mubr.f32.gmra.mrb[0].mxu0 %v3207
        %v4249 = vpop.f32.mrb[0].mxu0
        %v4250 = vadd.f32 %v3471, %v4249
        %v4251 = vpop.f32.mrb[0].mxu0
        %v4252 = vadd.f32 %v3475, %v4251
        %4253 = vmatprep.mubr.f32.mxu0 0.0
        %4254 = vmatmul.mubr.f32.gmra.mrb[0].mxu0 %v3212
        %v4255 = vpop.f32.mrb[0].mxu0
        %v4256 = vadd.f32 %v3471, %v4255
        %v4257 = vpop.f32.mrb[0].mxu0
        %v4258 = vadd.f32 %v3475, %v4257
        %4259 = vmatprep.mubr.f32.mxu0 0.0
        %4260 = vmatmul.mubr.f32.gmra.mrb[0].mxu0 %v3217
        %v4261 = vpop.f32.mrb[0].mxu0
        %v4262 = vadd.f32 %v3471, %v4261
        %v4263 = vpop.f32.mrb[0].mxu0
        %v4264 = vadd.f32 %v3475, %v4263
        %4265 = vmatprep.mubr.f32.mxu0 0.0
        %4266 = vmatmul.mubr.f32.gmra.mrb[0].mxu0 %v3222
        %v4267 = vpop.f32.mrb[0].mxu0
        %v4268 = vadd.f32 %v3471, %v4267
        %v4269 = vpop.f32.mrb[0].mxu0
        %v4270 = vadd.f32 %v3475, %v4269
        %4271 = vmatprep.mubr.f32.mxu0 0.0
        %4272 = vmatmul.mubr.f32.gmra.mrb[0].mxu0 %v3227
        %v4273 = vpop.f32.mrb[0].mxu0
        %v4274 = vadd.f32 %v3471, %v4273
        %v4275 = vpop.f32.mrb[0].mxu0
        %v4276 = vadd.f32 %v3475, %v4275
        %4277 = vmatprep.mubr.f32.mxu0 0.0
        %4278 = vmatmul.mubr.f32.gmra.mrb[0].mxu0 %v3232
        %v4279 = vpop.f32.mrb[0].mxu0
        %v4280 = vadd.f32 %v3471, %v4279
        %v4281 = vpop.f32.mrb[0].mxu0
        %v4282 = vadd.f32 %v3475, %v4281
        %4283 = vmatprep.mubr.f32.mxu0 0.0
        %4284 = vmatmul.mubr.f32.gmra.mrb[0].mxu0 %v3237
        %v4285 = vpop.f32.mrb[0].mxu0
        %v4286 = vadd.f32 %v3471, %v4285
        %v4287 = vpop.f32.mrb[0].mxu0
        %v4288 = vadd.f32 %v3475, %v4287
        %4289 = vmatprep.mubr.f32.mxu0 0.0
        %4290 = vmatmul.mubr.f32.gmra.mrb[0].mxu0 %v3242
        %v4291 = vpop.f32.mrb[0].mxu0
        %v4292 = vadd.f32 %v3471, %v4291
        %v4293 = vpop.f32.mrb[0].mxu0
        %v4294 = vadd.f32 %v3475, %v4293
        %4295 = vmatprep.mubr.f32.mxu0 0.0
        %4296 = vmatmul.mubr.f32.gmra.mrb[0].mxu0 %v3247
        %v4297 = vpop.f32.mrb[0].mxu0
        %v4298 = vadd.f32 %v3471, %v4297
        %v4299 = vpop.f32.mrb[0].mxu0
        %v4300 = vadd.f32 %v3475, %v4299
        %4301 = vmatprep.mubr.f32.mxu0 0.0
        %4302 = vmatmul.mubr.f32.gmra.mrb[0].mxu0 %v3252
        %v4303 = vpop.f32.mrb[0].mxu0
        %v4304 = vadd.f32 %v3471, %v4303
        %v4305 = vpop.f32.mrb[0].mxu0
        %v4306 = vadd.f32 %v3475, %v4305
        %4307 = vmatprep.mubr.f32.mxu0 0.0
        %4308 = vmatmul.mubr.f32.gmra.mrb[0].mxu0 %v3257
        %v4309 = vpop.f32.mrb[0].mxu0
        %v4310 = vadd.f32 %v3471, %v4309
        %v4311 = vpop.f32.mrb[0].mxu0
        %v4312 = vadd.f32 %v3475, %v4311
        %4313 = vmatprep.mubr.f32.mxu0 0.0
        %4314 = vmatmul.mubr.f32.gmra.mrb[0].mxu0 %v3262
        %v4315 = vpop.f32.mrb[0].mxu0
        %v4316 = vadd.f32 %v3471, %v4315
        %v4317 = vpop.f32.mrb[0].mxu0
        %v4318 = vadd.f32 %v3475, %v4317
        %4319 = vmatprep.mubr.f32.mxu0 0.0
        %4320 = vmatmul.mubr.f32.gmra.mrb[0].mxu0 %v3267
        %v4321 = vpop.f32.mrb[0].mxu0
        %v4322 = vadd.f32 %v3471, %v4321
        %v4323 = vpop.f32.mrb[0].mxu0
        %v4324 = vadd.f32 %v3475, %v4323
        %4325 = vmatprep.mubr.f32.mxu0 0.0
        %4326 = vmatmul.mubr.f32.gmra.mrb[0].mxu0 %v3272
        %v4327 = vpop.f32.mrb[0].mxu0
        %v4328 = vadd.f32 %v3471, %v4327
        %v4329 = vpop.f32.mrb[0].mxu0
        %v4330 = vadd.f32 %v3475, %v4329
        %4331 = vmatprep.mubr.f32.mxu0 0.0
        %4332 = vmatmul.mubr.f32.gmra.mrb[0].mxu0 %v3277
        %v4333 = vpop.f32.mrb[0].mxu0
        %v4334 = vadd.f32 %v3471, %v4333
        %v4335 = vpop.f32.mrb[0].mxu0
        %v4336 = vadd.f32 %v3475, %v4335
        %4337 = vmatprep.mubr.f32.mxu0 0.0
        %4338 = vmatmul.mubr.f32.gmra.mrb[0].mxu0 %v3282
        %v4339 = vpop.f32.mrb[0].mxu0
        %v4340 = vadd.f32 %v3471, %v4339
        %v4341 = vpop.f32.mrb[0].mxu0
        %v4342 = vadd.f32 %v3475, %v4341
        %4343 = vmatprep.mubr.f32.mxu0 0.0
        %4344 = vmatmul.mubr.f32.gmra.mrb[0].mxu0 %v3287
        %v4345 = vpop.f32.mrb[0].mxu0
        %v4346 = vadd.f32 %v3471, %v4345
        %v4347 = vpop.f32.mrb[0].mxu0
        %v4348 = vadd.f32 %v3475, %v4347
        %4349 = vmatprep.mubr.f32.mxu0 0.0
        %4350 = vmatmul.mubr.f32.gmra.mrb[0].mxu0 %v3292
        %v4351 = vpop.f32.mrb[0].mxu0
        %v4352 = vadd.f32 %v3471, %v4351
        %v4353 = vpop.f32.mrb[0].mxu0
        %v4354 = vadd.f32 %v3475, %v4353
        %4355 = vmatprep.mubr.f32.mxu0 0.0
        %4356 = vmatmul.mubr.f32.gmra.mrb[0].mxu0 %v3297
        %v4357 = vpop.f32.mrb[0].mxu0
        %v4358 = vadd.f32 %v3471, %v4357
        %v4359 = vpop.f32.mrb[0].mxu0
        %v4360 = vadd.f32 %v3475, %v4359
        %4361 = vmatprep.mubr.f32.mxu0 0.0
        %4362 = vmatmul.mubr.f32.gmra.mrb[0].mxu0 %v3302
        %v4363 = vpop.f32.mrb[0].mxu0
        %v4364 = vadd.f32 %v3471, %v4363
        %v4365 = vpop.f32.mrb[0].mxu0
        %v4366 = vadd.f32 %v3475, %v4365
        %4367 = vmatprep.mubr.f32.mxu0 0.0
        %4368 = vmatmul.mubr.f32.gmra.mrb[0].mxu0 %v3307
        %v4369 = vpop.f32.mrb[0].mxu0
        %v4370 = vadd.f32 %v3471, %v4369
        %v4371 = vpop.f32.mrb[0].mxu0
        %v4372 = vadd.f32 %v3475, %v4371
        %4373 = vmatprep.mubr.f32.mxu0 0.0
        %4374 = vmatmul.mubr.f32.gmra.mrb[0].mxu0 %v3312
        %v4375 = vpop.f32.mrb[0].mxu0
        %v4376 = vadd.f32 %v3471, %v4375
        %v4377 = vpop.f32.mrb[0].mxu0
        %v4378 = vadd.f32 %v3475, %v4377
        %4379 = vmatprep.mubr.f32.mxu0 0.0
        %4380 = vmatmul.mubr.f32.gmra.mrb[0].mxu0 %v3317
        %v4381 = vpop.f32.mrb[0].mxu0
        %v4382 = vadd.f32 %v3471, %v4381
        %v4383 = vpop.f32.mrb[0].mxu0
        %v4384 = vadd.f32 %v3475, %v4383
        %4385 = vmatprep.mubr.f32.mxu0 0.0
        %4386 = vmatmul.mubr.f32.gmra.mrb[0].mxu0 %v3322
        %v4387 = vpop.f32.mrb[0].mxu0
        %v4388 = vadd.f32 %v3471, %v4387
        %v4389 = vpop.f32.mrb[0].mxu0
        %v4390 = vadd.f32 %v3475, %v4389
        %4391 = vmatprep.mubr.f32.mxu0 0.0
        %4392 = vmatmul.mubr.f32.gmra.mrb[0].mxu0 %v3327
        %v4393 = vpop.f32.mrb[0].mxu0
        %v4394 = vadd.f32 %v3471, %v4393
        %v4395 = vpop.f32.mrb[0].mxu0
        %v4396 = vadd.f32 %v3475, %v4395
        %4397 = vdwg.mxu0
        %4398 = vmatprep.subr.mxu0 %v3335
        %4399 = vmatpush1.msra.mxu0 %v3334
        %4400 = vmatprep.subr.mxu0 %v3343
        %4401 = vmatpush1.msra.mxu0 %v3342
        %4402 = vmatprep.subr.mxu0 %v3351
        %4403 = vmatpush1.msra.mxu0 %v3350
        %4404 = vmatprep.subr.mxu0 %v3359
        %4405 = vmatpush1.msra.mxu0 %v3358
        %4406 = vmatprep.subr.mxu0 %v3367
        %4407 = vmatpush1.msra.mxu0 %v3366
        %4408 = vmatprep.subr.mxu0 %v3375
        %4409 = vmatpush1.msra.mxu0 %v3374
        %4410 = vmatprep.subr.mxu0 %v3383
        %4411 = vmatpush1.msra.mxu0 %v3382
        %4412 = vmatprep.subr.mxu0 %v3391
        %4413 = vmatpush1.msra.mxu0 %v3390
        %4414 = vmatprep.subr.mxu0 %v3399
        %4415 = vmatpush1.msra.mxu0 %v3398
        %4416 = vmatprep.subr.mxu0 %v3407
        %4417 = vmatpush1.msra.mxu0 %v3406
        %4418 = vmatprep.subr.mxu0 %v3415
        %4419 = vmatpush1.msra.mxu0 %v3414
        %4420 = vmatprep.subr.mxu0 %v3423
        %4421 = vmatpush1.msra.mxu0 %v3422
        %4422 = vmatprep.subr.mxu0 %v3431
        %4423 = vmatpush1.msra.mxu0 %v3430
        %4424 = vmatprep.subr.mxu0 %v3439
        %4425 = vmatpush1.msra.mxu0 %v3438
        %4426 = vmatprep.subr.mxu0 %v3447
        %4427 = vmatpush1.msra.mxu0 %v3446
        %4428 = vmatprep.subr.mxu0 %v3455
        %4429 = vmatpush1.msra.mxu0 %v3454
        %4430 = vmatprep.subr.mxu0 0.0
        %4431 = vmatpush1.msra.mxu0 0.0
        %4432 = vmatprep.subr.mxu0 0.0
        %4433 = vmatpush1.msra.mxu0 0.0
        %4434 = vmatprep.subr.mxu0 0.0
        %4435 = vmatpush1.msra.mxu0 0.0
        %4436 = vmatprep.subr.mxu0 0.0
        %4437 = vmatpush1.msra.mxu0 0.0
        %4438 = vmatprep.subr.mxu0 0.0
        %4439 = vmatpush1.msra.mxu0 0.0
        %4440 = vmatprep.subr.mxu0 0.0
        %4441 = vmatpush1.msra.mxu0 0.0
        %4442 = vmatprep.subr.mxu0 0.0
        %4443 = vmatpush1.msra.mxu0 0.0
        %4444 = vmatprep.subr.mxu0 0.0
        %4445 = vmatpush1.msra.mxu0 0.0
        %4446 = vmatprep.subr.mxu0 0.0
        %4447 = vmatpush1.msra.mxu0 0.0
        %4448 = vmatprep.subr.mxu0 0.0
        %4449 = vmatpush1.msra.mxu0 0.0
        %4450 = vmatprep.subr.mxu0 0.0
        %4451 = vmatpush1.msra.mxu0 0.0
        %4452 = vmatprep.subr.mxu0 0.0
        %4453 = vmatpush1.msra.mxu0 0.0
        %4454 = vmatprep.subr.mxu0 0.0
        %4455 = vmatpush1.msra.mxu0 0.0
        %4456 = vmatprep.subr.mxu0 0.0
        %4457 = vmatpush1.msra.mxu0 0.0
        %4458 = vmatprep.subr.mxu0 0.0
        %4459 = vmatpush1.msra.mxu0 0.0
        %4460 = vmatprep.subr.mxu0 0.0
        %4461 = vmatpush1.msra.mxu0 0.0
        %4462 = vmatprep.mubr.f32.mxu0 0.0
        %4463 = vmatmul.mubr.f32.gmra.mrb[0].mxu0 %v3012
        %v4464 = vpop.f32.mrb[0].mxu0
        %v4465 = vadd.f32 %v3479, %v4464
        %v4466 = vpop.f32.mrb[0].mxu0
        %v4467 = vadd.f32 %v3483, %v4466
        %4468 = vmatprep.mubr.f32.mxu0 0.0
        %4469 = vmatmul.mubr.f32.gmra.mrb[0].mxu0 %v3017
        %v4470 = vpop.f32.mrb[0].mxu0
        %v4471 = vadd.f32 %v3479, %v4470
        %v4472 = vpop.f32.mrb[0].mxu0
        %v4473 = vadd.f32 %v3483, %v4472
        %4474 = vmatprep.mubr.f32.mxu0 0.0
        %4475 = vmatmul.mubr.f32.gmra.mrb[0].mxu0 %v3022
        %v4476 = vpop.f32.mrb[0].mxu0
        %v4477 = vadd.f32 %v3479, %v4476
        %v4478 = vpop.f32.mrb[0].mxu0
        %v4479 = vadd.f32 %v3483, %v4478
        %4480 = vmatprep.mubr.f32.mxu0 0.0
        %4481 = vmatmul.mubr.f32.gmra.mrb[0].mxu0 %v3027
        %v4482 = vpop.f32.mrb[0].mxu0
        %v4483 = vadd.f32 %v3479, %v4482
        %v4484 = vpop.f32.mrb[0].mxu0
        %v4485 = vadd.f32 %v3483, %v4484
        %4486 = vmatprep.mubr.f32.mxu0 0.0
        %4487 = vmatmul.mubr.f32.gmra.mrb[0].mxu0 %v3032
        %v4488 = vpop.f32.mrb[0].mxu0
        %v4489 = vadd.f32 %v3479, %v4488
        %v4490 = vpop.f32.mrb[0].mxu0
        %v4491 = vadd.f32 %v3483, %v4490
        %4492 = vmatprep.mubr.f32.mxu0 0.0
        %4493 = vmatmul.mubr.f32.gmra.mrb[0].mxu0 %v3037
        %v4494 = vpop.f32.mrb[0].mxu0
        %v4495 = vadd.f32 %v3479, %v4494
        %v4496 = vpop.f32.mrb[0].mxu0
        %v4497 = vadd.f32 %v3483, %v4496
        %4498 = vmatprep.mubr.f32.mxu0 0.0
        %4499 = vmatmul.mubr.f32.gmra.mrb[0].mxu0 %v3042
        %v4500 = vpop.f32.mrb[0].mxu0
        %v4501 = vadd.f32 %v3479, %v4500
        %v4502 = vpop.f32.mrb[0].mxu0
        %v4503 = vadd.f32 %v3483, %v4502
        %4504 = vmatprep.mubr.f32.mxu0 0.0
        %4505 = vmatmul.mubr.f32.gmra.mrb[0].mxu0 %v3047
        %v4506 = vpop.f32.mrb[0].mxu0
        %v4507 = vadd.f32 %v3479, %v4506
        %v4508 = vpop.f32.mrb[0].mxu0
        %v4509 = vadd.f32 %v3483, %v4508
        %4510 = vmatprep.mubr.f32.mxu0 0.0
        %4511 = vmatmul.mubr.f32.gmra.mrb[0].mxu0 %v3052
        %v4512 = vpop.f32.mrb[0].mxu0
        %v4513 = vadd.f32 %v3479, %v4512
        %v4514 = vpop.f32.mrb[0].mxu0
        %v4515 = vadd.f32 %v3483, %v4514
        %4516 = vmatprep.mubr.f32.mxu0 0.0
        %4517 = vmatmul.mubr.f32.gmra.mrb[0].mxu0 %v3057
        %v4518 = vpop.f32.mrb[0].mxu0
        %v4519 = vadd.f32 %v3479, %v4518
        %v4520 = vpop.f32.mrb[0].mxu0
        %v4521 = vadd.f32 %v3483, %v4520
        %4522 = vmatprep.mubr.f32.mxu0 0.0
        %4523 = vmatmul.mubr.f32.gmra.mrb[0].mxu0 %v3062
        %v4524 = vpop.f32.mrb[0].mxu0
        %v4525 = vadd.f32 %v3479, %v4524
        %v4526 = vpop.f32.mrb[0].mxu0
        %v4527 = vadd.f32 %v3483, %v4526
        %4528 = vmatprep.mubr.f32.mxu0 0.0
        %4529 = vmatmul.mubr.f32.gmra.mrb[0].mxu0 %v3067
        %v4530 = vpop.f32.mrb[0].mxu0
        %v4531 = vadd.f32 %v3479, %v4530
        %v4532 = vpop.f32.mrb[0].mxu0
        %v4533 = vadd.f32 %v3483, %v4532
        %4534 = vmatprep.mubr.f32.mxu0 0.0
        %4535 = vmatmul.mubr.f32.gmra.mrb[0].mxu0 %v3072
        %v4536 = vpop.f32.mrb[0].mxu0
        %v4537 = vadd.f32 %v3479, %v4536
        %v4538 = vpop.f32.mrb[0].mxu0
        %v4539 = vadd.f32 %v3483, %v4538
        %4540 = vmatprep.mubr.f32.mxu0 0.0
        %4541 = vmatmul.mubr.f32.gmra.mrb[0].mxu0 %v3077
        %v4542 = vpop.f32.mrb[0].mxu0
        %v4543 = vadd.f32 %v3479, %v4542
        %v4544 = vpop.f32.mrb[0].mxu0
        %v4545 = vadd.f32 %v3483, %v4544
        %4546 = vmatprep.mubr.f32.mxu0 0.0
        %4547 = vmatmul.mubr.f32.gmra.mrb[0].mxu0 %v3082
        %v4548 = vpop.f32.mrb[0].mxu0
        %v4549 = vadd.f32 %v3479, %v4548
        %v4550 = vpop.f32.mrb[0].mxu0
        %v4551 = vadd.f32 %v3483, %v4550
        %4552 = vmatprep.mubr.f32.mxu0 0.0
        %4553 = vmatmul.mubr.f32.gmra.mrb[0].mxu0 %v3087
        %v4554 = vpop.f32.mrb[0].mxu0
        %v4555 = vadd.f32 %v3479, %v4554
        %v4556 = vpop.f32.mrb[0].mxu0
        %v4557 = vadd.f32 %v3483, %v4556
        %4558 = vmatprep.mubr.f32.mxu0 0.0
        %4559 = vmatmul.mubr.f32.gmra.mrb[0].mxu0 %v3092
        %v4560 = vpop.f32.mrb[0].mxu0
        %v4561 = vadd.f32 %v3479, %v4560
        %v4562 = vpop.f32.mrb[0].mxu0
        %v4563 = vadd.f32 %v3483, %v4562
        %4564 = vmatprep.mubr.f32.mxu0 0.0
        %4565 = vmatmul.mubr.f32.gmra.mrb[0].mxu0 %v3097
        %v4566 = vpop.f32.mrb[0].mxu0
        %v4567 = vadd.f32 %v3479, %v4566
        %v4568 = vpop.f32.mrb[0].mxu0
        %v4569 = vadd.f32 %v3483, %v4568
        %4570 = vmatprep.mubr.f32.mxu0 0.0
        %4571 = vmatmul.mubr.f32.gmra.mrb[0].mxu0 %v3102
        %v4572 = vpop.f32.mrb[0].mxu0
        %v4573 = vadd.f32 %v3479, %v4572
        %v4574 = vpop.f32.mrb[0].mxu0
        %v4575 = vadd.f32 %v3483, %v4574
        %4576 = vmatprep.mubr.f32.mxu0 0.0
        %4577 = vmatmul.mubr.f32.gmra.mrb[0].mxu0 %v3107
        %v4578 = vpop.f32.mrb[0].mxu0
        %v4579 = vadd.f32 %v3479, %v4578
        %v4580 = vpop.f32.mrb[0].mxu0
        %v4581 = vadd.f32 %v3483, %v4580
        %4582 = vmatprep.mubr.f32.mxu0 0.0
        %4583 = vmatmul.mubr.f32.gmra.mrb[0].mxu0 %v3112
        %v4584 = vpop.f32.mrb[0].mxu0
        %v4585 = vadd.f32 %v3479, %v4584
        %v4586 = vpop.f32.mrb[0].mxu0
        %v4587 = vadd.f32 %v3483, %v4586
        %4588 = vmatprep.mubr.f32.mxu0 0.0
        %4589 = vmatmul.mubr.f32.gmra.mrb[0].mxu0 %v3117
        %v4590 = vpop.f32.mrb[0].mxu0
        %v4591 = vadd.f32 %v3479, %v4590
        %v4592 = vpop.f32.mrb[0].mxu0
        %v4593 = vadd.f32 %v3483, %v4592
        %4594 = vmatprep.mubr.f32.mxu0 0.0
        %4595 = vmatmul.mubr.f32.gmra.mrb[0].mxu0 %v3122
        %v4596 = vpop.f32.mrb[0].mxu0
        %v4597 = vadd.f32 %v3479, %v4596
        %v4598 = vpop.f32.mrb[0].mxu0
        %v4599 = vadd.f32 %v3483, %v4598
        %4600 = vmatprep.mubr.f32.mxu0 0.0
        %4601 = vmatmul.mubr.f32.gmra.mrb[0].mxu0 %v3127
        %v4602 = vpop.f32.mrb[0].mxu0
        %v4603 = vadd.f32 %v3479, %v4602
        %v4604 = vpop.f32.mrb[0].mxu0
        %v4605 = vadd.f32 %v3483, %v4604
        %4606 = vmatprep.mubr.f32.mxu0 0.0
        %4607 = vmatmul.mubr.f32.gmra.mrb[0].mxu0 %v3132
        %v4608 = vpop.f32.mrb[0].mxu0
        %v4609 = vadd.f32 %v3479, %v4608
        %v4610 = vpop.f32.mrb[0].mxu0
        %v4611 = vadd.f32 %v3483, %v4610
        %4612 = vmatprep.mubr.f32.mxu0 0.0
        %4613 = vmatmul.mubr.f32.gmra.mrb[0].mxu0 %v3137
        %v4614 = vpop.f32.mrb[0].mxu0
        %v4615 = vadd.f32 %v3479, %v4614
        %v4616 = vpop.f32.mrb[0].mxu0
        %v4617 = vadd.f32 %v3483, %v4616
        %4618 = vmatprep.mubr.f32.mxu0 0.0
        %4619 = vmatmul.mubr.f32.gmra.mrb[0].mxu0 %v3142
        %v4620 = vpop.f32.mrb[0].mxu0
        %v4621 = vadd.f32 %v3479, %v4620
        %v4622 = vpop.f32.mrb[0].mxu0
        %v4623 = vadd.f32 %v3483, %v4622
        %4624 = vmatprep.mubr.f32.mxu0 0.0
        %4625 = vmatmul.mubr.f32.gmra.mrb[0].mxu0 %v3147
        %v4626 = vpop.f32.mrb[0].mxu0
        %v4627 = vadd.f32 %v3479, %v4626
        %v4628 = vpop.f32.mrb[0].mxu0
        %v4629 = vadd.f32 %v3483, %v4628
        %4630 = vmatprep.mubr.f32.mxu0 0.0
        %4631 = vmatmul.mubr.f32.gmra.mrb[0].mxu0 %v3152
        %v4632 = vpop.f32.mrb[0].mxu0
        %v4633 = vadd.f32 %v3479, %v4632
        %v4634 = vpop.f32.mrb[0].mxu0
        %v4635 = vadd.f32 %v3483, %v4634
        %4636 = vmatprep.mubr.f32.mxu0 0.0
        %4637 = vmatmul.mubr.f32.gmra.mrb[0].mxu0 %v3157
        %v4638 = vpop.f32.mrb[0].mxu0
        %v4639 = vadd.f32 %v3479, %v4638
        %v4640 = vpop.f32.mrb[0].mxu0
        %v4641 = vadd.f32 %v3483, %v4640
        %4642 = vmatprep.mubr.f32.mxu0 0.0
        %4643 = vmatmul.mubr.f32.gmra.mrb[0].mxu0 %v3162
        %v4644 = vpop.f32.mrb[0].mxu0
        %v4645 = vadd.f32 %v3479, %v4644
        %v4646 = vpop.f32.mrb[0].mxu0
        %v4647 = vadd.f32 %v3483, %v4646
        %4648 = vmatprep.mubr.f32.mxu0 0.0
        %4649 = vmatmul.mubr.f32.gmra.mrb[0].mxu0 %v3167
        %v4650 = vpop.f32.mrb[0].mxu0
        %v4651 = vadd.f32 %v3479, %v4650
        %v4652 = vpop.f32.mrb[0].mxu0
        %v4653 = vadd.f32 %v3483, %v4652
        %4654 = vmatprep.mubr.f32.mxu0 0.0
        %4655 = vmatmul.mubr.f32.gmra.mrb[0].mxu0 %v3172
        %v4656 = vpop.f32.mrb[0].mxu0
        %v4657 = vadd.f32 %v3479, %v4656
        %v4658 = vpop.f32.mrb[0].mxu0
        %v4659 = vadd.f32 %v3483, %v4658
        %4660 = vmatprep.mubr.f32.mxu0 0.0
        %4661 = vmatmul.mubr.f32.gmra.mrb[0].mxu0 %v3177
        %v4662 = vpop.f32.mrb[0].mxu0
        %v4663 = vadd.f32 %v3479, %v4662
        %v4664 = vpop.f32.mrb[0].mxu0
        %v4665 = vadd.f32 %v3483, %v4664
        %4666 = vmatprep.mubr.f32.mxu0 0.0
        %4667 = vmatmul.mubr.f32.gmra.mrb[0].mxu0 %v3182
        %v4668 = vpop.f32.mrb[0].mxu0
        %v4669 = vadd.f32 %v3479, %v4668
        %v4670 = vpop.f32.mrb[0].mxu0
        %v4671 = vadd.f32 %v3483, %v4670
        %4672 = vmatprep.mubr.f32.mxu0 0.0
        %4673 = vmatmul.mubr.f32.gmra.mrb[0].mxu0 %v3187
        %v4674 = vpop.f32.mrb[0].mxu0
        %v4675 = vadd.f32 %v3479, %v4674
        %v4676 = vpop.f32.mrb[0].mxu0
        %v4677 = vadd.f32 %v3483, %v4676
        %4678 = vmatprep.mubr.f32.mxu0 0.0
        %4679 = vmatmul.mubr.f32.gmra.mrb[0].mxu0 %v3192
        %v4680 = vpop.f32.mrb[0].mxu0
        %v4681 = vadd.f32 %v3479, %v4680
        %v4682 = vpop.f32.mrb[0].mxu0
        %v4683 = vadd.f32 %v3483, %v4682
        %4684 = vmatprep.mubr.f32.mxu0 0.0
        %4685 = vmatmul.mubr.f32.gmra.mrb[0].mxu0 %v3197
        %v4686 = vpop.f32.mrb[0].mxu0
        %v4687 = vadd.f32 %v3479, %v4686
        %v4688 = vpop.f32.mrb[0].mxu0
        %v4689 = vadd.f32 %v3483, %v4688
        %4690 = vmatprep.mubr.f32.mxu0 0.0
        %4691 = vmatmul.mubr.f32.gmra.mrb[0].mxu0 %v3202
        %v4692 = vpop.f32.mrb[0].mxu0
        %v4693 = vadd.f32 %v3479, %v4692
        %v4694 = vpop.f32.mrb[0].mxu0
        %v4695 = vadd.f32 %v3483, %v4694
        %4696 = vmatprep.mubr.f32.mxu0 0.0
        %4697 = vmatmul.mubr.f32.gmra.mrb[0].mxu0 %v3207
        %v4698 = vpop.f32.mrb[0].mxu0
        %v4699 = vadd.f32 %v3479, %v4698
        %v4700 = vpop.f32.mrb[0].mxu0
        %v4701 = vadd.f32 %v3483, %v4700
        %4702 = vmatprep.mubr.f32.mxu0 0.0
        %4703 = vmatmul.mubr.f32.gmra.mrb[0].mxu0 %v3212
        %v4704 = vpop.f32.mrb[0].mxu0
        %v4705 = vadd.f32 %v3479, %v4704
        %v4706 = vpop.f32.mrb[0].mxu0
        %v4707 = vadd.f32 %v3483, %v4706
        %4708 = vmatprep.mubr.f32.mxu0 0.0
        %4709 = vmatmul.mubr.f32.gmra.mrb[0].mxu0 %v3217
        %v4710 = vpop.f32.mrb[0].mxu0
        %v4711 = vadd.f32 %v3479, %v4710
        %v4712 = vpop.f32.mrb[0].mxu0
        %v4713 = vadd.f32 %v3483, %v4712
        %4714 = vmatprep.mubr.f32.mxu0 0.0
        %4715 = vmatmul.mubr.f32.gmra.mrb[0].mxu0 %v3222
        %v4716 = vpop.f32.mrb[0].mxu0
        %v4717 = vadd.f32 %v3479, %v4716
        %v4718 = vpop.f32.mrb[0].mxu0
        %v4719 = vadd.f32 %v3483, %v4718
        %4720 = vmatprep.mubr.f32.mxu0 0.0
        %4721 = vmatmul.mubr.f32.gmra.mrb[0].mxu0 %v3227
        %v4722 = vpop.f32.mrb[0].mxu0
        %v4723 = vadd.f32 %v3479, %v4722
        %v4724 = vpop.f32.mrb[0].mxu0
        %v4725 = vadd.f32 %v3483, %v4724
        %4726 = vmatprep.mubr.f32.mxu0 0.0
        %4727 = vmatmul.mubr.f32.gmra.mrb[0].mxu0 %v3232
        %v4728 = vpop.f32.mrb[0].mxu0
        %v4729 = vadd.f32 %v3479, %v4728
        %v4730 = vpop.f32.mrb[0].mxu0
        %v4731 = vadd.f32 %v3483, %v4730
        %4732 = vmatprep.mubr.f32.mxu0 0.0
        %4733 = vmatmul.mubr.f32.gmra.mrb[0].mxu0 %v3237
        %v4734 = vpop.f32.mrb[0].mxu0
        %v4735 = vadd.f32 %v3479, %v4734
        %v4736 = vpop.f32.mrb[0].mxu0
        %v4737 = vadd.f32 %v3483, %v4736
        %4738 = vmatprep.mubr.f32.mxu0 0.0
        %4739 = vmatmul.mubr.f32.gmra.mrb[0].mxu0 %v3242
        %v4740 = vpop.f32.mrb[0].mxu0
        %v4741 = vadd.f32 %v3479, %v4740
        %v4742 = vpop.f32.mrb[0].mxu0
        %v4743 = vadd.f32 %v3483, %v4742
        %4744 = vmatprep.mubr.f32.mxu0 0.0
        %4745 = vmatmul.mubr.f32.gmra.mrb[0].mxu0 %v3247
        %v4746 = vpop.f32.mrb[0].mxu0
        %v4747 = vadd.f32 %v3479, %v4746
        %v4748 = vpop.f32.mrb[0].mxu0
        %v4749 = vadd.f32 %v3483, %v4748
        %4750 = vmatprep.mubr.f32.mxu0 0.0
        %4751 = vmatmul.mubr.f32.gmra.mrb[0].mxu0 %v3252
        %v4752 = vpop.f32.mrb[0].mxu0
        %v4753 = vadd.f32 %v3479, %v4752
        %v4754 = vpop.f32.mrb[0].mxu0
        %v4755 = vadd.f32 %v3483, %v4754
        %4756 = vmatprep.mubr.f32.mxu0 0.0
        %4757 = vmatmul.mubr.f32.gmra.mrb[0].mxu0 %v3257
        %v4758 = vpop.f32.mrb[0].mxu0
        %v4759 = vadd.f32 %v3479, %v4758
        %v4760 = vpop.f32.mrb[0].mxu0
        %v4761 = vadd.f32 %v3483, %v4760
        %4762 = vmatprep.mubr.f32.mxu0 0.0
        %4763 = vmatmul.mubr.f32.gmra.mrb[0].mxu0 %v3262
        %v4764 = vpop.f32.mrb[0].mxu0
        %v4765 = vadd.f32 %v3479, %v4764
        %v4766 = vpop.f32.mrb[0].mxu0
        %v4767 = vadd.f32 %v3483, %v4766
        %4768 = vmatprep.mubr.f32.mxu0 0.0
        %4769 = vmatmul.mubr.f32.gmra.mrb[0].mxu0 %v3267
        %v4770 = vpop.f32.mrb[0].mxu0
        %v4771 = vadd.f32 %v3479, %v4770
        %v4772 = vpop.f32.mrb[0].mxu0
        %v4773 = vadd.f32 %v3483, %v4772
        %4774 = vmatprep.mubr.f32.mxu0 0.0
        %4775 = vmatmul.mubr.f32.gmra.mrb[0].mxu0 %v3272
        %v4776 = vpop.f32.mrb[0].mxu0
        %v4777 = vadd.f32 %v3479, %v4776
        %v4778 = vpop.f32.mrb[0].mxu0
        %v4779 = vadd.f32 %v3483, %v4778
        %4780 = vmatprep.mubr.f32.mxu0 0.0
        %4781 = vmatmul.mubr.f32.gmra.mrb[0].mxu0 %v3277
        %v4782 = vpop.f32.mrb[0].mxu0
        %v4783 = vadd.f32 %v3479, %v4782
        %v4784 = vpop.f32.mrb[0].mxu0
        %v4785 = vadd.f32 %v3483, %v4784
        %4786 = vmatprep.mubr.f32.mxu0 0.0
        %4787 = vmatmul.mubr.f32.gmra.mrb[0].mxu0 %v3282
        %v4788 = vpop.f32.mrb[0].mxu0
        %v4789 = vadd.f32 %v3479, %v4788
        %v4790 = vpop.f32.mrb[0].mxu0
        %v4791 = vadd.f32 %v3483, %v4790
        %4792 = vmatprep.mubr.f32.mxu0 0.0
        %4793 = vmatmul.mubr.f32.gmra.mrb[0].mxu0 %v3287
        %v4794 = vpop.f32.mrb[0].mxu0
        %v4795 = vadd.f32 %v3479, %v4794
        %v4796 = vpop.f32.mrb[0].mxu0
        %v4797 = vadd.f32 %v3483, %v4796
        %4798 = vmatprep.mubr.f32.mxu0 0.0
        %4799 = vmatmul.mubr.f32.gmra.mrb[0].mxu0 %v3292
        %v4800 = vpop.f32.mrb[0].mxu0
        %v4801 = vadd.f32 %v3479, %v4800
        %v4802 = vpop.f32.mrb[0].mxu0
        %v4803 = vadd.f32 %v3483, %v4802
        %4804 = vmatprep.mubr.f32.mxu0 0.0
        %4805 = vmatmul.mubr.f32.gmra.mrb[0].mxu0 %v3297
        %v4806 = vpop.f32.mrb[0].mxu0
        %v4807 = vadd.f32 %v3479, %v4806
        %v4808 = vpop.f32.mrb[0].mxu0
        %v4809 = vadd.f32 %v3483, %v4808
        %4810 = vmatprep.mubr.f32.mxu0 0.0
        %4811 = vmatmul.mubr.f32.gmra.mrb[0].mxu0 %v3302
        %v4812 = vpop.f32.mrb[0].mxu0
        %v4813 = vadd.f32 %v3479, %v4812
        %v4814 = vpop.f32.mrb[0].mxu0
        %v4815 = vadd.f32 %v3483, %v4814
        %4816 = vmatprep.mubr.f32.mxu0 0.0
        %4817 = vmatmul.mubr.f32.gmra.mrb[0].mxu0 %v3307
        %v4818 = vpop.f32.mrb[0].mxu0
        %v4819 = vadd.f32 %v3479, %v4818
        %v4820 = vpop.f32.mrb[0].mxu0
        %v4821 = vadd.f32 %v3483, %v4820
        %4822 = vmatprep.mubr.f32.mxu0 0.0
        %4823 = vmatmul.mubr.f32.gmra.mrb[0].mxu0 %v3312
        %v4824 = vpop.f32.mrb[0].mxu0
        %v4825 = vadd.f32 %v3479, %v4824
        %v4826 = vpop.f32.mrb[0].mxu0
        %v4827 = vadd.f32 %v3483, %v4826
        %4828 = vmatprep.mubr.f32.mxu0 0.0
        %4829 = vmatmul.mubr.f32.gmra.mrb[0].mxu0 %v3317
        %v4830 = vpop.f32.mrb[0].mxu0
        %v4831 = vadd.f32 %v3479, %v4830
        %v4832 = vpop.f32.mrb[0].mxu0
        %v4833 = vadd.f32 %v3483, %v4832
        %4834 = vmatprep.mubr.f32.mxu0 0.0
        %4835 = vmatmul.mubr.f32.gmra.mrb[0].mxu0 %v3322
        %v4836 = vpop.f32.mrb[0].mxu0
        %v4837 = vadd.f32 %v3479, %v4836
        %v4838 = vpop.f32.mrb[0].mxu0
        %v4839 = vadd.f32 %v3483, %v4838
        %4840 = vmatprep.mubr.f32.mxu0 0.0
        %4841 = vmatmul.mubr.f32.gmra.mrb[0].mxu0 %v3327
        %v4842 = vpop.f32.mrb[0].mxu0
        %v4843 = vadd.f32 %v3479, %v4842
        %v4844 = vpop.f32.mrb[0].mxu0
        %v4845 = vadd.f32 %v3483, %v4844
        %4846 = vdwg.mxu0
        %4847 = vmatprep.subr.mxu0 %v3337
        %4848 = vmatpush1.msra.mxu0 %v3336
        %4849 = vmatprep.subr.mxu0 %v3345
        %4850 = vmatpush1.msra.mxu0 %v3344
        %4851 = vmatprep.subr.mxu0 %v3353
        %4852 = vmatpush1.msra.mxu0 %v3352
        %4853 = vmatprep.subr.mxu0 %v3361
        %4854 = vmatpush1.msra.mxu0 %v3360
        %4855 = vmatprep.subr.mxu0 %v3369
        %4856 = vmatpush1.msra.mxu0 %v3368
        %4857 = vmatprep.subr.mxu0 %v3377
        %4858 = vmatpush1.msra.mxu0 %v3376
        %4859 = vmatprep.subr.mxu0 %v3385
        %4860 = vmatpush1.msra.mxu0 %v3384
        %4861 = vmatprep.subr.mxu0 %v3393
        %4862 = vmatpush1.msra.mxu0 %v3392
        %4863 = vmatprep.subr.mxu0 %v3401
        %4864 = vmatpush1.msra.mxu0 %v3400
        %4865 = vmatprep.subr.mxu0 %v3409
        %4866 = vmatpush1.msra.mxu0 %v3408
        %4867 = vmatprep.subr.mxu0 %v3417
        %4868 = vmatpush1.msra.mxu0 %v3416
        %4869 = vmatprep.subr.mxu0 %v3425
        %4870 = vmatpush1.msra.mxu0 %v3424
        %4871 = vmatprep.subr.mxu0 %v3433
        %4872 = vmatpush1.msra.mxu0 %v3432
        %4873 = vmatprep.subr.mxu0 %v3441
        %4874 = vmatpush1.msra.mxu0 %v3440
        %4875 = vmatprep.subr.mxu0 %v3449
        %4876 = vmatpush1.msra.mxu0 %v3448
        %4877 = vmatprep.subr.mxu0 %v3457
        %4878 = vmatpush1.msra.mxu0 %v3456
        %4879 = vmatprep.subr.mxu0 0.0
        %4880 = vmatpush1.msra.mxu0 0.0
        %4881 = vmatprep.subr.mxu0 0.0
        %4882 = vmatpush1.msra.mxu0 0.0
        %4883 = vmatprep.subr.mxu0 0.0
        %4884 = vmatpush1.msra.mxu0 0.0
        %4885 = vmatprep.subr.mxu0 0.0
        %4886 = vmatpush1.msra.mxu0 0.0
        %4887 = vmatprep.subr.mxu0 0.0
        %4888 = vmatpush1.msra.mxu0 0.0
        %4889 = vmatprep.subr.mxu0 0.0
        %4890 = vmatpush1.msra.mxu0 0.0
        %4891 = vmatprep.subr.mxu0 0.0
        %4892 = vmatpush1.msra.mxu0 0.0
        %4893 = vmatprep.subr.mxu0 0.0
        %4894 = vmatpush1.msra.mxu0 0.0
        %4895 = vmatprep.subr.mxu0 0.0
        %4896 = vmatpush1.msra.mxu0 0.0
        %4897 = vmatprep.subr.mxu0 0.0
        %4898 = vmatpush1.msra.mxu0 0.0
        %4899 = vmatprep.subr.mxu0 0.0
        %4900 = vmatpush1.msra.mxu0 0.0
        %4901 = vmatprep.subr.mxu0 0.0
        %4902 = vmatpush1.msra.mxu0 0.0
        %4903 = vmatprep.subr.mxu0 0.0
        %4904 = vmatpush1.msra.mxu0 0.0
        %4905 = vmatprep.subr.mxu0 0.0
        %4906 = vmatpush1.msra.mxu0 0.0
        %4907 = vmatprep.subr.mxu0 0.0
        %4908 = vmatpush1.msra.mxu0 0.0
        %4909 = vmatprep.subr.mxu0 0.0
        %4910 = vmatpush1.msra.mxu0 0.0
        %4911 = vmatprep.mubr.f32.mxu0 0.0
        %4912 = vmatmul.mubr.f32.gmra.mrb[0].mxu0 %v3012
        %v4913 = vpop.f32.mrb[0].mxu0
        %v4914 = vadd.f32 %v3487, %v4913
        %v4915 = vpop.f32.mrb[0].mxu0
        %v4916 = vadd.f32 %v3491, %v4915
        %4917 = vmatprep.mubr.f32.mxu0 0.0
        %4918 = vmatmul.mubr.f32.gmra.mrb[0].mxu0 %v3017
        %v4919 = vpop.f32.mrb[0].mxu0
        %v4920 = vadd.f32 %v3487, %v4919
        %v4921 = vpop.f32.mrb[0].mxu0
        %v4922 = vadd.f32 %v3491, %v4921
        %4923 = vmatprep.mubr.f32.mxu0 0.0
        %4924 = vmatmul.mubr.f32.gmra.mrb[0].mxu0 %v3022
        %v4925 = vpop.f32.mrb[0].mxu0
        %v4926 = vadd.f32 %v3487, %v4925
        %v4927 = vpop.f32.mrb[0].mxu0
        %v4928 = vadd.f32 %v3491, %v4927
        %4929 = vmatprep.mubr.f32.mxu0 0.0
        %4930 = vmatmul.mubr.f32.gmra.mrb[0].mxu0 %v3027
        %v4931 = vpop.f32.mrb[0].mxu0
        %v4932 = vadd.f32 %v3487, %v4931
        %v4933 = vpop.f32.mrb[0].mxu0
        %v4934 = vadd.f32 %v3491, %v4933
        %4935 = vmatprep.mubr.f32.mxu0 0.0
        %4936 = vmatmul.mubr.f32.gmra.mrb[0].mxu0 %v3032
        %v4937 = vpop.f32.mrb[0].mxu0
        %v4938 = vadd.f32 %v3487, %v4937
        %v4939 = vpop.f32.mrb[0].mxu0
        %v4940 = vadd.f32 %v3491, %v4939
        %4941 = vmatprep.mubr.f32.mxu0 0.0
        %4942 = vmatmul.mubr.f32.gmra.mrb[0].mxu0 %v3037
        %v4943 = vpop.f32.mrb[0].mxu0
        %v4944 = vadd.f32 %v3487, %v4943
        %v4945 = vpop.f32.mrb[0].mxu0
        %v4946 = vadd.f32 %v3491, %v4945
        %4947 = vmatprep.mubr.f32.mxu0 0.0
        %4948 = vmatmul.mubr.f32.gmra.mrb[0].mxu0 %v3042
        %v4949 = vpop.f32.mrb[0].mxu0
        %v4950 = vadd.f32 %v3487, %v4949
        %v4951 = vpop.f32.mrb[0].mxu0
        %v4952 = vadd.f32 %v3491, %v4951
        %4953 = vmatprep.mubr.f32.mxu0 0.0
        %4954 = vmatmul.mubr.f32.gmra.mrb[0].mxu0 %v3047
        %v4955 = vpop.f32.mrb[0].mxu0
        %v4956 = vadd.f32 %v3487, %v4955
        %v4957 = vpop.f32.mrb[0].mxu0
        %v4958 = vadd.f32 %v3491, %v4957
        %4959 = vmatprep.mubr.f32.mxu0 0.0
        %4960 = vmatmul.mubr.f32.gmra.mrb[0].mxu0 %v3052
        %v4961 = vpop.f32.mrb[0].mxu0
        %v4962 = vadd.f32 %v3487, %v4961
        %v4963 = vpop.f32.mrb[0].mxu0
        %v4964 = vadd.f32 %v3491, %v4963
        %4965 = vmatprep.mubr.f32.mxu0 0.0
        %4966 = vmatmul.mubr.f32.gmra.mrb[0].mxu0 %v3057
        %v4967 = vpop.f32.mrb[0].mxu0
        %v4968 = vadd.f32 %v3487, %v4967
        %v4969 = vpop.f32.mrb[0].mxu0
        %v4970 = vadd.f32 %v3491, %v4969
        %4971 = vmatprep.mubr.f32.mxu0 0.0
        %4972 = vmatmul.mubr.f32.gmra.mrb[0].mxu0 %v3062
        %v4973 = vpop.f32.mrb[0].mxu0
        %v4974 = vadd.f32 %v3487, %v4973
        %v4975 = vpop.f32.mrb[0].mxu0
        %v4976 = vadd.f32 %v3491, %v4975
        %4977 = vmatprep.mubr.f32.mxu0 0.0
        %4978 = vmatmul.mubr.f32.gmra.mrb[0].mxu0 %v3067
        %v4979 = vpop.f32.mrb[0].mxu0
        %v4980 = vadd.f32 %v3487, %v4979
        %v4981 = vpop.f32.mrb[0].mxu0
        %v4982 = vadd.f32 %v3491, %v4981
        %4983 = vmatprep.mubr.f32.mxu0 0.0
        %4984 = vmatmul.mubr.f32.gmra.mrb[0].mxu0 %v3072
        %v4985 = vpop.f32.mrb[0].mxu0
        %v4986 = vadd.f32 %v3487, %v4985
        %v4987 = vpop.f32.mrb[0].mxu0
        %v4988 = vadd.f32 %v3491, %v4987
        %4989 = vmatprep.mubr.f32.mxu0 0.0
        %4990 = vmatmul.mubr.f32.gmra.mrb[0].mxu0 %v3077
        %v4991 = vpop.f32.mrb[0].mxu0
        %v4992 = vadd.f32 %v3487, %v4991
        %v4993 = vpop.f32.mrb[0].mxu0
        %v4994 = vadd.f32 %v3491, %v4993
        %4995 = vmatprep.mubr.f32.mxu0 0.0
        %4996 = vmatmul.mubr.f32.gmra.mrb[0].mxu0 %v3082
        %v4997 = vpop.f32.mrb[0].mxu0
        %v4998 = vadd.f32 %v3487, %v4997
        %v4999 = vpop.f32.mrb[0].mxu0
        %v5000 = vadd.f32 %v3491, %v4999
        %5001 = vmatprep.mubr.f32.mxu0 0.0
        %5002 = vmatmul.mubr.f32.gmra.mrb[0].mxu0 %v3087
        %v5003 = vpop.f32.mrb[0].mxu0
        %v5004 = vadd.f32 %v3487, %v5003
        %v5005 = vpop.f32.mrb[0].mxu0
        %v5006 = vadd.f32 %v3491, %v5005
        %5007 = vmatprep.mubr.f32.mxu0 0.0
        %5008 = vmatmul.mubr.f32.gmra.mrb[0].mxu0 %v3092
        %v5009 = vpop.f32.mrb[0].mxu0
        %v5010 = vadd.f32 %v3487, %v5009
        %v5011 = vpop.f32.mrb[0].mxu0
        %v5012 = vadd.f32 %v3491, %v5011
        %5013 = vmatprep.mubr.f32.mxu0 0.0
        %5014 = vmatmul.mubr.f32.gmra.mrb[0].mxu0 %v3097
        %v5015 = vpop.f32.mrb[0].mxu0
        %v5016 = vadd.f32 %v3487, %v5015
        %v5017 = vpop.f32.mrb[0].mxu0
        %v5018 = vadd.f32 %v3491, %v5017
        %5019 = vmatprep.mubr.f32.mxu0 0.0
        %5020 = vmatmul.mubr.f32.gmra.mrb[0].mxu0 %v3102
        %v5021 = vpop.f32.mrb[0].mxu0
        %v5022 = vadd.f32 %v3487, %v5021
        %v5023 = vpop.f32.mrb[0].mxu0
        %v5024 = vadd.f32 %v3491, %v5023
        %5025 = vmatprep.mubr.f32.mxu0 0.0
        %5026 = vmatmul.mubr.f32.gmra.mrb[0].mxu0 %v3107
        %v5027 = vpop.f32.mrb[0].mxu0
        %v5028 = vadd.f32 %v3487, %v5027
        %v5029 = vpop.f32.mrb[0].mxu0
        %v5030 = vadd.f32 %v3491, %v5029
        %5031 = vmatprep.mubr.f32.mxu0 0.0
        %5032 = vmatmul.mubr.f32.gmra.mrb[0].mxu0 %v3112
        %v5033 = vpop.f32.mrb[0].mxu0
        %v5034 = vadd.f32 %v3487, %v5033
        %v5035 = vpop.f32.mrb[0].mxu0
        %v5036 = vadd.f32 %v3491, %v5035
        %5037 = vmatprep.mubr.f32.mxu0 0.0
        %5038 = vmatmul.mubr.f32.gmra.mrb[0].mxu0 %v3117
        %v5039 = vpop.f32.mrb[0].mxu0
        %v5040 = vadd.f32 %v3487, %v5039
        %v5041 = vpop.f32.mrb[0].mxu0
        %v5042 = vadd.f32 %v3491, %v5041
        %5043 = vmatprep.mubr.f32.mxu0 0.0
        %5044 = vmatmul.mubr.f32.gmra.mrb[0].mxu0 %v3122
        %v5045 = vpop.f32.mrb[0].mxu0
        %v5046 = vadd.f32 %v3487, %v5045
        %v5047 = vpop.f32.mrb[0].mxu0
        %v5048 = vadd.f32 %v3491, %v5047
        %5049 = vmatprep.mubr.f32.mxu0 0.0
        %5050 = vmatmul.mubr.f32.gmra.mrb[0].mxu0 %v3127
        %v5051 = vpop.f32.mrb[0].mxu0
        %v5052 = vadd.f32 %v3487, %v5051
        %v5053 = vpop.f32.mrb[0].mxu0
        %v5054 = vadd.f32 %v3491, %v5053
        %5055 = vmatprep.mubr.f32.mxu0 0.0
        %5056 = vmatmul.mubr.f32.gmra.mrb[0].mxu0 %v3132
        %v5057 = vpop.f32.mrb[0].mxu0
        %v5058 = vadd.f32 %v3487, %v5057
        %v5059 = vpop.f32.mrb[0].mxu0
        %v5060 = vadd.f32 %v3491, %v5059
        %5061 = vmatprep.mubr.f32.mxu0 0.0
        %5062 = vmatmul.mubr.f32.gmra.mrb[0].mxu0 %v3137
        %v5063 = vpop.f32.mrb[0].mxu0
        %v5064 = vadd.f32 %v3487, %v5063
        %v5065 = vpop.f32.mrb[0].mxu0
        %v5066 = vadd.f32 %v3491, %v5065
        %5067 = vmatprep.mubr.f32.mxu0 0.0
        %5068 = vmatmul.mubr.f32.gmra.mrb[0].mxu0 %v3142
        %v5069 = vpop.f32.mrb[0].mxu0
        %v5070 = vadd.f32 %v3487, %v5069
        %v5071 = vpop.f32.mrb[0].mxu0
        %v5072 = vadd.f32 %v3491, %v5071
        %5073 = vmatprep.mubr.f32.mxu0 0.0
        %5074 = vmatmul.mubr.f32.gmra.mrb[0].mxu0 %v3147
        %v5075 = vpop.f32.mrb[0].mxu0
        %v5076 = vadd.f32 %v3487, %v5075
        %v5077 = vpop.f32.mrb[0].mxu0
        %v5078 = vadd.f32 %v3491, %v5077
        %5079 = vmatprep.mubr.f32.mxu0 0.0
        %5080 = vmatmul.mubr.f32.gmra.mrb[0].mxu0 %v3152
        %v5081 = vpop.f32.mrb[0].mxu0
        %v5082 = vadd.f32 %v3487, %v5081
        %v5083 = vpop.f32.mrb[0].mxu0
        %v5084 = vadd.f32 %v3491, %v5083
        %5085 = vmatprep.mubr.f32.mxu0 0.0
        %5086 = vmatmul.mubr.f32.gmra.mrb[0].mxu0 %v3157
        %v5087 = vpop.f32.mrb[0].mxu0
        %v5088 = vadd.f32 %v3487, %v5087
        %v5089 = vpop.f32.mrb[0].mxu0
        %v5090 = vadd.f32 %v3491, %v5089
        %5091 = vmatprep.mubr.f32.mxu0 0.0
        %5092 = vmatmul.mubr.f32.gmra.mrb[0].mxu0 %v3162
        %v5093 = vpop.f32.mrb[0].mxu0
        %v5094 = vadd.f32 %v3487, %v5093
        %v5095 = vpop.f32.mrb[0].mxu0
        %v5096 = vadd.f32 %v3491, %v5095
        %5097 = vmatprep.mubr.f32.mxu0 0.0
        %5098 = vmatmul.mubr.f32.gmra.mrb[0].mxu0 %v3167
        %v5099 = vpop.f32.mrb[0].mxu0
        %v5100 = vadd.f32 %v3487, %v5099
        %v5101 = vpop.f32.mrb[0].mxu0
        %v5102 = vadd.f32 %v3491, %v5101
        %5103 = vmatprep.mubr.f32.mxu0 0.0
        %5104 = vmatmul.mubr.f32.gmra.mrb[0].mxu0 %v3172
        %v5105 = vpop.f32.mrb[0].mxu0
        %v5106 = vadd.f32 %v3487, %v5105
        %v5107 = vpop.f32.mrb[0].mxu0
        %v5108 = vadd.f32 %v3491, %v5107
        %5109 = vmatprep.mubr.f32.mxu0 0.0
        %5110 = vmatmul.mubr.f32.gmra.mrb[0].mxu0 %v3177
        %v5111 = vpop.f32.mrb[0].mxu0
        %v5112 = vadd.f32 %v3487, %v5111
        %v5113 = vpop.f32.mrb[0].mxu0
        %v5114 = vadd.f32 %v3491, %v5113
        %5115 = vmatprep.mubr.f32.mxu0 0.0
        %5116 = vmatmul.mubr.f32.gmra.mrb[0].mxu0 %v3182
        %v5117 = vpop.f32.mrb[0].mxu0
        %v5118 = vadd.f32 %v3487, %v5117
        %v5119 = vpop.f32.mrb[0].mxu0
        %v5120 = vadd.f32 %v3491, %v5119
        %5121 = vmatprep.mubr.f32.mxu0 0.0
        %5122 = vmatmul.mubr.f32.gmra.mrb[0].mxu0 %v3187
        %v5123 = vpop.f32.mrb[0].mxu0
        %v5124 = vadd.f32 %v3487, %v5123
        %v5125 = vpop.f32.mrb[0].mxu0
        %v5126 = vadd.f32 %v3491, %v5125
        %5127 = vmatprep.mubr.f32.mxu0 0.0
        %5128 = vmatmul.mubr.f32.gmra.mrb[0].mxu0 %v3192
        %v5129 = vpop.f32.mrb[0].mxu0
        %v5130 = vadd.f32 %v3487, %v5129
        %v5131 = vpop.f32.mrb[0].mxu0
        %v5132 = vadd.f32 %v3491, %v5131
        %5133 = vmatprep.mubr.f32.mxu0 0.0
        %5134 = vmatmul.mubr.f32.gmra.mrb[0].mxu0 %v3197
        %v5135 = vpop.f32.mrb[0].mxu0
        %v5136 = vadd.f32 %v3487, %v5135
        %v5137 = vpop.f32.mrb[0].mxu0
        %v5138 = vadd.f32 %v3491, %v5137
        %5139 = vmatprep.mubr.f32.mxu0 0.0
        %5140 = vmatmul.mubr.f32.gmra.mrb[0].mxu0 %v3202
        %v5141 = vpop.f32.mrb[0].mxu0
        %v5142 = vadd.f32 %v3487, %v5141
        %v5143 = vpop.f32.mrb[0].mxu0
        %v5144 = vadd.f32 %v3491, %v5143
        %5145 = vmatprep.mubr.f32.mxu0 0.0
        %5146 = vmatmul.mubr.f32.gmra.mrb[0].mxu0 %v3207
        %v5147 = vpop.f32.mrb[0].mxu0
        %v5148 = vadd.f32 %v3487, %v5147
        %v5149 = vpop.f32.mrb[0].mxu0
        %v5150 = vadd.f32 %v3491, %v5149
        %5151 = vmatprep.mubr.f32.mxu0 0.0
        %5152 = vmatmul.mubr.f32.gmra.mrb[0].mxu0 %v3212
        %v5153 = vpop.f32.mrb[0].mxu0
        %v5154 = vadd.f32 %v3487, %v5153
        %v5155 = vpop.f32.mrb[0].mxu0
        %v5156 = vadd.f32 %v3491, %v5155
        %5157 = vmatprep.mubr.f32.mxu0 0.0
        %5158 = vmatmul.mubr.f32.gmra.mrb[0].mxu0 %v3217
        %v5159 = vpop.f32.mrb[0].mxu0
        %v5160 = vadd.f32 %v3487, %v5159
        %v5161 = vpop.f32.mrb[0].mxu0
        %v5162 = vadd.f32 %v3491, %v5161
        %5163 = vmatprep.mubr.f32.mxu0 0.0
        %5164 = vmatmul.mubr.f32.gmra.mrb[0].mxu0 %v3222
        %v5165 = vpop.f32.mrb[0].mxu0
        %v5166 = vadd.f32 %v3487, %v5165
        %v5167 = vpop.f32.mrb[0].mxu0
        %v5168 = vadd.f32 %v3491, %v5167
        %5169 = vmatprep.mubr.f32.mxu0 0.0
        %5170 = vmatmul.mubr.f32.gmra.mrb[0].mxu0 %v3227
        %v5171 = vpop.f32.mrb[0].mxu0
        %v5172 = vadd.f32 %v3487, %v5171
        %v5173 = vpop.f32.mrb[0].mxu0
        %v5174 = vadd.f32 %v3491, %v5173
        %5175 = vmatprep.mubr.f32.mxu0 0.0
        %5176 = vmatmul.mubr.f32.gmra.mrb[0].mxu0 %v3232
        %v5177 = vpop.f32.mrb[0].mxu0
        %v5178 = vadd.f32 %v3487, %v5177
        %v5179 = vpop.f32.mrb[0].mxu0
        %v5180 = vadd.f32 %v3491, %v5179
        %5181 = vmatprep.mubr.f32.mxu0 0.0
        %5182 = vmatmul.mubr.f32.gmra.mrb[0].mxu0 %v3237
        %v5183 = vpop.f32.mrb[0].mxu0
        %v5184 = vadd.f32 %v3487, %v5183
        %v5185 = vpop.f32.mrb[0].mxu0
        %v5186 = vadd.f32 %v3491, %v5185
        %5187 = vmatprep.mubr.f32.mxu0 0.0
        %5188 = vmatmul.mubr.f32.gmra.mrb[0].mxu0 %v3242
        %v5189 = vpop.f32.mrb[0].mxu0
        %v5190 = vadd.f32 %v3487, %v5189
        %v5191 = vpop.f32.mrb[0].mxu0
        %v5192 = vadd.f32 %v3491, %v5191
        %5193 = vmatprep.mubr.f32.mxu0 0.0
        %5194 = vmatmul.mubr.f32.gmra.mrb[0].mxu0 %v3247
        %v5195 = vpop.f32.mrb[0].mxu0
        %v5196 = vadd.f32 %v3487, %v5195
        %v5197 = vpop.f32.mrb[0].mxu0
        %v5198 = vadd.f32 %v3491, %v5197
        %5199 = vmatprep.mubr.f32.mxu0 0.0
        %5200 = vmatmul.mubr.f32.gmra.mrb[0].mxu0 %v3252
        %v5201 = vpop.f32.mrb[0].mxu0
        %v5202 = vadd.f32 %v3487, %v5201
        %v5203 = vpop.f32.mrb[0].mxu0
        %v5204 = vadd.f32 %v3491, %v5203
        %5205 = vmatprep.mubr.f32.mxu0 0.0
        %5206 = vmatmul.mubr.f32.gmra.mrb[0].mxu0 %v3257
        %v5207 = vpop.f32.mrb[0].mxu0
        %v5208 = vadd.f32 %v3487, %v5207
        %v5209 = vpop.f32.mrb[0].mxu0
        %v5210 = vadd.f32 %v3491, %v5209
        %5211 = vmatprep.mubr.f32.mxu0 0.0
        %5212 = vmatmul.mubr.f32.gmra.mrb[0].mxu0 %v3262
        %v5213 = vpop.f32.mrb[0].mxu0
        %v5214 = vadd.f32 %v3487, %v5213
        %v5215 = vpop.f32.mrb[0].mxu0
        %v5216 = vadd.f32 %v3491, %v5215
        %5217 = vmatprep.mubr.f32.mxu0 0.0
        %5218 = vmatmul.mubr.f32.gmra.mrb[0].mxu0 %v3267
        %v5219 = vpop.f32.mrb[0].mxu0
        %v5220 = vadd.f32 %v3487, %v5219
        %v5221 = vpop.f32.mrb[0].mxu0
        %v5222 = vadd.f32 %v3491, %v5221
        %5223 = vmatprep.mubr.f32.mxu0 0.0
        %5224 = vmatmul.mubr.f32.gmra.mrb[0].mxu0 %v3272
        %v5225 = vpop.f32.mrb[0].mxu0
        %v5226 = vadd.f32 %v3487, %v5225
        %v5227 = vpop.f32.mrb[0].mxu0
        %v5228 = vadd.f32 %v3491, %v5227
        %5229 = vmatprep.mubr.f32.mxu0 0.0
        %5230 = vmatmul.mubr.f32.gmra.mrb[0].mxu0 %v3277
        %v5231 = vpop.f32.mrb[0].mxu0
        %v5232 = vadd.f32 %v3487, %v5231
        %v5233 = vpop.f32.mrb[0].mxu0
        %v5234 = vadd.f32 %v3491, %v5233
        %5235 = vmatprep.mubr.f32.mxu0 0.0
        %5236 = vmatmul.mubr.f32.gmra.mrb[0].mxu0 %v3282
        %v5237 = vpop.f32.mrb[0].mxu0
        %v5238 = vadd.f32 %v3487, %v5237
        %v5239 = vpop.f32.mrb[0].mxu0
        %v5240 = vadd.f32 %v3491, %v5239
        %5241 = vmatprep.mubr.f32.mxu0 0.0
        %5242 = vmatmul.mubr.f32.gmra.mrb[0].mxu0 %v3287
        %v5243 = vpop.f32.mrb[0].mxu0
        %v5244 = vadd.f32 %v3487, %v5243
        %v5245 = vpop.f32.mrb[0].mxu0
        %v5246 = vadd.f32 %v3491, %v5245
        %5247 = vmatprep.mubr.f32.mxu0 0.0
        %5248 = vmatmul.mubr.f32.gmra.mrb[0].mxu0 %v3292
        %v5249 = vpop.f32.mrb[0].mxu0
        %v5250 = vadd.f32 %v3487, %v5249
        %v5251 = vpop.f32.mrb[0].mxu0
        %v5252 = vadd.f32 %v3491, %v5251
        %5253 = vmatprep.mubr.f32.mxu0 0.0
        %5254 = vmatmul.mubr.f32.gmra.mrb[0].mxu0 %v3297
        %v5255 = vpop.f32.mrb[0].mxu0
        %v5256 = vadd.f32 %v3487, %v5255
        %v5257 = vpop.f32.mrb[0].mxu0
        %v5258 = vadd.f32 %v3491, %v5257
        %5259 = vmatprep.mubr.f32.mxu0 0.0
        %5260 = vmatmul.mubr.f32.gmra.mrb[0].mxu0 %v3302
        %v5261 = vpop.f32.mrb[0].mxu0
        %v5262 = vadd.f32 %v3487, %v5261
        %v5263 = vpop.f32.mrb[0].mxu0
        %v5264 = vadd.f32 %v3491, %v5263
        %5265 = vmatprep.mubr.f32.mxu0 0.0
        %5266 = vmatmul.mubr.f32.gmra.mrb[0].mxu0 %v3307
        %v5267 = vpop.f32.mrb[0].mxu0
        %v5268 = vadd.f32 %v3487, %v5267
        %v5269 = vpop.f32.mrb[0].mxu0
        %v5270 = vadd.f32 %v3491, %v5269
        %5271 = vmatprep.mubr.f32.mxu0 0.0
        %5272 = vmatmul.mubr.f32.gmra.mrb[0].mxu0 %v3312
        %v5273 = vpop.f32.mrb[0].mxu0
        %v5274 = vadd.f32 %v3487, %v5273
        %v5275 = vpop.f32.mrb[0].mxu0
        %v5276 = vadd.f32 %v3491, %v5275
        %5277 = vmatprep.mubr.f32.mxu0 0.0
        %5278 = vmatmul.mubr.f32.gmra.mrb[0].mxu0 %v3317
        %v5279 = vpop.f32.mrb[0].mxu0
        %v5280 = vadd.f32 %v3487, %v5279
        %v5281 = vpop.f32.mrb[0].mxu0
        %v5282 = vadd.f32 %v3491, %v5281
        %5283 = vmatprep.mubr.f32.mxu0 0.0
        %5284 = vmatmul.mubr.f32.gmra.mrb[0].mxu0 %v3322
        %v5285 = vpop.f32.mrb[0].mxu0
        %v5286 = vadd.f32 %v3487, %v5285
        %v5287 = vpop.f32.mrb[0].mxu0
        %v5288 = vadd.f32 %v3491, %v5287
        %5289 = vmatprep.mubr.f32.mxu0 0.0
        %5290 = vmatmul.mubr.f32.gmra.mrb[0].mxu0 %v3327
        %v5291 = vpop.f32.mrb[0].mxu0
        %v5292 = vadd.f32 %v3487, %v5291
        %v5293 = vpop.f32.mrb[0].mxu0
        %v5294 = vadd.f32 %v3491, %v5293
        %5295 = vdwg.mxu0
        %5296 = vst [vmem:[%s505] sm:$0xff] %v3567
        %5297 = vst [vmem:[%s505 + $0x8] sm:$0xff] %v3569
        %5298 = vst [vmem:[%s505 + $0x10] sm:$0xff] %v4016
        %5299 = vst [vmem:[%s505 + $0x18] sm:$0xff] %v4018
        %5300 = vst [vmem:[%s505 + $0x20] sm:$0xff] %v4465
        %5301 = vst [vmem:[%s505 + $0x28] sm:$0xff] %v4467
        %5302 = vst [vmem:[%s505 + $0x30] sm:$0xff] %v4914
        %5303 = vst [vmem:[%s505 + $0x38] sm:$0xff] %v4916
        %5304 = vst [vmem:[%s505 + $0x40] sm:$0xff] %v3573
        %5305 = vst [vmem:[%s505 + $0x48] sm:$0xff] %v3575
        %5306 = vst [vmem:[%s505 + $0x50] sm:$0xff] %v4022
        %5307 = vst [vmem:[%s505 + $0x58] sm:$0xff] %v4024
        %5308 = vst [vmem:[%s505 + $0x60] sm:$0xff] %v4471
        %5309 = vst [vmem:[%s505 + $0x68] sm:$0xff] %v4473
        %5310 = vst [vmem:[%s505 + $0x70] sm:$0xff] %v4920
        %5311 = vst [vmem:[%s505 + $0x78] sm:$0xff] %v4922
        %5312 = vst [vmem:[%s505 + $0x80] sm:$0xff] %v3579
        %5313 = vst [vmem:[%s505 + $0x88] sm:$0xff] %v3581
        %5314 = vst [vmem:[%s505 + $0x90] sm:$0xff] %v4028
        %5315 = vst [vmem:[%s505 + $0x98] sm:$0xff] %v4030
        %5316 = vst [vmem:[%s505 + $0xa0] sm:$0xff] %v4477
        %5317 = vst [vmem:[%s505 + $0xa8] sm:$0xff] %v4479
        %5318 = vst [vmem:[%s505 + $0xb0] sm:$0xff] %v4926
        %5319 = vst [vmem:[%s505 + $0xb8] sm:$0xff] %v4928
        %5320 = vst [vmem:[%s505 + $0xc0] sm:$0xff] %v3585
        %5321 = vst [vmem:[%s505 + $0xc8] sm:$0xff] %v3587
        %5322 = vst [vmem:[%s505 + $0xd0] sm:$0xff] %v4034
        %5323 = vst [vmem:[%s505 + $0xd8] sm:$0xff] %v4036
        %5324 = vst [vmem:[%s505 + $0xe0] sm:$0xff] %v4483
        %5325 = vst [vmem:[%s505 + $0xe8] sm:$0xff] %v4485
        %5326 = vst [vmem:[%s505 + $0xf0] sm:$0xff] %v4932
        %5327 = vst [vmem:[%s505 + $0xf8] sm:$0xff] %v4934
        %5328 = vst [vmem:[%s505 + $0x100] sm:$0xff] %v3591
        %5329 = vst [vmem:[%s505 + $0x108] sm:$0xff] %v3593
        %5330 = vst [vmem:[%s505 + $0x110] sm:$0xff] %v4040
        %5331 = vst [vmem:[%s505 + $0x118] sm:$0xff] %v4042
        %5332 = vst [vmem:[%s505 + $0x120] sm:$0xff] %v4489
        %5333 = vst [vmem:[%s505 + $0x128] sm:$0xff] %v4491
        %5334 = vst [vmem:[%s505 + $0x130] sm:$0xff] %v4938
        %5335 = vst [vmem:[%s505 + $0x138] sm:$0xff] %v4940
        %5336 = vst [vmem:[%s505 + $0x140] sm:$0xff] %v3597
        %5337 = vst [vmem:[%s505 + $0x148] sm:$0xff] %v3599
        %5338 = vst [vmem:[%s505 + $0x150] sm:$0xff] %v4046
        %5339 = vst [vmem:[%s505 + $0x158] sm:$0xff] %v4048
        %5340 = vst [vmem:[%s505 + $0x160] sm:$0xff] %v4495
        %5341 = vst [vmem:[%s505 + $0x168] sm:$0xff] %v4497
        %5342 = vst [vmem:[%s505 + $0x170] sm:$0xff] %v4944
        %5343 = vst [vmem:[%s505 + $0x178] sm:$0xff] %v4946
        %5344 = vst [vmem:[%s505 + $0x180] sm:$0xff] %v3603
        %5345 = vst [vmem:[%s505 + $0x188] sm:$0xff] %v3605
        %5346 = vst [vmem:[%s505 + $0x190] sm:$0xff] %v4052
        %5347 = vst [vmem:[%s505 + $0x198] sm:$0xff] %v4054
        %5348 = vst [vmem:[%s505 + $0x1a0] sm:$0xff] %v4501
        %5349 = vst [vmem:[%s505 + $0x1a8] sm:$0xff] %v4503
        %5350 = vst [vmem:[%s505 + $0x1b0] sm:$0xff] %v4950
        %5351 = vst [vmem:[%s505 + $0x1b8] sm:$0xff] %v4952
        %5352 = vst [vmem:[%s505 + $0x1c0] sm:$0xff] %v3609
        %5353 = vst [vmem:[%s505 + $0x1c8] sm:$0xff] %v3611
        %5354 = vst [vmem:[%s505 + $0x1d0] sm:$0xff] %v4058
        %5355 = vst [vmem:[%s505 + $0x1d8] sm:$0xff] %v4060
        %5356 = vst [vmem:[%s505 + $0x1e0] sm:$0xff] %v4507
        %5357 = vst [vmem:[%s505 + $0x1e8] sm:$0xff] %v4509
        %5358 = vst [vmem:[%s505 + $0x1f0] sm:$0xff] %v4956
        %5359 = vst [vmem:[%s505 + $0x1f8] sm:$0xff] %v4958
        %5360 = vst [vmem:[%s505 + $0x200] sm:$0xff] %v3615
        %5361 = vst [vmem:[%s505 + $0x208] sm:$0xff] %v3617
        %5362 = vst [vmem:[%s505 + $0x210] sm:$0xff] %v4064
        %5363 = vst [vmem:[%s505 + $0x218] sm:$0xff] %v4066
        %5364 = vst [vmem:[%s505 + $0x220] sm:$0xff] %v4513
        %5365 = vst [vmem:[%s505 + $0x228] sm:$0xff] %v4515
        %5366 = vst [vmem:[%s505 + $0x230] sm:$0xff] %v4962
        %5367 = vst [vmem:[%s505 + $0x238] sm:$0xff] %v4964
        %5368 = vst [vmem:[%s505 + $0x240] sm:$0xff] %v3621
        %5369 = vst [vmem:[%s505 + $0x248] sm:$0xff] %v3623
        %5370 = vst [vmem:[%s505 + $0x250] sm:$0xff] %v4070
        %5371 = vst [vmem:[%s505 + $0x258] sm:$0xff] %v4072
        %5372 = vst [vmem:[%s505 + $0x260] sm:$0xff] %v4519
        %5373 = vst [vmem:[%s505 + $0x268] sm:$0xff] %v4521
        %5374 = vst [vmem:[%s505 + $0x270] sm:$0xff] %v4968
        %5375 = vst [vmem:[%s505 + $0x278] sm:$0xff] %v4970
        %5376 = vst [vmem:[%s505 + $0x280] sm:$0xff] %v3627
        %5377 = vst [vmem:[%s505 + $0x288] sm:$0xff] %v3629
        %5378 = vst [vmem:[%s505 + $0x290] sm:$0xff] %v4076
        %5379 = vst [vmem:[%s505 + $0x298] sm:$0xff] %v4078
        %5380 = vst [vmem:[%s505 + $0x2a0] sm:$0xff] %v4525
        %5381 = vst [vmem:[%s505 + $0x2a8] sm:$0xff] %v4527
        %5382 = vst [vmem:[%s505 + $0x2b0] sm:$0xff] %v4974
        %5383 = vst [vmem:[%s505 + $0x2b8] sm:$0xff] %v4976
        %5384 = vst [vmem:[%s505 + $0x2c0] sm:$0xff] %v3633
        %5385 = vst [vmem:[%s505 + $0x2c8] sm:$0xff] %v3635
        %5386 = vst [vmem:[%s505 + $0x2d0] sm:$0xff] %v4082
        %5387 = vst [vmem:[%s505 + $0x2d8] sm:$0xff] %v4084
        %5388 = vst [vmem:[%s505 + $0x2e0] sm:$0xff] %v4531
        %5389 = vst [vmem:[%s505 + $0x2e8] sm:$0xff] %v4533
        %5390 = vst [vmem:[%s505 + $0x2f0] sm:$0xff] %v4980
        %5391 = vst [vmem:[%s505 + $0x2f8] sm:$0xff] %v4982
        %5392 = vst [vmem:[%s505 + $0x300] sm:$0xff] %v3639
        %5393 = vst [vmem:[%s505 + $0x308] sm:$0xff] %v3641
        %5394 = vst [vmem:[%s505 + $0x310] sm:$0xff] %v4088
        %5395 = vst [vmem:[%s505 + $0x318] sm:$0xff] %v4090
        %5396 = vst [vmem:[%s505 + $0x320] sm:$0xff] %v4537
        %5397 = vst [vmem:[%s505 + $0x328] sm:$0xff] %v4539
        %5398 = vst [vmem:[%s505 + $0x330] sm:$0xff] %v4986
        %5399 = vst [vmem:[%s505 + $0x338] sm:$0xff] %v4988
        %5400 = vst [vmem:[%s505 + $0x340] sm:$0xff] %v3645
        %5401 = vst [vmem:[%s505 + $0x348] sm:$0xff] %v3647
        %5402 = vst [vmem:[%s505 + $0x350] sm:$0xff] %v4094
        %5403 = vst [vmem:[%s505 + $0x358] sm:$0xff] %v4096
        %5404 = vst [vmem:[%s505 + $0x360] sm:$0xff] %v4543
        %5405 = vst [vmem:[%s505 + $0x368] sm:$0xff] %v4545
        %5406 = vst [vmem:[%s505 + $0x370] sm:$0xff] %v4992
        %5407 = vst [vmem:[%s505 + $0x378] sm:$0xff] %v4994
        %5408 = vst [vmem:[%s505 + $0x380] sm:$0xff] %v3651
        %5409 = vst [vmem:[%s505 + $0x388] sm:$0xff] %v3653
        %5410 = vst [vmem:[%s505 + $0x390] sm:$0xff] %v4100
        %5411 = vst [vmem:[%s505 + $0x398] sm:$0xff] %v4102
        %5412 = vst [vmem:[%s505 + $0x3a0] sm:$0xff] %v4549
        %5413 = vst [vmem:[%s505 + $0x3a8] sm:$0xff] %v4551
        %5414 = vst [vmem:[%s505 + $0x3b0] sm:$0xff] %v4998
        %5415 = vst [vmem:[%s505 + $0x3b8] sm:$0xff] %v5000
        %5416 = vst [vmem:[%s505 + $0x3c0] sm:$0xff] %v3657
        %5417 = vst [vmem:[%s505 + $0x3c8] sm:$0xff] %v3659
        %5418 = vst [vmem:[%s505 + $0x3d0] sm:$0xff] %v4106
        %5419 = vst [vmem:[%s505 + $0x3d8] sm:$0xff] %v4108
        %5420 = vst [vmem:[%s505 + $0x3e0] sm:$0xff] %v4555
        %5421 = vst [vmem:[%s505 + $0x3e8] sm:$0xff] %v4557
        %5422 = vst [vmem:[%s505 + $0x3f0] sm:$0xff] %v5004
        %5423 = vst [vmem:[%s505 + $0x3f8] sm:$0xff] %v5006
        %5424 = vst [vmem:[%s505 + $0x400] sm:$0xff] %v3663
        %5425 = vst [vmem:[%s505 + $0x408] sm:$0xff] %v3665
        %5426 = vst [vmem:[%s505 + $0x410] sm:$0xff] %v4112
        %5427 = vst [vmem:[%s505 + $0x418] sm:$0xff] %v4114
        %5428 = vst [vmem:[%s505 + $0x420] sm:$0xff] %v4561
        %5429 = vst [vmem:[%s505 + $0x428] sm:$0xff] %v4563
        %5430 = vst [vmem:[%s505 + $0x430] sm:$0xff] %v5010
        %5431 = vst [vmem:[%s505 + $0x438] sm:$0xff] %v5012
        %5432 = vst [vmem:[%s505 + $0x440] sm:$0xff] %v3669
        %5433 = vst [vmem:[%s505 + $0x448] sm:$0xff] %v3671
        %5434 = vst [vmem:[%s505 + $0x450] sm:$0xff] %v4118
        %5435 = vst [vmem:[%s505 + $0x458] sm:$0xff] %v4120
        %5436 = vst [vmem:[%s505 + $0x460] sm:$0xff] %v4567
        %5437 = vst [vmem:[%s505 + $0x468] sm:$0xff] %v4569
        %5438 = vst [vmem:[%s505 + $0x470] sm:$0xff] %v5016
        %5439 = vst [vmem:[%s505 + $0x478] sm:$0xff] %v5018
        %5440 = vst [vmem:[%s505 + $0x480] sm:$0xff] %v3675
        %5441 = vst [vmem:[%s505 + $0x488] sm:$0xff] %v3677
        %5442 = vst [vmem:[%s505 + $0x490] sm:$0xff] %v4124
        %5443 = vst [vmem:[%s505 + $0x498] sm:$0xff] %v4126
        %5444 = vst [vmem:[%s505 + $0x4a0] sm:$0xff] %v4573
        %5445 = vst [vmem:[%s505 + $0x4a8] sm:$0xff] %v4575
        %5446 = vst [vmem:[%s505 + $0x4b0] sm:$0xff] %v5022
        %5447 = vst [vmem:[%s505 + $0x4b8] sm:$0xff] %v5024
        %5448 = vst [vmem:[%s505 + $0x4c0] sm:$0xff] %v3681
        %5449 = vst [vmem:[%s505 + $0x4c8] sm:$0xff] %v3683
        %5450 = vst [vmem:[%s505 + $0x4d0] sm:$0xff] %v4130
        %5451 = vst [vmem:[%s505 + $0x4d8] sm:$0xff] %v4132
        %5452 = vst [vmem:[%s505 + $0x4e0] sm:$0xff] %v4579
        %5453 = vst [vmem:[%s505 + $0x4e8] sm:$0xff] %v4581
        %5454 = vst [vmem:[%s505 + $0x4f0] sm:$0xff] %v5028
        %5455 = vst [vmem:[%s505 + $0x4f8] sm:$0xff] %v5030
        %5456 = vst [vmem:[%s505 + $0x500] sm:$0xff] %v3687
        %5457 = vst [vmem:[%s505 + $0x508] sm:$0xff] %v3689
        %5458 = vst [vmem:[%s505 + $0x510] sm:$0xff] %v4136
        %5459 = vst [vmem:[%s505 + $0x518] sm:$0xff] %v4138
        %5460 = vst [vmem:[%s505 + $0x520] sm:$0xff] %v4585
        %5461 = vst [vmem:[%s505 + $0x528] sm:$0xff] %v4587
        %5462 = vst [vmem:[%s505 + $0x530] sm:$0xff] %v5034
        %5463 = vst [vmem:[%s505 + $0x538] sm:$0xff] %v5036
        %5464 = vst [vmem:[%s505 + $0x540] sm:$0xff] %v3693
        %5465 = vst [vmem:[%s505 + $0x548] sm:$0xff] %v3695
        %5466 = vst [vmem:[%s505 + $0x550] sm:$0xff] %v4142
        %5467 = vst [vmem:[%s505 + $0x558] sm:$0xff] %v4144
        %5468 = vst [vmem:[%s505 + $0x560] sm:$0xff] %v4591
        %5469 = vst [vmem:[%s505 + $0x568] sm:$0xff] %v4593
        %5470 = vst [vmem:[%s505 + $0x570] sm:$0xff] %v5040
        %5471 = vst [vmem:[%s505 + $0x578] sm:$0xff] %v5042
        %5472 = vst [vmem:[%s505 + $0x580] sm:$0xff] %v3699
        %5473 = vst [vmem:[%s505 + $0x588] sm:$0xff] %v3701
        %5474 = vst [vmem:[%s505 + $0x590] sm:$0xff] %v4148
        %5475 = vst [vmem:[%s505 + $0x598] sm:$0xff] %v4150
        %5476 = vst [vmem:[%s505 + $0x5a0] sm:$0xff] %v4597
        %5477 = vst [vmem:[%s505 + $0x5a8] sm:$0xff] %v4599
        %5478 = vst [vmem:[%s505 + $0x5b0] sm:$0xff] %v5046
        %5479 = vst [vmem:[%s505 + $0x5b8] sm:$0xff] %v5048
        %5480 = vst [vmem:[%s505 + $0x5c0] sm:$0xff] %v3705
        %5481 = vst [vmem:[%s505 + $0x5c8] sm:$0xff] %v3707
        %5482 = vst [vmem:[%s505 + $0x5d0] sm:$0xff] %v4154
        %5483 = vst [vmem:[%s505 + $0x5d8] sm:$0xff] %v4156
        %5484 = vst [vmem:[%s505 + $0x5e0] sm:$0xff] %v4603
        %5485 = vst [vmem:[%s505 + $0x5e8] sm:$0xff] %v4605
        %5486 = vst [vmem:[%s505 + $0x5f0] sm:$0xff] %v5052
        %5487 = vst [vmem:[%s505 + $0x5f8] sm:$0xff] %v5054
        %5488 = vst [vmem:[%s505 + $0x600] sm:$0xff] %v3711
        %5489 = vst [vmem:[%s505 + $0x608] sm:$0xff] %v3713
        %5490 = vst [vmem:[%s505 + $0x610] sm:$0xff] %v4160
        %5491 = vst [vmem:[%s505 + $0x618] sm:$0xff] %v4162
        %5492 = vst [vmem:[%s505 + $0x620] sm:$0xff] %v4609
        %5493 = vst [vmem:[%s505 + $0x628] sm:$0xff] %v4611
        %5494 = vst [vmem:[%s505 + $0x630] sm:$0xff] %v5058
        %5495 = vst [vmem:[%s505 + $0x638] sm:$0xff] %v5060
        %5496 = vst [vmem:[%s505 + $0x640] sm:$0xff] %v3717
        %5497 = vst [vmem:[%s505 + $0x648] sm:$0xff] %v3719
        %5498 = vst [vmem:[%s505 + $0x650] sm:$0xff] %v4166
        %5499 = vst [vmem:[%s505 + $0x658] sm:$0xff] %v4168
        %5500 = vst [vmem:[%s505 + $0x660] sm:$0xff] %v4615
        %5501 = vst [vmem:[%s505 + $0x668] sm:$0xff] %v4617
        %5502 = vst [vmem:[%s505 + $0x670] sm:$0xff] %v5064
        %5503 = vst [vmem:[%s505 + $0x678] sm:$0xff] %v5066
        %5504 = vst [vmem:[%s505 + $0x680] sm:$0xff] %v3723
        %5505 = vst [vmem:[%s505 + $0x688] sm:$0xff] %v3725
        %5506 = vst [vmem:[%s505 + $0x690] sm:$0xff] %v4172
        %5507 = vst [vmem:[%s505 + $0x698] sm:$0xff] %v4174
        %5508 = vst [vmem:[%s505 + $0x6a0] sm:$0xff] %v4621
        %5509 = vst [vmem:[%s505 + $0x6a8] sm:$0xff] %v4623
        %5510 = vst [vmem:[%s505 + $0x6b0] sm:$0xff] %v5070
        %5511 = vst [vmem:[%s505 + $0x6b8] sm:$0xff] %v5072
        %5512 = vst [vmem:[%s505 + $0x6c0] sm:$0xff] %v3729
        %5513 = vst [vmem:[%s505 + $0x6c8] sm:$0xff] %v3731
        %5514 = vst [vmem:[%s505 + $0x6d0] sm:$0xff] %v4178
        %5515 = vst [vmem:[%s505 + $0x6d8] sm:$0xff] %v4180
        %5516 = vst [vmem:[%s505 + $0x6e0] sm:$0xff] %v4627
        %5517 = vst [vmem:[%s505 + $0x6e8] sm:$0xff] %v4629
        %5518 = vst [vmem:[%s505 + $0x6f0] sm:$0xff] %v5076
        %5519 = vst [vmem:[%s505 + $0x6f8] sm:$0xff] %v5078
        %5520 = vst [vmem:[%s505 + $0x700] sm:$0xff] %v3735
        %5521 = vst [vmem:[%s505 + $0x708] sm:$0xff] %v3737
        %5522 = vst [vmem:[%s505 + $0x710] sm:$0xff] %v4184
        %5523 = vst [vmem:[%s505 + $0x718] sm:$0xff] %v4186
        %5524 = vst [vmem:[%s505 + $0x720] sm:$0xff] %v4633
        %5525 = vst [vmem:[%s505 + $0x728] sm:$0xff] %v4635
        %5526 = vst [vmem:[%s505 + $0x730] sm:$0xff] %v5082
        %5527 = vst [vmem:[%s505 + $0x738] sm:$0xff] %v5084
        %5528 = vst [vmem:[%s505 + $0x740] sm:$0xff] %v3741
        %5529 = vst [vmem:[%s505 + $0x748] sm:$0xff] %v3743
        %5530 = vst [vmem:[%s505 + $0x750] sm:$0xff] %v4190
        %5531 = vst [vmem:[%s505 + $0x758] sm:$0xff] %v4192
        %5532 = vst [vmem:[%s505 + $0x760] sm:$0xff] %v4639
        %5533 = vst [vmem:[%s505 + $0x768] sm:$0xff] %v4641
        %5534 = vst [vmem:[%s505 + $0x770] sm:$0xff] %v5088
        %5535 = vst [vmem:[%s505 + $0x778] sm:$0xff] %v5090
        %5536 = vst [vmem:[%s505 + $0x780] sm:$0xff] %v3747
        %5537 = vst [vmem:[%s505 + $0x788] sm:$0xff] %v3749
        %5538 = vst [vmem:[%s505 + $0x790] sm:$0xff] %v4196
        %5539 = vst [vmem:[%s505 + $0x798] sm:$0xff] %v4198
        %5540 = vst [vmem:[%s505 + $0x7a0] sm:$0xff] %v4645
        %5541 = vst [vmem:[%s505 + $0x7a8] sm:$0xff] %v4647
        %5542 = vst [vmem:[%s505 + $0x7b0] sm:$0xff] %v5094
        %5543 = vst [vmem:[%s505 + $0x7b8] sm:$0xff] %v5096
        %5544 = vst [vmem:[%s505 + $0x7c0] sm:$0xff] %v3753
        %5545 = vst [vmem:[%s505 + $0x7c8] sm:$0xff] %v3755
        %5546 = vst [vmem:[%s505 + $0x7d0] sm:$0xff] %v4202
        %5547 = vst [vmem:[%s505 + $0x7d8] sm:$0xff] %v4204
        %5548 = vst [vmem:[%s505 + $0x7e0] sm:$0xff] %v4651
        %5549 = vst [vmem:[%s505 + $0x7e8] sm:$0xff] %v4653
        %5550 = vst [vmem:[%s505 + $0x7f0] sm:$0xff] %v5100
        %5551 = vst [vmem:[%s505 + $0x7f8] sm:$0xff] %v5102
        %5552 = vst [vmem:[%s505 + $0x800] sm:$0xff] %v3759
        %5553 = vst [vmem:[%s505 + $0x808] sm:$0xff] %v3761
        %5554 = vst [vmem:[%s505 + $0x810] sm:$0xff] %v4208
        %5555 = vst [vmem:[%s505 + $0x818] sm:$0xff] %v4210
        %5556 = vst [vmem:[%s505 + $0x820] sm:$0xff] %v4657
        %5557 = vst [vmem:[%s505 + $0x828] sm:$0xff] %v4659
        %5558 = vst [vmem:[%s505 + $0x830] sm:$0xff] %v5106
        %5559 = vst [vmem:[%s505 + $0x838] sm:$0xff] %v5108
        %5560 = vst [vmem:[%s505 + $0x840] sm:$0xff] %v3765
        %5561 = vst [vmem:[%s505 + $0x848] sm:$0xff] %v3767
        %5562 = vst [vmem:[%s505 + $0x850] sm:$0xff] %v4214
        %5563 = vst [vmem:[%s505 + $0x858] sm:$0xff] %v4216
        %5564 = vst [vmem:[%s505 + $0x860] sm:$0xff] %v4663
        %5565 = vst [vmem:[%s505 + $0x868] sm:$0xff] %v4665
        %5566 = vst [vmem:[%s505 + $0x870] sm:$0xff] %v5112
        %5567 = vst [vmem:[%s505 + $0x878] sm:$0xff] %v5114
        %5568 = vst [vmem:[%s505 + $0x880] sm:$0xff] %v3771
        %5569 = vst [vmem:[%s505 + $0x888] sm:$0xff] %v3773
        %5570 = vst [vmem:[%s505 + $0x890] sm:$0xff] %v4220
        %5571 = vst [vmem:[%s505 + $0x898] sm:$0xff] %v4222
        %5572 = vst [vmem:[%s505 + $0x8a0] sm:$0xff] %v4669
        %5573 = vst [vmem:[%s505 + $0x8a8] sm:$0xff] %v4671
        %5574 = vst [vmem:[%s505 + $0x8b0] sm:$0xff] %v5118
        %5575 = vst [vmem:[%s505 + $0x8b8] sm:$0xff] %v5120
        %5576 = vst [vmem:[%s505 + $0x8c0] sm:$0xff] %v3777
        %5577 = vst [vmem:[%s505 + $0x8c8] sm:$0xff] %v3779
        %5578 = vst [vmem:[%s505 + $0x8d0] sm:$0xff] %v4226
        %5579 = vst [vmem:[%s505 + $0x8d8] sm:$0xff] %v4228
        %5580 = vst [vmem:[%s505 + $0x8e0] sm:$0xff] %v4675
        %5581 = vst [vmem:[%s505 + $0x8e8] sm:$0xff] %v4677
        %5582 = vst [vmem:[%s505 + $0x8f0] sm:$0xff] %v5124
        %5583 = vst [vmem:[%s505 + $0x8f8] sm:$0xff] %v5126
        %5584 = vst [vmem:[%s505 + $0x900] sm:$0xff] %v3783
        %5585 = vst [vmem:[%s505 + $0x908] sm:$0xff] %v3785
        %5586 = vst [vmem:[%s505 + $0x910] sm:$0xff] %v4232
        %5587 = vst [vmem:[%s505 + $0x918] sm:$0xff] %v4234
        %5588 = vst [vmem:[%s505 + $0x920] sm:$0xff] %v4681
        %5589 = vst [vmem:[%s505 + $0x928] sm:$0xff] %v4683
        %5590 = vst [vmem:[%s505 + $0x930] sm:$0xff] %v5130
        %5591 = vst [vmem:[%s505 + $0x938] sm:$0xff] %v5132
        %5592 = vst [vmem:[%s505 + $0x940] sm:$0xff] %v3789
        %5593 = vst [vmem:[%s505 + $0x948] sm:$0xff] %v3791
        %5594 = vst [vmem:[%s505 + $0x950] sm:$0xff] %v4238
        %5595 = vst [vmem:[%s505 + $0x958] sm:$0xff] %v4240
        %5596 = vst [vmem:[%s505 + $0x960] sm:$0xff] %v4687
        %5597 = vst [vmem:[%s505 + $0x968] sm:$0xff] %v4689
        %5598 = vst [vmem:[%s505 + $0x970] sm:$0xff] %v5136
        %5599 = vst [vmem:[%s505 + $0x978] sm:$0xff] %v5138
        %5600 = vst [vmem:[%s505 + $0x980] sm:$0xff] %v3795
        %5601 = vst [vmem:[%s505 + $0x988] sm:$0xff] %v3797
        %5602 = vst [vmem:[%s505 + $0x990] sm:$0xff] %v4244
        %5603 = vst [vmem:[%s505 + $0x998] sm:$0xff] %v4246
        %5604 = vst [vmem:[%s505 + $0x9a0] sm:$0xff] %v4693
        %5605 = vst [vmem:[%s505 + $0x9a8] sm:$0xff] %v4695
        %5606 = vst [vmem:[%s505 + $0x9b0] sm:$0xff] %v5142
        %5607 = vst [vmem:[%s505 + $0x9b8] sm:$0xff] %v5144
        %5608 = vst [vmem:[%s505 + $0x9c0] sm:$0xff] %v3801
        %5609 = vst [vmem:[%s505 + $0x9c8] sm:$0xff] %v3803
        %5610 = vst [vmem:[%s505 + $0x9d0] sm:$0xff] %v4250
        %5611 = vst [vmem:[%s505 + $0x9d8] sm:$0xff] %v4252
        %5612 = vst [vmem:[%s505 + $0x9e0] sm:$0xff] %v4699
        %5613 = vst [vmem:[%s505 + $0x9e8] sm:$0xff] %v4701
        %5614 = vst [vmem:[%s505 + $0x9f0] sm:$0xff] %v5148
        %5615 = vst [vmem:[%s505 + $0x9f8] sm:$0xff] %v5150
        %5616 = vst [vmem:[%s505 + $0xa00] sm:$0xff] %v3807
        %5617 = vst [vmem:[%s505 + $0xa08] sm:$0xff] %v3809
        %5618 = vst [vmem:[%s505 + $0xa10] sm:$0xff] %v4256
        %5619 = vst [vmem:[%s505 + $0xa18] sm:$0xff] %v4258
        %5620 = vst [vmem:[%s505 + $0xa20] sm:$0xff] %v4705
        %5621 = vst [vmem:[%s505 + $0xa28] sm:$0xff] %v4707
        %5622 = vst [vmem:[%s505 + $0xa30] sm:$0xff] %v5154
        %5623 = vst [vmem:[%s505 + $0xa38] sm:$0xff] %v5156
        %5624 = vst [vmem:[%s505 + $0xa40] sm:$0xff] %v3813
        %5625 = vst [vmem:[%s505 + $0xa48] sm:$0xff] %v3815
        %5626 = vst [vmem:[%s505 + $0xa50] sm:$0xff] %v4262
        %5627 = vst [vmem:[%s505 + $0xa58] sm:$0xff] %v4264
        %5628 = vst [vmem:[%s505 + $0xa60] sm:$0xff] %v4711
        %5629 = vst [vmem:[%s505 + $0xa68] sm:$0xff] %v4713
        %5630 = vst [vmem:[%s505 + $0xa70] sm:$0xff] %v5160
        %5631 = vst [vmem:[%s505 + $0xa78] sm:$0xff] %v5162
        %5632 = vst [vmem:[%s505 + $0xa80] sm:$0xff] %v3819
        %5633 = vst [vmem:[%s505 + $0xa88] sm:$0xff] %v3821
        %5634 = vst [vmem:[%s505 + $0xa90] sm:$0xff] %v4268
        %5635 = vst [vmem:[%s505 + $0xa98] sm:$0xff] %v4270
        %5636 = vst [vmem:[%s505 + $0xaa0] sm:$0xff] %v4717
        %5637 = vst [vmem:[%s505 + $0xaa8] sm:$0xff] %v4719
        %5638 = vst [vmem:[%s505 + $0xab0] sm:$0xff] %v5166
        %5639 = vst [vmem:[%s505 + $0xab8] sm:$0xff] %v5168
        %5640 = vst [vmem:[%s505 + $0xac0] sm:$0xff] %v3825
        %5641 = vst [vmem:[%s505 + $0xac8] sm:$0xff] %v3827
        %5642 = vst [vmem:[%s505 + $0xad0] sm:$0xff] %v4274
        %5643 = vst [vmem:[%s505 + $0xad8] sm:$0xff] %v4276
        %5644 = vst [vmem:[%s505 + $0xae0] sm:$0xff] %v4723
        %5645 = vst [vmem:[%s505 + $0xae8] sm:$0xff] %v4725
        %5646 = vst [vmem:[%s505 + $0xaf0] sm:$0xff] %v5172
        %5647 = vst [vmem:[%s505 + $0xaf8] sm:$0xff] %v5174
        %5648 = vst [vmem:[%s505 + $0xb00] sm:$0xff] %v3831
        %5649 = vst [vmem:[%s505 + $0xb08] sm:$0xff] %v3833
        %5650 = vst [vmem:[%s505 + $0xb10] sm:$0xff] %v4280
        %5651 = vst [vmem:[%s505 + $0xb18] sm:$0xff] %v4282
        %5652 = vst [vmem:[%s505 + $0xb20] sm:$0xff] %v4729
        %5653 = vst [vmem:[%s505 + $0xb28] sm:$0xff] %v4731
        %5654 = vst [vmem:[%s505 + $0xb30] sm:$0xff] %v5178
        %5655 = vst [vmem:[%s505 + $0xb38] sm:$0xff] %v5180
        %5656 = vst [vmem:[%s505 + $0xb40] sm:$0xff] %v3837
        %5657 = vst [vmem:[%s505 + $0xb48] sm:$0xff] %v3839
        %5658 = vst [vmem:[%s505 + $0xb50] sm:$0xff] %v4286
        %5659 = vst [vmem:[%s505 + $0xb58] sm:$0xff] %v4288
        %5660 = vst [vmem:[%s505 + $0xb60] sm:$0xff] %v4735
        %5661 = vst [vmem:[%s505 + $0xb68] sm:$0xff] %v4737
        %5662 = vst [vmem:[%s505 + $0xb70] sm:$0xff] %v5184
        %5663 = vst [vmem:[%s505 + $0xb78] sm:$0xff] %v5186
        %5664 = vst [vmem:[%s505 + $0xb80] sm:$0xff] %v3843
        %5665 = vst [vmem:[%s505 + $0xb88] sm:$0xff] %v3845
        %5666 = vst [vmem:[%s505 + $0xb90] sm:$0xff] %v4292
        %5667 = vst [vmem:[%s505 + $0xb98] sm:$0xff] %v4294
        %5668 = vst [vmem:[%s505 + $0xba0] sm:$0xff] %v4741
        %5669 = vst [vmem:[%s505 + $0xba8] sm:$0xff] %v4743
        %5670 = vst [vmem:[%s505 + $0xbb0] sm:$0xff] %v5190
        %5671 = vst [vmem:[%s505 + $0xbb8] sm:$0xff] %v5192
        %5672 = vst [vmem:[%s505 + $0xbc0] sm:$0xff] %v3849
        %5673 = vst [vmem:[%s505 + $0xbc8] sm:$0xff] %v3851
        %5674 = vst [vmem:[%s505 + $0xbd0] sm:$0xff] %v4298
        %5675 = vst [vmem:[%s505 + $0xbd8] sm:$0xff] %v4300
        %5676 = vst [vmem:[%s505 + $0xbe0] sm:$0xff] %v4747
        %5677 = vst [vmem:[%s505 + $0xbe8] sm:$0xff] %v4749
        %5678 = vst [vmem:[%s505 + $0xbf0] sm:$0xff] %v5196
        %5679 = vst [vmem:[%s505 + $0xbf8] sm:$0xff] %v5198
        %5680 = vst [vmem:[%s505 + $0xc00] sm:$0xff] %v3855
        %5681 = vst [vmem:[%s505 + $0xc08] sm:$0xff] %v3857
        %5682 = vst [vmem:[%s505 + $0xc10] sm:$0xff] %v4304
        %5683 = vst [vmem:[%s505 + $0xc18] sm:$0xff] %v4306
        %5684 = vst [vmem:[%s505 + $0xc20] sm:$0xff] %v4753
        %5685 = vst [vmem:[%s505 + $0xc28] sm:$0xff] %v4755
        %5686 = vst [vmem:[%s505 + $0xc30] sm:$0xff] %v5202
        %5687 = vst [vmem:[%s505 + $0xc38] sm:$0xff] %v5204
        %5688 = vst [vmem:[%s505 + $0xc40] sm:$0xff] %v3861
        %5689 = vst [vmem:[%s505 + $0xc48] sm:$0xff] %v3863
        %5690 = vst [vmem:[%s505 + $0xc50] sm:$0xff] %v4310
        %5691 = vst [vmem:[%s505 + $0xc58] sm:$0xff] %v4312
        %5692 = vst [vmem:[%s505 + $0xc60] sm:$0xff] %v4759
        %5693 = vst [vmem:[%s505 + $0xc68] sm:$0xff] %v4761
        %5694 = vst [vmem:[%s505 + $0xc70] sm:$0xff] %v5208
        %5695 = vst [vmem:[%s505 + $0xc78] sm:$0xff] %v5210
        %5696 = vst [vmem:[%s505 + $0xc80] sm:$0xff] %v3867
        %5697 = vst [vmem:[%s505 + $0xc88] sm:$0xff] %v3869
        %5698 = vst [vmem:[%s505 + $0xc90] sm:$0xff] %v4316
        %5699 = vst [vmem:[%s505 + $0xc98] sm:$0xff] %v4318
        %5700 = vst [vmem:[%s505 + $0xca0] sm:$0xff] %v4765
        %5701 = vst [vmem:[%s505 + $0xca8] sm:$0xff] %v4767
        %5702 = vst [vmem:[%s505 + $0xcb0] sm:$0xff] %v5214
        %5703 = vst [vmem:[%s505 + $0xcb8] sm:$0xff] %v5216
        %5704 = vst [vmem:[%s505 + $0xcc0] sm:$0xff] %v3873
        %5705 = vst [vmem:[%s505 + $0xcc8] sm:$0xff] %v3875
        %5706 = vst [vmem:[%s505 + $0xcd0] sm:$0xff] %v4322
        %5707 = vst [vmem:[%s505 + $0xcd8] sm:$0xff] %v4324
        %5708 = vst [vmem:[%s505 + $0xce0] sm:$0xff] %v4771
        %5709 = vst [vmem:[%s505 + $0xce8] sm:$0xff] %v4773
        %5710 = vst [vmem:[%s505 + $0xcf0] sm:$0xff] %v5220
        %5711 = vst [vmem:[%s505 + $0xcf8] sm:$0xff] %v5222
        %5712 = vst [vmem:[%s505 + $0xd00] sm:$0xff] %v3879
        %5713 = vst [vmem:[%s505 + $0xd08] sm:$0xff] %v3881
        %5714 = vst [vmem:[%s505 + $0xd10] sm:$0xff] %v4328
        %5715 = vst [vmem:[%s505 + $0xd18] sm:$0xff] %v4330
        %5716 = vst [vmem:[%s505 + $0xd20] sm:$0xff] %v4777
        %5717 = vst [vmem:[%s505 + $0xd28] sm:$0xff] %v4779
        %5718 = vst [vmem:[%s505 + $0xd30] sm:$0xff] %v5226
        %5719 = vst [vmem:[%s505 + $0xd38] sm:$0xff] %v5228
        %5720 = vst [vmem:[%s505 + $0xd40] sm:$0xff] %v3885
        %5721 = vst [vmem:[%s505 + $0xd48] sm:$0xff] %v3887
        %5722 = vst [vmem:[%s505 + $0xd50] sm:$0xff] %v4334
        %5723 = vst [vmem:[%s505 + $0xd58] sm:$0xff] %v4336
        %5724 = vst [vmem:[%s505 + $0xd60] sm:$0xff] %v4783
        %5725 = vst [vmem:[%s505 + $0xd68] sm:$0xff] %v4785
        %5726 = vst [vmem:[%s505 + $0xd70] sm:$0xff] %v5232
        %5727 = vst [vmem:[%s505 + $0xd78] sm:$0xff] %v5234
        %5728 = vst [vmem:[%s505 + $0xd80] sm:$0xff] %v3891
        %5729 = vst [vmem:[%s505 + $0xd88] sm:$0xff] %v3893
        %5730 = vst [vmem:[%s505 + $0xd90] sm:$0xff] %v4340
        %5731 = vst [vmem:[%s505 + $0xd98] sm:$0xff] %v4342
        %5732 = vst [vmem:[%s505 + $0xda0] sm:$0xff] %v4789
        %5733 = vst [vmem:[%s505 + $0xda8] sm:$0xff] %v4791
        %5734 = vst [vmem:[%s505 + $0xdb0] sm:$0xff] %v5238
        %5735 = vst [vmem:[%s505 + $0xdb8] sm:$0xff] %v5240
        %5736 = vst [vmem:[%s505 + $0xdc0] sm:$0xff] %v3897
        %5737 = vst [vmem:[%s505 + $0xdc8] sm:$0xff] %v3899
        %5738 = vst [vmem:[%s505 + $0xdd0] sm:$0xff] %v4346
        %5739 = vst [vmem:[%s505 + $0xdd8] sm:$0xff] %v4348
        %5740 = vst [vmem:[%s505 + $0xde0] sm:$0xff] %v4795
        %5741 = vst [vmem:[%s505 + $0xde8] sm:$0xff] %v4797
        %5742 = vst [vmem:[%s505 + $0xdf0] sm:$0xff] %v5244
        %5743 = vst [vmem:[%s505 + $0xdf8] sm:$0xff] %v5246
        %5744 = vst [vmem:[%s505 + $0xe00] sm:$0xff] %v3903
        %5745 = vst [vmem:[%s505 + $0xe08] sm:$0xff] %v3905
        %5746 = vst [vmem:[%s505 + $0xe10] sm:$0xff] %v4352
        %5747 = vst [vmem:[%s505 + $0xe18] sm:$0xff] %v4354
        %5748 = vst [vmem:[%s505 + $0xe20] sm:$0xff] %v4801
        %5749 = vst [vmem:[%s505 + $0xe28] sm:$0xff] %v4803
        %5750 = vst [vmem:[%s505 + $0xe30] sm:$0xff] %v5250
        %5751 = vst [vmem:[%s505 + $0xe38] sm:$0xff] %v5252
        %5752 = vst [vmem:[%s505 + $0xe40] sm:$0xff] %v3909
        %5753 = vst [vmem:[%s505 + $0xe48] sm:$0xff] %v3911
        %5754 = vst [vmem:[%s505 + $0xe50] sm:$0xff] %v4358
        %5755 = vst [vmem:[%s505 + $0xe58] sm:$0xff] %v4360
        %5756 = vst [vmem:[%s505 + $0xe60] sm:$0xff] %v4807
        %5757 = vst [vmem:[%s505 + $0xe68] sm:$0xff] %v4809
        %5758 = vst [vmem:[%s505 + $0xe70] sm:$0xff] %v5256
        %5759 = vst [vmem:[%s505 + $0xe78] sm:$0xff] %v5258
        %5760 = vst [vmem:[%s505 + $0xe80] sm:$0xff] %v3915
        %5761 = vst [vmem:[%s505 + $0xe88] sm:$0xff] %v3917
        %5762 = vst [vmem:[%s505 + $0xe90] sm:$0xff] %v4364
        %5763 = vst [vmem:[%s505 + $0xe98] sm:$0xff] %v4366
        %5764 = vst [vmem:[%s505 + $0xea0] sm:$0xff] %v4813
        %5765 = vst [vmem:[%s505 + $0xea8] sm:$0xff] %v4815
        %5766 = vst [vmem:[%s505 + $0xeb0] sm:$0xff] %v5262
        %5767 = vst [vmem:[%s505 + $0xeb8] sm:$0xff] %v5264
        %5768 = vst [vmem:[%s505 + $0xec0] sm:$0xff] %v3921
        %5769 = vst [vmem:[%s505 + $0xec8] sm:$0xff] %v3923
        %5770 = vst [vmem:[%s505 + $0xed0] sm:$0xff] %v4370
        %5771 = vst [vmem:[%s505 + $0xed8] sm:$0xff] %v4372
        %5772 = vst [vmem:[%s505 + $0xee0] sm:$0xff] %v4819
        %5773 = vst [vmem:[%s505 + $0xee8] sm:$0xff] %v4821
        %5774 = vst [vmem:[%s505 + $0xef0] sm:$0xff] %v5268
        %5775 = vst [vmem:[%s505 + $0xef8] sm:$0xff] %v5270
        %5776 = vst [vmem:[%s505 + $0xf00] sm:$0xff] %v3927
        %5777 = vst [vmem:[%s505 + $0xf08] sm:$0xff] %v3929
        %5778 = vst [vmem:[%s505 + $0xf10] sm:$0xff] %v4376
        %5779 = vst [vmem:[%s505 + $0xf18] sm:$0xff] %v4378
        %5780 = vst [vmem:[%s505 + $0xf20] sm:$0xff] %v4825
        %5781 = vst [vmem:[%s505 + $0xf28] sm:$0xff] %v4827
        %5782 = vst [vmem:[%s505 + $0xf30] sm:$0xff] %v5274
        %5783 = vst [vmem:[%s505 + $0xf38] sm:$0xff] %v5276
        %5784 = vst [vmem:[%s505 + $0xf40] sm:$0xff] %v3933
        %5785 = vst [vmem:[%s505 + $0xf48] sm:$0xff] %v3935
        %5786 = vst [vmem:[%s505 + $0xf50] sm:$0xff] %v4382
        %5787 = vst [vmem:[%s505 + $0xf58] sm:$0xff] %v4384
        %5788 = vst [vmem:[%s505 + $0xf60] sm:$0xff] %v4831
        %5789 = vst [vmem:[%s505 + $0xf68] sm:$0xff] %v4833
        %5790 = vst [vmem:[%s505 + $0xf70] sm:$0xff] %v5280
        %5791 = vst [vmem:[%s505 + $0xf78] sm:$0xff] %v5282
        %5792 = vst [vmem:[%s505 + $0xf80] sm:$0xff] %v3939
        %5793 = vst [vmem:[%s505 + $0xf88] sm:$0xff] %v3941
        %5794 = vst [vmem:[%s505 + $0xf90] sm:$0xff] %v4388
        %5795 = vst [vmem:[%s505 + $0xf98] sm:$0xff] %v4390
        %5796 = vst [vmem:[%s505 + $0xfa0] sm:$0xff] %v4837
        %5797 = vst [vmem:[%s505 + $0xfa8] sm:$0xff] %v4839
        %5798 = vst [vmem:[%s505 + $0xfb0] sm:$0xff] %v5286
        %5799 = vst [vmem:[%s505 + $0xfb8] sm:$0xff] %v5288
        %5800 = vst [vmem:[%s505 + $0xfc0] sm:$0xff] %v3945
        %5801 = vst [vmem:[%s505 + $0xfc8] sm:$0xff] %v3947
        %5802 = vst [vmem:[%s505 + $0xfd0] sm:$0xff] %v4394
        %5803 = vst [vmem:[%s505 + $0xfd8] sm:$0xff] %v4396
        %5804 = vst [vmem:[%s505 + $0xfe0] sm:$0xff] %v4843
        %5805 = vst [vmem:[%s505 + $0xfe8] sm:$0xff] %v4845
        %5806 = vst [vmem:[%s505 + $0xff0] sm:$0xff] %v5292
        %5807 = vst [vmem:[%s505 + $0xff8] sm:$0xff] %v5294
        %s5808 = sand.u32 %s276, 1
        %s5809 = scalar_lea.sflag [#allocation6], %s5808
        %s5810 = sand.u32 %s276, 1
        %s5811 = smul.addr %s5810, 4096
        %s5812 = scalar_lea.vmem [#allocation19], %s5811
        // Predicated region
        $region101: #{tpu_custom_call.1} parent=63 // pred_check
          %p5813 = pneg %p286
        $region102: #{tpu_custom_call.1} parent=63 // pred_check_branch
          %5815 = sbr.rel (%p5813) target = $region104
        $region103: #{tpu_custom_call.1} parent=63 // pred_region
          %s5817 = ssub.s32 65536, 65536
          %5818 = vsyncadd %s5809, %s5817
          %s5819 = smul.addr %s32, 512
          %s5820 = smul.addr %s5819, 128
          %s5821 = scalar_lea.hbm %s11, %s5820
          %s5822 = sshll.u32 %s5812, 4
          %s5823 = int_to_ptr.vmem [resolvable:$true] %s5822
          %5828 = dma.vmem_to_hbm [thread:$0]  %s5823, 65536, %s5821, %s5809, 1024, 1024, 64
        $region104: #{tpu_custom_call.1} parent=63 // pred_fallthru
          _
      $region64: #{tpu_custom_call.1} parent=5 // pred_fallthru
        _
      %p5829 = scmp.le.s32.totalorder 2, %s27
      // Predicated region
      $region105: #{tpu_custom_call.1} parent=5 // pred_check
        %p5830 = pneg %p5829
      $region106: #{tpu_custom_call.1} parent=5 // pred_check_branch
        %5832 = sbr.rel (%p5830) target = $region108
      $region107: #{tpu_custom_call.1} parent=5 // pred_region
        %s5833 = ssub.s32 %s27, 2
        // Predicated region
        $region109: #{tpu_custom_call.1} parent=107 // pred_check
          %p5834 = pneg %p292
        $region110: #{tpu_custom_call.1} parent=107 // pred_check_branch
          %5836 = sbr.rel (%p5834) target = $region112
        $region111: #{tpu_custom_call.1} parent=107 // pred_region
          %s5837 = sand.u32 %s277, 1
          %s5838 = scalar_lea.sflag [#allocation6], %s5837
          %s5839 = sand.u32 %s277, 1
          %s5840 = smul.addr %s5839, 4096
          %s5841 = scalar_lea.vmem [#allocation19], %s5840
          %5842 = dma.done %s5838, 65536
        $region112: #{tpu_custom_call.1} parent=107 // pred_fallthru
          _
      $region108: #{tpu_custom_call.1} parent=5 // pred_fallthru
        _
    $region6: #{tpu_custom_call.1} parent=1 // loop_footer
      %s31 = sadd.s32 1, %s27
    $region7: #{tpu_custom_call.1} parent=1 // loop_footer_branch
      %26 = sbr.rel target = $region3
    $region8: #{tpu_custom_call.1} parent=1 // loop_exit
      _
    %5843 = vsyncpa [#allocation5], 1
    %s5844 = scalar_lea.sflag [#allocation5], 1
    %5845 = vsyncpa %s5844, 1
    %5846 = vsyncpa [#allocation8], 1
    %5847 = vsyncpa [#allocation11], 1
    %5848 = vsyncpa [#allocation14], 1
    %5849 = vsyncpa [#allocation17], 1
    %5850 = vsyncpa [#allocation6], 1
    %s5851 = scalar_lea.sflag [#allocation6], 1
    %5852 = vsyncpa %s5851, 1

</llo_original>
